<compile_context>
chip_gen: v7x
topology: tpu7x:2x2x1
jax: 0.10.0
libtpu: 0.0.40
codegen_flags: <defaults>
</compile_context>

<pallas_src>
import functools
import numpy as np
import jax
import jax.numpy as jnp
from jax.experimental import pallas as pl
from jax.experimental.pallas import tpu as pltpu

NEG_SLOPE = 0.01      # nn.LeakyReLU default
IN_EPS = 1e-5         # nn.InstanceNorm3d default


def _round_up(x, m):
    return (x + m - 1) // m * m


@functools.lru_cache(maxsize=None)
def _vmem_limit():
    """Per-generation VMEM limit: ~96MiB on 128MiB parts, ~48MiB on 64MiB parts."""
    cap = None
    try:
        info = pltpu.get_tpu_info()
        for name in ("vmem_capacity_bytes", "vmem_size_bytes", "vmem_bytes"):
            cap = getattr(info, name, None)
            if cap:
                break
    except Exception:
        cap = None
    if not cap:
        cap = 128 * 1024 * 1024
    return int(min(cap * 3 // 4, 96 * 1024 * 1024))


# ----------------------------------------------------------------------------
# geometry helpers for the padded-flat conv layout (128-lane aligned)
# ----------------------------------------------------------------------------
def _ext_geometry(D, H, W):
    Dp, Hp, Wp = D + 2, H + 2, W + 2
    Sp = Dp * Hp * Wp                             # padded-volume flat size
    Sp128 = _round_up(Sp, 128)                    # lane-dense flat size
    halo = Hp * Wp + Wp + 1                       # max |flat tap offset|
    Sext = _round_up(Sp128 + 2 * halo, 128)       # halo-extended flat size
    taps = tuple(halo + ((kd - 1) * Hp + (kh - 1)) * Wp + (kw - 1)
                 for kd in range(3) for kh in range(3) for kw in range(3))
    return Dp, Hp, Wp, Sp, Sp128, halo, Sext, taps


def _interior_mask(D, H, W):
    """(1, Sp128) f32 mask: 1 on interior voxels, 0 on halo ring + lane tail."""
    _, _, _, Sp, Sp128, _, _, _ = _ext_geometry(D, H, W)
    m = np.zeros((D + 2, H + 2, W + 2), np.float32)
    m[1:-1, 1:-1, 1:-1] = 1.0
    m = m.reshape(1, Sp)
    m = np.pad(m, ((0, 0), (0, Sp128 - Sp)))
    return jnp.asarray(m)


def _to_ext_flat(x5, dtype=jnp.bfloat16):
    """(B,C,D,H,W) -> halo-extended, lane-padded flat layout (B,C,Sext)."""
    B, C, D, H, W = x5.shape
    _, _, _, Sp, _, halo, Sext, _ = _ext_geometry(D, H, W)
    xp = jnp.pad(x5, ((0, 0), (0, 0), (1, 1), (1, 1), (1, 1))).reshape(B, C, Sp)
    xp = jnp.pad(xp, ((0, 0), (0, 0), (halo, Sext - Sp - halo)))
    return xp.astype(dtype)


def _to_padded_flat(x5, dtype=jnp.bfloat16):
    """(B,C,D,H,W) -> padded-flat, lane-padded layout (B,C,Sp128), zero ring/tail."""
    B, C, D, H, W = x5.shape
    _, _, _, Sp, Sp128, _, _, _ = _ext_geometry(D, H, W)
    xp = jnp.pad(x5, ((0, 0), (0, 0), (1, 1), (1, 1), (1, 1))).reshape(B, C, Sp)
    return jnp.pad(xp, ((0, 0), (0, 0), (0, Sp128 - Sp))).astype(dtype)


def _from_padded_flat(yf, D, H, W):
    """(B,C,Sp128) padded-flat -> (B,C,D,H,W) interior."""
    B, C, _ = yf.shape
    Sp = (D + 2) * (H + 2) * (W + 2)
    return yf[:, :, :Sp].reshape(B, C, D + 2, H + 2, W + 2)[:, :, 1:-1, 1:-1, 1:-1]


def _bs_full(shape):
    """BlockSpec covering the whole (small) array at every grid step."""
    n = len(shape)
    return pl.BlockSpec(tuple(shape), lambda *_: (0,) * n)


# ----------------------------------------------------------------------------
# in-kernel building blocks
# ----------------------------------------------------------------------------
def _conv3_im2col(xb, col_ref, wt_ref, b_ref, taps, sp, cin):
    """3x3x3 conv as ONE MXU matmul over an im2col VMEM scratch (f32 accum)."""
    for t, off in enumerate(taps):
        col_ref[t * cin:(t + 1) * cin, :] = xb[:, off:off + sp]
    return jnp.dot(wt_ref[...], col_ref[...],
                   preferred_element_type=jnp.float32) + b_ref[...]


def _in_lrelu(conv, m, n_valid):
    """Masked two-pass InstanceNorm (biased var) + LeakyReLU (all f32)."""
    inv_n = 1.0 / n_valid
    mean = jnp.sum(conv * m, axis=1, keepdims=True) * inv_n
    diff = (conv - mean) * m
    var = jnp.maximum(jnp.sum(diff * diff, axis=1, keepdims=True) * inv_n, 0.0)
    y = (conv - mean) * jax.lax.rsqrt(var + IN_EPS)
    return jnp.where(y >= 0.0, y, NEG_SLOPE * y)


# ----------------------------------------------------------------------------
# kernel 1: per-scale  conv3 -> IN -> LReLU -> SE -> 1x1 projection + WG logit
# ----------------------------------------------------------------------------
def _enhance_project_kernel(x_ref, mask_ref, wt_ref, cb_ref,
                            sw1_ref, sb1_ref, sw2_ref, sb2_ref,
                            gw1_ref, gb1_ref, gw2_ref, gb2_ref,
                            pw_ref, pb_ref,
                            proj_ref, wg_ref, col_ref,
                            *, taps, sp, cin, n_valid):
    xb = x_ref[0]                                           # (Cin, Sext) bf16
    m = mask_ref[...]                                       # (1, Sp128) interior mask
    conv = _conv3_im2col(xb, col_ref, wt_ref, cb_ref, taps, sp, cin)   # (C, Sp128) f32
    y = _in_lrelu(conv, m, n_valid)

    # Squeeze-Excitation on the pooled vector (VPU + small XLU, no N=1 MXU dots)
    inv_n = 1.0 / n_valid
    pooled = jnp.sum(y * m, axis=1, keepdims=True) * inv_n              # (C, 1)
    h = jnp.maximum(jnp.sum(sw1_ref[...] * pooled.T, axis=1, keepdims=True)
                    + sb1_ref[...], 0.0)                                # (r, 1)
    s = jax.nn.sigmoid(jnp.sum(sw2_ref[...] * h.T, axis=1, keepdims=True)
                       + sb2_ref[...])                                  # (C, 1)
    enh = y * s                                                         # enhanced feature

    # fused 1x1 projection (enhanced map never leaves VMEM); mask zeroes the halo
    # ring + lane tail so the bf16 result is directly a valid padded-flat layout.
    proj = jnp.dot(pw_ref[...], enh.astype(jnp.bfloat16),
                   preferred_element_type=jnp.float32) + pb_ref[...]
    proj_ref[0] = (proj * m).astype(proj_ref.dtype)

    # weight-generator logit:  pool(enh) == s * pool(y)
    pe = s * pooled
    hw = jnp.sum(gw1_ref[...] * pe.T, axis=1, keepdims=True) + gb1_ref[...]
    hw = jnp.where(hw >= 0.0, hw, NEG_SLOPE * hw)
    wg_ref[0] = jnp.sum(gw2_ref[...] * hw.T, axis=1, keepdims=True) + gb2_ref[...]


def _conv_weight_2d(w):
    """(Cout, Cin, 3,3,3) -> (Cout, 27*Cin) matching im2col row order [tap, cin]."""
    co, ci = w.shape[0], w.shape[1]
    return w.reshape(co, ci, 27).transpose(0, 2, 1).reshape(co, 27 * ci).astype(jnp.bfloat16)


def enhance_and_project(x, pe, pp, out_ch):
    B, C, D, H, W = x.shape
    _, _, _, _, Sp128, _, Sext, taps = _ext_geometry(D, H, W)
    x_ext = _to_ext_flat(x)                       # (B, C, Sext) bf16 (halves HBM read)
    mask = _interior_mask(D, H, W)

    wt = _conv_weight_2d(pe["w"])                 # (C, 27*C) bf16
    cb = pe["b"].reshape(C, 1)
    sw1, sb1 = pe["se_w1"], pe["se_b1"].reshape(-1, 1)
    sw2, sb2 = pe["se_w2"], pe["se_b2"].reshape(-1, 1)
    gw1, gb1 = pe["wg_w1"], pe["wg_b1"].reshape(-1, 1)
    gw2, gb2 = pe["wg_w2"], pe["wg_b2"].reshape(1, 1)
    pw = pp["w"].reshape(out_ch, C).astype(jnp.bfloat16)
    pb = pp["b"].reshape(out_ch, 1)

    kernel = functools.partial(_enhance_project_kernel, taps=taps, sp=Sp128,
                               cin=C, n_valid=float(D * H * W))
    proj, wg = pl.pallas_call(
        kernel,
        out_shape=(jax.ShapeDtypeStruct((B, out_ch, Sp128), jnp.bfloat16),
                   jax.ShapeDtypeStruct((B, 1, 1), jnp.float32)),
        grid=(B,),
        in_specs=[
            pl.BlockSpec((1, C, Sext), lambda b: (b, 0, 0)),
            _bs_full(mask.shape), _bs_full(wt.shape), _bs_full(cb.shape),
            _bs_full(sw1.shape), _bs_full(sb1.shape),
            _bs_full(sw2.shape), _bs_full(sb2.shape),
            _bs_full(gw1.shape), _bs_full(gb1.shape),
            _bs_full(gw2.shape), _bs_full(gb2.shape),
            _bs_full(pw.shape), _bs_full(pb.shape),
        ],
        out_specs=(pl.BlockSpec((1, out_ch, Sp128), lambda b: (b, 0, 0)),
                   pl.BlockSpec((1, 1, 1), lambda b: (b, 0, 0))),
        scratch_shapes=[pltpu.VMEM((27 * C, Sp128), jnp.bfloat16)],   # im2col
        compiler_params=pltpu.CompilerParams(
            dimension_semantics=("parallel",),
            vmem_limit_bytes=_vmem_limit()),
    )(x_ext, mask, wt, cb, sw1, sb1, sw2, sb2, gw1, gb1, gw2, gb2, pw, pb)
    return proj, wg[:, :, 0]                      # (B, out_ch, Sp128) bf16, (B, 1)


# ----------------------------------------------------------------------------
# kernel 2: softmax-weighted sum across scales + fusion conv3 -> IN -> LReLU
# ----------------------------------------------------------------------------
def _fusion_kernel(*args, n_scales, taps, sp, halo, sext, cin, n_valid):
    x_refs = args[:n_scales]                      # n x (1, C, Sp128) bf16
    w_ref, mask_ref, wt_ref, b_ref, out_ref, col_ref = args[n_scales:]
    b = pl.program_id(0)

    # per-batch scalar softmax weights from SMEM; accumulate the weighted sum in f32
    acc = w_ref[b, 0] * x_refs[0][0].astype(jnp.float32)
    for i in range(1, n_scales):
        acc = acc + w_ref[b, i] * x_refs[i][0].astype(jnp.float32)

    # rebuild the flat halo extension in-register (halo ring of acc is already zero)
    ext = jnp.concatenate(
        [jnp.zeros((cin, halo), jnp.bfloat16),
         acc.astype(jnp.bfloat16),
         jnp.zeros((cin, sext - halo - sp), jnp.bfloat16)], axis=1)

    conv = _conv3_im2col(ext, col_ref, wt_ref, b_ref, taps, sp, cin)
    out_ref[0] = _in_lrelu(conv, mask_ref[...], n_valid)


def fuse_and_output(proj_list, weights, pf, D, H, W):
    n = len(proj_list)
    B, C, _ = proj_list[0].shape
    _, _, _, _, Sp128, halo, Sext, taps = _ext_geometry(D, H, W)
    mask = _interior_mask(D, H, W)
    wt = _conv_weight_2d(pf["w"])
    bias = pf["b"].reshape(C, 1)

    kernel = functools.partial(_fusion_kernel, n_scales=n, taps=taps, sp=Sp128,
                               halo=halo, sext=Sext, cin=C, n_valid=float(D * H * W))
    in_specs = ([pl.BlockSpec((1, C, Sp128), lambda b: (b, 0, 0)) for _ in range(n)]
                + [pl.BlockSpec(memory_space=pltpu.MemorySpace.SMEM),
                   _bs_full(mask.shape), _bs_full(wt.shape), _bs_full(bias.shape)])
    out = pl.pallas_call(
        kernel,
        out_shape=jax.ShapeDtypeStruct((B, C, Sp128), jnp.float32),
        grid=(B,),
        in_specs=in_specs,
        out_specs=pl.BlockSpec((1, C, Sp128), lambda b: (b, 0, 0)),
        scratch_shapes=[pltpu.VMEM((27 * C, Sp128), jnp.bfloat16)],   # im2col
        compiler_params=pltpu.CompilerParams(
            dimension_semantics=("parallel",),
            vmem_limit_bytes=_vmem_limit()),
    )(*proj_list, weights, mask, wt, bias)
    return _from_padded_flat(out, D, H, W)


# ----------------------------------------------------------------------------
# QuantizedAMSFF forward
# ----------------------------------------------------------------------------
def amsff_forward(params, feature_maps):
    target = tuple(feature_maps[0].shape[2:])
    Dt, Ht, Wt = target
    out_ch = params["fus"]["w"].shape[0]

    proj_list, logits = [], []
    for f, pe, pp in zip(feature_maps, params["enh"], params["proj"]):
        pfl, wg = enhance_and_project(f, pe, pp, out_ch)
        D, H, W = f.shape[2:]
        if (D, H, W) != target:
            p5 = _from_padded_flat(pfl, D, H, W).astype(jnp.float32)
            p5 = jax.image.resize(p5, p5.shape[:2] + target, method="trilinear")
            pfl = _to_padded_flat(p5)             # bf16, target-res padded-flat layout
        proj_list.append(pfl)
        logits.append(wg)
    w = jax.nn.softmax(jnp.concatenate(logits, axis=1), axis=1)   # (B, n_scales) f32
    return fuse_and_output(proj_list, w, params["fus"], Dt, Ht, Wt)


# ----------------------------------------------------------------------------
# matched-precision JAX reference (bf16 MXU operands, f32 accum) for the check
# ----------------------------------------------------------------------------
def _lrelu(x):
    return jnp.where(x >= 0, x, NEG_SLOPE * x)


def _conv3_ref(x, w, b):
    y = jax.lax.conv_general_dilated(
        x.astype(jnp.bfloat16), w.astype(jnp.bfloat16), (1, 1, 1),
        ((1, 1), (1, 1), (1, 1)),
        dimension_numbers=("NCDHW", "OIDHW", "NCDHW"),
        preferred_element_type=jnp.float32)
    return y + b.reshape(1, -1, 1, 1, 1)


def _in_ref(x):
    mu = jnp.mean(x, axis=(2, 3, 4), keepdims=True)
    va = jnp.var(x, axis=(2, 3, 4), keepdims=True)
    return (x - mu) * jax.lax.rsqrt(va + IN_EPS)


def amsff_ref(params, feature_maps):
    target = feature_maps[0].shape[2:]
    B = feature_maps[0].shape[0]
    enhanced, logits = [], []
    for f, p in zip(feature_maps, params["enh"]):
        y = _lrelu(_in_ref(_conv3_ref(f, p["w"], p["b"])))
        pooled = jnp.mean(y, axis=(2, 3, 4))
        h = jnp.maximum(pooled @ p["se_w1"].T + p["se_b1"], 0.0)
        s = jax.nn.sigmoid(h @ p["se_w2"].T + p["se_b2"])
        e = y * s[:, :, None, None, None]
        enhanced.append(e)
        pe = jnp.mean(e, axis=(2, 3, 4))
        hw = _lrelu(pe @ p["wg_w1"].T + p["wg_b1"])
        logits.append(hw @ p["wg_w2"].T + p["wg_b2"])
    w = jax.nn.softmax(jnp.concatenate(logits, axis=1), axis=1)
    fused = None
    for i, (e, p) in enumerate(zip(enhanced, params["proj"])):
        pr = jnp.einsum("oc,bcdhw->bodhw",
                        p["w"].reshape(p["w"].shape[0], -1).astype(jnp.bfloat16),
                        e.astype(jnp.bfloat16),
                        preferred_element_type=jnp.float32)
        pr = pr + p["b"].reshape(1, -1, 1, 1, 1)
        pr = pr.astype(jnp.bfloat16).astype(jnp.float32)   # mirror kernel-1 bf16 output
        if pr.shape[2:] != target:
            pr = jax.image.resize(pr, pr.shape[:2] + tuple(target), method="trilinear")
            pr = pr.astype(jnp.bfloat16).astype(jnp.float32)   # mirror bf16 re-layout
        pr = pr * w[:, i].reshape(B, 1, 1, 1, 1)
        fused = pr if fused is None else fused + pr
    return _lrelu(_in_ref(_conv3_ref(fused, params["fus"]["w"], params["fus"]["b"])))


# ----------------------------------------------------------------------------
# deterministic parameter init (matches module shapes)
# ----------------------------------------------------------------------------
class _KeyGen:
    def __init__(self, key):
        self.key = key

    def __call__(self):
        self.key, k = jax.random.split(self.key)
        return k


def init_params(key, channels_list, output_channels=None):
    out_ch = output_channels or max(channels_list)
    kg = _KeyGen(key)

    def w_init(shape, fan_in):
        return jax.random.normal(kg(), shape, jnp.float32) / np.sqrt(float(fan_in))

    def b_init(shape):
        return 0.1 * jax.random.normal(kg(), shape, jnp.float32)

    enh, proj = [], []
    for c in channels_list:
        r = max(1, c // 16)        # SqueezeExcitation reduction
        r2 = c // 8                # weight-generator hidden width (needs c >= 8)
        enh.append({
            "w": w_init((c, c, 3, 3, 3), c * 27), "b": b_init((c,)),
            "se_w1": w_init((r, c), c), "se_b1": b_init((r,)),
            "se_w2": w_init((c, r), r), "se_b2": b_init((c,)),
            "wg_w1": w_init((r2, c), c), "wg_b1": b_init((r2,)),
            "wg_w2": w_init((1, r2), r2), "wg_b2": b_init((1,)),
        })
        proj.append({"w": w_init((out_ch, c, 1, 1, 1), c), "b": b_init((out_ch,))})
    fus = {"w": w_init((out_ch, out_ch, 3, 3, 3), out_ch * 27), "b": b_init((out_ch,))}
    return {"enh": enh, "proj": proj, "fus": fus}, out_ch


# ----------------------------------------------------------------------------
if __name__ == "__main__":
    key = jax.random.PRNGKey(0)
    kp, k0, k1 = jax.random.split(key, 3)

    channels_list = [8, 16]
    params, out_ch = init_params(kp, channels_list)

    B = 2
    f0 = jax.random.normal(k0, (B, channels_list[0], 8, 8, 8), jnp.float32)
    f1 = jax.random.normal(k1, (B, channels_list[1], 4, 4, 4), jnp.float32)

    fwd = jax.jit(lambda p, a, b: amsff_forward(p, [a, b]))
    out = jax.block_until_ready(fwd(params, f0, f1))

    assert out.shape == (B, out_ch, 8, 8, 8), out.shape
    assert bool(jnp.all(jnp.isfinite(out)))

    ref = jax.jit(lambda p, a, b: amsff_ref(p, [a, b]))(params, f0, f1)
    np.testing.assert_allclose(np.asarray(out), np.asarray(ref), rtol=5e-2, atol=5e-2)

    print("KERNEL_OK")
</pallas_src>

<mosaic_0001>
module attributes {stable_mosaic.version = 11 : i64} {
  func.func @_enhance_project_kernel(%arg0: i32, %arg1: memref<1x16x384xbf16, #tpu.memory_space<vmem>>, %arg2: memref<1x256xf32, #tpu.memory_space<vmem>>, %arg3: memref<16x432xbf16, #tpu.memory_space<vmem>>, %arg4: memref<16x1xf32, #tpu.memory_space<vmem>>, %arg5: memref<1x16xf32, #tpu.memory_space<vmem>>, %arg6: memref<1x1xf32, #tpu.memory_space<vmem>>, %arg7: memref<16x1xf32, #tpu.memory_space<vmem>>, %arg8: memref<16x1xf32, #tpu.memory_space<vmem>>, %arg9: memref<2x16xf32, #tpu.memory_space<vmem>>, %arg10: memref<2x1xf32, #tpu.memory_space<vmem>>, %arg11: memref<1x2xf32, #tpu.memory_space<vmem>>, %arg12: memref<1x1xf32, #tpu.memory_space<vmem>>, %arg13: memref<16x16xbf16, #tpu.memory_space<vmem>>, %arg14: memref<16x1xf32, #tpu.memory_space<vmem>>, %arg15: memref<1x16x256xbf16, #tpu.memory_space<vmem>>, %arg16: memref<1x1x1xf32, #tpu.memory_space<vmem>>, %arg17: memref<432x256xbf16, #tpu.memory_space<vmem>>) attributes {dimension_semantics = [#tpu.dimension_semantics<parallel>], iteration_bounds = array<i64: 2>, scalar_prefetch = 0 : i64, scratch_operands = 1 : i64, tpu.core_type = #tpu.core_type<tc>, window_params = [{transform_indices = @transform_0, window_bounds = array<i64: 1, 16, 384>}, {pipeline_mode = #tpu.pipeline_mode<synchronous>, transform_indices = @transform_1, window_bounds = array<i64: 1, 256>}, {pipeline_mode = #tpu.pipeline_mode<synchronous>, transform_indices = @transform_2, window_bounds = array<i64: 16, 432>}, {pipeline_mode = #tpu.pipeline_mode<synchronous>, transform_indices = @transform_3, window_bounds = array<i64: 16, 1>}, {pipeline_mode = #tpu.pipeline_mode<synchronous>, transform_indices = @transform_4, window_bounds = array<i64: 1, 16>}, {pipeline_mode = #tpu.pipeline_mode<synchronous>, transform_indices = @transform_5, window_bounds = array<i64: 1, 1>}, {pipeline_mode = #tpu.pipeline_mode<synchronous>, transform_indices = @transform_6, window_bounds = array<i64: 16, 1>}, {pipeline_mode = #tpu.pipeline_mode<synchronous>, transform_indices = @transform_7, window_bounds = array<i64: 16, 1>}, {pipeline_mode = #tpu.pipeline_mode<synchronous>, transform_indices = @transform_8, window_bounds = array<i64: 2, 16>}, {pipeline_mode = #tpu.pipeline_mode<synchronous>, transform_indices = @transform_9, window_bounds = array<i64: 2, 1>}, {pipeline_mode = #tpu.pipeline_mode<synchronous>, transform_indices = @transform_10, window_bounds = array<i64: 1, 2>}, {pipeline_mode = #tpu.pipeline_mode<synchronous>, transform_indices = @transform_11, window_bounds = array<i64: 1, 1>}, {pipeline_mode = #tpu.pipeline_mode<synchronous>, transform_indices = @transform_12, window_bounds = array<i64: 16, 16>}, {pipeline_mode = #tpu.pipeline_mode<synchronous>, transform_indices = @transform_13, window_bounds = array<i64: 16, 1>}, {transform_indices = @transform_14, window_bounds = array<i64: 1, 16, 256>}, {transform_indices = @transform_15, window_bounds = array<i64: 1, 1, 1>}]} {
    %c0 = arith.constant 0 : index
    %c0_0 = arith.constant 0 : index
    %c0_1 = arith.constant 0 : index
    %0 = vector.load %arg1[%c0, %c0_0, %c0_1] : memref<1x16x384xbf16, #tpu.memory_space<vmem>>, vector<1x16x384xbf16>
    %1 = vector.shape_cast %0 : vector<1x16x384xbf16> to vector<16x384xbf16>
    %c0_2 = arith.constant 0 : index
    %c0_3 = arith.constant 0 : index
    %2 = vector.load %arg2[%c0_2, %c0_3] : memref<1x256xf32, #tpu.memory_space<vmem>>, vector<1x256xf32>
    %3 = vector.extract_strided_slice %1 {offsets = [0, 0], sizes = [16, 256], strides = [1, 1]} : vector<16x384xbf16> to vector<16x256xbf16>
    %c0_4 = arith.constant 0 : index
    %c0_5 = arith.constant 0 : index
    %4 = vector.load %arg17[%c0_4, %c0_5] : memref<432x256xbf16, #tpu.memory_space<vmem>>, vector<16x256xbf16>
    tpu.vector_store %arg17[%c0_4, %c0_5], %3 {strides = array<i32>} : memref<432x256xbf16, #tpu.memory_space<vmem>>, vector<16x256xbf16>,
    %5 = vector.extract_strided_slice %1 {offsets = [0, 1], sizes = [16, 256], strides = [1, 1]} : vector<16x384xbf16> to vector<16x256xbf16>
    %c16 = arith.constant 16 : index
    %c0_6 = arith.constant 0 : index
    %6 = vector.load %arg17[%c16, %c0_6] : memref<432x256xbf16, #tpu.memory_space<vmem>>, vector<16x256xbf16>
    tpu.vector_store %arg17[%c16, %c0_6], %5 {strides = array<i32>} : memref<432x256xbf16, #tpu.memory_space<vmem>>, vector<16x256xbf16>,
    %7 = vector.extract_strided_slice %1 {offsets = [0, 2], sizes = [16, 256], strides = [1, 1]} : vector<16x384xbf16> to vector<16x256xbf16>
    %c32 = arith.constant 32 : index
    %c0_7 = arith.constant 0 : index
    %8 = vector.load %arg17[%c32, %c0_7] : memref<432x256xbf16, #tpu.memory_space<vmem>>, vector<16x256xbf16>
    tpu.vector_store %arg17[%c32, %c0_7], %7 {strides = array<i32>} : memref<432x256xbf16, #tpu.memory_space<vmem>>, vector<16x256xbf16>,
    %9 = vector.extract_strided_slice %1 {offsets = [0, 6], sizes = [16, 256], strides = [1, 1]} : vector<16x384xbf16> to vector<16x256xbf16>
    %c48 = arith.constant 48 : index
    %c0_8 = arith.constant 0 : index
    %10 = vector.load %arg17[%c48, %c0_8] : memref<432x256xbf16, #tpu.memory_space<vmem>>, vector<16x256xbf16>
    tpu.vector_store %arg17[%c48, %c0_8], %9 {strides = array<i32>} : memref<432x256xbf16, #tpu.memory_space<vmem>>, vector<16x256xbf16>,
    %11 = vector.extract_strided_slice %1 {offsets = [0, 7], sizes = [16, 256], strides = [1, 1]} : vector<16x384xbf16> to vector<16x256xbf16>
    %c64 = arith.constant 64 : index
    %c0_9 = arith.constant 0 : index
    %12 = vector.load %arg17[%c64, %c0_9] : memref<432x256xbf16, #tpu.memory_space<vmem>>, vector<16x256xbf16>
    tpu.vector_store %arg17[%c64, %c0_9], %11 {strides = array<i32>} : memref<432x256xbf16, #tpu.memory_space<vmem>>, vector<16x256xbf16>,
    %13 = vector.extract_strided_slice %1 {offsets = [0, 8], sizes = [16, 256], strides = [1, 1]} : vector<16x384xbf16> to vector<16x256xbf16>
    %c80 = arith.constant 80 : index
    %c0_10 = arith.constant 0 : index
    %14 = vector.load %arg17[%c80, %c0_10] : memref<432x256xbf16, #tpu.memory_space<vmem>>, vector<16x256xbf16>
    tpu.vector_store %arg17[%c80, %c0_10], %13 {strides = array<i32>} : memref<432x256xbf16, #tpu.memory_space<vmem>>, vector<16x256xbf16>,
    %15 = vector.extract_strided_slice %1 {offsets = [0, 12], sizes = [16, 256], strides = [1, 1]} : vector<16x384xbf16> to vector<16x256xbf16>
    %c96 = arith.constant 96 : index
    %c0_11 = arith.constant 0 : index
    %16 = vector.load %arg17[%c96, %c0_11] : memref<432x256xbf16, #tpu.memory_space<vmem>>, vector<16x256xbf16>
    tpu.vector_store %arg17[%c96, %c0_11], %15 {strides = array<i32>} : memref<432x256xbf16, #tpu.memory_space<vmem>>, vector<16x256xbf16>,
    %17 = vector.extract_strided_slice %1 {offsets = [0, 13], sizes = [16, 256], strides = [1, 1]} : vector<16x384xbf16> to vector<16x256xbf16>
    %c112 = arith.constant 112 : index
    %c0_12 = arith.constant 0 : index
    %18 = vector.load %arg17[%c112, %c0_12] : memref<432x256xbf16, #tpu.memory_space<vmem>>, vector<16x256xbf16>
    tpu.vector_store %arg17[%c112, %c0_12], %17 {strides = array<i32>} : memref<432x256xbf16, #tpu.memory_space<vmem>>, vector<16x256xbf16>,
    %19 = vector.extract_strided_slice %1 {offsets = [0, 14], sizes = [16, 256], strides = [1, 1]} : vector<16x384xbf16> to vector<16x256xbf16>
    %c128 = arith.constant 128 : index
    %c0_13 = arith.constant 0 : index
    %20 = vector.load %arg17[%c128, %c0_13] : memref<432x256xbf16, #tpu.memory_space<vmem>>, vector<16x256xbf16>
    tpu.vector_store %arg17[%c128, %c0_13], %19 {strides = array<i32>} : memref<432x256xbf16, #tpu.memory_space<vmem>>, vector<16x256xbf16>,
    %21 = vector.extract_strided_slice %1 {offsets = [0, 36], sizes = [16, 256], strides = [1, 1]} : vector<16x384xbf16> to vector<16x256xbf16>
    %c144 = arith.constant 144 : index
    %c0_14 = arith.constant 0 : index
    %22 = vector.load %arg17[%c144, %c0_14] : memref<432x256xbf16, #tpu.memory_space<vmem>>, vector<16x256xbf16>
    tpu.vector_store %arg17[%c144, %c0_14], %21 {strides = array<i32>} : memref<432x256xbf16, #tpu.memory_space<vmem>>, vector<16x256xbf16>,
    %23 = vector.extract_strided_slice %1 {offsets = [0, 37], sizes = [16, 256], strides = [1, 1]} : vector<16x384xbf16> to vector<16x256xbf16>
    %c160 = arith.constant 160 : index
    %c0_15 = arith.constant 0 : index
    %24 = vector.load %arg17[%c160, %c0_15] : memref<432x256xbf16, #tpu.memory_space<vmem>>, vector<16x256xbf16>
    tpu.vector_store %arg17[%c160, %c0_15], %23 {strides = array<i32>} : memref<432x256xbf16, #tpu.memory_space<vmem>>, vector<16x256xbf16>,
    %25 = vector.extract_strided_slice %1 {offsets = [0, 38], sizes = [16, 256], strides = [1, 1]} : vector<16x384xbf16> to vector<16x256xbf16>
    %c176 = arith.constant 176 : index
    %c0_16 = arith.constant 0 : index
    %26 = vector.load %arg17[%c176, %c0_16] : memref<432x256xbf16, #tpu.memory_space<vmem>>, vector<16x256xbf16>
    tpu.vector_store %arg17[%c176, %c0_16], %25 {strides = array<i32>} : memref<432x256xbf16, #tpu.memory_space<vmem>>, vector<16x256xbf16>,
    %27 = vector.extract_strided_slice %1 {offsets = [0, 42], sizes = [16, 256], strides = [1, 1]} : vector<16x384xbf16> to vector<16x256xbf16>
    %c192 = arith.constant 192 : index
    %c0_17 = arith.constant 0 : index
    %28 = vector.load %arg17[%c192, %c0_17] : memref<432x256xbf16, #tpu.memory_space<vmem>>, vector<16x256xbf16>
    tpu.vector_store %arg17[%c192, %c0_17], %27 {strides = array<i32>} : memref<432x256xbf16, #tpu.memory_space<vmem>>, vector<16x256xbf16>,
    %29 = vector.extract_strided_slice %1 {offsets = [0, 43], sizes = [16, 256], strides = [1, 1]} : vector<16x384xbf16> to vector<16x256xbf16>
    %c208 = arith.constant 208 : index
    %c0_18 = arith.constant 0 : index
    %30 = vector.load %arg17[%c208, %c0_18] : memref<432x256xbf16, #tpu.memory_space<vmem>>, vector<16x256xbf16>
    tpu.vector_store %arg17[%c208, %c0_18], %29 {strides = array<i32>} : memref<432x256xbf16, #tpu.memory_space<vmem>>, vector<16x256xbf16>,
    %31 = vector.extract_strided_slice %1 {offsets = [0, 44], sizes = [16, 256], strides = [1, 1]} : vector<16x384xbf16> to vector<16x256xbf16>
    %c224 = arith.constant 224 : index
    %c0_19 = arith.constant 0 : index
    %32 = vector.load %arg17[%c224, %c0_19] : memref<432x256xbf16, #tpu.memory_space<vmem>>, vector<16x256xbf16>
    tpu.vector_store %arg17[%c224, %c0_19], %31 {strides = array<i32>} : memref<432x256xbf16, #tpu.memory_space<vmem>>, vector<16x256xbf16>,
    %33 = vector.extract_strided_slice %1 {offsets = [0, 48], sizes = [16, 256], strides = [1, 1]} : vector<16x384xbf16> to vector<16x256xbf16>
    %c240 = arith.constant 240 : index
    %c0_20 = arith.constant 0 : index
    %34 = vector.load %arg17[%c240, %c0_20] : memref<432x256xbf16, #tpu.memory_space<vmem>>, vector<16x256xbf16>
    tpu.vector_store %arg17[%c240, %c0_20], %33 {strides = array<i32>} : memref<432x256xbf16, #tpu.memory_space<vmem>>, vector<16x256xbf16>,
    %35 = vector.extract_strided_slice %1 {offsets = [0, 49], sizes = [16, 256], strides = [1, 1]} : vector<16x384xbf16> to vector<16x256xbf16>
    %c256 = arith.constant 256 : index
    %c0_21 = arith.constant 0 : index
    %36 = vector.load %arg17[%c256, %c0_21] : memref<432x256xbf16, #tpu.memory_space<vmem>>, vector<16x256xbf16>
    tpu.vector_store %arg17[%c256, %c0_21], %35 {strides = array<i32>} : memref<432x256xbf16, #tpu.memory_space<vmem>>, vector<16x256xbf16>,
    %37 = vector.extract_strided_slice %1 {offsets = [0, 50], sizes = [16, 256], strides = [1, 1]} : vector<16x384xbf16> to vector<16x256xbf16>
    %c272 = arith.constant 272 : index
    %c0_22 = arith.constant 0 : index
    %38 = vector.load %arg17[%c272, %c0_22] : memref<432x256xbf16, #tpu.memory_space<vmem>>, vector<16x256xbf16>
    tpu.vector_store %arg17[%c272, %c0_22], %37 {strides = array<i32>} : memref<432x256xbf16, #tpu.memory_space<vmem>>, vector<16x256xbf16>,
    %39 = vector.extract_strided_slice %1 {offsets = [0, 72], sizes = [16, 256], strides = [1, 1]} : vector<16x384xbf16> to vector<16x256xbf16>
    %c288 = arith.constant 288 : index
    %c0_23 = arith.constant 0 : index
    %40 = vector.load %arg17[%c288, %c0_23] : memref<432x256xbf16, #tpu.memory_space<vmem>>, vector<16x256xbf16>
    tpu.vector_store %arg17[%c288, %c0_23], %39 {strides = array<i32>} : memref<432x256xbf16, #tpu.memory_space<vmem>>, vector<16x256xbf16>,
    %41 = vector.extract_strided_slice %1 {offsets = [0, 73], sizes = [16, 256], strides = [1, 1]} : vector<16x384xbf16> to vector<16x256xbf16>
    %c304 = arith.constant 304 : index
    %c0_24 = arith.constant 0 : index
    %42 = vector.load %arg17[%c304, %c0_24] : memref<432x256xbf16, #tpu.memory_space<vmem>>, vector<16x256xbf16>
    tpu.vector_store %arg17[%c304, %c0_24], %41 {strides = array<i32>} : memref<432x256xbf16, #tpu.memory_space<vmem>>, vector<16x256xbf16>,
    %43 = vector.extract_strided_slice %1 {offsets = [0, 74], sizes = [16, 256], strides = [1, 1]} : vector<16x384xbf16> to vector<16x256xbf16>
    %c320 = arith.constant 320 : index
    %c0_25 = arith.constant 0 : index
    %44 = vector.load %arg17[%c320, %c0_25] : memref<432x256xbf16, #tpu.memory_space<vmem>>, vector<16x256xbf16>
    tpu.vector_store %arg17[%c320, %c0_25], %43 {strides = array<i32>} : memref<432x256xbf16, #tpu.memory_space<vmem>>, vector<16x256xbf16>,
    %45 = vector.extract_strided_slice %1 {offsets = [0, 78], sizes = [16, 256], strides = [1, 1]} : vector<16x384xbf16> to vector<16x256xbf16>
    %c336 = arith.constant 336 : index
    %c0_26 = arith.constant 0 : index
    %46 = vector.load %arg17[%c336, %c0_26] : memref<432x256xbf16, #tpu.memory_space<vmem>>, vector<16x256xbf16>
    tpu.vector_store %arg17[%c336, %c0_26], %45 {strides = array<i32>} : memref<432x256xbf16, #tpu.memory_space<vmem>>, vector<16x256xbf16>,
    %47 = vector.extract_strided_slice %1 {offsets = [0, 79], sizes = [16, 256], strides = [1, 1]} : vector<16x384xbf16> to vector<16x256xbf16>
    %c352 = arith.constant 352 : index
    %c0_27 = arith.constant 0 : index
    %48 = vector.load %arg17[%c352, %c0_27] : memref<432x256xbf16, #tpu.memory_space<vmem>>, vector<16x256xbf16>
    tpu.vector_store %arg17[%c352, %c0_27], %47 {strides = array<i32>} : memref<432x256xbf16, #tpu.memory_space<vmem>>, vector<16x256xbf16>,
    %49 = vector.extract_strided_slice %1 {offsets = [0, 80], sizes = [16, 256], strides = [1, 1]} : vector<16x384xbf16> to vector<16x256xbf16>
    %c368 = arith.constant 368 : index
    %c0_28 = arith.constant 0 : index
    %50 = vector.load %arg17[%c368, %c0_28] : memref<432x256xbf16, #tpu.memory_space<vmem>>, vector<16x256xbf16>
    tpu.vector_store %arg17[%c368, %c0_28], %49 {strides = array<i32>} : memref<432x256xbf16, #tpu.memory_space<vmem>>, vector<16x256xbf16>,
    %51 = vector.extract_strided_slice %1 {offsets = [0, 84], sizes = [16, 256], strides = [1, 1]} : vector<16x384xbf16> to vector<16x256xbf16>
    %c384 = arith.constant 384 : index
    %c0_29 = arith.constant 0 : index
    %52 = vector.load %arg17[%c384, %c0_29] : memref<432x256xbf16, #tpu.memory_space<vmem>>, vector<16x256xbf16>
    tpu.vector_store %arg17[%c384, %c0_29], %51 {strides = array<i32>} : memref<432x256xbf16, #tpu.memory_space<vmem>>, vector<16x256xbf16>,
    %53 = vector.extract_strided_slice %1 {offsets = [0, 85], sizes = [16, 256], strides = [1, 1]} : vector<16x384xbf16> to vector<16x256xbf16>
    %c400 = arith.constant 400 : index
    %c0_30 = arith.constant 0 : index
    %54 = vector.load %arg17[%c400, %c0_30] : memref<432x256xbf16, #tpu.memory_space<vmem>>, vector<16x256xbf16>
    tpu.vector_store %arg17[%c400, %c0_30], %53 {strides = array<i32>} : memref<432x256xbf16, #tpu.memory_space<vmem>>, vector<16x256xbf16>,
    %55 = vector.extract_strided_slice %1 {offsets = [0, 86], sizes = [16, 256], strides = [1, 1]} : vector<16x384xbf16> to vector<16x256xbf16>
    %c416 = arith.constant 416 : index
    %c0_31 = arith.constant 0 : index
    %56 = vector.load %arg17[%c416, %c0_31] : memref<432x256xbf16, #tpu.memory_space<vmem>>, vector<16x256xbf16>
    tpu.vector_store %arg17[%c416, %c0_31], %55 {strides = array<i32>} : memref<432x256xbf16, #tpu.memory_space<vmem>>, vector<16x256xbf16>,
    %c0_32 = arith.constant 0 : index
    %c0_33 = arith.constant 0 : index
    %57 = vector.load %arg3[%c0_32, %c0_33] : memref<16x432xbf16, #tpu.memory_space<vmem>>, vector<16x432xbf16>
    %c0_34 = arith.constant 0 : index
    %c0_35 = arith.constant 0 : index
    %58 = vector.load %arg17[%c0_34, %c0_35] : memref<432x256xbf16, #tpu.memory_space<vmem>>, vector<432x256xbf16>
    %cst = arith.constant dense<0.000000e+00> : vector<16x256xf32>
    %59 = tpu.matmul %57, %58, %cst {dimension_numbers = #tpu.dot_dimension_numbers<[1], [0], [0], [1], [0, 0, 1, 1], [], []>} : vector<16x432xbf16>, vector<432x256xbf16>, vector<16x256xf32> -> vector<16x256xf32>
    %c0_36 = arith.constant 0 : index
    %c0_37 = arith.constant 0 : index
    %60 = vector.load %arg4[%c0_36, %c0_37] : memref<16x1xf32, #tpu.memory_space<vmem>>, vector<16x1xf32>
    %61 = vector.broadcast %60 : vector<16x1xf32> to vector<16x256xf32>
    %62 = arith.addf %59, %61 : vector<16x256xf32>
    %63 = vector.broadcast %2 : vector<1x256xf32> to vector<16x256xf32>
    %64 = arith.mulf %62, %63 : vector<16x256xf32>
    %cst_38 = arith.constant dense<0.000000e+00> : vector<16xf32>
    %65 = vector.multi_reduction <add>, %64, %cst_38 [1] : vector<16x256xf32> to vector<16xf32>
    %66 = vector.shape_cast %65 : vector<16xf32> to vector<16x1xf32>
    %cst_39 = arith.constant 1.562500e-02 : f32
    %67 = vector.broadcast %cst_39 : f32 to vector<16x1xf32>
    %68 = arith.mulf %66, %67 : vector<16x1xf32>
    %69 = vector.broadcast %68 : vector<16x1xf32> to vector<16x256xf32>
    %70 = arith.subf %62, %69 : vector<16x256xf32>
    %71 = vector.broadcast %2 : vector<1x256xf32> to vector<16x256xf32>
    %72 = arith.mulf %70, %71 : vector<16x256xf32>
    %73 = arith.mulf %72, %72 : vector<16x256xf32>
    %cst_40 = arith.constant dense<0.000000e+00> : vector<16xf32>
    %74 = vector.multi_reduction <add>, %73, %cst_40 [1] : vector<16x256xf32> to vector<16xf32>
    %75 = vector.shape_cast %74 : vector<16xf32> to vector<16x1xf32>
    %cst_41 = arith.constant 1.562500e-02 : f32
    %76 = vector.broadcast %cst_41 : f32 to vector<16x1xf32>
    %77 = arith.mulf %75, %76 : vector<16x1xf32>
    %cst_42 = arith.constant 0.000000e+00 : f32
    %78 = vector.broadcast %cst_42 : f32 to vector<16x1xf32>
    %79 = arith.maximumf %77, %78 : vector<16x1xf32>
    %80 = vector.broadcast %68 : vector<16x1xf32> to vector<16x256xf32>
    %81 = arith.subf %62, %80 : vector<16x256xf32>
    %cst_43 = arith.constant 9.99999974E-6 : f32
    %82 = vector.broadcast %cst_43 : f32 to vector<16x1xf32>
    %83 = arith.addf %79, %82 : vector<16x1xf32>
    %84 = math.rsqrt %83 : vector<16x1xf32>
    %85 = vector.broadcast %84 : vector<16x1xf32> to vector<16x256xf32>
    %86 = arith.mulf %81, %85 : vector<16x256xf32>
    %cst_44 = arith.constant 0.000000e+00 : f32
    %87 = vector.broadcast %cst_44 : f32 to vector<16x256xf32>
    %88 = arith.cmpf oge, %86, %87 : vector<16x256xf32>
    %cst_45 = arith.constant 0.00999999977 : f32
    %89 = vector.broadcast %cst_45 : f32 to vector<16x256xf32>
    %90 = arith.mulf %89, %86 : vector<16x256xf32>
    %91 = arith.select %88, %86, %90 : vector<16x256xi1>, vector<16x256xf32>
    %92 = vector.broadcast %2 : vector<1x256xf32> to vector<16x256xf32>
    %93 = arith.mulf %91, %92 : vector<16x256xf32>
    %cst_46 = arith.constant dense<0.000000e+00> : vector<16xf32>
    %94 = vector.multi_reduction <add>, %93, %cst_46 [1] : vector<16x256xf32> to vector<16xf32>
    %95 = vector.shape_cast %94 : vector<16xf32> to vector<16x1xf32>
    %cst_47 = arith.constant 1.562500e-02 : f32
    %96 = vector.broadcast %cst_47 : f32 to vector<16x1xf32>
    %97 = arith.mulf %95, %96 : vector<16x1xf32>
    %c0_48 = arith.constant 0 : index
    %c0_49 = arith.constant 0 : index
    %98 = vector.load %arg5[%c0_48, %c0_49] : memref<1x16xf32, #tpu.memory_space<vmem>>, vector<1x16xf32>
    %99 = tpu.transpose %97, [1, 0] : vector<16x1xf32> -> vector<1x16xf32>
    %100 = arith.mulf %98, %99 : vector<1x16xf32>
    %cst_50 = arith.constant dense<0.000000e+00> : vector<1xf32>
    %101 = vector.multi_reduction <add>, %100, %cst_50 [1] : vector<1x16xf32> to vector<1xf32>
    %102 = vector.shape_cast %101 : vector<1xf32> to vector<1x1xf32>
    %c0_51 = arith.constant 0 : index
    %c0_52 = arith.constant 0 : index
    %103 = vector.load %arg6[%c0_51, %c0_52] : memref<1x1xf32, #tpu.memory_space<vmem>>, vector<1x1xf32>
    %104 = arith.addf %102, %103 : vector<1x1xf32>
    %cst_53 = arith.constant 0.000000e+00 : f32
    %105 = vector.broadcast %cst_53 : f32 to vector<1x1xf32>
    %106 = arith.maximumf %104, %105 : vector<1x1xf32>
    %c0_54 = arith.constant 0 : index
    %c0_55 = arith.constant 0 : index
    %107 = vector.load %arg7[%c0_54, %c0_55] : memref<16x1xf32, #tpu.memory_space<vmem>>, vector<16x1xf32>
    %108 = tpu.transpose %106, [1, 0] : vector<1x1xf32> -> vector<1x1xf32>
    %109 = vector.broadcast %108 : vector<1x1xf32> to vector<16x1xf32>
    %110 = arith.mulf %107, %109 : vector<16x1xf32>
    %cst_56 = arith.constant dense<0.000000e+00> : vector<16xf32>
    %111 = vector.multi_reduction <add>, %110, %cst_56 [1] : vector<16x1xf32> to vector<16xf32>
    %112 = vector.shape_cast %111 : vector<16xf32> to vector<16x1xf32>
    %c0_57 = arith.constant 0 : index
    %c0_58 = arith.constant 0 : index
    %113 = vector.load %arg8[%c0_57, %c0_58] : memref<16x1xf32, #tpu.memory_space<vmem>>, vector<16x1xf32>
    %114 = arith.addf %112, %113 : vector<16x1xf32>
    %115 = arith.negf %114 : vector<16x1xf32>
    %116 = math.exp %115 : vector<16x1xf32>
    %cst_59 = arith.constant 1.000000e+00 : f32
    %117 = vector.broadcast %cst_59 : f32 to vector<16x1xf32>
    %118 = arith.addf %117, %116 : vector<16x1xf32>
    %119 = arith.divf %117, %118 : vector<16x1xf32>
    %120 = vector.broadcast %119 : vector<16x1xf32> to vector<16x256xf32>
    %121 = arith.mulf %91, %120 : vector<16x256xf32>
    %c0_60 = arith.constant 0 : index
    %c0_61 = arith.constant 0 : index
    %122 = vector.load %arg13[%c0_60, %c0_61] : memref<16x16xbf16, #tpu.memory_space<vmem>>, vector<16x16xbf16>
    %123 = arith.truncf %121 : vector<16x256xf32> to vector<16x256xbf16>
    %cst_62 = arith.constant dense<0.000000e+00> : vector<16x256xf32>
    %124 = tpu.matmul %122, %123, %cst_62 {dimension_numbers = #tpu.dot_dimension_numbers<[1], [0], [0], [1], [0, 0, 1, 1], [], []>} : vector<16x16xbf16>, vector<16x256xbf16>, vector<16x256xf32> -> vector<16x256xf32>
    %c0_63 = arith.constant 0 : index
    %c0_64 = arith.constant 0 : index
    %125 = vector.load %arg14[%c0_63, %c0_64] : memref<16x1xf32, #tpu.memory_space<vmem>>, vector<16x1xf32>
    %126 = vector.broadcast %125 : vector<16x1xf32> to vector<16x256xf32>
    %127 = arith.addf %124, %126 : vector<16x256xf32>
    %128 = vector.broadcast %2 : vector<1x256xf32> to vector<16x256xf32>
    %129 = arith.mulf %127, %128 : vector<16x256xf32>
    %130 = arith.truncf %129 : vector<16x256xf32> to vector<16x256xbf16>
    %c0_65 = arith.constant 0 : index
    %c0_66 = arith.constant 0 : index
    %c0_67 = arith.constant 0 : index
    %131 = vector.load %arg15[%c0_65, %c0_66, %c0_67] : memref<1x16x256xbf16, #tpu.memory_space<vmem>>, vector<1x16x256xbf16>
    %132 = vector.shape_cast %131 : vector<1x16x256xbf16> to vector<16x256xbf16>
    %133 = vector.shape_cast %130 : vector<16x256xbf16> to vector<1x16x256xbf16>
    tpu.vector_store %arg15[%c0_65, %c0_66, %c0_67], %133 {strides = array<i32>} : memref<1x16x256xbf16, #tpu.memory_space<vmem>>, vector<1x16x256xbf16>,
    %134 = arith.mulf %119, %97 : vector<16x1xf32>
    %c0_68 = arith.constant 0 : index
    %c0_69 = arith.constant 0 : index
    %135 = vector.load %arg9[%c0_68, %c0_69] : memref<2x16xf32, #tpu.memory_space<vmem>>, vector<2x16xf32>
    %136 = tpu.transpose %134, [1, 0] : vector<16x1xf32> -> vector<1x16xf32>
    %137 = vector.broadcast %136 : vector<1x16xf32> to vector<2x16xf32>
    %138 = arith.mulf %135, %137 : vector<2x16xf32>
    %cst_70 = arith.constant dense<0.000000e+00> : vector<2xf32>
    %139 = vector.multi_reduction <add>, %138, %cst_70 [1] : vector<2x16xf32> to vector<2xf32>
    %140 = vector.shape_cast %139 : vector<2xf32> to vector<2x1xf32>
    %c0_71 = arith.constant 0 : index
    %c0_72 = arith.constant 0 : index
    %141 = vector.load %arg10[%c0_71, %c0_72] : memref<2x1xf32, #tpu.memory_space<vmem>>, vector<2x1xf32>
    %142 = arith.addf %140, %141 : vector<2x1xf32>
    %cst_73 = arith.constant 0.000000e+00 : f32
    %143 = vector.broadcast %cst_73 : f32 to vector<2x1xf32>
    %144 = arith.cmpf oge, %142, %143 : vector<2x1xf32>
    %cst_74 = arith.constant 0.00999999977 : f32
    %145 = vector.broadcast %cst_74 : f32 to vector<2x1xf32>
    %146 = arith.mulf %145, %142 : vector<2x1xf32>
    %147 = arith.select %144, %142, %146 : vector<2x1xi1>, vector<2x1xf32>
    %c0_75 = arith.constant 0 : index
    %c0_76 = arith.constant 0 : index
    %148 = vector.load %arg11[%c0_75, %c0_76] : memref<1x2xf32, #tpu.memory_space<vmem>>, vector<1x2xf32>
    %149 = tpu.transpose %147, [1, 0] : vector<2x1xf32> -> vector<1x2xf32>
    %150 = arith.mulf %148, %149 : vector<1x2xf32>
    %cst_77 = arith.constant dense<0.000000e+00> : vector<1xf32>
    %151 = vector.multi_reduction <add>, %150, %cst_77 [1] : vector<1x2xf32> to vector<1xf32>
    %152 = vector.shape_cast %151 : vector<1xf32> to vector<1x1xf32>
    %c0_78 = arith.constant 0 : index
    %c0_79 = arith.constant 0 : index
    %153 = vector.load %arg12[%c0_78, %c0_79] : memref<1x1xf32, #tpu.memory_space<vmem>>, vector<1x1xf32>
    %154 = arith.addf %152, %153 : vector<1x1xf32>
    %c0_80 = arith.constant 0 : index
    %c0_81 = arith.constant 0 : index
    %c0_82 = arith.constant 0 : index
    %155 = vector.load %arg16[%c0_80, %c0_81, %c0_82] : memref<1x1x1xf32, #tpu.memory_space<vmem>>, vector<1x1x1xf32>
    %156 = vector.shape_cast %155 : vector<1x1x1xf32> to vector<1x1xf32>
    %157 = vector.shape_cast %154 : vector<1x1xf32> to vector<1x1x1xf32>
    tpu.vector_store %arg16[%c0_80, %c0_81, %c0_82], %157 {strides = array<i32>} : memref<1x1x1xf32, #tpu.memory_space<vmem>>, vector<1x1x1xf32>,
    return
  }
  func.func @transform_0(%arg0: i32) -> (i32, i32, i32) {
    %c0_i32 = arith.constant 0 : i32
    %c0_i32_0 = arith.constant 0 : i32
    %c0_i32_1 = arith.constant 0 : i32
    return %arg0, %c0_i32, %c0_i32_0 : i32, i32, i32
  }
  func.func @transform_1(%arg0: i32) -> (i32, i32) {
    %c0_i32 = arith.constant 0 : i32
    %c0_i32_0 = arith.constant 0 : i32
    %c0_i32_1 = arith.constant 0 : i32
    return %c0_i32, %c0_i32_0 : i32, i32
  }
  func.func @transform_2(%arg0: i32) -> (i32, i32) {
    %c0_i32 = arith.constant 0 : i32
    %c0_i32_0 = arith.constant 0 : i32
    %c0_i32_1 = arith.constant 0 : i32
    return %c0_i32, %c0_i32_0 : i32, i32
  }
  func.func @transform_3(%arg0: i32) -> (i32, i32) {
    %c0_i32 = arith.constant 0 : i32
    %c0_i32_0 = arith.constant 0 : i32
    %c0_i32_1 = arith.constant 0 : i32
    return %c0_i32, %c0_i32_0 : i32, i32
  }
  func.func @transform_4(%arg0: i32) -> (i32, i32) {
    %c0_i32 = arith.constant 0 : i32
    %c0_i32_0 = arith.constant 0 : i32
    %c0_i32_1 = arith.constant 0 : i32
    return %c0_i32, %c0_i32_0 : i32, i32
  }
  func.func @transform_5(%arg0: i32) -> (i32, i32) {
    %c0_i32 = arith.constant 0 : i32
    %c0_i32_0 = arith.constant 0 : i32
    %c0_i32_1 = arith.constant 0 : i32
    return %c0_i32, %c0_i32_0 : i32, i32
  }
  func.func @transform_6(%arg0: i32) -> (i32, i32) {
    %c0_i32 = arith.constant 0 : i32
    %c0_i32_0 = arith.constant 0 : i32
    %c0_i32_1 = arith.constant 0 : i32
    return %c0_i32, %c0_i32_0 : i32, i32
  }
  func.func @transform_7(%arg0: i32) -> (i32, i32) {
    %c0_i32 = arith.constant 0 : i32
    %c0_i32_0 = arith.constant 0 : i32
    %c0_i32_1 = arith.constant 0 : i32
    return %c0_i32, %c0_i32_0 : i32, i32
  }
  func.func @transform_8(%arg0: i32) -> (i32, i32) {
    %c0_i32 = arith.constant 0 : i32
    %c0_i32_0 = arith.constant 0 : i32
    %c0_i32_1 = arith.constant 0 : i32
    return %c0_i32, %c0_i32_0 : i32, i32
  }
  func.func @transform_9(%arg0: i32) -> (i32, i32) {
    %c0_i32 = arith.constant 0 : i32
    %c0_i32_0 = arith.constant 0 : i32
    %c0_i32_1 = arith.constant 0 : i32
    return %c0_i32, %c0_i32_0 : i32, i32
  }
  func.func @transform_10(%arg0: i32) -> (i32, i32) {
    %c0_i32 = arith.constant 0 : i32
    %c0_i32_0 = arith.constant 0 : i32
    %c0_i32_1 = arith.constant 0 : i32
    return %c0_i32, %c0_i32_0 : i32, i32
  }
  func.func @transform_11(%arg0: i32) -> (i32, i32) {
    %c0_i32 = arith.constant 0 : i32
    %c0_i32_0 = arith.constant 0 : i32
    %c0_i32_1 = arith.constant 0 : i32
    return %c0_i32, %c0_i32_0 : i32, i32
  }
  func.func @transform_12(%arg0: i32) -> (i32, i32) {
    %c0_i32 = arith.constant 0 : i32
    %c0_i32_0 = arith.constant 0 : i32
    %c0_i32_1 = arith.constant 0 : i32
    return %c0_i32, %c0_i32_0 : i32, i32
  }
  func.func @transform_13(%arg0: i32) -> (i32, i32) {
    %c0_i32 = arith.constant 0 : i32
    %c0_i32_0 = arith.constant 0 : i32
    %c0_i32_1 = arith.constant 0 : i32
    return %c0_i32, %c0_i32_0 : i32, i32
  }
  func.func @transform_14(%arg0: i32) -> (i32, i32, i32) {
    %c0_i32 = arith.constant 0 : i32
    %c0_i32_0 = arith.constant 0 : i32
    %c0_i32_1 = arith.constant 0 : i32
    return %arg0, %c0_i32, %c0_i32_0 : i32, i32, i32
  }
  func.func @transform_15(%arg0: i32) -> (i32, i32, i32) {
    %c0_i32 = arith.constant 0 : i32
    %c0_i32_0 = arith.constant 0 : i32
    %c0_i32_1 = arith.constant 0 : i32
    return %arg0, %c0_i32, %c0_i32_0 : i32, i32, i32
  }
}

module attributes {stable_mosaic.version = 11 : i64} {
  func.func @_enhance_project_kernel(%arg0: i32, %arg1: memref<1x8x1280xbf16, #tpu.memory_space<vmem>>, %arg2: memref<1x1024xf32, #tpu.memory_space<vmem>>, %arg3: memref<8x216xbf16, #tpu.memory_space<vmem>>, %arg4: memref<8x1xf32, #tpu.memory_space<vmem>>, %arg5: memref<1x8xf32, #tpu.memory_space<vmem>>, %arg6: memref<1x1xf32, #tpu.memory_space<vmem>>, %arg7: memref<8x1xf32, #tpu.memory_space<vmem>>, %arg8: memref<8x1xf32, #tpu.memory_space<vmem>>, %arg9: memref<1x8xf32, #tpu.memory_space<vmem>>, %arg10: memref<1x1xf32, #tpu.memory_space<vmem>>, %arg11: memref<1x1xf32, #tpu.memory_space<vmem>>, %arg12: memref<1x1xf32, #tpu.memory_space<vmem>>, %arg13: memref<16x8xbf16, #tpu.memory_space<vmem>>, %arg14: memref<16x1xf32, #tpu.memory_space<vmem>>, %arg15: memref<1x16x1024xbf16, #tpu.memory_space<vmem>>, %arg16: memref<1x1x1xf32, #tpu.memory_space<vmem>>, %arg17: memref<216x1024xbf16, #tpu.memory_space<vmem>>) attributes {dimension_semantics = [#tpu.dimension_semantics<parallel>], iteration_bounds = array<i64: 2>, scalar_prefetch = 0 : i64, scratch_operands = 1 : i64, tpu.core_type = #tpu.core_type<tc>, window_params = [{transform_indices = @transform_0, window_bounds = array<i64: 1, 8, 1280>}, {pipeline_mode = #tpu.pipeline_mode<synchronous>, transform_indices = @transform_1, window_bounds = array<i64: 1, 1024>}, {pipeline_mode = #tpu.pipeline_mode<synchronous>, transform_indices = @transform_2, window_bounds = array<i64: 8, 216>}, {pipeline_mode = #tpu.pipeline_mode<synchronous>, transform_indices = @transform_3, window_bounds = array<i64: 8, 1>}, {pipeline_mode = #tpu.pipeline_mode<synchronous>, transform_indices = @transform_4, window_bounds = array<i64: 1, 8>}, {pipeline_mode = #tpu.pipeline_mode<synchronous>, transform_indices = @transform_5, window_bounds = array<i64: 1, 1>}, {pipeline_mode = #tpu.pipeline_mode<synchronous>, transform_indices = @transform_6, window_bounds = array<i64: 8, 1>}, {pipeline_mode = #tpu.pipeline_mode<synchronous>, transform_indices = @transform_7, window_bounds = array<i64: 8, 1>}, {pipeline_mode = #tpu.pipeline_mode<synchronous>, transform_indices = @transform_8, window_bounds = array<i64: 1, 8>}, {pipeline_mode = #tpu.pipeline_mode<synchronous>, transform_indices = @transform_9, window_bounds = array<i64: 1, 1>}, {pipeline_mode = #tpu.pipeline_mode<synchronous>, transform_indices = @transform_10, window_bounds = array<i64: 1, 1>}, {pipeline_mode = #tpu.pipeline_mode<synchronous>, transform_indices = @transform_11, window_bounds = array<i64: 1, 1>}, {pipeline_mode = #tpu.pipeline_mode<synchronous>, transform_indices = @transform_12, window_bounds = array<i64: 16, 8>}, {pipeline_mode = #tpu.pipeline_mode<synchronous>, transform_indices = @transform_13, window_bounds = array<i64: 16, 1>}, {transform_indices = @transform_14, window_bounds = array<i64: 1, 16, 1024>}, {transform_indices = @transform_15, window_bounds = array<i64: 1, 1, 1>}]} {
    %c0 = arith.constant 0 : index
    %c0_0 = arith.constant 0 : index
    %c0_1 = arith.constant 0 : index
    %0 = vector.load %arg1[%c0, %c0_0, %c0_1] : memref<1x8x1280xbf16, #tpu.memory_space<vmem>>, vector<1x8x1280xbf16>
    %1 = vector.shape_cast %0 : vector<1x8x1280xbf16> to vector<8x1280xbf16>
    %c0_2 = arith.constant 0 : index
    %c0_3 = arith.constant 0 : index
    %2 = vector.load %arg2[%c0_2, %c0_3] : memref<1x1024xf32, #tpu.memory_space<vmem>>, vector<1x1024xf32>
    %3 = vector.extract_strided_slice %1 {offsets = [0, 0], sizes = [8, 1024], strides = [1, 1]} : vector<8x1280xbf16> to vector<8x1024xbf16>
    %c0_4 = arith.constant 0 : index
    %c0_5 = arith.constant 0 : index
    %4 = vector.load %arg17[%c0_4, %c0_5] : memref<216x1024xbf16, #tpu.memory_space<vmem>>, vector<8x1024xbf16>
    tpu.vector_store %arg17[%c0_4, %c0_5], %3 {strides = array<i32>} : memref<216x1024xbf16, #tpu.memory_space<vmem>>, vector<8x1024xbf16>,
    %5 = vector.extract_strided_slice %1 {offsets = [0, 1], sizes = [8, 1024], strides = [1, 1]} : vector<8x1280xbf16> to vector<8x1024xbf16>
    %c8 = arith.constant 8 : index
    %c0_6 = arith.constant 0 : index
    %6 = vector.load %arg17[%c8, %c0_6] : memref<216x1024xbf16, #tpu.memory_space<vmem>>, vector<8x1024xbf16>
    tpu.vector_store %arg17[%c8, %c0_6], %5 {strides = array<i32>} : memref<216x1024xbf16, #tpu.memory_space<vmem>>, vector<8x1024xbf16>,
    %7 = vector.extract_strided_slice %1 {offsets = [0, 2], sizes = [8, 1024], strides = [1, 1]} : vector<8x1280xbf16> to vector<8x1024xbf16>
    %c16 = arith.constant 16 : index
    %c0_7 = arith.constant 0 : index
    %8 = vector.load %arg17[%c16, %c0_7] : memref<216x1024xbf16, #tpu.memory_space<vmem>>, vector<8x1024xbf16>
    tpu.vector_store %arg17[%c16, %c0_7], %7 {strides = array<i32>} : memref<216x1024xbf16, #tpu.memory_space<vmem>>, vector<8x1024xbf16>,
    %9 = vector.extract_strided_slice %1 {offsets = [0, 10], sizes = [8, 1024], strides = [1, 1]} : vector<8x1280xbf16> to vector<8x1024xbf16>
    %c24 = arith.constant 24 : index
    %c0_8 = arith.constant 0 : index
    %10 = vector.load %arg17[%c24, %c0_8] : memref<216x1024xbf16, #tpu.memory_space<vmem>>, vector<8x1024xbf16>
    tpu.vector_store %arg17[%c24, %c0_8], %9 {strides = array<i32>} : memref<216x1024xbf16, #tpu.memory_space<vmem>>, vector<8x1024xbf16>,
    %11 = vector.extract_strided_slice %1 {offsets = [0, 11], sizes = [8, 1024], strides = [1, 1]} : vector<8x1280xbf16> to vector<8x1024xbf16>
    %c32 = arith.constant 32 : index
    %c0_9 = arith.constant 0 : index
    %12 = vector.load %arg17[%c32, %c0_9] : memref<216x1024xbf16, #tpu.memory_space<vmem>>, vector<8x1024xbf16>
    tpu.vector_store %arg17[%c32, %c0_9], %11 {strides = array<i32>} : memref<216x1024xbf16, #tpu.memory_space<vmem>>, vector<8x1024xbf16>,
    %13 = vector.extract_strided_slice %1 {offsets = [0, 12], sizes = [8, 1024], strides = [1, 1]} : vector<8x1280xbf16> to vector<8x1024xbf16>
    %c40 = arith.constant 40 : index
    %c0_10 = arith.constant 0 : index
    %14 = vector.load %arg17[%c40, %c0_10] : memref<216x1024xbf16, #tpu.memory_space<vmem>>, vector<8x1024xbf16>
    tpu.vector_store %arg17[%c40, %c0_10], %13 {strides = array<i32>} : memref<216x1024xbf16, #tpu.memory_space<vmem>>, vector<8x1024xbf16>,
    %15 = vector.extract_strided_slice %1 {offsets = [0, 20], sizes = [8, 1024], strides = [1, 1]} : vector<8x1280xbf16> to vector<8x1024xbf16>
    %c48 = arith.constant 48 : index
    %c0_11 = arith.constant 0 : index
    %16 = vector.load %arg17[%c48, %c0_11] : memref<216x1024xbf16, #tpu.memory_space<vmem>>, vector<8x1024xbf16>
    tpu.vector_store %arg17[%c48, %c0_11], %15 {strides = array<i32>} : memref<216x1024xbf16, #tpu.memory_space<vmem>>, vector<8x1024xbf16>,
    %17 = vector.extract_strided_slice %1 {offsets = [0, 21], sizes = [8, 1024], strides = [1, 1]} : vector<8x1280xbf16> to vector<8x1024xbf16>
    %c56 = arith.constant 56 : index
    %c0_12 = arith.constant 0 : index
    %18 = vector.load %arg17[%c56, %c0_12] : memref<216x1024xbf16, #tpu.memory_space<vmem>>, vector<8x1024xbf16>
    tpu.vector_store %arg17[%c56, %c0_12], %17 {strides = array<i32>} : memref<216x1024xbf16, #tpu.memory_space<vmem>>, vector<8x1024xbf16>,
    %19 = vector.extract_strided_slice %1 {offsets = [0, 22], sizes = [8, 1024], strides = [1, 1]} : vector<8x1280xbf16> to vector<8x1024xbf16>
    %c64 = arith.constant 64 : index
    %c0_13 = arith.constant 0 : index
    %20 = vector.load %arg17[%c64, %c0_13] : memref<216x1024xbf16, #tpu.memory_space<vmem>>, vector<8x1024xbf16>
    tpu.vector_store %arg17[%c64, %c0_13], %19 {strides = array<i32>} : memref<216x1024xbf16, #tpu.memory_space<vmem>>, vector<8x1024xbf16>,
    %21 = vector.extract_strided_slice %1 {offsets = [0, 100], sizes = [8, 1024], strides = [1, 1]} : vector<8x1280xbf16> to vector<8x1024xbf16>
    %c72 = arith.constant 72 : index
    %c0_14 = arith.constant 0 : index
    %22 = vector.load %arg17[%c72, %c0_14] : memref<216x1024xbf16, #tpu.memory_space<vmem>>, vector<8x1024xbf16>
    tpu.vector_store %arg17[%c72, %c0_14], %21 {strides = array<i32>} : memref<216x1024xbf16, #tpu.memory_space<vmem>>, vector<8x1024xbf16>,
    %23 = vector.extract_strided_slice %1 {offsets = [0, 101], sizes = [8, 1024], strides = [1, 1]} : vector<8x1280xbf16> to vector<8x1024xbf16>
    %c80 = arith.constant 80 : index
    %c0_15 = arith.constant 0 : index
    %24 = vector.load %arg17[%c80, %c0_15] : memref<216x1024xbf16, #tpu.memory_space<vmem>>, vector<8x1024xbf16>
    tpu.vector_store %arg17[%c80, %c0_15], %23 {strides = array<i32>} : memref<216x1024xbf16, #tpu.memory_space<vmem>>, vector<8x1024xbf16>,
    %25 = vector.extract_strided_slice %1 {offsets = [0, 102], sizes = [8, 1024], strides = [1, 1]} : vector<8x1280xbf16> to vector<8x1024xbf16>
    %c88 = arith.constant 88 : index
    %c0_16 = arith.constant 0 : index
    %26 = vector.load %arg17[%c88, %c0_16] : memref<216x1024xbf16, #tpu.memory_space<vmem>>, vector<8x1024xbf16>
    tpu.vector_store %arg17[%c88, %c0_16], %25 {strides = array<i32>} : memref<216x1024xbf16, #tpu.memory_space<vmem>>, vector<8x1024xbf16>,
    %27 = vector.extract_strided_slice %1 {offsets = [0, 110], sizes = [8, 1024], strides = [1, 1]} : vector<8x1280xbf16> to vector<8x1024xbf16>
    %c96 = arith.constant 96 : index
    %c0_17 = arith.constant 0 : index
    %28 = vector.load %arg17[%c96, %c0_17] : memref<216x1024xbf16, #tpu.memory_space<vmem>>, vector<8x1024xbf16>
    tpu.vector_store %arg17[%c96, %c0_17], %27 {strides = array<i32>} : memref<216x1024xbf16, #tpu.memory_space<vmem>>, vector<8x1024xbf16>,
    %29 = vector.extract_strided_slice %1 {offsets = [0, 111], sizes = [8, 1024], strides = [1, 1]} : vector<8x1280xbf16> to vector<8x1024xbf16>
    %c104 = arith.constant 104 : index
    %c0_18 = arith.constant 0 : index
    %30 = vector.load %arg17[%c104, %c0_18] : memref<216x1024xbf16, #tpu.memory_space<vmem>>, vector<8x1024xbf16>
    tpu.vector_store %arg17[%c104, %c0_18], %29 {strides = array<i32>} : memref<216x1024xbf16, #tpu.memory_space<vmem>>, vector<8x1024xbf16>,
    %31 = vector.extract_strided_slice %1 {offsets = [0, 112], sizes = [8, 1024], strides = [1, 1]} : vector<8x1280xbf16> to vector<8x1024xbf16>
    %c112 = arith.constant 112 : index
    %c0_19 = arith.constant 0 : index
    %32 = vector.load %arg17[%c112, %c0_19] : memref<216x1024xbf16, #tpu.memory_space<vmem>>, vector<8x1024xbf16>
    tpu.vector_store %arg17[%c112, %c0_19], %31 {strides = array<i32>} : memref<216x1024xbf16, #tpu.memory_space<vmem>>, vector<8x1024xbf16>,
    %33 = vector.extract_strided_slice %1 {offsets = [0, 120], sizes = [8, 1024], strides = [1, 1]} : vector<8x1280xbf16> to vector<8x1024xbf16>
    %c120 = arith.constant 120 : index
    %c0_20 = arith.constant 0 : index
    %34 = vector.load %arg17[%c120, %c0_20] : memref<216x1024xbf16, #tpu.memory_space<vmem>>, vector<8x1024xbf16>
    tpu.vector_store %arg17[%c120, %c0_20], %33 {strides = array<i32>} : memref<216x1024xbf16, #tpu.memory_space<vmem>>, vector<8x1024xbf16>,
    %35 = vector.extract_strided_slice %1 {offsets = [0, 121], sizes = [8, 1024], strides = [1, 1]} : vector<8x1280xbf16> to vector<8x1024xbf16>
    %c128 = arith.constant 128 : index
    %c0_21 = arith.constant 0 : index
    %36 = vector.load %arg17[%c128, %c0_21] : memref<216x1024xbf16, #tpu.memory_space<vmem>>, vector<8x1024xbf16>
    tpu.vector_store %arg17[%c128, %c0_21], %35 {strides = array<i32>} : memref<216x1024xbf16, #tpu.memory_space<vmem>>, vector<8x1024xbf16>,
    %37 = vector.extract_strided_slice %1 {offsets = [0, 122], sizes = [8, 1024], strides = [1, 1]} : vector<8x1280xbf16> to vector<8x1024xbf16>
    %c136 = arith.constant 136 : index
    %c0_22 = arith.constant 0 : index
    %38 = vector.load %arg17[%c136, %c0_22] : memref<216x1024xbf16, #tpu.memory_space<vmem>>, vector<8x1024xbf16>
    tpu.vector_store %arg17[%c136, %c0_22], %37 {strides = array<i32>} : memref<216x1024xbf16, #tpu.memory_space<vmem>>, vector<8x1024xbf16>,
    %39 = vector.extract_strided_slice %1 {offsets = [0, 200], sizes = [8, 1024], strides = [1, 1]} : vector<8x1280xbf16> to vector<8x1024xbf16>
    %c144 = arith.constant 144 : index
    %c0_23 = arith.constant 0 : index
    %40 = vector.load %arg17[%c144, %c0_23] : memref<216x1024xbf16, #tpu.memory_space<vmem>>, vector<8x1024xbf16>
    tpu.vector_store %arg17[%c144, %c0_23], %39 {strides = array<i32>} : memref<216x1024xbf16, #tpu.memory_space<vmem>>, vector<8x1024xbf16>,
    %41 = vector.extract_strided_slice %1 {offsets = [0, 201], sizes = [8, 1024], strides = [1, 1]} : vector<8x1280xbf16> to vector<8x1024xbf16>
    %c152 = arith.constant 152 : index
    %c0_24 = arith.constant 0 : index
    %42 = vector.load %arg17[%c152, %c0_24] : memref<216x1024xbf16, #tpu.memory_space<vmem>>, vector<8x1024xbf16>
    tpu.vector_store %arg17[%c152, %c0_24], %41 {strides = array<i32>} : memref<216x1024xbf16, #tpu.memory_space<vmem>>, vector<8x1024xbf16>,
    %43 = vector.extract_strided_slice %1 {offsets = [0, 202], sizes = [8, 1024], strides = [1, 1]} : vector<8x1280xbf16> to vector<8x1024xbf16>
    %c160 = arith.constant 160 : index
    %c0_25 = arith.constant 0 : index
    %44 = vector.load %arg17[%c160, %c0_25] : memref<216x1024xbf16, #tpu.memory_space<vmem>>, vector<8x1024xbf16>
    tpu.vector_store %arg17[%c160, %c0_25], %43 {strides = array<i32>} : memref<216x1024xbf16, #tpu.memory_space<vmem>>, vector<8x1024xbf16>,
    %45 = vector.extract_strided_slice %1 {offsets = [0, 210], sizes = [8, 1024], strides = [1, 1]} : vector<8x1280xbf16> to vector<8x1024xbf16>
    %c168 = arith.constant 168 : index
    %c0_26 = arith.constant 0 : index
    %46 = vector.load %arg17[%c168, %c0_26] : memref<216x1024xbf16, #tpu.memory_space<vmem>>, vector<8x1024xbf16>
    tpu.vector_store %arg17[%c168, %c0_26], %45 {strides = array<i32>} : memref<216x1024xbf16, #tpu.memory_space<vmem>>, vector<8x1024xbf16>,
    %47 = vector.extract_strided_slice %1 {offsets = [0, 211], sizes = [8, 1024], strides = [1, 1]} : vector<8x1280xbf16> to vector<8x1024xbf16>
    %c176 = arith.constant 176 : index
    %c0_27 = arith.constant 0 : index
    %48 = vector.load %arg17[%c176, %c0_27] : memref<216x1024xbf16, #tpu.memory_space<vmem>>, vector<8x1024xbf16>
    tpu.vector_store %arg17[%c176, %c0_27], %47 {strides = array<i32>} : memref<216x1024xbf16, #tpu.memory_space<vmem>>, vector<8x1024xbf16>,
    %49 = vector.extract_strided_slice %1 {offsets = [0, 212], sizes = [8, 1024], strides = [1, 1]} : vector<8x1280xbf16> to vector<8x1024xbf16>
    %c184 = arith.constant 184 : index
    %c0_28 = arith.constant 0 : index
    %50 = vector.load %arg17[%c184, %c0_28] : memref<216x1024xbf16, #tpu.memory_space<vmem>>, vector<8x1024xbf16>
    tpu.vector_store %arg17[%c184, %c0_28], %49 {strides = array<i32>} : memref<216x1024xbf16, #tpu.memory_space<vmem>>, vector<8x1024xbf16>,
    %51 = vector.extract_strided_slice %1 {offsets = [0, 220], sizes = [8, 1024], strides = [1, 1]} : vector<8x1280xbf16> to vector<8x1024xbf16>
    %c192 = arith.constant 192 : index
    %c0_29 = arith.constant 0 : index
    %52 = vector.load %arg17[%c192, %c0_29] : memref<216x1024xbf16, #tpu.memory_space<vmem>>, vector<8x1024xbf16>
    tpu.vector_store %arg17[%c192, %c0_29], %51 {strides = array<i32>} : memref<216x1024xbf16, #tpu.memory_space<vmem>>, vector<8x1024xbf16>,
    %53 = vector.extract_strided_slice %1 {offsets = [0, 221], sizes = [8, 1024], strides = [1, 1]} : vector<8x1280xbf16> to vector<8x1024xbf16>
    %c200 = arith.constant 200 : index
    %c0_30 = arith.constant 0 : index
    %54 = vector.load %arg17[%c200, %c0_30] : memref<216x1024xbf16, #tpu.memory_space<vmem>>, vector<8x1024xbf16>
    tpu.vector_store %arg17[%c200, %c0_30], %53 {strides = array<i32>} : memref<216x1024xbf16, #tpu.memory_space<vmem>>, vector<8x1024xbf16>,
    %55 = vector.extract_strided_slice %1 {offsets = [0, 222], sizes = [8, 1024], strides = [1, 1]} : vector<8x1280xbf16> to vector<8x1024xbf16>
    %c208 = arith.constant 208 : index
    %c0_31 = arith.constant 0 : index
    %56 = vector.load %arg17[%c208, %c0_31] : memref<216x1024xbf16, #tpu.memory_space<vmem>>, vector<8x1024xbf16>
    tpu.vector_store %arg17[%c208, %c0_31], %55 {strides = array<i32>} : memref<216x1024xbf16, #tpu.memory_space<vmem>>, vector<8x1024xbf16>,
    %c0_32 = arith.constant 0 : index
    %c0_33 = arith.constant 0 : index
    %57 = vector.load %arg3[%c0_32, %c0_33] : memref<8x216xbf16, #tpu.memory_space<vmem>>, vector<8x216xbf16>
    %c0_34 = arith.constant 0 : index
    %c0_35 = arith.constant 0 : index
    %58 = vector.load %arg17[%c0_34, %c0_35] : memref<216x1024xbf16, #tpu.memory_space<vmem>>, vector<216x1024xbf16>
    %cst = arith.constant dense<0.000000e+00> : vector<8x1024xf32>
    %59 = tpu.matmul %57, %58, %cst {dimension_numbers = #tpu.dot_dimension_numbers<[1], [0], [0], [1], [0, 0, 1, 1], [], []>} : vector<8x216xbf16>, vector<216x1024xbf16>, vector<8x1024xf32> -> vector<8x1024xf32>
    %c0_36 = arith.constant 0 : index
    %c0_37 = arith.constant 0 : index
    %60 = vector.load %arg4[%c0_36, %c0_37] : memref<8x1xf32, #tpu.memory_space<vmem>>, vector<8x1xf32>
    %61 = vector.broadcast %60 : vector<8x1xf32> to vector<8x1024xf32>
    %62 = arith.addf %59, %61 : vector<8x1024xf32>
    %63 = vector.broadcast %2 : vector<1x1024xf32> to vector<8x1024xf32>
    %64 = arith.mulf %62, %63 : vector<8x1024xf32>
    %cst_38 = arith.constant dense<0.000000e+00> : vector<8xf32>
    %65 = vector.multi_reduction <add>, %64, %cst_38 [1] : vector<8x1024xf32> to vector<8xf32>
    %66 = vector.shape_cast %65 : vector<8xf32> to vector<8x1xf32>
    %cst_39 = arith.constant 0.001953125 : f32
    %67 = vector.broadcast %cst_39 : f32 to vector<8x1xf32>
    %68 = arith.mulf %66, %67 : vector<8x1xf32>
    %69 = vector.broadcast %68 : vector<8x1xf32> to vector<8x1024xf32>
    %70 = arith.subf %62, %69 : vector<8x1024xf32>
    %71 = vector.broadcast %2 : vector<1x1024xf32> to vector<8x1024xf32>
    %72 = arith.mulf %70, %71 : vector<8x1024xf32>
    %73 = arith.mulf %72, %72 : vector<8x1024xf32>
    %cst_40 = arith.constant dense<0.000000e+00> : vector<8xf32>
    %74 = vector.multi_reduction <add>, %73, %cst_40 [1] : vector<8x1024xf32> to vector<8xf32>
    %75 = vector.shape_cast %74 : vector<8xf32> to vector<8x1xf32>
    %cst_41 = arith.constant 0.001953125 : f32
    %76 = vector.broadcast %cst_41 : f32 to vector<8x1xf32>
    %77 = arith.mulf %75, %76 : vector<8x1xf32>
    %cst_42 = arith.constant 0.000000e+00 : f32
    %78 = vector.broadcast %cst_42 : f32 to vector<8x1xf32>
    %79 = arith.maximumf %77, %78 : vector<8x1xf32>
    %80 = vector.broadcast %68 : vector<8x1xf32> to vector<8x1024xf32>
    %81 = arith.subf %62, %80 : vector<8x1024xf32>
    %cst_43 = arith.constant 9.99999974E-6 : f32
    %82 = vector.broadcast %cst_43 : f32 to vector<8x1xf32>
    %83 = arith.addf %79, %82 : vector<8x1xf32>
    %84 = math.rsqrt %83 : vector<8x1xf32>
    %85 = vector.broadcast %84 : vector<8x1xf32> to vector<8x1024xf32>
    %86 = arith.mulf %81, %85 : vector<8x1024xf32>
    %cst_44 = arith.constant 0.000000e+00 : f32
    %87 = vector.broadcast %cst_44 : f32 to vector<8x1024xf32>
    %88 = arith.cmpf oge, %86, %87 : vector<8x1024xf32>
    %cst_45 = arith.constant 0.00999999977 : f32
    %89 = vector.broadcast %cst_45 : f32 to vector<8x1024xf32>
    %90 = arith.mulf %89, %86 : vector<8x1024xf32>
    %91 = arith.select %88, %86, %90 : vector<8x1024xi1>, vector<8x1024xf32>
    %92 = vector.broadcast %2 : vector<1x1024xf32> to vector<8x1024xf32>
    %93 = arith.mulf %91, %92 : vector<8x1024xf32>
    %cst_46 = arith.constant dense<0.000000e+00> : vector<8xf32>
    %94 = vector.multi_reduction <add>, %93, %cst_46 [1] : vector<8x1024xf32> to vector<8xf32>
    %95 = vector.shape_cast %94 : vector<8xf32> to vector<8x1xf32>
    %cst_47 = arith.constant 0.001953125 : f32
    %96 = vector.broadcast %cst_47 : f32 to vector<8x1xf32>
    %97 = arith.mulf %95, %96 : vector<8x1xf32>
    %c0_48 = arith.constant 0 : index
    %c0_49 = arith.constant 0 : index
    %98 = vector.load %arg5[%c0_48, %c0_49] : memref<1x8xf32, #tpu.memory_space<vmem>>, vector<1x8xf32>
    %99 = tpu.transpose %97, [1, 0] : vector<8x1xf32> -> vector<1x8xf32>
    %100 = arith.mulf %98, %99 : vector<1x8xf32>
    %cst_50 = arith.constant dense<0.000000e+00> : vector<1xf32>
    %101 = vector.multi_reduction <add>, %100, %cst_50 [1] : vector<1x8xf32> to vector<1xf32>
    %102 = vector.shape_cast %101 : vector<1xf32> to vector<1x1xf32>
    %c0_51 = arith.constant 0 : index
    %c0_52 = arith.constant 0 : index
    %103 = vector.load %arg6[%c0_51, %c0_52] : memref<1x1xf32, #tpu.memory_space<vmem>>, vector<1x1xf32>
    %104 = arith.addf %102, %103 : vector<1x1xf32>
    %cst_53 = arith.constant 0.000000e+00 : f32
    %105 = vector.broadcast %cst_53 : f32 to vector<1x1xf32>
    %106 = arith.maximumf %104, %105 : vector<1x1xf32>
    %c0_54 = arith.constant 0 : index
    %c0_55 = arith.constant 0 : index
    %107 = vector.load %arg7[%c0_54, %c0_55] : memref<8x1xf32, #tpu.memory_space<vmem>>, vector<8x1xf32>
    %108 = tpu.transpose %106, [1, 0] : vector<1x1xf32> -> vector<1x1xf32>
    %109 = vector.broadcast %108 : vector<1x1xf32> to vector<8x1xf32>
    %110 = arith.mulf %107, %109 : vector<8x1xf32>
    %cst_56 = arith.constant dense<0.000000e+00> : vector<8xf32>
    %111 = vector.multi_reduction <add>, %110, %cst_56 [1] : vector<8x1xf32> to vector<8xf32>
    %112 = vector.shape_cast %111 : vector<8xf32> to vector<8x1xf32>
    %c0_57 = arith.constant 0 : index
    %c0_58 = arith.constant 0 : index
    %113 = vector.load %arg8[%c0_57, %c0_58] : memref<8x1xf32, #tpu.memory_space<vmem>>, vector<8x1xf32>
    %114 = arith.addf %112, %113 : vector<8x1xf32>
    %115 = arith.negf %114 : vector<8x1xf32>
    %116 = math.exp %115 : vector<8x1xf32>
    %cst_59 = arith.constant 1.000000e+00 : f32
    %117 = vector.broadcast %cst_59 : f32 to vector<8x1xf32>
    %118 = arith.addf %117, %116 : vector<8x1xf32>
    %119 = arith.divf %117, %118 : vector<8x1xf32>
    %120 = vector.broadcast %119 : vector<8x1xf32> to vector<8x1024xf32>
    %121 = arith.mulf %91, %120 : vector<8x1024xf32>
    %c0_60 = arith.constant 0 : index
    %c0_61 = arith.constant 0 : index
    %122 = vector.load %arg13[%c0_60, %c0_61] : memref<16x8xbf16, #tpu.memory_space<vmem>>, vector<16x8xbf16>
    %123 = arith.truncf %121 : vector<8x1024xf32> to vector<8x1024xbf16>
    %cst_62 = arith.constant dense<0.000000e+00> : vector<16x1024xf32>
    %124 = tpu.matmul %122, %123, %cst_62 {dimension_numbers = #tpu.dot_dimension_numbers<[1], [0], [0], [1], [0, 0, 1, 1], [], []>} : vector<16x8xbf16>, vector<8x1024xbf16>, vector<16x1024xf32> -> vector<16x1024xf32>
    %c0_63 = arith.constant 0 : index
    %c0_64 = arith.constant 0 : index
    %125 = vector.load %arg14[%c0_63, %c0_64] : memref<16x1xf32, #tpu.memory_space<vmem>>, vector<16x1xf32>
    %126 = vector.broadcast %125 : vector<16x1xf32> to vector<16x1024xf32>
    %127 = arith.addf %124, %126 : vector<16x1024xf32>
    %128 = vector.broadcast %2 : vector<1x1024xf32> to vector<16x1024xf32>
    %129 = arith.mulf %127, %128 : vector<16x1024xf32>
    %130 = arith.truncf %129 : vector<16x1024xf32> to vector<16x1024xbf16>
    %c0_65 = arith.constant 0 : index
    %c0_66 = arith.constant 0 : index
    %c0_67 = arith.constant 0 : index
    %131 = vector.load %arg15[%c0_65, %c0_66, %c0_67] : memref<1x16x1024xbf16, #tpu.memory_space<vmem>>, vector<1x16x1024xbf16>
    %132 = vector.shape_cast %131 : vector<1x16x1024xbf16> to vector<16x1024xbf16>
    %133 = vector.shape_cast %130 : vector<16x1024xbf16> to vector<1x16x1024xbf16>
    tpu.vector_store %arg15[%c0_65, %c0_66, %c0_67], %133 {strides = array<i32>} : memref<1x16x1024xbf16, #tpu.memory_space<vmem>>, vector<1x16x1024xbf16>,
    %134 = arith.mulf %119, %97 : vector<8x1xf32>
    %c0_68 = arith.constant 0 : index
    %c0_69 = arith.constant 0 : index
    %135 = vector.load %arg9[%c0_68, %c0_69] : memref<1x8xf32, #tpu.memory_space<vmem>>, vector<1x8xf32>
    %136 = tpu.transpose %134, [1, 0] : vector<8x1xf32> -> vector<1x8xf32>
    %137 = arith.mulf %135, %136 : vector<1x8xf32>
    %cst_70 = arith.constant dense<0.000000e+00> : vector<1xf32>
    %138 = vector.multi_reduction <add>, %137, %cst_70 [1] : vector<1x8xf32> to vector<1xf32>
    %139 = vector.shape_cast %138 : vector<1xf32> to vector<1x1xf32>
    %c0_71 = arith.constant 0 : index
    %c0_72 = arith.constant 0 : index
    %140 = vector.load %arg10[%c0_71, %c0_72] : memref<1x1xf32, #tpu.memory_space<vmem>>, vector<1x1xf32>
    %141 = arith.addf %139, %140 : vector<1x1xf32>
    %cst_73 = arith.constant 0.000000e+00 : f32
    %142 = vector.broadcast %cst_73 : f32 to vector<1x1xf32>
    %143 = arith.cmpf oge, %141, %142 : vector<1x1xf32>
    %cst_74 = arith.constant 0.00999999977 : f32
    %144 = vector.broadcast %cst_74 : f32 to vector<1x1xf32>
    %145 = arith.mulf %144, %141 : vector<1x1xf32>
    %146 = arith.select %143, %141, %145 : vector<1x1xi1>, vector<1x1xf32>
    %c0_75 = arith.constant 0 : index
    %c0_76 = arith.constant 0 : index
    %147 = vector.load %arg11[%c0_75, %c0_76] : memref<1x1xf32, #tpu.memory_space<vmem>>, vector<1x1xf32>
    %148 = tpu.transpose %146, [1, 0] : vector<1x1xf32> -> vector<1x1xf32>
    %149 = arith.mulf %147, %148 : vector<1x1xf32>
    %cst_77 = arith.constant dense<0.000000e+00> : vector<1xf32>
    %150 = vector.multi_reduction <add>, %149, %cst_77 [1] : vector<1x1xf32> to vector<1xf32>
    %151 = vector.shape_cast %150 : vector<1xf32> to vector<1x1xf32>
    %c0_78 = arith.constant 0 : index
    %c0_79 = arith.constant 0 : index
    %152 = vector.load %arg12[%c0_78, %c0_79] : memref<1x1xf32, #tpu.memory_space<vmem>>, vector<1x1xf32>
    %153 = arith.addf %151, %152 : vector<1x1xf32>
    %c0_80 = arith.constant 0 : index
    %c0_81 = arith.constant 0 : index
    %c0_82 = arith.constant 0 : index
    %154 = vector.load %arg16[%c0_80, %c0_81, %c0_82] : memref<1x1x1xf32, #tpu.memory_space<vmem>>, vector<1x1x1xf32>
    %155 = vector.shape_cast %154 : vector<1x1x1xf32> to vector<1x1xf32>
    %156 = vector.shape_cast %153 : vector<1x1xf32> to vector<1x1x1xf32>
    tpu.vector_store %arg16[%c0_80, %c0_81, %c0_82], %156 {strides = array<i32>} : memref<1x1x1xf32, #tpu.memory_space<vmem>>, vector<1x1x1xf32>,
    return
  }
  func.func @transform_0(%arg0: i32) -> (i32, i32, i32) {
    %c0_i32 = arith.constant 0 : i32
    %c0_i32_0 = arith.constant 0 : i32
    %c0_i32_1 = arith.constant 0 : i32
    return %arg0, %c0_i32, %c0_i32_0 : i32, i32, i32
  }
  func.func @transform_1(%arg0: i32) -> (i32, i32) {
    %c0_i32 = arith.constant 0 : i32
    %c0_i32_0 = arith.constant 0 : i32
    %c0_i32_1 = arith.constant 0 : i32
    return %c0_i32, %c0_i32_0 : i32, i32
  }
  func.func @transform_2(%arg0: i32) -> (i32, i32) {
    %c0_i32 = arith.constant 0 : i32
    %c0_i32_0 = arith.constant 0 : i32
    %c0_i32_1 = arith.constant 0 : i32
    return %c0_i32, %c0_i32_0 : i32, i32
  }
  func.func @transform_3(%arg0: i32) -> (i32, i32) {
    %c0_i32 = arith.constant 0 : i32
    %c0_i32_0 = arith.constant 0 : i32
    %c0_i32_1 = arith.constant 0 : i32
    return %c0_i32, %c0_i32_0 : i32, i32
  }
  func.func @transform_4(%arg0: i32) -> (i32, i32) {
    %c0_i32 = arith.constant 0 : i32
    %c0_i32_0 = arith.constant 0 : i32
    %c0_i32_1 = arith.constant 0 : i32
    return %c0_i32, %c0_i32_0 : i32, i32
  }
  func.func @transform_5(%arg0: i32) -> (i32, i32) {
    %c0_i32 = arith.constant 0 : i32
    %c0_i32_0 = arith.constant 0 : i32
    %c0_i32_1 = arith.constant 0 : i32
    return %c0_i32, %c0_i32_0 : i32, i32
  }
  func.func @transform_6(%arg0: i32) -> (i32, i32) {
    %c0_i32 = arith.constant 0 : i32
    %c0_i32_0 = arith.constant 0 : i32
    %c0_i32_1 = arith.constant 0 : i32
    return %c0_i32, %c0_i32_0 : i32, i32
  }
  func.func @transform_7(%arg0: i32) -> (i32, i32) {
    %c0_i32 = arith.constant 0 : i32
    %c0_i32_0 = arith.constant 0 : i32
    %c0_i32_1 = arith.constant 0 : i32
    return %c0_i32, %c0_i32_0 : i32, i32
  }
  func.func @transform_8(%arg0: i32) -> (i32, i32) {
    %c0_i32 = arith.constant 0 : i32
    %c0_i32_0 = arith.constant 0 : i32
    %c0_i32_1 = arith.constant 0 : i32
    return %c0_i32, %c0_i32_0 : i32, i32
  }
  func.func @transform_9(%arg0: i32) -> (i32, i32) {
    %c0_i32 = arith.constant 0 : i32
    %c0_i32_0 = arith.constant 0 : i32
    %c0_i32_1 = arith.constant 0 : i32
    return %c0_i32, %c0_i32_0 : i32, i32
  }
  func.func @transform_10(%arg0: i32) -> (i32, i32) {
    %c0_i32 = arith.constant 0 : i32
    %c0_i32_0 = arith.constant 0 : i32
    %c0_i32_1 = arith.constant 0 : i32
    return %c0_i32, %c0_i32_0 : i32, i32
  }
  func.func @transform_11(%arg0: i32) -> (i32, i32) {
    %c0_i32 = arith.constant 0 : i32
    %c0_i32_0 = arith.constant 0 : i32
    %c0_i32_1 = arith.constant 0 : i32
    return %c0_i32, %c0_i32_0 : i32, i32
  }
  func.func @transform_12(%arg0: i32) -> (i32, i32) {
    %c0_i32 = arith.constant 0 : i32
    %c0_i32_0 = arith.constant 0 : i32
    %c0_i32_1 = arith.constant 0 : i32
    return %c0_i32, %c0_i32_0 : i32, i32
  }
  func.func @transform_13(%arg0: i32) -> (i32, i32) {
    %c0_i32 = arith.constant 0 : i32
    %c0_i32_0 = arith.constant 0 : i32
    %c0_i32_1 = arith.constant 0 : i32
    return %c0_i32, %c0_i32_0 : i32, i32
  }
  func.func @transform_14(%arg0: i32) -> (i32, i32, i32) {
    %c0_i32 = arith.constant 0 : i32
    %c0_i32_0 = arith.constant 0 : i32
    %c0_i32_1 = arith.constant 0 : i32
    return %arg0, %c0_i32, %c0_i32_0 : i32, i32, i32
  }
  func.func @transform_15(%arg0: i32) -> (i32, i32, i32) {
    %c0_i32 = arith.constant 0 : i32
    %c0_i32_0 = arith.constant 0 : i32
    %c0_i32_1 = arith.constant 0 : i32
    return %arg0, %c0_i32, %c0_i32_0 : i32, i32, i32
  }
}

module attributes {stable_mosaic.version = 11 : i64} {
  func.func @_fusion_kernel(%arg0: i32, %arg1: memref<1x16x1024xbf16, #tpu.memory_space<vmem>>, %arg2: memref<1x16x1024xbf16, #tpu.memory_space<vmem>>, %arg3: memref<2x2xf32, #tpu.memory_space<smem>>, %arg4: memref<1x1024xf32, #tpu.memory_space<vmem>>, %arg5: memref<16x432xbf16, #tpu.memory_space<vmem>>, %arg6: memref<16x1xf32, #tpu.memory_space<vmem>>, %arg7: memref<1x16x1024xf32, #tpu.memory_space<vmem>>, %arg8: memref<432x1024xbf16, #tpu.memory_space<vmem>>) attributes {dimension_semantics = [#tpu.dimension_semantics<parallel>], iteration_bounds = array<i64: 2>, scalar_prefetch = 0 : i64, scratch_operands = 1 : i64, tpu.core_type = #tpu.core_type<tc>, window_params = [{transform_indices = @transform_0, window_bounds = array<i64: 1, 16, 1024>}, {transform_indices = @transform_1, window_bounds = array<i64: 1, 16, 1024>}, {transform_indices = @transform_2, window_bounds = array<i64: 2, 2>}, {pipeline_mode = #tpu.pipeline_mode<synchronous>, transform_indices = @transform_3, window_bounds = array<i64: 1, 1024>}, {pipeline_mode = #tpu.pipeline_mode<synchronous>, transform_indices = @transform_4, window_bounds = array<i64: 16, 432>}, {pipeline_mode = #tpu.pipeline_mode<synchronous>, transform_indices = @transform_5, window_bounds = array<i64: 16, 1>}, {transform_indices = @transform_6, window_bounds = array<i64: 1, 16, 1024>}]} {
    %0 = arith.index_cast %arg0 : i32 to index
    %c0 = arith.constant 0 : index
    %1 = memref.load %arg3[%0, %c0] : memref<2x2xf32, #tpu.memory_space<smem>>
    %c0_0 = arith.constant 0 : index
    %c0_1 = arith.constant 0 : index
    %c0_2 = arith.constant 0 : index
    %2 = vector.load %arg1[%c0_0, %c0_1, %c0_2] : memref<1x16x1024xbf16, #tpu.memory_space<vmem>>, vector<1x16x1024xbf16>
    %3 = vector.shape_cast %2 : vector<1x16x1024xbf16> to vector<16x1024xbf16>
    %4 = arith.extf %3 : vector<16x1024xbf16> to vector<16x1024xf32>
    %5 = vector.broadcast %1 : f32 to vector<16x1024xf32>
    %6 = arith.mulf %5, %4 : vector<16x1024xf32>
    %7 = arith.index_cast %arg0 : i32 to index
    %c1 = arith.constant 1 : index
    %8 = memref.load %arg3[%7, %c1] : memref<2x2xf32, #tpu.memory_space<smem>>
    %c0_3 = arith.constant 0 : index
    %c0_4 = arith.constant 0 : index
    %c0_5 = arith.constant 0 : index
    %9 = vector.load %arg2[%c0_3, %c0_4, %c0_5] : memref<1x16x1024xbf16, #tpu.memory_space<vmem>>, vector<1x16x1024xbf16>
    %10 = vector.shape_cast %9 : vector<1x16x1024xbf16> to vector<16x1024xbf16>
    %11 = arith.extf %10 : vector<16x1024xbf16> to vector<16x1024xf32>
    %12 = vector.broadcast %8 : f32 to vector<16x1024xf32>
    %13 = arith.mulf %12, %11 : vector<16x1024xf32>
    %14 = arith.addf %6, %13 : vector<16x1024xf32>
    %cst = arith.constant 0.000000e+00 : bf16
    %15 = vector.broadcast %cst : bf16 to vector<16x111xbf16>
    %16 = arith.truncf %14 : vector<16x1024xf32> to vector<16x1024xbf16>
    %cst_6 = arith.constant 0.000000e+00 : bf16
    %17 = vector.broadcast %cst_6 : bf16 to vector<16x145xbf16>
    %18 = tpu.concatenate %15, %16, %17 in 1 : vector<16x111xbf16>, vector<16x1024xbf16>, vector<16x145xbf16> -> vector<16x1280xbf16>
    %19 = vector.extract_strided_slice %18 {offsets = [0, 0], sizes = [16, 1024], strides = [1, 1]} : vector<16x1280xbf16> to vector<16x1024xbf16>
    %c0_7 = arith.constant 0 : index
    %c0_8 = arith.constant 0 : index
    %20 = vector.load %arg8[%c0_7, %c0_8] : memref<432x1024xbf16, #tpu.memory_space<vmem>>, vector<16x1024xbf16>
    tpu.vector_store %arg8[%c0_7, %c0_8], %19 {strides = array<i32>} : memref<432x1024xbf16, #tpu.memory_space<vmem>>, vector<16x1024xbf16>,
    %21 = vector.extract_strided_slice %18 {offsets = [0, 1], sizes = [16, 1024], strides = [1, 1]} : vector<16x1280xbf16> to vector<16x1024xbf16>
    %c16 = arith.constant 16 : index
    %c0_9 = arith.constant 0 : index
    %22 = vector.load %arg8[%c16, %c0_9] : memref<432x1024xbf16, #tpu.memory_space<vmem>>, vector<16x1024xbf16>
    tpu.vector_store %arg8[%c16, %c0_9], %21 {strides = array<i32>} : memref<432x1024xbf16, #tpu.memory_space<vmem>>, vector<16x1024xbf16>,
    %23 = vector.extract_strided_slice %18 {offsets = [0, 2], sizes = [16, 1024], strides = [1, 1]} : vector<16x1280xbf16> to vector<16x1024xbf16>
    %c32 = arith.constant 32 : index
    %c0_10 = arith.constant 0 : index
    %24 = vector.load %arg8[%c32, %c0_10] : memref<432x1024xbf16, #tpu.memory_space<vmem>>, vector<16x1024xbf16>
    tpu.vector_store %arg8[%c32, %c0_10], %23 {strides = array<i32>} : memref<432x1024xbf16, #tpu.memory_space<vmem>>, vector<16x1024xbf16>,
    %25 = vector.extract_strided_slice %18 {offsets = [0, 10], sizes = [16, 1024], strides = [1, 1]} : vector<16x1280xbf16> to vector<16x1024xbf16>
    %c48 = arith.constant 48 : index
    %c0_11 = arith.constant 0 : index
    %26 = vector.load %arg8[%c48, %c0_11] : memref<432x1024xbf16, #tpu.memory_space<vmem>>, vector<16x1024xbf16>
    tpu.vector_store %arg8[%c48, %c0_11], %25 {strides = array<i32>} : memref<432x1024xbf16, #tpu.memory_space<vmem>>, vector<16x1024xbf16>,
    %27 = vector.extract_strided_slice %18 {offsets = [0, 11], sizes = [16, 1024], strides = [1, 1]} : vector<16x1280xbf16> to vector<16x1024xbf16>
    %c64 = arith.constant 64 : index
    %c0_12 = arith.constant 0 : index
    %28 = vector.load %arg8[%c64, %c0_12] : memref<432x1024xbf16, #tpu.memory_space<vmem>>, vector<16x1024xbf16>
    tpu.vector_store %arg8[%c64, %c0_12], %27 {strides = array<i32>} : memref<432x1024xbf16, #tpu.memory_space<vmem>>, vector<16x1024xbf16>,
    %29 = vector.extract_strided_slice %18 {offsets = [0, 12], sizes = [16, 1024], strides = [1, 1]} : vector<16x1280xbf16> to vector<16x1024xbf16>
    %c80 = arith.constant 80 : index
    %c0_13 = arith.constant 0 : index
    %30 = vector.load %arg8[%c80, %c0_13] : memref<432x1024xbf16, #tpu.memory_space<vmem>>, vector<16x1024xbf16>
    tpu.vector_store %arg8[%c80, %c0_13], %29 {strides = array<i32>} : memref<432x1024xbf16, #tpu.memory_space<vmem>>, vector<16x1024xbf16>,
    %31 = vector.extract_strided_slice %18 {offsets = [0, 20], sizes = [16, 1024], strides = [1, 1]} : vector<16x1280xbf16> to vector<16x1024xbf16>
    %c96 = arith.constant 96 : index
    %c0_14 = arith.constant 0 : index
    %32 = vector.load %arg8[%c96, %c0_14] : memref<432x1024xbf16, #tpu.memory_space<vmem>>, vector<16x1024xbf16>
    tpu.vector_store %arg8[%c96, %c0_14], %31 {strides = array<i32>} : memref<432x1024xbf16, #tpu.memory_space<vmem>>, vector<16x1024xbf16>,
    %33 = vector.extract_strided_slice %18 {offsets = [0, 21], sizes = [16, 1024], strides = [1, 1]} : vector<16x1280xbf16> to vector<16x1024xbf16>
    %c112 = arith.constant 112 : index
    %c0_15 = arith.constant 0 : index
    %34 = vector.load %arg8[%c112, %c0_15] : memref<432x1024xbf16, #tpu.memory_space<vmem>>, vector<16x1024xbf16>
    tpu.vector_store %arg8[%c112, %c0_15], %33 {strides = array<i32>} : memref<432x1024xbf16, #tpu.memory_space<vmem>>, vector<16x1024xbf16>,
    %35 = vector.extract_strided_slice %18 {offsets = [0, 22], sizes = [16, 1024], strides = [1, 1]} : vector<16x1280xbf16> to vector<16x1024xbf16>
    %c128 = arith.constant 128 : index
    %c0_16 = arith.constant 0 : index
    %36 = vector.load %arg8[%c128, %c0_16] : memref<432x1024xbf16, #tpu.memory_space<vmem>>, vector<16x1024xbf16>
    tpu.vector_store %arg8[%c128, %c0_16], %35 {strides = array<i32>} : memref<432x1024xbf16, #tpu.memory_space<vmem>>, vector<16x1024xbf16>,
    %37 = vector.extract_strided_slice %18 {offsets = [0, 100], sizes = [16, 1024], strides = [1, 1]} : vector<16x1280xbf16> to vector<16x1024xbf16>
    %c144 = arith.constant 144 : index
    %c0_17 = arith.constant 0 : index
    %38 = vector.load %arg8[%c144, %c0_17] : memref<432x1024xbf16, #tpu.memory_space<vmem>>, vector<16x1024xbf16>
    tpu.vector_store %arg8[%c144, %c0_17], %37 {strides = array<i32>} : memref<432x1024xbf16, #tpu.memory_space<vmem>>, vector<16x1024xbf16>,
    %39 = vector.extract_strided_slice %18 {offsets = [0, 101], sizes = [16, 1024], strides = [1, 1]} : vector<16x1280xbf16> to vector<16x1024xbf16>
    %c160 = arith.constant 160 : index
    %c0_18 = arith.constant 0 : index
    %40 = vector.load %arg8[%c160, %c0_18] : memref<432x1024xbf16, #tpu.memory_space<vmem>>, vector<16x1024xbf16>
    tpu.vector_store %arg8[%c160, %c0_18], %39 {strides = array<i32>} : memref<432x1024xbf16, #tpu.memory_space<vmem>>, vector<16x1024xbf16>,
    %41 = vector.extract_strided_slice %18 {offsets = [0, 102], sizes = [16, 1024], strides = [1, 1]} : vector<16x1280xbf16> to vector<16x1024xbf16>
    %c176 = arith.constant 176 : index
    %c0_19 = arith.constant 0 : index
    %42 = vector.load %arg8[%c176, %c0_19] : memref<432x1024xbf16, #tpu.memory_space<vmem>>, vector<16x1024xbf16>
    tpu.vector_store %arg8[%c176, %c0_19], %41 {strides = array<i32>} : memref<432x1024xbf16, #tpu.memory_space<vmem>>, vector<16x1024xbf16>,
    %43 = vector.extract_strided_slice %18 {offsets = [0, 110], sizes = [16, 1024], strides = [1, 1]} : vector<16x1280xbf16> to vector<16x1024xbf16>
    %c192 = arith.constant 192 : index
    %c0_20 = arith.constant 0 : index
    %44 = vector.load %arg8[%c192, %c0_20] : memref<432x1024xbf16, #tpu.memory_space<vmem>>, vector<16x1024xbf16>
    tpu.vector_store %arg8[%c192, %c0_20], %43 {strides = array<i32>} : memref<432x1024xbf16, #tpu.memory_space<vmem>>, vector<16x1024xbf16>,
    %45 = vector.extract_strided_slice %18 {offsets = [0, 111], sizes = [16, 1024], strides = [1, 1]} : vector<16x1280xbf16> to vector<16x1024xbf16>
    %c208 = arith.constant 208 : index
    %c0_21 = arith.constant 0 : index
    %46 = vector.load %arg8[%c208, %c0_21] : memref<432x1024xbf16, #tpu.memory_space<vmem>>, vector<16x1024xbf16>
    tpu.vector_store %arg8[%c208, %c0_21], %45 {strides = array<i32>} : memref<432x1024xbf16, #tpu.memory_space<vmem>>, vector<16x1024xbf16>,
    %47 = vector.extract_strided_slice %18 {offsets = [0, 112], sizes = [16, 1024], strides = [1, 1]} : vector<16x1280xbf16> to vector<16x1024xbf16>
    %c224 = arith.constant 224 : index
    %c0_22 = arith.constant 0 : index
    %48 = vector.load %arg8[%c224, %c0_22] : memref<432x1024xbf16, #tpu.memory_space<vmem>>, vector<16x1024xbf16>
    tpu.vector_store %arg8[%c224, %c0_22], %47 {strides = array<i32>} : memref<432x1024xbf16, #tpu.memory_space<vmem>>, vector<16x1024xbf16>,
    %49 = vector.extract_strided_slice %18 {offsets = [0, 120], sizes = [16, 1024], strides = [1, 1]} : vector<16x1280xbf16> to vector<16x1024xbf16>
    %c240 = arith.constant 240 : index
    %c0_23 = arith.constant 0 : index
    %50 = vector.load %arg8[%c240, %c0_23] : memref<432x1024xbf16, #tpu.memory_space<vmem>>, vector<16x1024xbf16>
    tpu.vector_store %arg8[%c240, %c0_23], %49 {strides = array<i32>} : memref<432x1024xbf16, #tpu.memory_space<vmem>>, vector<16x1024xbf16>,
    %51 = vector.extract_strided_slice %18 {offsets = [0, 121], sizes = [16, 1024], strides = [1, 1]} : vector<16x1280xbf16> to vector<16x1024xbf16>
    %c256 = arith.constant 256 : index
    %c0_24 = arith.constant 0 : index
    %52 = vector.load %arg8[%c256, %c0_24] : memref<432x1024xbf16, #tpu.memory_space<vmem>>, vector<16x1024xbf16>
    tpu.vector_store %arg8[%c256, %c0_24], %51 {strides = array<i32>} : memref<432x1024xbf16, #tpu.memory_space<vmem>>, vector<16x1024xbf16>,
    %53 = vector.extract_strided_slice %18 {offsets = [0, 122], sizes = [16, 1024], strides = [1, 1]} : vector<16x1280xbf16> to vector<16x1024xbf16>
    %c272 = arith.constant 272 : index
    %c0_25 = arith.constant 0 : index
    %54 = vector.load %arg8[%c272, %c0_25] : memref<432x1024xbf16, #tpu.memory_space<vmem>>, vector<16x1024xbf16>
    tpu.vector_store %arg8[%c272, %c0_25], %53 {strides = array<i32>} : memref<432x1024xbf16, #tpu.memory_space<vmem>>, vector<16x1024xbf16>,
    %55 = vector.extract_strided_slice %18 {offsets = [0, 200], sizes = [16, 1024], strides = [1, 1]} : vector<16x1280xbf16> to vector<16x1024xbf16>
    %c288 = arith.constant 288 : index
    %c0_26 = arith.constant 0 : index
    %56 = vector.load %arg8[%c288, %c0_26] : memref<432x1024xbf16, #tpu.memory_space<vmem>>, vector<16x1024xbf16>
    tpu.vector_store %arg8[%c288, %c0_26], %55 {strides = array<i32>} : memref<432x1024xbf16, #tpu.memory_space<vmem>>, vector<16x1024xbf16>,
    %57 = vector.extract_strided_slice %18 {offsets = [0, 201], sizes = [16, 1024], strides = [1, 1]} : vector<16x1280xbf16> to vector<16x1024xbf16>
    %c304 = arith.constant 304 : index
    %c0_27 = arith.constant 0 : index
    %58 = vector.load %arg8[%c304, %c0_27] : memref<432x1024xbf16, #tpu.memory_space<vmem>>, vector<16x1024xbf16>
    tpu.vector_store %arg8[%c304, %c0_27], %57 {strides = array<i32>} : memref<432x1024xbf16, #tpu.memory_space<vmem>>, vector<16x1024xbf16>,
    %59 = vector.extract_strided_slice %18 {offsets = [0, 202], sizes = [16, 1024], strides = [1, 1]} : vector<16x1280xbf16> to vector<16x1024xbf16>
    %c320 = arith.constant 320 : index
    %c0_28 = arith.constant 0 : index
    %60 = vector.load %arg8[%c320, %c0_28] : memref<432x1024xbf16, #tpu.memory_space<vmem>>, vector<16x1024xbf16>
    tpu.vector_store %arg8[%c320, %c0_28], %59 {strides = array<i32>} : memref<432x1024xbf16, #tpu.memory_space<vmem>>, vector<16x1024xbf16>,
    %61 = vector.extract_strided_slice %18 {offsets = [0, 210], sizes = [16, 1024], strides = [1, 1]} : vector<16x1280xbf16> to vector<16x1024xbf16>
    %c336 = arith.constant 336 : index
    %c0_29 = arith.constant 0 : index
    %62 = vector.load %arg8[%c336, %c0_29] : memref<432x1024xbf16, #tpu.memory_space<vmem>>, vector<16x1024xbf16>
    tpu.vector_store %arg8[%c336, %c0_29], %61 {strides = array<i32>} : memref<432x1024xbf16, #tpu.memory_space<vmem>>, vector<16x1024xbf16>,
    %63 = vector.extract_strided_slice %18 {offsets = [0, 211], sizes = [16, 1024], strides = [1, 1]} : vector<16x1280xbf16> to vector<16x1024xbf16>
    %c352 = arith.constant 352 : index
    %c0_30 = arith.constant 0 : index
    %64 = vector.load %arg8[%c352, %c0_30] : memref<432x1024xbf16, #tpu.memory_space<vmem>>, vector<16x1024xbf16>
    tpu.vector_store %arg8[%c352, %c0_30], %63 {strides = array<i32>} : memref<432x1024xbf16, #tpu.memory_space<vmem>>, vector<16x1024xbf16>,
    %65 = vector.extract_strided_slice %18 {offsets = [0, 212], sizes = [16, 1024], strides = [1, 1]} : vector<16x1280xbf16> to vector<16x1024xbf16>
    %c368 = arith.constant 368 : index
    %c0_31 = arith.constant 0 : index
    %66 = vector.load %arg8[%c368, %c0_31] : memref<432x1024xbf16, #tpu.memory_space<vmem>>, vector<16x1024xbf16>
    tpu.vector_store %arg8[%c368, %c0_31], %65 {strides = array<i32>} : memref<432x1024xbf16, #tpu.memory_space<vmem>>, vector<16x1024xbf16>,
    %67 = vector.extract_strided_slice %18 {offsets = [0, 220], sizes = [16, 1024], strides = [1, 1]} : vector<16x1280xbf16> to vector<16x1024xbf16>
    %c384 = arith.constant 384 : index
    %c0_32 = arith.constant 0 : index
    %68 = vector.load %arg8[%c384, %c0_32] : memref<432x1024xbf16, #tpu.memory_space<vmem>>, vector<16x1024xbf16>
    tpu.vector_store %arg8[%c384, %c0_32], %67 {strides = array<i32>} : memref<432x1024xbf16, #tpu.memory_space<vmem>>, vector<16x1024xbf16>,
    %69 = vector.extract_strided_slice %18 {offsets = [0, 221], sizes = [16, 1024], strides = [1, 1]} : vector<16x1280xbf16> to vector<16x1024xbf16>
    %c400 = arith.constant 400 : index
    %c0_33 = arith.constant 0 : index
    %70 = vector.load %arg8[%c400, %c0_33] : memref<432x1024xbf16, #tpu.memory_space<vmem>>, vector<16x1024xbf16>
    tpu.vector_store %arg8[%c400, %c0_33], %69 {strides = array<i32>} : memref<432x1024xbf16, #tpu.memory_space<vmem>>, vector<16x1024xbf16>,
    %71 = vector.extract_strided_slice %18 {offsets = [0, 222], sizes = [16, 1024], strides = [1, 1]} : vector<16x1280xbf16> to vector<16x1024xbf16>
    %c416 = arith.constant 416 : index
    %c0_34 = arith.constant 0 : index
    %72 = vector.load %arg8[%c416, %c0_34] : memref<432x1024xbf16, #tpu.memory_space<vmem>>, vector<16x1024xbf16>
    tpu.vector_store %arg8[%c416, %c0_34], %71 {strides = array<i32>} : memref<432x1024xbf16, #tpu.memory_space<vmem>>, vector<16x1024xbf16>,
    %c0_35 = arith.constant 0 : index
    %c0_36 = arith.constant 0 : index
    %73 = vector.load %arg5[%c0_35, %c0_36] : memref<16x432xbf16, #tpu.memory_space<vmem>>, vector<16x432xbf16>
    %c0_37 = arith.constant 0 : index
    %c0_38 = arith.constant 0 : index
    %74 = vector.load %arg8[%c0_37, %c0_38] : memref<432x1024xbf16, #tpu.memory_space<vmem>>, vector<432x1024xbf16>
    %cst_39 = arith.constant dense<0.000000e+00> : vector<16x1024xf32>
    %75 = tpu.matmul %73, %74, %cst_39 {dimension_numbers = #tpu.dot_dimension_numbers<[1], [0], [0], [1], [0, 0, 1, 1], [], []>} : vector<16x432xbf16>, vector<432x1024xbf16>, vector<16x1024xf32> -> vector<16x1024xf32>
    %c0_40 = arith.constant 0 : index
    %c0_41 = arith.constant 0 : index
    %76 = vector.load %arg6[%c0_40, %c0_41] : memref<16x1xf32, #tpu.memory_space<vmem>>, vector<16x1xf32>
    %77 = vector.broadcast %76 : vector<16x1xf32> to vector<16x1024xf32>
    %78 = arith.addf %75, %77 : vector<16x1024xf32>
    %c0_42 = arith.constant 0 : index
    %c0_43 = arith.constant 0 : index
    %79 = vector.load %arg4[%c0_42, %c0_43] : memref<1x1024xf32, #tpu.memory_space<vmem>>, vector<1x1024xf32>
    %80 = vector.broadcast %79 : vector<1x1024xf32> to vector<16x1024xf32>
    %81 = arith.mulf %78, %80 : vector<16x1024xf32>
    %cst_44 = arith.constant dense<0.000000e+00> : vector<16xf32>
    %82 = vector.multi_reduction <add>, %81, %cst_44 [1] : vector<16x1024xf32> to vector<16xf32>
    %83 = vector.shape_cast %82 : vector<16xf32> to vector<16x1xf32>
    %cst_45 = arith.constant 0.001953125 : f32
    %84 = vector.broadcast %cst_45 : f32 to vector<16x1xf32>
    %85 = arith.mulf %83, %84 : vector<16x1xf32>
    %86 = vector.broadcast %85 : vector<16x1xf32> to vector<16x1024xf32>
    %87 = arith.subf %78, %86 : vector<16x1024xf32>
    %88 = vector.broadcast %79 : vector<1x1024xf32> to vector<16x1024xf32>
    %89 = arith.mulf %87, %88 : vector<16x1024xf32>
    %90 = arith.mulf %89, %89 : vector<16x1024xf32>
    %cst_46 = arith.constant dense<0.000000e+00> : vector<16xf32>
    %91 = vector.multi_reduction <add>, %90, %cst_46 [1] : vector<16x1024xf32> to vector<16xf32>
    %92 = vector.shape_cast %91 : vector<16xf32> to vector<16x1xf32>
    %cst_47 = arith.constant 0.001953125 : f32
    %93 = vector.broadcast %cst_47 : f32 to vector<16x1xf32>
    %94 = arith.mulf %92, %93 : vector<16x1xf32>
    %cst_48 = arith.constant 0.000000e+00 : f32
    %95 = vector.broadcast %cst_48 : f32 to vector<16x1xf32>
    %96 = arith.maximumf %94, %95 : vector<16x1xf32>
    %97 = vector.broadcast %85 : vector<16x1xf32> to vector<16x1024xf32>
    %98 = arith.subf %78, %97 : vector<16x1024xf32>
    %cst_49 = arith.constant 9.99999974E-6 : f32
    %99 = vector.broadcast %cst_49 : f32 to vector<16x1xf32>
    %100 = arith.addf %96, %99 : vector<16x1xf32>
    %101 = math.rsqrt %100 : vector<16x1xf32>
    %102 = vector.broadcast %101 : vector<16x1xf32> to vector<16x1024xf32>
    %103 = arith.mulf %98, %102 : vector<16x1024xf32>
    %cst_50 = arith.constant 0.000000e+00 : f32
    %104 = vector.broadcast %cst_50 : f32 to vector<16x1024xf32>
    %105 = arith.cmpf oge, %103, %104 : vector<16x1024xf32>
    %cst_51 = arith.constant 0.00999999977 : f32
    %106 = vector.broadcast %cst_51 : f32 to vector<16x1024xf32>
    %107 = arith.mulf %106, %103 : vector<16x1024xf32>
    %108 = arith.select %105, %103, %107 : vector<16x1024xi1>, vector<16x1024xf32>
    %c0_52 = arith.constant 0 : index
    %c0_53 = arith.constant 0 : index
    %c0_54 = arith.constant 0 : index
    %109 = vector.load %arg7[%c0_52, %c0_53, %c0_54] : memref<1x16x1024xf32, #tpu.memory_space<vmem>>, vector<1x16x1024xf32>
    %110 = vector.shape_cast %109 : vector<1x16x1024xf32> to vector<16x1024xf32>
    %111 = vector.shape_cast %108 : vector<16x1024xf32> to vector<1x16x1024xf32>
    tpu.vector_store %arg7[%c0_52, %c0_53, %c0_54], %111 {strides = array<i32>} : memref<1x16x1024xf32, #tpu.memory_space<vmem>>, vector<1x16x1024xf32>,
    return
  }
  func.func @transform_0(%arg0: i32) -> (i32, i32, i32) {
    %c0_i32 = arith.constant 0 : i32
    %c0_i32_0 = arith.constant 0 : i32
    %c0_i32_1 = arith.constant 0 : i32
    return %arg0, %c0_i32, %c0_i32_0 : i32, i32, i32
  }
  func.func @transform_1(%arg0: i32) -> (i32, i32, i32) {
    %c0_i32 = arith.constant 0 : i32
    %c0_i32_0 = arith.constant 0 : i32
    %c0_i32_1 = arith.constant 0 : i32
    return %arg0, %c0_i32, %c0_i32_0 : i32, i32, i32
  }
  func.func @transform_2(%arg0: i32) -> (i32, i32) {
    %c0_i32 = arith.constant 0 : i32
    %c0_i32_0 = arith.constant 0 : i32
    %c0_i32_1 = arith.constant 0 : i32
    return %c0_i32, %c0_i32_0 : i32, i32
  }
  func.func @transform_3(%arg0: i32) -> (i32, i32) {
    %c0_i32 = arith.constant 0 : i32
    %c0_i32_0 = arith.constant 0 : i32
    %c0_i32_1 = arith.constant 0 : i32
    return %c0_i32, %c0_i32_0 : i32, i32
  }
  func.func @transform_4(%arg0: i32) -> (i32, i32) {
    %c0_i32 = arith.constant 0 : i32
    %c0_i32_0 = arith.constant 0 : i32
    %c0_i32_1 = arith.constant 0 : i32
    return %c0_i32, %c0_i32_0 : i32, i32
  }
  func.func @transform_5(%arg0: i32) -> (i32, i32) {
    %c0_i32 = arith.constant 0 : i32
    %c0_i32_0 = arith.constant 0 : i32
    %c0_i32_1 = arith.constant 0 : i32
    return %c0_i32, %c0_i32_0 : i32, i32
  }
  func.func @transform_6(%arg0: i32) -> (i32, i32, i32) {
    %c0_i32 = arith.constant 0 : i32
    %c0_i32_0 = arith.constant 0 : i32
    %c0_i32_1 = arith.constant 0 : i32
    return %arg0, %c0_i32, %c0_i32_0 : i32, i32, i32
  }
}

</mosaic_0001>

<llo_original>
// kernel: _lambda_.4
$region0: #{_lambda_.4}
  #allocation0 [shape = 'u32[]', space=smem, size = 0x4, offset = 0x4, fixed_abs, tag = 'smem constant byte address 0x4 - core index']
  #allocation1 [shape = 'u32[144,128]{1,0:T(1,128)}', space=vmem, size = 0x12000, scoped, tag = 'internal scratch']
  #allocation2 [shape = 'bf16[432,256]{1,0:T(16,128)(2,1)}', space=vmem, size = 0x36000, scoped, tag = 'scratch operand']
  #allocation3 [shape = 'f32[1,1]{1,0:T(1,128)S(1)}', space=vmem, size = 0x200, scoped, tag = 'scoped memory for _lambda_.4']
  #allocation4 [shape = 'f32[1,1]{1,0:T(1,128)S(1)}', space=vmem, size = 0x200, scoped, tag = 'scoped memory for _lambda_.4']
  %s0 = inlined_call_operand.hbm [shape: bf16[2,16,384], index: 0, kind: input, shape index: {}]
  %s1 = inlined_call_operand.hbm [shape: f32[1,256], index: 1, kind: input, shape index: {}]
  %s2 = inlined_call_operand.hbm [shape: bf16[16,432], index: 2, kind: input, shape index: {}]
  %s3 = inlined_call_operand.hbm [shape: f32[16,1], index: 3, kind: input, shape index: {}]
  %s4 = inlined_call_operand.hbm [shape: f32[1,16], index: 4, kind: input, shape index: {}]
  %s5 = inlined_call_operand.<no memory space> [shape: f32[1,1], index: 5, kind: input, shape index: {}]
  %s6 = inlined_call_operand.hbm [shape: f32[16,1], index: 6, kind: input, shape index: {}]
  %s7 = inlined_call_operand.hbm [shape: f32[16,1], index: 7, kind: input, shape index: {}]
  %s8 = inlined_call_operand.hbm [shape: f32[2,16], index: 8, kind: input, shape index: {}]
  %s9 = inlined_call_operand.hbm [shape: f32[2,1], index: 9, kind: input, shape index: {}]
  %s10 = inlined_call_operand.hbm [shape: f32[1,2], index: 10, kind: input, shape index: {}]
  %s11 = inlined_call_operand.<no memory space> [shape: f32[1,1], index: 11, kind: input, shape index: {}]
  %s12 = inlined_call_operand.hbm [shape: bf16[16,16], index: 12, kind: input, shape index: {}]
  %s13 = inlined_call_operand.hbm [shape: f32[16,1], index: 13, kind: input, shape index: {}]
  %s14 = inlined_call_operand.hbm [shape: bf16[2,16,256], index: 14, kind: output, shape index: {0}]
  %s15 = inlined_call_operand.hbm [shape: f32[2,1,1], index: 15, kind: output, shape index: {1}]
  %16 = xla_tuple %s14, %s15
  %s17 = sld [smem:[#allocation0]]
  $region145: #{_lambda_.4} parent=0
    _
  %s19 = ssub.s32 1, %s17
  %s20 = scalar_select 0, %s19, %s17
  %v21 = vstv %s5
  %22 = vst [vmem:[#allocation3] sm:$0x1] %v21
  %v23 = vstv %s11
  %24 = vst [vmem:[#allocation4] sm:$0x1] %v23
  $region1: #{_lambda_.4} parent=0
    #allocation5 [shape = 'u8[24576]{0}', space=vmem, size = 0x6000, scoped, tag = 'input window, operand 0']
    #allocation6 [shape = 's32[2]{0}', space=sflag, size = 0x8, scoped, tag = 'scoped memory for _lambda_.4']
    #allocation7 [shape = 's32[2]{0}', space=sflag, size = 0x8, scoped, tag = 'scoped memory for _lambda_.4']
    #allocation8 [shape = 'u8[1024]{0}', space=vmem, size = 0x400, scoped, tag = 'input window, operand 1, single buffered']
    #allocation9 [shape = 's32[1]{0}', space=sflag, size = 0x4, scoped, tag = 'scoped memory for _lambda_.4']
    #allocation10 [shape = 'u8[16384]{0}', space=vmem, size = 0x4000, scoped, tag = 'input window, operand 2, single buffered']
    #allocation11 [shape = 'u8[8192]{0}', space=vmem, size = 0x2000, scoped, tag = 'input window, operand 3, single buffered']
    #allocation12 [shape = 's32[1]{0}', space=sflag, size = 0x4, scoped, tag = 'scoped memory for _lambda_.4']
    #allocation13 [shape = 'u8[512]{0}', space=vmem, size = 0x400, scoped, tag = 'input window, operand 4, single buffered']
    #allocation14 [shape = 'u8[8192]{0}', space=vmem, size = 0x2000, scoped, tag = 'input window, operand 6, single buffered']
    #allocation15 [shape = 's32[1]{0}', space=sflag, size = 0x4, scoped, tag = 'scoped memory for _lambda_.4']
    #allocation16 [shape = 'u8[8192]{0}', space=vmem, size = 0x2000, scoped, tag = 'input window, operand 7, single buffered']
    #allocation17 [shape = 'u8[1024]{0}', space=vmem, size = 0x400, scoped, tag = 'input window, operand 8, single buffered']
    #allocation18 [shape = 's32[1]{0}', space=sflag, size = 0x4, scoped, tag = 'scoped memory for _lambda_.4']
    #allocation19 [shape = 'u8[1024]{0}', space=vmem, size = 0x400, scoped, tag = 'input window, operand 9, single buffered']
    #allocation20 [shape = 'u8[512]{0}', space=vmem, size = 0x400, scoped, tag = 'input window, operand 10, single buffered']
    #allocation21 [shape = 's32[1]{0}', space=sflag, size = 0x4, scoped, tag = 'scoped memory for _lambda_.4']
    #allocation22 [shape = 'u8[4096]{0}', space=vmem, size = 0x1000, scoped, tag = 'input window, operand 12, single buffered']
    #allocation23 [shape = 'u8[8192]{0}', space=vmem, size = 0x2000, scoped, tag = 'input window, operand 13, single buffered']
    #allocation24 [shape = 's32[1]{0}', space=sflag, size = 0x4, scoped, tag = 'scoped memory for _lambda_.4']
    #allocation25 [shape = 'u8[16384]{0}', space=vmem, size = 0x4000, scoped, tag = 'output window, operand 0']
    #allocation26 [shape = 'u8[1024]{0}', space=vmem, size = 0x400, scoped, tag = 'output window, operand 1']
    #allocation27 [shape = 's32[2]{0}', space=sflag, size = 0x8, scoped, tag = 'scoped memory for _lambda_.4']
    %25 = vsyncpa [#allocation6], 0
    %s26 = scalar_lea.sflag [#allocation6], 1
    %27 = vsyncpa %s26, 0
    %28 = vsyncpa [#allocation9], 0
    %29 = vsyncpa [#allocation12], 0
    %30 = vsyncpa [#allocation15], 0
    %31 = vsyncpa [#allocation18], 0
    %32 = vsyncpa [#allocation21], 0
    %33 = vsyncpa [#allocation24], 0
    %34 = vsyncpa [#allocation7], 0
    %s35 = scalar_lea.sflag [#allocation7], 1
    %36 = vsyncpa %s35, 0
    %37 = vsyncpa [#allocation27], 0
    %s38 = scalar_lea.sflag [#allocation27], 1
    %39 = vsyncpa %s38, 0
    loop: start=0, step=1, limit=4
    $region2: #{_lambda_.4} parent=1 // loop_pre_header
      _
    $region3: #{_lambda_.4} parent=1 // loop_header
      %s41 = sphi 0, %s45
      %p42 = scmp.ge.s32.totalorder %s41, 4
      %s51 = sphi 0, %s53
      %s54 = sphi 0, %s51
      %s55 = sphi 0, %s54
      %s71 = sphi 0, %s55
      %s75 = sphi 0, %s75
      %s77 = sphi 0, %s75
      %s78 = sphi 0, %s77
      %s92 = sphi 0, %s78
      %s96 = sphi 0, %s96
      %s98 = sphi 0, %s96
      %s99 = sphi 0, %s98
      %s113 = sphi 0, %s99
      %s117 = sphi 0, %s117
      %s119 = sphi 0, %s117
      %s120 = sphi 0, %s119
      %s134 = sphi 0, %s120
      %s138 = sphi 0, %s138
      %s140 = sphi 0, %s138
      %s141 = sphi 0, %s140
      %s155 = sphi 0, %s141
      %s159 = sphi 0, %s159
      %s161 = sphi 0, %s159
      %s162 = sphi 0, %s161
      %s176 = sphi 0, %s162
      %s180 = sphi 0, %s180
      %s182 = sphi 0, %s180
      %s183 = sphi 0, %s182
      %s197 = sphi 0, %s183
      %s201 = sphi 0, %s201
      %s203 = sphi 0, %s201
      %s204 = sphi 0, %s203
      %s218 = sphi 0, %s204
      %s222 = sphi 0, %s222
      %s224 = sphi 0, %s222
      %s225 = sphi 0, %s224
      %s239 = sphi 0, %s225
      %s243 = sphi 0, %s243
      %s245 = sphi 0, %s243
      %s246 = sphi 0, %s245
      %s260 = sphi 0, %s246
      %s264 = sphi 0, %s264
      %s266 = sphi 0, %s264
      %s267 = sphi 0, %s266
      %s281 = sphi 0, %s267
      %s285 = sphi 0, %s285
      %s287 = sphi 0, %s285
      %s288 = sphi 0, %s287
      %s302 = sphi 0, %s288
      %s306 = sphi 0, %s306
      %s308 = sphi 0, %s306
      %s309 = sphi 0, %s308
      %s323 = sphi 0, %s309
      %s327 = sphi 0, %s327
      %s329 = sphi 0, %s327
      %s330 = sphi 0, %s329
      %s344 = sphi 0, %s330
      %s350 = sphi 0, %s352
      %s353 = sphi 0, %s350
      %s354 = sphi 0, %s353
      %s370 = sphi 0, %s354
      %s376 = sphi 0, %s378
      %s379 = sphi 0, %s376
      %s380 = sphi 0, %s379
      %s396 = sphi 0, %s380
    $region4: #{_lambda_.4} parent=1 // loop_header_branch
      %44 = sbr.rel (%p42) target = $region8
    $region5: #{_lambda_.4} parent=1 // loop_body
      %s46 = ssub.s32 %s41, 1
      %s47 = ssub.s32 %s41, 2
      %s48 = sadd.s32 %s41, 1
      %s49 = ssub.s32 %s41, %s48
      %p50 = scmp.eq.s32.totalorder %s49, 0
      %s52 = sadd.s32 %s51, 1
      %s53 = scalar_select %p50, %s51, %s52
      %p56 = pneg %p50
      %p57 = scmp.eq.s32.totalorder %s41, 1
      %p58 = por %p56, %p57
      %p59 = scmp.ne.s32.totalorder %s51, %s54
      %p60 = scmp.eq.s32.totalorder %s41, 0
      %p61 = por %p59, %p60
      %p62 = scmp.ne.s32.totalorder %s51, %s54
      %p63 = scmp.eq.s32.totalorder %s46, 1
      %p64 = por %p62, %p63
      %p65 = scmp.ne.s32.totalorder %s54, %s55
      %p66 = scmp.eq.s32.totalorder %s46, 0
      %p67 = por %p65, %p66
      %p68 = scmp.ne.s32.totalorder %s54, %s55
      %p69 = scmp.eq.s32.totalorder %s47, 1
      %p70 = por %p68, %p69
      %p72 = scmp.ne.s32.totalorder %s55, %s71
      %p73 = scmp.eq.s32.totalorder %s47, 0
      %p74 = por %p72, %p73
      %s76 = sadd.s32 %s75, 1
      %p79 = scmp.eq.s32.totalorder %s41, 1
      %p80 = scmp.ne.s32.totalorder %s75, %s77
      %p81 = scmp.eq.s32.totalorder %s41, 0
      %p82 = por %p80, %p81
      %p83 = scmp.ne.s32.totalorder %s75, %s77
      %p84 = scmp.eq.s32.totalorder %s46, 1
      %p85 = por %p83, %p84
      %p86 = scmp.ne.s32.totalorder %s77, %s78
      %p87 = scmp.eq.s32.totalorder %s46, 0
      %p88 = por %p86, %p87
      %p89 = scmp.ne.s32.totalorder %s77, %s78
      %p90 = scmp.eq.s32.totalorder %s47, 1
      %p91 = por %p89, %p90
      %p93 = scmp.ne.s32.totalorder %s78, %s92
      %p94 = scmp.eq.s32.totalorder %s47, 0
      %p95 = por %p93, %p94
      %s97 = sadd.s32 %s96, 1
      %p100 = scmp.eq.s32.totalorder %s41, 1
      %p101 = scmp.ne.s32.totalorder %s96, %s98
      %p102 = scmp.eq.s32.totalorder %s41, 0
      %p103 = por %p101, %p102
      %p104 = scmp.ne.s32.totalorder %s96, %s98
      %p105 = scmp.eq.s32.totalorder %s46, 1
      %p106 = por %p104, %p105
      %p107 = scmp.ne.s32.totalorder %s98, %s99
      %p108 = scmp.eq.s32.totalorder %s46, 0
      %p109 = por %p107, %p108
      %p110 = scmp.ne.s32.totalorder %s98, %s99
      %p111 = scmp.eq.s32.totalorder %s47, 1
      %p112 = por %p110, %p111
      %p114 = scmp.ne.s32.totalorder %s99, %s113
      %p115 = scmp.eq.s32.totalorder %s47, 0
      %p116 = por %p114, %p115
      %s118 = sadd.s32 %s117, 1
      %p121 = scmp.eq.s32.totalorder %s41, 1
      %p122 = scmp.ne.s32.totalorder %s117, %s119
      %p123 = scmp.eq.s32.totalorder %s41, 0
      %p124 = por %p122, %p123
      %p125 = scmp.ne.s32.totalorder %s117, %s119
      %p126 = scmp.eq.s32.totalorder %s46, 1
      %p127 = por %p125, %p126
      %p128 = scmp.ne.s32.totalorder %s119, %s120
      %p129 = scmp.eq.s32.totalorder %s46, 0
      %p130 = por %p128, %p129
      %p131 = scmp.ne.s32.totalorder %s119, %s120
      %p132 = scmp.eq.s32.totalorder %s47, 1
      %p133 = por %p131, %p132
      %p135 = scmp.ne.s32.totalorder %s120, %s134
      %p136 = scmp.eq.s32.totalorder %s47, 0
      %p137 = por %p135, %p136
      %s139 = sadd.s32 %s138, 1
      %p142 = scmp.eq.s32.totalorder %s41, 1
      %p143 = scmp.ne.s32.totalorder %s138, %s140
      %p144 = scmp.eq.s32.totalorder %s41, 0
      %p145 = por %p143, %p144
      %p146 = scmp.ne.s32.totalorder %s138, %s140
      %p147 = scmp.eq.s32.totalorder %s46, 1
      %p148 = por %p146, %p147
      %p149 = scmp.ne.s32.totalorder %s140, %s141
      %p150 = scmp.eq.s32.totalorder %s46, 0
      %p151 = por %p149, %p150
      %p152 = scmp.ne.s32.totalorder %s140, %s141
      %p153 = scmp.eq.s32.totalorder %s47, 1
      %p154 = por %p152, %p153
      %p156 = scmp.ne.s32.totalorder %s141, %s155
      %p157 = scmp.eq.s32.totalorder %s47, 0
      %p158 = por %p156, %p157
      %s160 = sadd.s32 %s159, 1
      %p163 = scmp.eq.s32.totalorder %s41, 1
      %p164 = scmp.ne.s32.totalorder %s159, %s161
      %p165 = scmp.eq.s32.totalorder %s41, 0
      %p166 = por %p164, %p165
      %p167 = scmp.ne.s32.totalorder %s159, %s161
      %p168 = scmp.eq.s32.totalorder %s46, 1
      %p169 = por %p167, %p168
      %p170 = scmp.ne.s32.totalorder %s161, %s162
      %p171 = scmp.eq.s32.totalorder %s46, 0
      %p172 = por %p170, %p171
      %p173 = scmp.ne.s32.totalorder %s161, %s162
      %p174 = scmp.eq.s32.totalorder %s47, 1
      %p175 = por %p173, %p174
      %p177 = scmp.ne.s32.totalorder %s162, %s176
      %p178 = scmp.eq.s32.totalorder %s47, 0
      %p179 = por %p177, %p178
      %s181 = sadd.s32 %s180, 1
      %p184 = scmp.eq.s32.totalorder %s41, 1
      %p185 = scmp.ne.s32.totalorder %s180, %s182
      %p186 = scmp.eq.s32.totalorder %s41, 0
      %p187 = por %p185, %p186
      %p188 = scmp.ne.s32.totalorder %s180, %s182
      %p189 = scmp.eq.s32.totalorder %s46, 1
      %p190 = por %p188, %p189
      %p191 = scmp.ne.s32.totalorder %s182, %s183
      %p192 = scmp.eq.s32.totalorder %s46, 0
      %p193 = por %p191, %p192
      %p194 = scmp.ne.s32.totalorder %s182, %s183
      %p195 = scmp.eq.s32.totalorder %s47, 1
      %p196 = por %p194, %p195
      %p198 = scmp.ne.s32.totalorder %s183, %s197
      %p199 = scmp.eq.s32.totalorder %s47, 0
      %p200 = por %p198, %p199
      %s202 = sadd.s32 %s201, 1
      %p205 = scmp.eq.s32.totalorder %s41, 1
      %p206 = scmp.ne.s32.totalorder %s201, %s203
      %p207 = scmp.eq.s32.totalorder %s41, 0
      %p208 = por %p206, %p207
      %p209 = scmp.ne.s32.totalorder %s201, %s203
      %p210 = scmp.eq.s32.totalorder %s46, 1
      %p211 = por %p209, %p210
      %p212 = scmp.ne.s32.totalorder %s203, %s204
      %p213 = scmp.eq.s32.totalorder %s46, 0
      %p214 = por %p212, %p213
      %p215 = scmp.ne.s32.totalorder %s203, %s204
      %p216 = scmp.eq.s32.totalorder %s47, 1
      %p217 = por %p215, %p216
      %p219 = scmp.ne.s32.totalorder %s204, %s218
      %p220 = scmp.eq.s32.totalorder %s47, 0
      %p221 = por %p219, %p220
      %s223 = sadd.s32 %s222, 1
      %p226 = scmp.eq.s32.totalorder %s41, 1
      %p227 = scmp.ne.s32.totalorder %s222, %s224
      %p228 = scmp.eq.s32.totalorder %s41, 0
      %p229 = por %p227, %p228
      %p230 = scmp.ne.s32.totalorder %s222, %s224
      %p231 = scmp.eq.s32.totalorder %s46, 1
      %p232 = por %p230, %p231
      %p233 = scmp.ne.s32.totalorder %s224, %s225
      %p234 = scmp.eq.s32.totalorder %s46, 0
      %p235 = por %p233, %p234
      %p236 = scmp.ne.s32.totalorder %s224, %s225
      %p237 = scmp.eq.s32.totalorder %s47, 1
      %p238 = por %p236, %p237
      %p240 = scmp.ne.s32.totalorder %s225, %s239
      %p241 = scmp.eq.s32.totalorder %s47, 0
      %p242 = por %p240, %p241
      %s244 = sadd.s32 %s243, 1
      %p247 = scmp.eq.s32.totalorder %s41, 1
      %p248 = scmp.ne.s32.totalorder %s243, %s245
      %p249 = scmp.eq.s32.totalorder %s41, 0
      %p250 = por %p248, %p249
      %p251 = scmp.ne.s32.totalorder %s243, %s245
      %p252 = scmp.eq.s32.totalorder %s46, 1
      %p253 = por %p251, %p252
      %p254 = scmp.ne.s32.totalorder %s245, %s246
      %p255 = scmp.eq.s32.totalorder %s46, 0
      %p256 = por %p254, %p255
      %p257 = scmp.ne.s32.totalorder %s245, %s246
      %p258 = scmp.eq.s32.totalorder %s47, 1
      %p259 = por %p257, %p258
      %p261 = scmp.ne.s32.totalorder %s246, %s260
      %p262 = scmp.eq.s32.totalorder %s47, 0
      %p263 = por %p261, %p262
      %s265 = sadd.s32 %s264, 1
      %p268 = scmp.eq.s32.totalorder %s41, 1
      %p269 = scmp.ne.s32.totalorder %s264, %s266
      %p270 = scmp.eq.s32.totalorder %s41, 0
      %p271 = por %p269, %p270
      %p272 = scmp.ne.s32.totalorder %s264, %s266
      %p273 = scmp.eq.s32.totalorder %s46, 1
      %p274 = por %p272, %p273
      %p275 = scmp.ne.s32.totalorder %s266, %s267
      %p276 = scmp.eq.s32.totalorder %s46, 0
      %p277 = por %p275, %p276
      %p278 = scmp.ne.s32.totalorder %s266, %s267
      %p279 = scmp.eq.s32.totalorder %s47, 1
      %p280 = por %p278, %p279
      %p282 = scmp.ne.s32.totalorder %s267, %s281
      %p283 = scmp.eq.s32.totalorder %s47, 0
      %p284 = por %p282, %p283
      %s286 = sadd.s32 %s285, 1
      %p289 = scmp.eq.s32.totalorder %s41, 1
      %p290 = scmp.ne.s32.totalorder %s285, %s287
      %p291 = scmp.eq.s32.totalorder %s41, 0
      %p292 = por %p290, %p291
      %p293 = scmp.ne.s32.totalorder %s285, %s287
      %p294 = scmp.eq.s32.totalorder %s46, 1
      %p295 = por %p293, %p294
      %p296 = scmp.ne.s32.totalorder %s287, %s288
      %p297 = scmp.eq.s32.totalorder %s46, 0
      %p298 = por %p296, %p297
      %p299 = scmp.ne.s32.totalorder %s287, %s288
      %p300 = scmp.eq.s32.totalorder %s47, 1
      %p301 = por %p299, %p300
      %p303 = scmp.ne.s32.totalorder %s288, %s302
      %p304 = scmp.eq.s32.totalorder %s47, 0
      %p305 = por %p303, %p304
      %s307 = sadd.s32 %s306, 1
      %p310 = scmp.eq.s32.totalorder %s41, 1
      %p311 = scmp.ne.s32.totalorder %s306, %s308
      %p312 = scmp.eq.s32.totalorder %s41, 0
      %p313 = por %p311, %p312
      %p314 = scmp.ne.s32.totalorder %s306, %s308
      %p315 = scmp.eq.s32.totalorder %s46, 1
      %p316 = por %p314, %p315
      %p317 = scmp.ne.s32.totalorder %s308, %s309
      %p318 = scmp.eq.s32.totalorder %s46, 0
      %p319 = por %p317, %p318
      %p320 = scmp.ne.s32.totalorder %s308, %s309
      %p321 = scmp.eq.s32.totalorder %s47, 1
      %p322 = por %p320, %p321
      %p324 = scmp.ne.s32.totalorder %s309, %s323
      %p325 = scmp.eq.s32.totalorder %s47, 0
      %p326 = por %p324, %p325
      %s328 = sadd.s32 %s327, 1
      %p331 = scmp.eq.s32.totalorder %s41, 1
      %p332 = scmp.ne.s32.totalorder %s327, %s329
      %p333 = scmp.eq.s32.totalorder %s41, 0
      %p334 = por %p332, %p333
      %p335 = scmp.ne.s32.totalorder %s327, %s329
      %p336 = scmp.eq.s32.totalorder %s46, 1
      %p337 = por %p335, %p336
      %p338 = scmp.ne.s32.totalorder %s329, %s330
      %p339 = scmp.eq.s32.totalorder %s46, 0
      %p340 = por %p338, %p339
      %p341 = scmp.ne.s32.totalorder %s329, %s330
      %p342 = scmp.eq.s32.totalorder %s47, 1
      %p343 = por %p341, %p342
      %p345 = scmp.ne.s32.totalorder %s330, %s344
      %p346 = scmp.eq.s32.totalorder %s47, 0
      %p347 = por %p345, %p346
      %s348 = ssub.s32 %s41, %s48
      %p349 = scmp.eq.s32.totalorder %s348, 0
      %s351 = sadd.s32 %s350, 1
      %s352 = scalar_select %p349, %s350, %s351
      %p355 = pneg %p349
      %p356 = scmp.eq.s32.totalorder %s41, 1
      %p357 = por %p355, %p356
      %p358 = scmp.ne.s32.totalorder %s350, %s353
      %p359 = scmp.eq.s32.totalorder %s41, 0
      %p360 = por %p358, %p359
      %p361 = scmp.ne.s32.totalorder %s350, %s353
      %p362 = scmp.eq.s32.totalorder %s46, 1
      %p363 = por %p361, %p362
      %p364 = scmp.ne.s32.totalorder %s353, %s354
      %p365 = scmp.eq.s32.totalorder %s46, 0
      %p366 = por %p364, %p365
      %p367 = scmp.ne.s32.totalorder %s353, %s354
      %p368 = scmp.eq.s32.totalorder %s47, 1
      %p369 = por %p367, %p368
      %p371 = scmp.ne.s32.totalorder %s354, %s370
      %p372 = scmp.eq.s32.totalorder %s47, 0
      %p373 = por %p371, %p372
      %s374 = ssub.s32 %s41, %s48
      %p375 = scmp.eq.s32.totalorder %s374, 0
      %s377 = sadd.s32 %s376, 1
      %s378 = scalar_select %p375, %s376, %s377
      %p381 = pneg %p375
      %p382 = scmp.eq.s32.totalorder %s41, 1
      %p383 = por %p381, %p382
      %p384 = scmp.ne.s32.totalorder %s376, %s379
      %p385 = scmp.eq.s32.totalorder %s41, 0
      %p386 = por %p384, %p385
      %p387 = scmp.ne.s32.totalorder %s376, %s379
      %p388 = scmp.eq.s32.totalorder %s46, 1
      %p389 = por %p387, %p388
      %p390 = scmp.ne.s32.totalorder %s379, %s380
      %p391 = scmp.eq.s32.totalorder %s46, 0
      %p392 = por %p390, %p391
      %p393 = scmp.ne.s32.totalorder %s379, %s380
      %p394 = scmp.eq.s32.totalorder %s47, 1
      %p395 = por %p393, %p394
      %p397 = scmp.ne.s32.totalorder %s380, %s396
      %p398 = scmp.eq.s32.totalorder %s47, 0
      %p399 = por %p397, %p398
      %p400 = scmp.le.s32.totalorder 1, %s41
      %p401 = scmp.lt.s32.totalorder %s41, 3
      %p402 = pnand %p400, %p401
      %p403 = pneg %p402
      // Predicated region
      $region9: #{_lambda_.4} parent=5 // pred_check
        _
      $region10: #{_lambda_.4} parent=5 // pred_check_branch
        %405 = sbr.rel (%p402) target = $region12
      $region11: #{_lambda_.4} parent=5 // pred_region
        %s406 = ssub.s32 %s41, 1
        // Predicated region
        $region13: #{_lambda_.4} parent=11 // pred_check
          %p407 = pneg %p88
        $region14: #{_lambda_.4} parent=11 // pred_check_branch
          %409 = sbr.rel (%p407) target = $region16
        $region15: #{_lambda_.4} parent=11 // pred_region
          %s411 = ssub.s32 32, 32
          %412 = vsyncadd [#allocation9], %s411
          %s414 = sshll.u32 [#allocation8], 4
          %s415 = int_to_ptr.vmem [resolvable:$true] %s414
          %417 = dma.hbm_to_vmem [thread:$0]  %s1, 32, %s415, [#allocation9]
        $region16: #{_lambda_.4} parent=11 // pred_fallthru
          _
        // Predicated region
        $region17: #{_lambda_.4} parent=11 // pred_check
          %p418 = pneg %p109
        $region18: #{_lambda_.4} parent=11 // pred_check_branch
          %420 = sbr.rel (%p418) target = $region20
        $region19: #{_lambda_.4} parent=11 // pred_region
          %s422 = ssub.s32 512, 512
          %423 = vsyncadd [#allocation9], %s422
          %s424 = sshll.u32 [#allocation10], 4
          %s425 = int_to_ptr.vmem [resolvable:$true] %s424
          %430 = dma.hbm_to_vmem [thread:$0]  %s2, 512, %s425, [#allocation9], 256, 256, 16
        $region20: #{_lambda_.4} parent=11 // pred_fallthru
          _
        // Predicated region
        $region21: #{_lambda_.4} parent=11 // pred_check
          %p431 = pneg %p130
        $region22: #{_lambda_.4} parent=11 // pred_check_branch
          %433 = sbr.rel (%p431) target = $region24
        $region23: #{_lambda_.4} parent=11 // pred_region
          %s435 = ssub.s32 256, 256
          %436 = vsyncadd [#allocation12], %s435
          %s437 = sshll.u32 [#allocation11], 4
          %s438 = int_to_ptr.vmem [resolvable:$true] %s437
          %443 = dma.hbm_to_vmem [thread:$0]  %s3, 256, %s438, [#allocation12], 128, 128, 8
        $region24: #{_lambda_.4} parent=11 // pred_fallthru
          _
        // Predicated region
        $region25: #{_lambda_.4} parent=11 // pred_check
          %p444 = pneg %p151
        $region26: #{_lambda_.4} parent=11 // pred_check_branch
          %446 = sbr.rel (%p444) target = $region28
        $region27: #{_lambda_.4} parent=11 // pred_region
          %s448 = ssub.s32 16, 16
          %449 = vsyncadd [#allocation12], %s448
          %s451 = sshll.u32 [#allocation13], 4
          %s452 = int_to_ptr.vmem [resolvable:$true] %s451
          %454 = dma.hbm_to_vmem [thread:$0]  %s4, 16, %s452, [#allocation12]
        $region28: #{_lambda_.4} parent=11 // pred_fallthru
          _
        // Predicated region
        $region29: #{_lambda_.4} parent=11 // pred_check
          %p455 = pneg %p172
        $region30: #{_lambda_.4} parent=11 // pred_check_branch
          %457 = sbr.rel (%p455) target = $region32
        $region31: #{_lambda_.4} parent=11 // pred_region
          _
        $region32: #{_lambda_.4} parent=11 // pred_fallthru
          _
        // Predicated region
        $region33: #{_lambda_.4} parent=11 // pred_check
          %p458 = pneg %p193
        $region34: #{_lambda_.4} parent=11 // pred_check_branch
          %460 = sbr.rel (%p458) target = $region36
        $region35: #{_lambda_.4} parent=11 // pred_region
          %s462 = ssub.s32 256, 256
          %463 = vsyncadd [#allocation15], %s462
          %s464 = sshll.u32 [#allocation14], 4
          %s465 = int_to_ptr.vmem [resolvable:$true] %s464
          %470 = dma.hbm_to_vmem [thread:$0]  %s6, 256, %s465, [#allocation15], 128, 128, 8
        $region36: #{_lambda_.4} parent=11 // pred_fallthru
          _
        // Predicated region
        $region37: #{_lambda_.4} parent=11 // pred_check
          %p471 = pneg %p214
        $region38: #{_lambda_.4} parent=11 // pred_check_branch
          %473 = sbr.rel (%p471) target = $region40
        $region39: #{_lambda_.4} parent=11 // pred_region
          %s475 = ssub.s32 256, 256
          %476 = vsyncadd [#allocation15], %s475
          %s477 = sshll.u32 [#allocation16], 4
          %s478 = int_to_ptr.vmem [resolvable:$true] %s477
          %483 = dma.hbm_to_vmem [thread:$0]  %s7, 256, %s478, [#allocation15], 128, 128, 8
        $region40: #{_lambda_.4} parent=11 // pred_fallthru
          _
        // Predicated region
        $region41: #{_lambda_.4} parent=11 // pred_check
          %p484 = pneg %p235
        $region42: #{_lambda_.4} parent=11 // pred_check_branch
          %486 = sbr.rel (%p484) target = $region44
        $region43: #{_lambda_.4} parent=11 // pred_region
          %s488 = ssub.s32 32, 32
          %489 = vsyncadd [#allocation18], %s488
          %s491 = sshll.u32 [#allocation17], 4
          %s492 = int_to_ptr.vmem [resolvable:$true] %s491
          %494 = dma.hbm_to_vmem [thread:$0]  %s8, 32, %s492, [#allocation18]
        $region44: #{_lambda_.4} parent=11 // pred_fallthru
          _
        // Predicated region
        $region45: #{_lambda_.4} parent=11 // pred_check
          %p495 = pneg %p256
        $region46: #{_lambda_.4} parent=11 // pred_check_branch
          %497 = sbr.rel (%p495) target = $region48
        $region47: #{_lambda_.4} parent=11 // pred_region
          %s499 = ssub.s32 32, 32
          %500 = vsyncadd [#allocation18], %s499
          %s502 = sshll.u32 [#allocation19], 4
          %s503 = int_to_ptr.vmem [resolvable:$true] %s502
          %505 = dma.hbm_to_vmem [thread:$0]  %s9, 32, %s503, [#allocation18]
        $region48: #{_lambda_.4} parent=11 // pred_fallthru
          _
        // Predicated region
        $region49: #{_lambda_.4} parent=11 // pred_check
          %p506 = pneg %p277
        $region50: #{_lambda_.4} parent=11 // pred_check_branch
          %508 = sbr.rel (%p506) target = $region52
        $region51: #{_lambda_.4} parent=11 // pred_region
          %s510 = ssub.s32 16, 16
          %511 = vsyncadd [#allocation21], %s510
          %s513 = sshll.u32 [#allocation20], 4
          %s514 = int_to_ptr.vmem [resolvable:$true] %s513
          %516 = dma.hbm_to_vmem [thread:$0]  %s10, 16, %s514, [#allocation21]
        $region52: #{_lambda_.4} parent=11 // pred_fallthru
          _
        // Predicated region
        $region53: #{_lambda_.4} parent=11 // pred_check
          %p517 = pneg %p298
        $region54: #{_lambda_.4} parent=11 // pred_check_branch
          %519 = sbr.rel (%p517) target = $region56
        $region55: #{_lambda_.4} parent=11 // pred_region
          _
        $region56: #{_lambda_.4} parent=11 // pred_fallthru
          _
        // Predicated region
        $region57: #{_lambda_.4} parent=11 // pred_check
          %p520 = pneg %p319
        $region58: #{_lambda_.4} parent=11 // pred_check_branch
          %522 = sbr.rel (%p520) target = $region60
        $region59: #{_lambda_.4} parent=11 // pred_region
          %s524 = ssub.s32 128, 128
          %525 = vsyncadd [#allocation21], %s524
          %s526 = sshll.u32 [#allocation22], 4
          %s527 = int_to_ptr.vmem [resolvable:$true] %s526
          %532 = dma.hbm_to_vmem [thread:$0]  %s12, 128, %s527, [#allocation21], 64, 64, 4
        $region60: #{_lambda_.4} parent=11 // pred_fallthru
          _
        // Predicated region
        $region61: #{_lambda_.4} parent=11 // pred_check
          %p533 = pneg %p340
        $region62: #{_lambda_.4} parent=11 // pred_check_branch
          %535 = sbr.rel (%p533) target = $region64
        $region63: #{_lambda_.4} parent=11 // pred_region
          %s537 = ssub.s32 256, 256
          %538 = vsyncadd [#allocation24], %s537
          %s539 = sshll.u32 [#allocation23], 4
          %s540 = int_to_ptr.vmem [resolvable:$true] %s539
          %545 = dma.hbm_to_vmem [thread:$0]  %s13, 256, %s540, [#allocation24], 128, 128, 8
        $region64: #{_lambda_.4} parent=11 // pred_fallthru
          _
      $region12: #{_lambda_.4} parent=5 // pred_fallthru
        _
      %p546 = scmp.lt.s32.totalorder %s41, 2
      // Predicated region
      $region65: #{_lambda_.4} parent=5 // pred_check
        %p547 = pneg %p546
      $region66: #{_lambda_.4} parent=5 // pred_check_branch
        %549 = sbr.rel (%p547) target = $region68
      $region67: #{_lambda_.4} parent=5 // pred_region
        // Predicated region
        $region69: #{_lambda_.4} parent=67 // pred_check
          %p550 = pneg %p61
        $region70: #{_lambda_.4} parent=67 // pred_check_branch
          %552 = sbr.rel (%p550) target = $region72
        $region71: #{_lambda_.4} parent=67 // pred_region
          %s553 = sand.u32 %s51, 1
          %s554 = scalar_lea.sflag [#allocation6], %s553
          %s555 = sand.u32 %s51, 1
          %s556 = smul.addr %s555, 24
          %s557 = scalar_lea.vmem [#allocation5], %s556
          %s559 = ssub.s32 384, 384
          %560 = vsyncadd %s554, %s559
          %s561 = smul.addr %s41, 6
          %s562 = smul.addr %s561, 64
          %s563 = scalar_lea.hbm %s0, %s562
          %s564 = sshll.u32 %s557, 4
          %s565 = int_to_ptr.vmem [resolvable:$true] %s564
          %570 = dma.hbm_to_vmem [thread:$0]  %s563, 384, %s565, %s554, 192, 192, 12
        $region72: #{_lambda_.4} parent=67 // pred_fallthru
          _
      $region68: #{_lambda_.4} parent=5 // pred_fallthru
        _
      %p571 = scmp.le.s32.totalorder 1, %s41
      %p572 = scmp.lt.s32.totalorder %s41, 3
      %p573 = pnand %p571, %p572
      %p574 = pneg %p573
      // Predicated region
      $region73: #{_lambda_.4} parent=5 // pred_check
        _
      $region74: #{_lambda_.4} parent=5 // pred_check_branch
        %576 = sbr.rel (%p573) target = $region76
      $region75: #{_lambda_.4} parent=5 // pred_region
        %s577 = ssub.s32 %s41, 1
        %s578 = sand.u32 %s54, 1
        %s579 = scalar_lea.sflag [#allocation6], %s578
        %s580 = sand.u32 %s54, 1
        %s581 = smul.addr %s580, 24
        %s582 = scalar_lea.vmem [#allocation5], %s581
        // Predicated region
        $region77: #{_lambda_.4} parent=75 // pred_check
          %p583 = pneg %p67
        $region78: #{_lambda_.4} parent=75 // pred_check_branch
          %585 = sbr.rel (%p583) target = $region80
        $region79: #{_lambda_.4} parent=75 // pred_region
          %586 = dma.done %s579, 384
        $region80: #{_lambda_.4} parent=75 // pred_fallthru
          _
        // Predicated region
        $region81: #{_lambda_.4} parent=75 // pred_check
          %p587 = pneg %p88
        $region82: #{_lambda_.4} parent=75 // pred_check_branch
          %589 = sbr.rel (%p587) target = $region84
        $region83: #{_lambda_.4} parent=75 // pred_region
          %590 = dma.done [#allocation9], 32
        $region84: #{_lambda_.4} parent=75 // pred_fallthru
          _
        // Predicated region
        $region85: #{_lambda_.4} parent=75 // pred_check
          %p591 = pneg %p109
        $region86: #{_lambda_.4} parent=75 // pred_check_branch
          %593 = sbr.rel (%p591) target = $region88
        $region87: #{_lambda_.4} parent=75 // pred_region
          %594 = dma.done [#allocation9], 512
        $region88: #{_lambda_.4} parent=75 // pred_fallthru
          _
        // Predicated region
        $region89: #{_lambda_.4} parent=75 // pred_check
          %p595 = pneg %p130
        $region90: #{_lambda_.4} parent=75 // pred_check_branch
          %597 = sbr.rel (%p595) target = $region92
        $region91: #{_lambda_.4} parent=75 // pred_region
          %598 = dma.done [#allocation12], 256
        $region92: #{_lambda_.4} parent=75 // pred_fallthru
          _
        // Predicated region
        $region93: #{_lambda_.4} parent=75 // pred_check
          %p599 = pneg %p151
        $region94: #{_lambda_.4} parent=75 // pred_check_branch
          %601 = sbr.rel (%p599) target = $region96
        $region95: #{_lambda_.4} parent=75 // pred_region
          %602 = dma.done [#allocation12], 16
        $region96: #{_lambda_.4} parent=75 // pred_fallthru
          _
        // Predicated region
        $region97: #{_lambda_.4} parent=75 // pred_check
          %p603 = pneg %p193
        $region98: #{_lambda_.4} parent=75 // pred_check_branch
          %605 = sbr.rel (%p603) target = $region100
        $region99: #{_lambda_.4} parent=75 // pred_region
          %606 = dma.done [#allocation15], 256
        $region100: #{_lambda_.4} parent=75 // pred_fallthru
          _
        // Predicated region
        $region101: #{_lambda_.4} parent=75 // pred_check
          %p607 = pneg %p214
        $region102: #{_lambda_.4} parent=75 // pred_check_branch
          %609 = sbr.rel (%p607) target = $region104
        $region103: #{_lambda_.4} parent=75 // pred_region
          %610 = dma.done [#allocation15], 256
        $region104: #{_lambda_.4} parent=75 // pred_fallthru
          _
        // Predicated region
        $region105: #{_lambda_.4} parent=75 // pred_check
          %p611 = pneg %p235
        $region106: #{_lambda_.4} parent=75 // pred_check_branch
          %613 = sbr.rel (%p611) target = $region108
        $region107: #{_lambda_.4} parent=75 // pred_region
          %614 = dma.done [#allocation18], 32
        $region108: #{_lambda_.4} parent=75 // pred_fallthru
          _
        // Predicated region
        $region109: #{_lambda_.4} parent=75 // pred_check
          %p615 = pneg %p256
        $region110: #{_lambda_.4} parent=75 // pred_check_branch
          %617 = sbr.rel (%p615) target = $region112
        $region111: #{_lambda_.4} parent=75 // pred_region
          %618 = dma.done [#allocation18], 32
        $region112: #{_lambda_.4} parent=75 // pred_fallthru
          _
        // Predicated region
        $region113: #{_lambda_.4} parent=75 // pred_check
          %p619 = pneg %p277
        $region114: #{_lambda_.4} parent=75 // pred_check_branch
          %621 = sbr.rel (%p619) target = $region116
        $region115: #{_lambda_.4} parent=75 // pred_region
          %622 = dma.done [#allocation21], 16
        $region116: #{_lambda_.4} parent=75 // pred_fallthru
          _
        // Predicated region
        $region117: #{_lambda_.4} parent=75 // pred_check
          %p623 = pneg %p319
        $region118: #{_lambda_.4} parent=75 // pred_check_branch
          %625 = sbr.rel (%p623) target = $region120
        $region119: #{_lambda_.4} parent=75 // pred_region
          %626 = dma.done [#allocation21], 128
        $region120: #{_lambda_.4} parent=75 // pred_fallthru
          _
        // Predicated region
        $region121: #{_lambda_.4} parent=75 // pred_check
          %p627 = pneg %p340
        $region122: #{_lambda_.4} parent=75 // pred_check_branch
          %629 = sbr.rel (%p627) target = $region124
        $region123: #{_lambda_.4} parent=75 // pred_region
          %630 = dma.done [#allocation24], 256
        $region124: #{_lambda_.4} parent=75 // pred_fallthru
          _
        %s631 = sand.u32 %s54, 1
        %s632 = scalar_lea.sflag [#allocation6], %s631
        %s633 = sand.u32 %s54, 1
        %s634 = smul.addr %s633, 24
        %s635 = scalar_lea.vmem [#allocation5], %s634
        %p636 = pneg %p67
        %p637 = pneg %p64
        %p638 = pneg %p88
        %p639 = pneg %p85
        %p640 = pneg %p109
        %p641 = pneg %p106
        %p642 = pneg %p130
        %p643 = pneg %p127
        %p644 = pneg %p151
        %p645 = pneg %p148
        %p646 = pneg %p172
        %p647 = pneg %p169
        %p648 = pneg %p193
        %p649 = pneg %p190
        %p650 = pneg %p214
        %p651 = pneg %p211
        %p652 = pneg %p235
        %p653 = pneg %p232
        %p654 = pneg %p256
        %p655 = pneg %p253
        %p656 = pneg %p277
        %p657 = pneg %p274
        %p658 = pneg %p298
        %p659 = pneg %p295
        %p660 = pneg %p319
        %p661 = pneg %p316
        %p662 = pneg %p340
        %p663 = pneg %p337
        %p664 = pneg %p366
        %p665 = pneg %p363
        %s666 = sand.u32 %s353, 1
        %s667 = scalar_lea.sflag [#allocation7], %s666
        %s668 = sand.u32 %s353, 1
        %s669 = smul.addr %s668, 16
        %s670 = scalar_lea.vmem [#allocation25], %s669
        %p671 = pneg %p392
        %p672 = pneg %p389
        %s673 = sand.u32 %s379, 1
        %s674 = scalar_lea.sflag [#allocation27], %s673
        %s675 = sand.u32 %s379, 1
        %s676 = scalar_lea.vmem [#allocation26], %s675
        %v678 = vld [vmem:[%s582] sm:$0xff]
        %v679 = vld [vmem:[%s582 + $0x8] sm:$0xf]
        %v680 = vld [vmem:[%s582 + $0xc] sm:$0xff]
        %v681 = vld [vmem:[%s582 + $0x14] sm:$0xf]
        %v682 = vld [vmem:[#allocation8] sm:$0x3]
        %v685 = vunpack.c.l.b16 %v678
        %v686 = vunpack.c.h.b16 %v678
        %v687 = vunpack.c.l.b16 %v680
        %v688 = vunpack.c.h.b16 %v680
        %v689 = vpack.c.b16 %v687, %v685
        %v690 = vpack.c.b16 %v688, %v686
        %693 = vst [vmem:[#allocation2] sm:$0xff] %v689
        %694 = vst [vmem:[#allocation2 + $0x8] sm:$0xff] %v690
        %v697 = vunpack.c.l.b16 %v679
        %v698 = vunpack.c.l.b16 %v681
        %v699 = vpack.c.b16 %v698, %v697
        %700 = vrot.lane.b32.xlu0 %v689, 127
        %v701 = vpop.permute.xlu0 %700
        %702 = vrot.lane.b32.xlu0 %v690, 127
        %v703 = vpop.permute.xlu0 %702
        %704 = vrot.lane.b32.xlu0 %v699, 127
        %v705 = vpop.permute.xlu0 %704
        %vm706 = vcmask 1039360
        %v707 = vsel %vm706, %v701, %v703
        %v708 = vsel %vm706, %v703, %v705
        %711 = vst [vmem:[#allocation2 + $0x10] sm:$0xff] %v707
        %712 = vst [vmem:[#allocation2 + $0x18] sm:$0xff] %v708
        %713 = vrot.lane.b32.xlu0 %v689, 126
        %v714 = vpop.permute.xlu0 %713
        %715 = vrot.lane.b32.xlu0 %v690, 126
        %v716 = vpop.permute.xlu0 %715
        %717 = vrot.lane.b32.xlu0 %v699, 126
        %v718 = vpop.permute.xlu0 %717
        %vm719 = vcmask 1031168
        %v720 = vsel %vm719, %v714, %v716
        %v721 = vsel %vm719, %v716, %v718
        %724 = vst [vmem:[#allocation2 + $0x20] sm:$0xff] %v720
        %725 = vst [vmem:[#allocation2 + $0x28] sm:$0xff] %v721
        %726 = vrot.lane.b32.xlu0 %v689, 122
        %v727 = vpop.permute.xlu0 %726
        %728 = vrot.lane.b32.xlu0 %v690, 122
        %v729 = vpop.permute.xlu0 %728
        %730 = vrot.lane.b32.xlu0 %v699, 122
        %v731 = vpop.permute.xlu0 %730
        %vm732 = vcmask 998400
        %v733 = vsel %vm732, %v727, %v729
        %v734 = vsel %vm732, %v729, %v731
        %737 = vst [vmem:[#allocation2 + $0x30] sm:$0xff] %v733
        %738 = vst [vmem:[#allocation2 + $0x38] sm:$0xff] %v734
        %739 = vrot.lane.b32.xlu0 %v689, 121
        %v740 = vpop.permute.xlu0 %739
        %741 = vrot.lane.b32.xlu0 %v690, 121
        %v742 = vpop.permute.xlu0 %741
        %743 = vrot.lane.b32.xlu0 %v699, 121
        %v744 = vpop.permute.xlu0 %743
        %vm745 = vcmask 990208
        %v746 = vsel %vm745, %v740, %v742
        %v747 = vsel %vm745, %v742, %v744
        %750 = vst [vmem:[#allocation2 + $0x40] sm:$0xff] %v746
        %751 = vst [vmem:[#allocation2 + $0x48] sm:$0xff] %v747
        %752 = vrot.lane.b32.xlu0 %v689, 120
        %v753 = vpop.permute.xlu0 %752
        %754 = vrot.lane.b32.xlu0 %v690, 120
        %v755 = vpop.permute.xlu0 %754
        %756 = vrot.lane.b32.xlu0 %v699, 120
        %v757 = vpop.permute.xlu0 %756
        %vm758 = vcmask 982016
        %v759 = vsel %vm758, %v753, %v755
        %v760 = vsel %vm758, %v755, %v757
        %763 = vst [vmem:[#allocation2 + $0x50] sm:$0xff] %v759
        %764 = vst [vmem:[#allocation2 + $0x58] sm:$0xff] %v760
        %765 = vrot.lane.b32.xlu0 %v689, 116
        %v766 = vpop.permute.xlu0 %765
        %767 = vrot.lane.b32.xlu0 %v690, 116
        %v768 = vpop.permute.xlu0 %767
        %769 = vrot.lane.b32.xlu0 %v699, 116
        %v770 = vpop.permute.xlu0 %769
        %vm771 = vcmask 949248
        %v772 = vsel %vm771, %v766, %v768
        %v773 = vsel %vm771, %v768, %v770
        %776 = vst [vmem:[#allocation2 + $0x60] sm:$0xff] %v772
        %777 = vst [vmem:[#allocation2 + $0x68] sm:$0xff] %v773
        %778 = vrot.lane.b32.xlu0 %v689, 115
        %v779 = vpop.permute.xlu0 %778
        %780 = vrot.lane.b32.xlu0 %v690, 115
        %v781 = vpop.permute.xlu0 %780
        %782 = vrot.lane.b32.xlu0 %v699, 115
        %v783 = vpop.permute.xlu0 %782
        %vm784 = vcmask 941056
        %v785 = vsel %vm784, %v779, %v781
        %v786 = vsel %vm784, %v781, %v783
        %789 = vst [vmem:[#allocation2 + $0x70] sm:$0xff] %v785
        %790 = vst [vmem:[#allocation2 + $0x78] sm:$0xff] %v786
        %791 = vrot.lane.b32.xlu0 %v689, 114
        %v792 = vpop.permute.xlu0 %791
        %793 = vrot.lane.b32.xlu0 %v690, 114
        %v794 = vpop.permute.xlu0 %793
        %795 = vrot.lane.b32.xlu0 %v699, 114
        %v796 = vpop.permute.xlu0 %795
        %vm797 = vcmask 932864
        %v798 = vsel %vm797, %v792, %v794
        %v799 = vsel %vm797, %v794, %v796
        %802 = vst [vmem:[#allocation2 + $0x80] sm:$0xff] %v798
        %803 = vst [vmem:[#allocation2 + $0x88] sm:$0xff] %v799
        %804 = vrot.lane.b32.xlu0 %v689, 92
        %v805 = vpop.permute.xlu0 %804
        %806 = vrot.lane.b32.xlu0 %v690, 92
        %v807 = vpop.permute.xlu0 %806
        %808 = vrot.lane.b32.xlu0 %v699, 92
        %v809 = vpop.permute.xlu0 %808
        %vm810 = vcmask 752640
        %v811 = vsel %vm810, %v805, %v807
        %v812 = vsel %vm810, %v807, %v809
        %815 = vst [vmem:[#allocation2 + $0x90] sm:$0xff] %v811
        %816 = vst [vmem:[#allocation2 + $0x98] sm:$0xff] %v812
        %817 = vrot.lane.b32.xlu0 %v689, 91
        %v818 = vpop.permute.xlu0 %817
        %819 = vrot.lane.b32.xlu0 %v690, 91
        %v820 = vpop.permute.xlu0 %819
        %821 = vrot.lane.b32.xlu0 %v699, 91
        %v822 = vpop.permute.xlu0 %821
        %vm823 = vcmask 744448
        %v824 = vsel %vm823, %v818, %v820
        %v825 = vsel %vm823, %v820, %v822
        %828 = vst [vmem:[#allocation2 + $0xa0] sm:$0xff] %v824
        %829 = vst [vmem:[#allocation2 + $0xa8] sm:$0xff] %v825
        %830 = vrot.lane.b32.xlu0 %v689, 90
        %v831 = vpop.permute.xlu0 %830
        %832 = vrot.lane.b32.xlu0 %v690, 90
        %v833 = vpop.permute.xlu0 %832
        %834 = vrot.lane.b32.xlu0 %v699, 90
        %v835 = vpop.permute.xlu0 %834
        %vm836 = vcmask 736256
        %v837 = vsel %vm836, %v831, %v833
        %v838 = vsel %vm836, %v833, %v835
        %841 = vst [vmem:[#allocation2 + $0xb0] sm:$0xff] %v837
        %842 = vst [vmem:[#allocation2 + $0xb8] sm:$0xff] %v838
        %843 = vrot.lane.b32.xlu0 %v689, 86
        %v844 = vpop.permute.xlu0 %843
        %845 = vrot.lane.b32.xlu0 %v690, 86
        %v846 = vpop.permute.xlu0 %845
        %847 = vrot.lane.b32.xlu0 %v699, 86
        %v848 = vpop.permute.xlu0 %847
        %vm849 = vcmask 703488
        %v850 = vsel %vm849, %v844, %v846
        %v851 = vsel %vm849, %v846, %v848
        %854 = vst [vmem:[#allocation2 + $0xc0] sm:$0xff] %v850
        %855 = vst [vmem:[#allocation2 + $0xc8] sm:$0xff] %v851
        %856 = vrot.lane.b32.xlu0 %v689, 85
        %v857 = vpop.permute.xlu0 %856
        %858 = vrot.lane.b32.xlu0 %v690, 85
        %v859 = vpop.permute.xlu0 %858
        %860 = vrot.lane.b32.xlu0 %v699, 85
        %v861 = vpop.permute.xlu0 %860
        %vm862 = vcmask 695296
        %v863 = vsel %vm862, %v857, %v859
        %v864 = vsel %vm862, %v859, %v861
        %867 = vst [vmem:[#allocation2 + $0xd0] sm:$0xff] %v863
        %868 = vst [vmem:[#allocation2 + $0xd8] sm:$0xff] %v864
        %869 = vrot.lane.b32.xlu0 %v689, 84
        %v870 = vpop.permute.xlu0 %869
        %871 = vrot.lane.b32.xlu0 %v690, 84
        %v872 = vpop.permute.xlu0 %871
        %873 = vrot.lane.b32.xlu0 %v699, 84
        %v874 = vpop.permute.xlu0 %873
        %vm875 = vcmask 687104
        %v876 = vsel %vm875, %v870, %v872
        %v877 = vsel %vm875, %v872, %v874
        %880 = vst [vmem:[#allocation2 + $0xe0] sm:$0xff] %v876
        %881 = vst [vmem:[#allocation2 + $0xe8] sm:$0xff] %v877
        %882 = vrot.lane.b32.xlu0 %v689, 80
        %v883 = vpop.permute.xlu0 %882
        %884 = vrot.lane.b32.xlu0 %v690, 80
        %v885 = vpop.permute.xlu0 %884
        %886 = vrot.lane.b32.xlu0 %v699, 80
        %v887 = vpop.permute.xlu0 %886
        %vm888 = vcmask 654336
        %v889 = vsel %vm888, %v883, %v885
        %v890 = vsel %vm888, %v885, %v887
        %893 = vst [vmem:[#allocation2 + $0xf0] sm:$0xff] %v889
        %894 = vst [vmem:[#allocation2 + $0xf8] sm:$0xff] %v890
        %895 = vrot.lane.b32.xlu0 %v689, 79
        %v896 = vpop.permute.xlu0 %895
        %897 = vrot.lane.b32.xlu0 %v690, 79
        %v898 = vpop.permute.xlu0 %897
        %899 = vrot.lane.b32.xlu0 %v699, 79
        %v900 = vpop.permute.xlu0 %899
        %vm901 = vcmask 646144
        %v902 = vsel %vm901, %v896, %v898
        %v903 = vsel %vm901, %v898, %v900
        %906 = vst [vmem:[#allocation2 + $0x100] sm:$0xff] %v902
        %907 = vst [vmem:[#allocation2 + $0x108] sm:$0xff] %v903
        %908 = vrot.lane.b32.xlu0 %v689, 78
        %v909 = vpop.permute.xlu0 %908
        %910 = vrot.lane.b32.xlu0 %v690, 78
        %v911 = vpop.permute.xlu0 %910
        %912 = vrot.lane.b32.xlu0 %v699, 78
        %v913 = vpop.permute.xlu0 %912
        %vm914 = vcmask 637952
        %v915 = vsel %vm914, %v909, %v911
        %v916 = vsel %vm914, %v911, %v913
        %919 = vst [vmem:[#allocation2 + $0x110] sm:$0xff] %v915
        %920 = vst [vmem:[#allocation2 + $0x118] sm:$0xff] %v916
        %921 = vrot.lane.b32.xlu0 %v689, 56
        %v922 = vpop.permute.xlu0 %921
        %923 = vrot.lane.b32.xlu0 %v690, 56
        %v924 = vpop.permute.xlu0 %923
        %925 = vrot.lane.b32.xlu0 %v699, 56
        %v926 = vpop.permute.xlu0 %925
        %vm927 = vcmask 457728
        %v928 = vsel %vm927, %v922, %v924
        %v929 = vsel %vm927, %v924, %v926
        %932 = vst [vmem:[#allocation2 + $0x120] sm:$0xff] %v928
        %933 = vst [vmem:[#allocation2 + $0x128] sm:$0xff] %v929
        %934 = vrot.lane.b32.xlu0 %v689, 55
        %v935 = vpop.permute.xlu0 %934
        %936 = vrot.lane.b32.xlu0 %v690, 55
        %v937 = vpop.permute.xlu0 %936
        %938 = vrot.lane.b32.xlu0 %v699, 55
        %v939 = vpop.permute.xlu0 %938
        %vm940 = vcmask 449536
        %v941 = vsel %vm940, %v935, %v937
        %v942 = vsel %vm940, %v937, %v939
        %945 = vst [vmem:[#allocation2 + $0x130] sm:$0xff] %v941
        %946 = vst [vmem:[#allocation2 + $0x138] sm:$0xff] %v942
        %947 = vrot.lane.b32.xlu0 %v689, 54
        %v948 = vpop.permute.xlu0 %947
        %949 = vrot.lane.b32.xlu0 %v690, 54
        %v950 = vpop.permute.xlu0 %949
        %951 = vrot.lane.b32.xlu0 %v699, 54
        %v952 = vpop.permute.xlu0 %951
        %vm953 = vcmask 441344
        %v954 = vsel %vm953, %v948, %v950
        %v955 = vsel %vm953, %v950, %v952
        %958 = vst [vmem:[#allocation2 + $0x140] sm:$0xff] %v954
        %959 = vst [vmem:[#allocation2 + $0x148] sm:$0xff] %v955
        %960 = vrot.lane.b32.xlu0 %v689, 50
        %v961 = vpop.permute.xlu0 %960
        %962 = vrot.lane.b32.xlu0 %v690, 50
        %v963 = vpop.permute.xlu0 %962
        %964 = vrot.lane.b32.xlu0 %v699, 50
        %v965 = vpop.permute.xlu0 %964
        %vm966 = vcmask 408576
        %v967 = vsel %vm966, %v961, %v963
        %v968 = vsel %vm966, %v963, %v965
        %971 = vst [vmem:[#allocation2 + $0x150] sm:$0xff] %v967
        %972 = vst [vmem:[#allocation2 + $0x158] sm:$0xff] %v968
        %973 = vrot.lane.b32.xlu0 %v689, 49
        %v974 = vpop.permute.xlu0 %973
        %975 = vrot.lane.b32.xlu0 %v690, 49
        %v976 = vpop.permute.xlu0 %975
        %977 = vrot.lane.b32.xlu0 %v699, 49
        %v978 = vpop.permute.xlu0 %977
        %vm979 = vcmask 400384
        %v980 = vsel %vm979, %v974, %v976
        %v981 = vsel %vm979, %v976, %v978
        %984 = vst [vmem:[#allocation2 + $0x160] sm:$0xff] %v980
        %985 = vst [vmem:[#allocation2 + $0x168] sm:$0xff] %v981
        %986 = vrot.lane.b32.xlu0 %v689, 48
        %v987 = vpop.permute.xlu0 %986
        %988 = vrot.lane.b32.xlu0 %v690, 48
        %v989 = vpop.permute.xlu0 %988
        %990 = vrot.lane.b32.xlu0 %v699, 48
        %v991 = vpop.permute.xlu0 %990
        %vm992 = vcmask 392192
        %v993 = vsel %vm992, %v987, %v989
        %v994 = vsel %vm992, %v989, %v991
        %997 = vst [vmem:[#allocation2 + $0x170] sm:$0xff] %v993
        %998 = vst [vmem:[#allocation2 + $0x178] sm:$0xff] %v994
        %999 = vrot.lane.b32.xlu0 %v689, 44
        %v1000 = vpop.permute.xlu0 %999
        %1001 = vrot.lane.b32.xlu0 %v690, 44
        %v1002 = vpop.permute.xlu0 %1001
        %1003 = vrot.lane.b32.xlu0 %v699, 44
        %v1004 = vpop.permute.xlu0 %1003
        %vm1005 = vcmask 359424
        %v1006 = vsel %vm1005, %v1000, %v1002
        %v1007 = vsel %vm1005, %v1002, %v1004
        %1010 = vst [vmem:[#allocation2 + $0x180] sm:$0xff] %v1006
        %1011 = vst [vmem:[#allocation2 + $0x188] sm:$0xff] %v1007
        %1012 = vrot.lane.b32.xlu0 %v689, 43
        %v1013 = vpop.permute.xlu0 %1012
        %1014 = vrot.lane.b32.xlu0 %v690, 43
        %v1015 = vpop.permute.xlu0 %1014
        %1016 = vrot.lane.b32.xlu0 %v699, 43
        %v1017 = vpop.permute.xlu0 %1016
        %vm1018 = vcmask 351232
        %v1019 = vsel %vm1018, %v1013, %v1015
        %v1020 = vsel %vm1018, %v1015, %v1017
        %1023 = vst [vmem:[#allocation2 + $0x190] sm:$0xff] %v1019
        %1024 = vst [vmem:[#allocation2 + $0x198] sm:$0xff] %v1020
        %1025 = vrot.lane.b32.xlu0 %v689, 42
        %v1026 = vpop.permute.xlu0 %1025
        %1027 = vrot.lane.b32.xlu0 %v690, 42
        %v1028 = vpop.permute.xlu0 %1027
        %1029 = vrot.lane.b32.xlu0 %v699, 42
        %v1030 = vpop.permute.xlu0 %1029
        %vm1031 = vcmask 343040
        %v1032 = vsel %vm1031, %v1026, %v1028
        %v1033 = vsel %vm1031, %v1028, %v1030
        %1036 = vst [vmem:[#allocation2 + $0x1a0] sm:$0xff] %v1032
        %1037 = vst [vmem:[#allocation2 + $0x1a8] sm:$0xff] %v1033
        %v1038 = vld [vmem:[#allocation10] sm:$0xff]
        %v1039 = vld [vmem:[#allocation10 + $0x8] sm:$0xff]
        %v1040 = vld [vmem:[#allocation10 + $0x10] sm:$0xff]
        %v1041 = vld [vmem:[#allocation10 + $0x18] sm:$0xff]
        %v1042 = vld [vmem:[#allocation2] sm:$0xff]
        %v1043 = vld [vmem:[#allocation2 + $0x8] sm:$0xff]
        %v1044 = vld [vmem:[#allocation2 + $0x10] sm:$0xff]
        %v1045 = vld [vmem:[#allocation2 + $0x18] sm:$0xff]
        %v1046 = vld [vmem:[#allocation2 + $0x20] sm:$0xff]
        %v1047 = vld [vmem:[#allocation2 + $0x28] sm:$0xff]
        %v1048 = vld [vmem:[#allocation2 + $0x30] sm:$0xff]
        %v1049 = vld [vmem:[#allocation2 + $0x38] sm:$0xff]
        %v1050 = vld [vmem:[#allocation2 + $0x40] sm:$0xff]
        %v1051 = vld [vmem:[#allocation2 + $0x48] sm:$0xff]
        %v1052 = vld [vmem:[#allocation2 + $0x50] sm:$0xff]
        %v1053 = vld [vmem:[#allocation2 + $0x58] sm:$0xff]
        %v1054 = vld [vmem:[#allocation2 + $0x60] sm:$0xff]
        %v1055 = vld [vmem:[#allocation2 + $0x68] sm:$0xff]
        %v1056 = vld [vmem:[#allocation2 + $0x70] sm:$0xff]
        %v1057 = vld [vmem:[#allocation2 + $0x78] sm:$0xff]
        %v1058 = vld [vmem:[#allocation2 + $0x80] sm:$0xff]
        %v1059 = vld [vmem:[#allocation2 + $0x88] sm:$0xff]
        %v1060 = vld [vmem:[#allocation2 + $0x90] sm:$0xff]
        %v1061 = vld [vmem:[#allocation2 + $0x98] sm:$0xff]
        %v1062 = vld [vmem:[#allocation2 + $0xa0] sm:$0xff]
        %v1063 = vld [vmem:[#allocation2 + $0xa8] sm:$0xff]
        %v1064 = vld [vmem:[#allocation2 + $0xb0] sm:$0xff]
        %v1065 = vld [vmem:[#allocation2 + $0xb8] sm:$0xff]
        %v1066 = vld [vmem:[#allocation2 + $0xc0] sm:$0xff]
        %v1067 = vld [vmem:[#allocation2 + $0xc8] sm:$0xff]
        %v1068 = vld [vmem:[#allocation2 + $0xd0] sm:$0xff]
        %v1069 = vld [vmem:[#allocation2 + $0xd8] sm:$0xff]
        %v1070 = vld [vmem:[#allocation2 + $0xe0] sm:$0xff]
        %v1071 = vld [vmem:[#allocation2 + $0xe8] sm:$0xff]
        %v1072 = vld [vmem:[#allocation2 + $0xf0] sm:$0xff]
        %v1073 = vld [vmem:[#allocation2 + $0xf8] sm:$0xff]
        %v1074 = vld [vmem:[#allocation2 + $0x100] sm:$0xff]
        %v1075 = vld [vmem:[#allocation2 + $0x108] sm:$0xff]
        %v1076 = vld [vmem:[#allocation2 + $0x110] sm:$0xff]
        %v1077 = vld [vmem:[#allocation2 + $0x118] sm:$0xff]
        %v1078 = vld [vmem:[#allocation2 + $0x120] sm:$0xff]
        %v1079 = vld [vmem:[#allocation2 + $0x128] sm:$0xff]
        %v1080 = vld [vmem:[#allocation2 + $0x130] sm:$0xff]
        %v1081 = vld [vmem:[#allocation2 + $0x138] sm:$0xff]
        %v1082 = vld [vmem:[#allocation2 + $0x140] sm:$0xff]
        %v1083 = vld [vmem:[#allocation2 + $0x148] sm:$0xff]
        %v1084 = vld [vmem:[#allocation2 + $0x150] sm:$0xff]
        %v1085 = vld [vmem:[#allocation2 + $0x158] sm:$0xff]
        %v1086 = vld [vmem:[#allocation2 + $0x160] sm:$0xff]
        %v1087 = vld [vmem:[#allocation2 + $0x168] sm:$0xff]
        %v1088 = vld [vmem:[#allocation2 + $0x170] sm:$0xff]
        %v1089 = vld [vmem:[#allocation2 + $0x178] sm:$0xff]
        %v1090 = vld [vmem:[#allocation2 + $0x180] sm:$0xff]
        %v1091 = vld [vmem:[#allocation2 + $0x188] sm:$0xff]
        %v1092 = vld [vmem:[#allocation2 + $0x190] sm:$0xff]
        %v1093 = vld [vmem:[#allocation2 + $0x198] sm:$0xff]
        %v1094 = vld [vmem:[#allocation2 + $0x1a0] sm:$0xff]
        %v1095 = vld [vmem:[#allocation2 + $0x1a8] sm:$0xff]
        %v1096 = vld [vmem:[#allocation11] sm:$0xff]
        %v1097 = vld [vmem:[#allocation11 + $0x8] sm:$0xff]
        %1099 = vset.pattern.permute.xlu0 0
        %1100 = vperm.xlu0 %1099, %v1096
        %v1101 = vpop.permute.xlu0 %1100
        %1104 = vset.pattern.permute.xlu0 0
        %1105 = vperm.xlu0 %1104, %v1097
        %v1106 = vpop.permute.xlu0 %1105
        %v1112 = vunpack.c.l.b16 %v1038
        %v1113 = vunpack.c.h.b16 %v1038
        %v1114 = vunpack.c.l.b16 %v1039
        %v1115 = vunpack.c.h.b16 %v1039
        %v1116 = vunpack.c.l.b16 %v1040
        %v1117 = vunpack.c.h.b16 %v1040
        %v1118 = vunpack.c.l.b16 %v1041
        %v1119 = vunpack.c.h.b16 %v1041
        %v1120 = vpack.c.b16 %v1116, %v1112
        %v1121 = vpack.c.b16 %v1117, %v1113
        %v1122 = vpack.c.b16 %v1118, %v1114
        %v1123 = vpack.c.b16 %v1119, %v1115
        %vm1127 = vcmask 392192
        %v1129 = vsel %vm1127, %v1123, 0
        %1131 = vmatprep.subr.bf16.mxu0 %v1043
        %1132 = vmatpush1.bf16.msra.mxu0 %v1042
        %1133 = vmatprep.subr.bf16.mxu0 %v1045
        %1134 = vmatpush1.bf16.msra.mxu0 %v1044
        %1135 = vmatprep.subr.bf16.mxu0 %v1047
        %1136 = vmatpush1.bf16.msra.mxu0 %v1046
        %1137 = vmatprep.subr.bf16.mxu0 %v1049
        %1138 = vmatpush1.bf16.msra.mxu0 %v1048
        %1139 = vmatprep.subr.bf16.mxu0 %v1051
        %1140 = vmatpush1.bf16.msra.mxu0 %v1050
        %1141 = vmatprep.subr.bf16.mxu0 %v1053
        %1142 = vmatpush1.bf16.msra.mxu0 %v1052
        %1143 = vmatprep.subr.bf16.mxu0 %v1055
        %1144 = vmatpush1.bf16.msra.mxu0 %v1054
        %1145 = vmatprep.subr.bf16.mxu0 %v1057
        %1146 = vmatpush1.bf16.msra.mxu0 %v1056
        %1147 = vmatprep.subr.bf16.mxu0 %v1059
        %1148 = vmatpush1.bf16.msra.mxu0 %v1058
        %1149 = vmatprep.subr.bf16.mxu0 %v1061
        %1150 = vmatpush1.bf16.msra.mxu0 %v1060
        %1151 = vmatprep.subr.bf16.mxu0 %v1063
        %1152 = vmatpush1.bf16.msra.mxu0 %v1062
        %1153 = vmatprep.subr.bf16.mxu0 %v1065
        %1154 = vmatpush1.bf16.msra.mxu0 %v1064
        %1155 = vmatprep.subr.bf16.mxu0 %v1067
        %1156 = vmatpush1.bf16.msra.mxu0 %v1066
        %1157 = vmatprep.subr.bf16.mxu0 %v1069
        %1158 = vmatpush1.bf16.msra.mxu0 %v1068
        %1159 = vmatprep.subr.bf16.mxu0 %v1071
        %1160 = vmatpush1.bf16.msra.mxu0 %v1070
        %1161 = vmatprep.subr.bf16.mxu0 %v1073
        %1162 = vmatpush1.bf16.msra.mxu0 %v1072
        %1163 = vmatprep.mubr.bf16.mxu0 %v1121
        %1164 = vmatmul.mubr.bf16.gmra.mrb[0].mxu0 %v1120
        %v1165 = vpop.f32.mrb[0].mxu0
        %v1166 = vadd.f32 %v1101, %v1165
        %v1167 = vpop.f32.mrb[0].mxu0
        %v1168 = vadd.f32 %v1101, %v1167
        %v1169 = vpop.f32.mrb[0].mxu0
        %v1170 = vadd.f32 %v1106, %v1169
        %v1171 = vpop.f32.mrb[0].mxu0
        %v1172 = vadd.f32 %v1106, %v1171
        %1173 = vdwg.mxu0
        %1174 = vmatprep.subr.bf16.mxu0 %v1075
        %1175 = vmatpush1.bf16.msra.mxu0 %v1074
        %1176 = vmatprep.subr.bf16.mxu0 %v1077
        %1177 = vmatpush1.bf16.msra.mxu0 %v1076
        %1178 = vmatprep.subr.bf16.mxu0 %v1079
        %1179 = vmatpush1.bf16.msra.mxu0 %v1078
        %1180 = vmatprep.subr.bf16.mxu0 %v1081
        %1181 = vmatpush1.bf16.msra.mxu0 %v1080
        %1182 = vmatprep.subr.bf16.mxu0 %v1083
        %1183 = vmatpush1.bf16.msra.mxu0 %v1082
        %1184 = vmatprep.subr.bf16.mxu0 %v1085
        %1185 = vmatpush1.bf16.msra.mxu0 %v1084
        %1186 = vmatprep.subr.bf16.mxu0 %v1087
        %1187 = vmatpush1.bf16.msra.mxu0 %v1086
        %1188 = vmatprep.subr.bf16.mxu0 %v1089
        %1189 = vmatpush1.bf16.msra.mxu0 %v1088
        %1190 = vmatprep.subr.bf16.mxu0 %v1091
        %1191 = vmatpush1.bf16.msra.mxu0 %v1090
        %1192 = vmatprep.subr.bf16.mxu0 %v1093
        %1193 = vmatpush1.bf16.msra.mxu0 %v1092
        %1194 = vmatprep.subr.bf16.mxu0 %v1095
        %1195 = vmatpush1.bf16.msra.mxu0 %v1094
        %1196 = vmatprep.subr.bf16.mxu0 0
        %1197 = vmatpush1.bf16.msra.mxu0 0
        %1198 = vmatprep.subr.bf16.mxu0 0
        %1199 = vmatpush1.bf16.msra.mxu0 0
        %1200 = vmatprep.subr.bf16.mxu0 0
        %1201 = vmatpush1.bf16.msra.mxu0 0
        %1202 = vmatprep.subr.bf16.mxu0 0
        %1203 = vmatpush1.bf16.msra.mxu0 0
        %1204 = vmatprep.subr.bf16.mxu0 0
        %1205 = vmatpush1.bf16.msra.mxu0 0
        %1206 = vmatprep.mubr.bf16.mxu0 %v1129
        %1207 = vmatmul.mubr.bf16.gmra.mrb[0].mxu0 %v1122
        %v1208 = vpop.f32.mrb[0].mxu0
        %v1209 = vadd.f32 %v1166, %v1208
        %v1210 = vpop.f32.mrb[0].mxu0
        %v1211 = vadd.f32 %v1168, %v1210
        %v1212 = vpop.f32.mrb[0].mxu0
        %v1213 = vadd.f32 %v1170, %v1212
        %v1214 = vpop.f32.mrb[0].mxu0
        %v1215 = vadd.f32 %v1172, %v1214
        %1216 = vdwg.mxu0
        %v1218 = vlaneseq
        %v1219 = vshrl.u32 %v1218, 7
        %v1220 = vsub.s32 0, %v1219
        %v1221 = vrot.slane %v682, %v1220
        %v1222 = vlaneseq
        %v1223 = vshrl.u32 %v1222, 7
        %v1224 = vsub.s32 1, %v1223
        %v1225 = vrot.slane %v682, %v1224
        %v1228 = vmul.f32 %v1209, %v1221
        %v1229 = vmul.f32 %v1211, %v1225
        %v1230 = vmul.f32 %v1213, %v1221
        %v1231 = vmul.f32 %v1215, %v1225
        %v1232 = vadd.f32 %v1228, %v1229
        %1233 = vadd.xlane.f32.xlu0 %v1232
        %v1234 = vpop.xlane.xlu0 %1233
        %v1235 = vadd.f32 %v1230, %v1231
        %1236 = vadd.xlane.f32.xlu0 %v1235
        %v1237 = vpop.xlane.xlu0 %1236
        %v1238 = vmul.f32 %v1234, 0.015625
        %v1239 = vmul.f32 %v1237, 0.015625
        %v1240 = vsub.f32 %v1209, %v1238
        %v1241 = vsub.f32 %v1211, %v1238
        %v1242 = vsub.f32 %v1213, %v1239
        %v1243 = vsub.f32 %v1215, %v1239
        %v1244 = vmul.f32 %v1240, %v1221
        %v1245 = vmul.f32 %v1241, %v1225
        %v1246 = vmul.f32 %v1242, %v1221
        %v1247 = vmul.f32 %v1243, %v1225
        %v1248 = vmul.f32 %v1244, %v1244
        %v1249 = vmul.f32 %v1245, %v1245
        %v1250 = vmul.f32 %v1246, %v1246
        %v1251 = vmul.f32 %v1247, %v1247
        %v1252 = vadd.f32 %v1248, %v1249
        %1253 = vadd.xlane.f32.xlu0 %v1252
        %v1254 = vpop.xlane.xlu0 %1253
        %v1255 = vadd.f32 %v1250, %v1251
        %1256 = vadd.xlane.f32.xlu0 %v1255
        %v1257 = vpop.xlane.xlu0 %1256
        %v1258 = vmul.f32 %v1254, 0.015625
        %v1259 = vmul.f32 %v1257, 0.015625
        %v1260 = vmax.f32 %v1258, 0.0
        %v1261 = vmax.f32 %v1259, 0.0
        %v1262 = vadd.f32 %v1260, 1e-05
        %v1263 = vadd.f32 %v1261, 1e-05
        %v1264 = vrsqrt.pop %v1262
        %v1265 = vrsqrt.pop %v1263
        %v1266 = vmul.f32 %v1240, %v1264
        %v1267 = vmul.f32 %v1241, %v1264
        %v1268 = vmul.f32 %v1242, %v1265
        %v1269 = vmul.f32 %v1243, %v1265
        %vm1270 = vcmp.ge.f32.partialorder %v1266, 0.0
        %vm1271 = vcmp.ge.f32.partialorder %v1267, 0.0
        %vm1272 = vcmp.ge.f32.partialorder %v1268, 0.0
        %vm1273 = vcmp.ge.f32.partialorder %v1269, 0.0
        %v1274 = vmul.f32 %v1266, 0.01
        %v1275 = vmul.f32 %v1267, 0.01
        %v1276 = vmul.f32 %v1268, 0.01
        %v1277 = vmul.f32 %v1269, 0.01
        %v1278 = vsel %vm1270, %v1266, %v1274
        %v1279 = vsel %vm1271, %v1267, %v1275
        %v1280 = vsel %vm1272, %v1268, %v1276
        %v1281 = vsel %vm1273, %v1269, %v1277
        %v1282 = vmul.f32 %v1278, %v1221
        %v1283 = vmul.f32 %v1279, %v1225
        %v1284 = vmul.f32 %v1280, %v1221
        %v1285 = vmul.f32 %v1281, %v1225
        %v1286 = vadd.f32 %v1282, %v1283
        %1287 = vadd.xlane.f32.xlu0 %v1286
        %v1288 = vpop.xlane.xlu0 %1287
        %v1289 = vadd.f32 %v1284, %v1285
        %1290 = vadd.xlane.f32.xlu0 %v1289
        %v1291 = vpop.xlane.xlu0 %1290
        %v1292 = vmul.f32 %v1288, 0.015625
        %v1293 = vmul.f32 %v1291, 0.015625
        %v1294 = vld [vmem:[#allocation13] sm:$0x1]
        %1295 = vxpose.xlu0.b32.start [1/16] %v1292, 128
        %1296 = vxpose.xlu0.b32.cont [2/16] %v1293, 128
        %1297 = vxpose.xlu0.b32.cont [3/16] 0.0, 128
        %1298 = vxpose.xlu0.b32.cont [4/16] 0.0, 128
        %1299 = vxpose.xlu0.b32.cont [5/16] 0.0, 128
        %1300 = vxpose.xlu0.b32.cont [6/16] 0.0, 128
        %1301 = vxpose.xlu0.b32.cont [7/16] 0.0, 128
        %1302 = vxpose.xlu0.b32.cont [8/16] 0.0, 128
        %1303 = vxpose.xlu0.b32.cont [9/16] 0.0, 128
        %1304 = vxpose.xlu0.b32.cont [10/16] 0.0, 128
        %1305 = vxpose.xlu0.b32.cont [11/16] 0.0, 128
        %1306 = vxpose.xlu0.b32.cont [12/16] 0.0, 128
        %1307 = vxpose.xlu0.b32.cont [13/16] 0.0, 128
        %1308 = vxpose.xlu0.b32.cont [14/16] 0.0, 128
        %1309 = vxpose.xlu0.b32.cont [15/16] 0.0, 128
        %1310 = vxpose.xlu0.b32.end [16/16] 0.0, 128
        %v1311 = vpop.trf.xlu0
        %v1312 = vpop.trf.xlu0
        %v1313 = vpop.trf.xlu0
        %v1314 = vpop.trf.xlu0
        %v1315 = vpop.trf.xlu0
        %v1316 = vpop.trf.xlu0
        %v1317 = vpop.trf.xlu0
        %v1318 = vpop.trf.xlu0
        %v1319 = vpop.trf.xlu0
        %v1320 = vpop.trf.xlu0
        %v1321 = vpop.trf.xlu0
        %v1322 = vpop.trf.xlu0
        %v1323 = vpop.trf.xlu0
        %v1324 = vpop.trf.xlu0
        %v1325 = vpop.trf.xlu0
        %v1326 = vpop.trf.xlu0
        %v1327 = vmul.f32 %v1294, %v1311
        %vm1328 = vcmask 122880
        %v1329 = vsel %vm1328, %v1327, 0.0
        %1330 = vadd.xlane.f32.xlu0 %v1329
        %v1331 = vpop.xlane.xlu0 %1330
        %v1332 = vld [vmem:[#allocation3] sm:$0x1]
        %v1333 = vadd.f32 %v1331, %v1332
        %v1334 = vmax.f32 %v1333, 0.0
        %v1335 = vld [vmem:[#allocation14] sm:$0xff]
        %v1336 = vld [vmem:[#allocation14 + $0x8] sm:$0xff]
        %1337 = vxpose.xlu0.b32.start [1/16] %v1334, 128
        %1338 = vxpose.xlu0.b32.cont [2/16] 0.0, 128
        %1339 = vxpose.xlu0.b32.cont [3/16] 0.0, 128
        %1340 = vxpose.xlu0.b32.cont [4/16] 0.0, 128
        %1341 = vxpose.xlu0.b32.cont [5/16] 0.0, 128
        %1342 = vxpose.xlu0.b32.cont [6/16] 0.0, 128
        %1343 = vxpose.xlu0.b32.cont [7/16] 0.0, 128
        %1344 = vxpose.xlu0.b32.cont [8/16] 0.0, 128
        %1345 = vxpose.xlu0.b32.cont [9/16] 0.0, 128
        %1346 = vxpose.xlu0.b32.cont [10/16] 0.0, 128
        %1347 = vxpose.xlu0.b32.cont [11/16] 0.0, 128
        %1348 = vxpose.xlu0.b32.cont [12/16] 0.0, 128
        %1349 = vxpose.xlu0.b32.cont [13/16] 0.0, 128
        %1350 = vxpose.xlu0.b32.cont [14/16] 0.0, 128
        %1351 = vxpose.xlu0.b32.cont [15/16] 0.0, 128
        %1352 = vxpose.xlu0.b32.end [16/16] 0.0, 128
        %v1353 = vpop.trf.xlu0
        %v1354 = vpop.trf.xlu0
        %v1355 = vpop.trf.xlu0
        %v1356 = vpop.trf.xlu0
        %v1357 = vpop.trf.xlu0
        %v1358 = vpop.trf.xlu0
        %v1359 = vpop.trf.xlu0
        %v1360 = vpop.trf.xlu0
        %v1361 = vpop.trf.xlu0
        %v1362 = vpop.trf.xlu0
        %v1363 = vpop.trf.xlu0
        %v1364 = vpop.trf.xlu0
        %v1365 = vpop.trf.xlu0
        %v1366 = vpop.trf.xlu0
        %v1367 = vpop.trf.xlu0
        %v1368 = vpop.trf.xlu0
        %v1369 = vlaneseq
        %v1370 = vshrl.u32 %v1369, 7
        %v1371 = vsub.s32 0, %v1370
        %v1372 = vrot.slane %v1353, %v1371
        %v1373 = vmul.f32 %v1335, %v1372
        %v1374 = vmul.f32 %v1336, %v1372
        %v1375 = vadd.f32 %v1373, 0.0
        %v1376 = vadd.f32 %v1374, 0.0
        %v1377 = vld [vmem:[#allocation16] sm:$0xff]
        %v1378 = vld [vmem:[#allocation16 + $0x8] sm:$0xff]
        %v1379 = vadd.f32 %v1375, %v1377
        %v1380 = vadd.f32 %v1376, %v1378
        %v1381 = vxor.u32 %v1379, 2147483648
        %v1382 = vxor.u32 %v1380, 2147483648
        %v1383 = vmul.f32 %v1381, 1.442695
        %v1384 = vpow.pop %v1383
        %v1385 = vmul.f32 %v1382, 1.442695
        %v1386 = vpow.pop %v1385
        %v1387 = vadd.f32 %v1384, 1.0
        %v1388 = vadd.f32 %v1386, 1.0
        %v1389 = vrcp.pop %v1387
        %v1390 = vmul.f32 1.0, %v1389
        %v1391 = vrcp.pop %v1388
        %v1392 = vmul.f32 1.0, %v1391
        %1394 = vset.pattern.permute.xlu0 0
        %1395 = vperm.xlu0 %1394, %v1390
        %v1396 = vpop.permute.xlu0 %1395
        %1399 = vset.pattern.permute.xlu0 0
        %1400 = vperm.xlu0 %1399, %v1392
        %v1401 = vpop.permute.xlu0 %1400
        %v1403 = vmul.f32 %v1278, %v1396
        %v1404 = vmul.f32 %v1279, %v1396
        %v1405 = vmul.f32 %v1280, %v1401
        %v1406 = vmul.f32 %v1281, %v1401
        %v1407 = vld [vmem:[#allocation22] sm:$0xf]
        %v1408 = vld [vmem:[#allocation22 + $0x4] sm:$0xf]
        %v1409 = vpack.c.bf16 %v1405, %v1403
        %v1410 = vpack.c.bf16 %v1406, %v1404
        %v1411 = vld [vmem:[#allocation23] sm:$0xff]
        %v1412 = vld [vmem:[#allocation23 + $0x8] sm:$0xff]
        %1414 = vset.pattern.permute.xlu0 0
        %1415 = vperm.xlu0 %1414, %v1411
        %v1416 = vpop.permute.xlu0 %1415
        %1419 = vset.pattern.permute.xlu0 0
        %1420 = vperm.xlu0 %1419, %v1412
        %v1421 = vpop.permute.xlu0 %1420
        %v1425 = vunpack.c.l.b16 %v1407
        %v1426 = vunpack.c.l.b16 %v1408
        %v1427 = vpack.c.b16 %v1426, %v1425
        %vm1428 = vcmask 130048
        %v1430 = vsel %vm1428, %v1427, 0
        %1432 = vmatprep.subr.bf16.mxu0 %v1410
        %1433 = vmatpush1.bf16.msra.mxu0 %v1409
        %1434 = vmatprep.subr.bf16.mxu0 0
        %1435 = vmatpush1.bf16.msra.mxu0 0
        %1436 = vmatprep.subr.bf16.mxu0 0
        %1437 = vmatpush1.bf16.msra.mxu0 0
        %1438 = vmatprep.subr.bf16.mxu0 0
        %1439 = vmatpush1.bf16.msra.mxu0 0
        %1440 = vmatprep.subr.bf16.mxu0 0
        %1441 = vmatpush1.bf16.msra.mxu0 0
        %1442 = vmatprep.subr.bf16.mxu0 0
        %1443 = vmatpush1.bf16.msra.mxu0 0
        %1444 = vmatprep.subr.bf16.mxu0 0
        %1445 = vmatpush1.bf16.msra.mxu0 0
        %1446 = vmatprep.subr.bf16.mxu0 0
        %1447 = vmatpush1.bf16.msra.mxu0 0
        %1448 = vmatprep.subr.bf16.mxu0 0
        %1449 = vmatpush1.bf16.msra.mxu0 0
        %1450 = vmatprep.subr.bf16.mxu0 0
        %1451 = vmatpush1.bf16.msra.mxu0 0
        %1452 = vmatprep.subr.bf16.mxu0 0
        %1453 = vmatpush1.bf16.msra.mxu0 0
        %1454 = vmatprep.subr.bf16.mxu0 0
        %1455 = vmatpush1.bf16.msra.mxu0 0
        %1456 = vmatprep.subr.bf16.mxu0 0
        %1457 = vmatpush1.bf16.msra.mxu0 0
        %1458 = vmatprep.subr.bf16.mxu0 0
        %1459 = vmatpush1.bf16.msra.mxu0 0
        %1460 = vmatprep.subr.bf16.mxu0 0
        %1461 = vmatpush1.bf16.msra.mxu0 0
        %1462 = vmatprep.subr.bf16.mxu0 0
        %1463 = vmatpush1.bf16.msra.mxu0 0
        %1464 = vmatprep.mubr.bf16.mxu0 0
        %1465 = vmatmul.mubr.bf16.gmra.mrb[0].mxu0 %v1430
        %v1466 = vpop.f32.mrb[0].mxu0
        %v1467 = vadd.f32 %v1416, %v1466
        %v1468 = vpop.f32.mrb[0].mxu0
        %v1469 = vadd.f32 %v1416, %v1468
        %v1470 = vpop.f32.mrb[0].mxu0
        %v1471 = vadd.f32 %v1421, %v1470
        %v1472 = vpop.f32.mrb[0].mxu0
        %v1473 = vadd.f32 %v1421, %v1472
        %1474 = vdwg.mxu0
        %v1475 = vmul.f32 %v1467, %v1221
        %v1476 = vmul.f32 %v1469, %v1225
        %v1477 = vmul.f32 %v1471, %v1221
        %v1478 = vmul.f32 %v1473, %v1225
        %v1479 = vpack.c.bf16 %v1477, %v1475
        %v1480 = vpack.c.bf16 %v1478, %v1476
        %v1483 = vunpack.c.l.b16 %v1479
        %v1484 = vunpack.c.l.b16 %v1480
        %v1485 = vunpack.c.h.b16 %v1479
        %v1486 = vunpack.c.h.b16 %v1480
        %v1487 = vpack.c.b16 %v1484, %v1483
        %v1488 = vpack.c.b16 %v1486, %v1485
        %1491 = vst [vmem:[%s670] sm:$0xff] %v1487
        %1492 = vst [vmem:[%s670 + $0x8] sm:$0xff] %v1488
        %v1493 = vmul.f32 %v1390, %v1292
        %v1494 = vmul.f32 %v1392, %v1293
        %v1495 = vld [vmem:[#allocation17] sm:$0x3]
        %1496 = vxpose.xlu0.b32.start [1/16] %v1493, 128
        %1497 = vxpose.xlu0.b32.cont [2/16] %v1494, 128
        %1498 = vxpose.xlu0.b32.cont [3/16] 0.0, 128
        %1499 = vxpose.xlu0.b32.cont [4/16] 0.0, 128
        %1500 = vxpose.xlu0.b32.cont [5/16] 0.0, 128
        %1501 = vxpose.xlu0.b32.cont [6/16] 0.0, 128
        %1502 = vxpose.xlu0.b32.cont [7/16] 0.0, 128
        %1503 = vxpose.xlu0.b32.cont [8/16] 0.0, 128
        %1504 = vxpose.xlu0.b32.cont [9/16] 0.0, 128
        %1505 = vxpose.xlu0.b32.cont [10/16] 0.0, 128
        %1506 = vxpose.xlu0.b32.cont [11/16] 0.0, 128
        %1507 = vxpose.xlu0.b32.cont [12/16] 0.0, 128
        %1508 = vxpose.xlu0.b32.cont [13/16] 0.0, 128
        %1509 = vxpose.xlu0.b32.cont [14/16] 0.0, 128
        %1510 = vxpose.xlu0.b32.cont [15/16] 0.0, 128
        %1511 = vxpose.xlu0.b32.end [16/16] 0.0, 128
        %v1512 = vpop.trf.xlu0
        %v1513 = vpop.trf.xlu0
        %v1514 = vpop.trf.xlu0
        %v1515 = vpop.trf.xlu0
        %v1516 = vpop.trf.xlu0
        %v1517 = vpop.trf.xlu0
        %v1518 = vpop.trf.xlu0
        %v1519 = vpop.trf.xlu0
        %v1520 = vpop.trf.xlu0
        %v1521 = vpop.trf.xlu0
        %v1522 = vpop.trf.xlu0
        %v1523 = vpop.trf.xlu0
        %v1524 = vpop.trf.xlu0
        %v1525 = vpop.trf.xlu0
        %v1526 = vpop.trf.xlu0
        %v1527 = vpop.trf.xlu0
        %v1528 = vlaneseq
        %v1529 = vshrl.u32 %v1528, 7
        %v1530 = vsub.s32 0, %v1529
        %v1531 = vrot.slane %v1512, %v1530
        %v1532 = vmul.f32 %v1495, %v1531
        %vm1533 = vcmask 123904
        %v1534 = vsel %vm1533, %v1532, 0.0
        %1535 = vadd.xlane.f32.xlu0 %v1534
        %v1536 = vpop.xlane.xlu0 %1535
        %v1537 = vld [vmem:[#allocation19] sm:$0x3]
        %v1538 = vadd.f32 %v1536, %v1537
        %vm1539 = vcmp.ge.f32.partialorder %v1538, 0.0
        %v1540 = vmul.f32 %v1538, 0.01
        %v1541 = vsel %vm1539, %v1538, %v1540
        %v1542 = vld [vmem:[#allocation20] sm:$0x1]
        %1543 = vxpose.xlu0.b32.start [1/16] %v1541, 128
        %1544 = vxpose.xlu0.b32.cont [2/16] 0.0, 128
        %1545 = vxpose.xlu0.b32.cont [3/16] 0.0, 128
        %1546 = vxpose.xlu0.b32.cont [4/16] 0.0, 128
        %1547 = vxpose.xlu0.b32.cont [5/16] 0.0, 128
        %1548 = vxpose.xlu0.b32.cont [6/16] 0.0, 128
        %1549 = vxpose.xlu0.b32.cont [7/16] 0.0, 128
        %1550 = vxpose.xlu0.b32.cont [8/16] 0.0, 128
        %1551 = vxpose.xlu0.b32.cont [9/16] 0.0, 128
        %1552 = vxpose.xlu0.b32.cont [10/16] 0.0, 128
        %1553 = vxpose.xlu0.b32.cont [11/16] 0.0, 128
        %1554 = vxpose.xlu0.b32.cont [12/16] 0.0, 128
        %1555 = vxpose.xlu0.b32.cont [13/16] 0.0, 128
        %1556 = vxpose.xlu0.b32.cont [14/16] 0.0, 128
        %1557 = vxpose.xlu0.b32.cont [15/16] 0.0, 128
        %1558 = vxpose.xlu0.b32.end [16/16] 0.0, 128
        %v1559 = vpop.trf.xlu0
        %v1560 = vpop.trf.xlu0
        %v1561 = vpop.trf.xlu0
        %v1562 = vpop.trf.xlu0
        %v1563 = vpop.trf.xlu0
        %v1564 = vpop.trf.xlu0
        %v1565 = vpop.trf.xlu0
        %v1566 = vpop.trf.xlu0
        %v1567 = vpop.trf.xlu0
        %v1568 = vpop.trf.xlu0
        %v1569 = vpop.trf.xlu0
        %v1570 = vpop.trf.xlu0
        %v1571 = vpop.trf.xlu0
        %v1572 = vpop.trf.xlu0
        %v1573 = vpop.trf.xlu0
        %v1574 = vpop.trf.xlu0
        %v1575 = vmul.f32 %v1542, %v1559
        %vm1576 = vcmask 8192
        %v1577 = vsel %vm1576, %v1575, 0.0
        %1578 = vadd.xlane.f32.xlu0 %v1577
        %v1579 = vpop.xlane.xlu0 %1578
        %v1580 = vld [vmem:[#allocation4] sm:$0x1]
        %v1581 = vadd.f32 %v1579, %v1580
        %vm1582 = vcmask 0
        %1583 = vst.msk [vmem:[%s676] sm:$0x1] %vm1582, %v1581
        %s1584 = sand.u32 %s353, 1
        %s1585 = scalar_lea.sflag [#allocation7], %s1584
        %s1586 = sand.u32 %s353, 1
        %s1587 = smul.addr %s1586, 16
        %s1588 = scalar_lea.vmem [#allocation25], %s1587
        %s1589 = sand.u32 %s379, 1
        %s1590 = scalar_lea.sflag [#allocation27], %s1589
        %s1591 = sand.u32 %s379, 1
        %s1592 = scalar_lea.vmem [#allocation26], %s1591
        // Predicated region
        $region125: #{_lambda_.4} parent=75 // pred_check
          %p1593 = pneg %p363
        $region126: #{_lambda_.4} parent=75 // pred_check_branch
          %1595 = sbr.rel (%p1593) target = $region128
        $region127: #{_lambda_.4} parent=75 // pred_region
          %s1597 = ssub.s32 256, 256
          %1598 = vsyncadd %s1585, %s1597
          %s1599 = smul.addr %s46, 4
          %s1600 = smul.addr %s1599, 64
          %s1601 = scalar_lea.hbm %s14, %s1600
          %s1602 = sshll.u32 %s1588, 4
          %s1603 = int_to_ptr.vmem [resolvable:$true] %s1602
          %1608 = dma.vmem_to_hbm [thread:$0]  %s1603, 256, %s1601, %s1585, 128, 128, 8
        $region128: #{_lambda_.4} parent=75 // pred_fallthru
          _
        // Predicated region
        $region129: #{_lambda_.4} parent=75 // pred_check
          %p1609 = pneg %p389
        $region130: #{_lambda_.4} parent=75 // pred_check_branch
          %1611 = sbr.rel (%p1609) target = $region132
        $region131: #{_lambda_.4} parent=75 // pred_region
          %s1613 = ssub.s32 16, 16
          %1614 = vsyncadd %s1590, %s1613
          %s1615 = smul.addr %s46, 16
          %s1616 = scalar_lea.hbm %s15, %s1615
          %s1618 = sshll.u32 %s1592, 4
          %s1619 = int_to_ptr.vmem [resolvable:$true] %s1618
          %1621 = dma.vmem_to_hbm [thread:$0]  %s1619, 16, %s1616, %s1590
        $region132: #{_lambda_.4} parent=75 // pred_fallthru
          _
      $region76: #{_lambda_.4} parent=5 // pred_fallthru
        _
      %p1622 = scmp.le.s32.totalorder 2, %s41
      // Predicated region
      $region133: #{_lambda_.4} parent=5 // pred_check
        %p1623 = pneg %p1622
      $region134: #{_lambda_.4} parent=5 // pred_check_branch
        %1625 = sbr.rel (%p1623) target = $region136
      $region135: #{_lambda_.4} parent=5 // pred_region
        %s1626 = ssub.s32 %s41, 2
        // Predicated region
        $region137: #{_lambda_.4} parent=135 // pred_check
          %p1627 = pneg %p369
        $region138: #{_lambda_.4} parent=135 // pred_check_branch
          %1629 = sbr.rel (%p1627) target = $region140
        $region139: #{_lambda_.4} parent=135 // pred_region
          %s1630 = sand.u32 %s354, 1
          %s1631 = scalar_lea.sflag [#allocation7], %s1630
          %s1632 = sand.u32 %s354, 1
          %s1633 = smul.addr %s1632, 16
          %s1634 = scalar_lea.vmem [#allocation25], %s1633
          %1635 = dma.done %s1631, 256
        $region140: #{_lambda_.4} parent=135 // pred_fallthru
          _
        // Predicated region
        $region141: #{_lambda_.4} parent=135 // pred_check
          %p1636 = pneg %p395
        $region142: #{_lambda_.4} parent=135 // pred_check_branch
          %1638 = sbr.rel (%p1636) target = $region144
        $region143: #{_lambda_.4} parent=135 // pred_region
          %s1639 = sand.u32 %s380, 1
          %s1640 = scalar_lea.sflag [#allocation27], %s1639
          %s1641 = sand.u32 %s380, 1
          %s1642 = scalar_lea.vmem [#allocation26], %s1641
          %1643 = dma.done %s1640, 16
        $region144: #{_lambda_.4} parent=135 // pred_fallthru
          _
      $region136: #{_lambda_.4} parent=5 // pred_fallthru
        _
    $region6: #{_lambda_.4} parent=1 // loop_footer
      %s45 = sadd.s32 1, %s41
    $region7: #{_lambda_.4} parent=1 // loop_footer_branch
      %40 = sbr.rel target = $region3
    $region8: #{_lambda_.4} parent=1 // loop_exit
      _
    %1644 = vsyncpa [#allocation6], 1
    %s1645 = scalar_lea.sflag [#allocation6], 1
    %1646 = vsyncpa %s1645, 1
    %1647 = vsyncpa [#allocation9], 1
    %1648 = vsyncpa [#allocation12], 1
    %1649 = vsyncpa [#allocation15], 1
    %1650 = vsyncpa [#allocation18], 1
    %1651 = vsyncpa [#allocation21], 1
    %1652 = vsyncpa [#allocation24], 1
    %1653 = vsyncpa [#allocation7], 1
    %s1654 = scalar_lea.sflag [#allocation7], 1
    %1655 = vsyncpa %s1654, 1
    %1656 = vsyncpa [#allocation27], 1
    %s1657 = scalar_lea.sflag [#allocation27], 1
    %1658 = vsyncpa %s1657, 1

// kernel: _lambda_.3
$region0: #{_lambda_.3}
  #allocation0 [shape = 'u32[]', space=smem, size = 0x4, offset = 0x4, fixed_abs, tag = 'smem constant byte address 0x4 - core index']
  #allocation1 [shape = 'u32[144,128]{1,0:T(1,128)}', space=vmem, size = 0x12000, scoped, tag = 'internal scratch']
  #allocation2 [shape = 'bf16[216,1024]{1,0:T(8,128)(2,1)}', space=vmem, size = 0x6c000, scoped, tag = 'scratch operand']
  #allocation3 [shape = 'f32[1,1]{1,0:T(1,128)S(1)}', space=vmem, size = 0x200, scoped, tag = 'scoped memory for _lambda_.3']
  #allocation4 [shape = 'f32[1,1]{1,0:T(1,128)S(1)}', space=vmem, size = 0x200, scoped, tag = 'scoped memory for _lambda_.3']
  #allocation5 [shape = 'f32[1,1]{1,0:T(1,128)S(1)}', space=vmem, size = 0x200, scoped, tag = 'scoped memory for _lambda_.3']
  #allocation6 [shape = 'f32[1,1]{1,0:T(1,128)S(1)}', space=vmem, size = 0x200, scoped, tag = 'scoped memory for _lambda_.3']
  %s0 = inlined_call_operand.hbm [shape: bf16[2,8,1280], index: 0, kind: input, shape index: {}]
  %s1 = inlined_call_operand.hbm [shape: f32[1,1024], index: 1, kind: input, shape index: {}]
  %s2 = inlined_call_operand.hbm [shape: bf16[8,216], index: 2, kind: input, shape index: {}]
  %s3 = inlined_call_operand.hbm [shape: f32[8,1], index: 3, kind: input, shape index: {}]
  %s4 = inlined_call_operand.hbm [shape: f32[1,8], index: 4, kind: input, shape index: {}]
  %s5 = inlined_call_operand.<no memory space> [shape: f32[1,1], index: 5, kind: input, shape index: {}]
  %s6 = inlined_call_operand.hbm [shape: f32[8,1], index: 6, kind: input, shape index: {}]
  %s7 = inlined_call_operand.hbm [shape: f32[8,1], index: 7, kind: input, shape index: {}]
  %s8 = inlined_call_operand.hbm [shape: f32[1,8], index: 8, kind: input, shape index: {}]
  %s9 = inlined_call_operand.<no memory space> [shape: f32[1,1], index: 9, kind: input, shape index: {}]
  %s10 = inlined_call_operand.<no memory space> [shape: f32[1,1], index: 10, kind: input, shape index: {}]
  %s11 = inlined_call_operand.<no memory space> [shape: f32[1,1], index: 11, kind: input, shape index: {}]
  %s12 = inlined_call_operand.hbm [shape: bf16[16,8], index: 12, kind: input, shape index: {}]
  %s13 = inlined_call_operand.hbm [shape: f32[16,1], index: 13, kind: input, shape index: {}]
  %s14 = inlined_call_operand.hbm [shape: bf16[2,16,1024], index: 14, kind: output, shape index: {0}]
  %s15 = inlined_call_operand.hbm [shape: f32[2,1,1], index: 15, kind: output, shape index: {1}]
  %16 = xla_tuple %s14, %s15
  %s17 = sld [smem:[#allocation0]]
  $region137: #{_lambda_.3} parent=0
    _
  %s19 = ssub.s32 1, %s17
  %s20 = scalar_select 0, %s19, %s17
  %v21 = vstv %s5
  %22 = vst [vmem:[#allocation3] sm:$0x1] %v21
  %v23 = vstv %s9
  %24 = vst [vmem:[#allocation4] sm:$0x1] %v23
  %v25 = vstv %s10
  %26 = vst [vmem:[#allocation5] sm:$0x1] %v25
  %v27 = vstv %s11
  %28 = vst [vmem:[#allocation6] sm:$0x1] %v27
  $region1: #{_lambda_.3} parent=0
    #allocation7 [shape = 'u8[40960]{0}', space=vmem, size = 0xa000, scoped, tag = 'input window, operand 0']
    #allocation8 [shape = 's32[2]{0}', space=sflag, size = 0x8, scoped, tag = 'scoped memory for _lambda_.3']
    #allocation9 [shape = 's32[2]{0}', space=sflag, size = 0x8, scoped, tag = 'scoped memory for _lambda_.3']
    #allocation10 [shape = 'u8[4096]{0}', space=vmem, size = 0x1000, scoped, tag = 'input window, operand 1, single buffered']
    #allocation11 [shape = 's32[1]{0}', space=sflag, size = 0x4, scoped, tag = 'scoped memory for _lambda_.3']
    #allocation12 [shape = 'u8[4096]{0}', space=vmem, size = 0x1000, scoped, tag = 'input window, operand 2, single buffered']
    #allocation13 [shape = 'u8[4096]{0}', space=vmem, size = 0x1000, scoped, tag = 'input window, operand 3, single buffered']
    #allocation14 [shape = 's32[1]{0}', space=sflag, size = 0x4, scoped, tag = 'scoped memory for _lambda_.3']
    #allocation15 [shape = 'u8[512]{0}', space=vmem, size = 0x400, scoped, tag = 'input window, operand 4, single buffered']
    #allocation16 [shape = 'u8[4096]{0}', space=vmem, size = 0x1000, scoped, tag = 'input window, operand 6, single buffered']
    #allocation17 [shape = 's32[1]{0}', space=sflag, size = 0x4, scoped, tag = 'scoped memory for _lambda_.3']
    #allocation18 [shape = 'u8[4096]{0}', space=vmem, size = 0x1000, scoped, tag = 'input window, operand 7, single buffered']
    #allocation19 [shape = 'u8[512]{0}', space=vmem, size = 0x400, scoped, tag = 'input window, operand 8, single buffered']
    #allocation20 [shape = 's32[1]{0}', space=sflag, size = 0x4, scoped, tag = 'scoped memory for _lambda_.3']
    #allocation21 [shape = 'u8[4096]{0}', space=vmem, size = 0x1000, scoped, tag = 'input window, operand 12, single buffered']
    #allocation22 [shape = 'u8[8192]{0}', space=vmem, size = 0x2000, scoped, tag = 'input window, operand 13, single buffered']
    #allocation23 [shape = 's32[1]{0}', space=sflag, size = 0x4, scoped, tag = 'scoped memory for _lambda_.3']
    #allocation24 [shape = 'u8[65536]{0}', space=vmem, size = 0x10000, scoped, tag = 'output window, operand 0']
    #allocation25 [shape = 'u8[1024]{0}', space=vmem, size = 0x400, scoped, tag = 'output window, operand 1']
    #allocation26 [shape = 's32[2]{0}', space=sflag, size = 0x8, scoped, tag = 'scoped memory for _lambda_.3']
    %29 = vsyncpa [#allocation8], 0
    %s30 = scalar_lea.sflag [#allocation8], 1
    %31 = vsyncpa %s30, 0
    %32 = vsyncpa [#allocation11], 0
    %33 = vsyncpa [#allocation14], 0
    %34 = vsyncpa [#allocation17], 0
    %35 = vsyncpa [#allocation20], 0
    %36 = vsyncpa [#allocation23], 0
    %37 = vsyncpa [#allocation9], 0
    %s38 = scalar_lea.sflag [#allocation9], 1
    %39 = vsyncpa %s38, 0
    %40 = vsyncpa [#allocation26], 0
    %s41 = scalar_lea.sflag [#allocation26], 1
    %42 = vsyncpa %s41, 0
    loop: start=0, step=1, limit=4
    $region2: #{_lambda_.3} parent=1 // loop_pre_header
      _
    $region3: #{_lambda_.3} parent=1 // loop_header
      %s44 = sphi 0, %s48
      %p45 = scmp.ge.s32.totalorder %s44, 4
      %s54 = sphi 0, %s56
      %s57 = sphi 0, %s54
      %s58 = sphi 0, %s57
      %s74 = sphi 0, %s58
      %s78 = sphi 0, %s78
      %s80 = sphi 0, %s78
      %s81 = sphi 0, %s80
      %s95 = sphi 0, %s81
      %s99 = sphi 0, %s99
      %s101 = sphi 0, %s99
      %s102 = sphi 0, %s101
      %s116 = sphi 0, %s102
      %s120 = sphi 0, %s120
      %s122 = sphi 0, %s120
      %s123 = sphi 0, %s122
      %s137 = sphi 0, %s123
      %s141 = sphi 0, %s141
      %s143 = sphi 0, %s141
      %s144 = sphi 0, %s143
      %s158 = sphi 0, %s144
      %s162 = sphi 0, %s162
      %s164 = sphi 0, %s162
      %s165 = sphi 0, %s164
      %s179 = sphi 0, %s165
      %s183 = sphi 0, %s183
      %s185 = sphi 0, %s183
      %s186 = sphi 0, %s185
      %s200 = sphi 0, %s186
      %s204 = sphi 0, %s204
      %s206 = sphi 0, %s204
      %s207 = sphi 0, %s206
      %s221 = sphi 0, %s207
      %s225 = sphi 0, %s225
      %s227 = sphi 0, %s225
      %s228 = sphi 0, %s227
      %s242 = sphi 0, %s228
      %s246 = sphi 0, %s246
      %s248 = sphi 0, %s246
      %s249 = sphi 0, %s248
      %s263 = sphi 0, %s249
      %s267 = sphi 0, %s267
      %s269 = sphi 0, %s267
      %s270 = sphi 0, %s269
      %s284 = sphi 0, %s270
      %s288 = sphi 0, %s288
      %s290 = sphi 0, %s288
      %s291 = sphi 0, %s290
      %s305 = sphi 0, %s291
      %s309 = sphi 0, %s309
      %s311 = sphi 0, %s309
      %s312 = sphi 0, %s311
      %s326 = sphi 0, %s312
      %s330 = sphi 0, %s330
      %s332 = sphi 0, %s330
      %s333 = sphi 0, %s332
      %s347 = sphi 0, %s333
      %s353 = sphi 0, %s355
      %s356 = sphi 0, %s353
      %s357 = sphi 0, %s356
      %s373 = sphi 0, %s357
      %s379 = sphi 0, %s381
      %s382 = sphi 0, %s379
      %s383 = sphi 0, %s382
      %s399 = sphi 0, %s383
    $region4: #{_lambda_.3} parent=1 // loop_header_branch
      %47 = sbr.rel (%p45) target = $region8
    $region5: #{_lambda_.3} parent=1 // loop_body
      %s49 = ssub.s32 %s44, 1
      %s50 = ssub.s32 %s44, 2
      %s51 = sadd.s32 %s44, 1
      %s52 = ssub.s32 %s44, %s51
      %p53 = scmp.eq.s32.totalorder %s52, 0
      %s55 = sadd.s32 %s54, 1
      %s56 = scalar_select %p53, %s54, %s55
      %p59 = pneg %p53
      %p60 = scmp.eq.s32.totalorder %s44, 1
      %p61 = por %p59, %p60
      %p62 = scmp.ne.s32.totalorder %s54, %s57
      %p63 = scmp.eq.s32.totalorder %s44, 0
      %p64 = por %p62, %p63
      %p65 = scmp.ne.s32.totalorder %s54, %s57
      %p66 = scmp.eq.s32.totalorder %s49, 1
      %p67 = por %p65, %p66
      %p68 = scmp.ne.s32.totalorder %s57, %s58
      %p69 = scmp.eq.s32.totalorder %s49, 0
      %p70 = por %p68, %p69
      %p71 = scmp.ne.s32.totalorder %s57, %s58
      %p72 = scmp.eq.s32.totalorder %s50, 1
      %p73 = por %p71, %p72
      %p75 = scmp.ne.s32.totalorder %s58, %s74
      %p76 = scmp.eq.s32.totalorder %s50, 0
      %p77 = por %p75, %p76
      %s79 = sadd.s32 %s78, 1
      %p82 = scmp.eq.s32.totalorder %s44, 1
      %p83 = scmp.ne.s32.totalorder %s78, %s80
      %p84 = scmp.eq.s32.totalorder %s44, 0
      %p85 = por %p83, %p84
      %p86 = scmp.ne.s32.totalorder %s78, %s80
      %p87 = scmp.eq.s32.totalorder %s49, 1
      %p88 = por %p86, %p87
      %p89 = scmp.ne.s32.totalorder %s80, %s81
      %p90 = scmp.eq.s32.totalorder %s49, 0
      %p91 = por %p89, %p90
      %p92 = scmp.ne.s32.totalorder %s80, %s81
      %p93 = scmp.eq.s32.totalorder %s50, 1
      %p94 = por %p92, %p93
      %p96 = scmp.ne.s32.totalorder %s81, %s95
      %p97 = scmp.eq.s32.totalorder %s50, 0
      %p98 = por %p96, %p97
      %s100 = sadd.s32 %s99, 1
      %p103 = scmp.eq.s32.totalorder %s44, 1
      %p104 = scmp.ne.s32.totalorder %s99, %s101
      %p105 = scmp.eq.s32.totalorder %s44, 0
      %p106 = por %p104, %p105
      %p107 = scmp.ne.s32.totalorder %s99, %s101
      %p108 = scmp.eq.s32.totalorder %s49, 1
      %p109 = por %p107, %p108
      %p110 = scmp.ne.s32.totalorder %s101, %s102
      %p111 = scmp.eq.s32.totalorder %s49, 0
      %p112 = por %p110, %p111
      %p113 = scmp.ne.s32.totalorder %s101, %s102
      %p114 = scmp.eq.s32.totalorder %s50, 1
      %p115 = por %p113, %p114
      %p117 = scmp.ne.s32.totalorder %s102, %s116
      %p118 = scmp.eq.s32.totalorder %s50, 0
      %p119 = por %p117, %p118
      %s121 = sadd.s32 %s120, 1
      %p124 = scmp.eq.s32.totalorder %s44, 1
      %p125 = scmp.ne.s32.totalorder %s120, %s122
      %p126 = scmp.eq.s32.totalorder %s44, 0
      %p127 = por %p125, %p126
      %p128 = scmp.ne.s32.totalorder %s120, %s122
      %p129 = scmp.eq.s32.totalorder %s49, 1
      %p130 = por %p128, %p129
      %p131 = scmp.ne.s32.totalorder %s122, %s123
      %p132 = scmp.eq.s32.totalorder %s49, 0
      %p133 = por %p131, %p132
      %p134 = scmp.ne.s32.totalorder %s122, %s123
      %p135 = scmp.eq.s32.totalorder %s50, 1
      %p136 = por %p134, %p135
      %p138 = scmp.ne.s32.totalorder %s123, %s137
      %p139 = scmp.eq.s32.totalorder %s50, 0
      %p140 = por %p138, %p139
      %s142 = sadd.s32 %s141, 1
      %p145 = scmp.eq.s32.totalorder %s44, 1
      %p146 = scmp.ne.s32.totalorder %s141, %s143
      %p147 = scmp.eq.s32.totalorder %s44, 0
      %p148 = por %p146, %p147
      %p149 = scmp.ne.s32.totalorder %s141, %s143
      %p150 = scmp.eq.s32.totalorder %s49, 1
      %p151 = por %p149, %p150
      %p152 = scmp.ne.s32.totalorder %s143, %s144
      %p153 = scmp.eq.s32.totalorder %s49, 0
      %p154 = por %p152, %p153
      %p155 = scmp.ne.s32.totalorder %s143, %s144
      %p156 = scmp.eq.s32.totalorder %s50, 1
      %p157 = por %p155, %p156
      %p159 = scmp.ne.s32.totalorder %s144, %s158
      %p160 = scmp.eq.s32.totalorder %s50, 0
      %p161 = por %p159, %p160
      %s163 = sadd.s32 %s162, 1
      %p166 = scmp.eq.s32.totalorder %s44, 1
      %p167 = scmp.ne.s32.totalorder %s162, %s164
      %p168 = scmp.eq.s32.totalorder %s44, 0
      %p169 = por %p167, %p168
      %p170 = scmp.ne.s32.totalorder %s162, %s164
      %p171 = scmp.eq.s32.totalorder %s49, 1
      %p172 = por %p170, %p171
      %p173 = scmp.ne.s32.totalorder %s164, %s165
      %p174 = scmp.eq.s32.totalorder %s49, 0
      %p175 = por %p173, %p174
      %p176 = scmp.ne.s32.totalorder %s164, %s165
      %p177 = scmp.eq.s32.totalorder %s50, 1
      %p178 = por %p176, %p177
      %p180 = scmp.ne.s32.totalorder %s165, %s179
      %p181 = scmp.eq.s32.totalorder %s50, 0
      %p182 = por %p180, %p181
      %s184 = sadd.s32 %s183, 1
      %p187 = scmp.eq.s32.totalorder %s44, 1
      %p188 = scmp.ne.s32.totalorder %s183, %s185
      %p189 = scmp.eq.s32.totalorder %s44, 0
      %p190 = por %p188, %p189
      %p191 = scmp.ne.s32.totalorder %s183, %s185
      %p192 = scmp.eq.s32.totalorder %s49, 1
      %p193 = por %p191, %p192
      %p194 = scmp.ne.s32.totalorder %s185, %s186
      %p195 = scmp.eq.s32.totalorder %s49, 0
      %p196 = por %p194, %p195
      %p197 = scmp.ne.s32.totalorder %s185, %s186
      %p198 = scmp.eq.s32.totalorder %s50, 1
      %p199 = por %p197, %p198
      %p201 = scmp.ne.s32.totalorder %s186, %s200
      %p202 = scmp.eq.s32.totalorder %s50, 0
      %p203 = por %p201, %p202
      %s205 = sadd.s32 %s204, 1
      %p208 = scmp.eq.s32.totalorder %s44, 1
      %p209 = scmp.ne.s32.totalorder %s204, %s206
      %p210 = scmp.eq.s32.totalorder %s44, 0
      %p211 = por %p209, %p210
      %p212 = scmp.ne.s32.totalorder %s204, %s206
      %p213 = scmp.eq.s32.totalorder %s49, 1
      %p214 = por %p212, %p213
      %p215 = scmp.ne.s32.totalorder %s206, %s207
      %p216 = scmp.eq.s32.totalorder %s49, 0
      %p217 = por %p215, %p216
      %p218 = scmp.ne.s32.totalorder %s206, %s207
      %p219 = scmp.eq.s32.totalorder %s50, 1
      %p220 = por %p218, %p219
      %p222 = scmp.ne.s32.totalorder %s207, %s221
      %p223 = scmp.eq.s32.totalorder %s50, 0
      %p224 = por %p222, %p223
      %s226 = sadd.s32 %s225, 1
      %p229 = scmp.eq.s32.totalorder %s44, 1
      %p230 = scmp.ne.s32.totalorder %s225, %s227
      %p231 = scmp.eq.s32.totalorder %s44, 0
      %p232 = por %p230, %p231
      %p233 = scmp.ne.s32.totalorder %s225, %s227
      %p234 = scmp.eq.s32.totalorder %s49, 1
      %p235 = por %p233, %p234
      %p236 = scmp.ne.s32.totalorder %s227, %s228
      %p237 = scmp.eq.s32.totalorder %s49, 0
      %p238 = por %p236, %p237
      %p239 = scmp.ne.s32.totalorder %s227, %s228
      %p240 = scmp.eq.s32.totalorder %s50, 1
      %p241 = por %p239, %p240
      %p243 = scmp.ne.s32.totalorder %s228, %s242
      %p244 = scmp.eq.s32.totalorder %s50, 0
      %p245 = por %p243, %p244
      %s247 = sadd.s32 %s246, 1
      %p250 = scmp.eq.s32.totalorder %s44, 1
      %p251 = scmp.ne.s32.totalorder %s246, %s248
      %p252 = scmp.eq.s32.totalorder %s44, 0
      %p253 = por %p251, %p252
      %p254 = scmp.ne.s32.totalorder %s246, %s248
      %p255 = scmp.eq.s32.totalorder %s49, 1
      %p256 = por %p254, %p255
      %p257 = scmp.ne.s32.totalorder %s248, %s249
      %p258 = scmp.eq.s32.totalorder %s49, 0
      %p259 = por %p257, %p258
      %p260 = scmp.ne.s32.totalorder %s248, %s249
      %p261 = scmp.eq.s32.totalorder %s50, 1
      %p262 = por %p260, %p261
      %p264 = scmp.ne.s32.totalorder %s249, %s263
      %p265 = scmp.eq.s32.totalorder %s50, 0
      %p266 = por %p264, %p265
      %s268 = sadd.s32 %s267, 1
      %p271 = scmp.eq.s32.totalorder %s44, 1
      %p272 = scmp.ne.s32.totalorder %s267, %s269
      %p273 = scmp.eq.s32.totalorder %s44, 0
      %p274 = por %p272, %p273
      %p275 = scmp.ne.s32.totalorder %s267, %s269
      %p276 = scmp.eq.s32.totalorder %s49, 1
      %p277 = por %p275, %p276
      %p278 = scmp.ne.s32.totalorder %s269, %s270
      %p279 = scmp.eq.s32.totalorder %s49, 0
      %p280 = por %p278, %p279
      %p281 = scmp.ne.s32.totalorder %s269, %s270
      %p282 = scmp.eq.s32.totalorder %s50, 1
      %p283 = por %p281, %p282
      %p285 = scmp.ne.s32.totalorder %s270, %s284
      %p286 = scmp.eq.s32.totalorder %s50, 0
      %p287 = por %p285, %p286
      %s289 = sadd.s32 %s288, 1
      %p292 = scmp.eq.s32.totalorder %s44, 1
      %p293 = scmp.ne.s32.totalorder %s288, %s290
      %p294 = scmp.eq.s32.totalorder %s44, 0
      %p295 = por %p293, %p294
      %p296 = scmp.ne.s32.totalorder %s288, %s290
      %p297 = scmp.eq.s32.totalorder %s49, 1
      %p298 = por %p296, %p297
      %p299 = scmp.ne.s32.totalorder %s290, %s291
      %p300 = scmp.eq.s32.totalorder %s49, 0
      %p301 = por %p299, %p300
      %p302 = scmp.ne.s32.totalorder %s290, %s291
      %p303 = scmp.eq.s32.totalorder %s50, 1
      %p304 = por %p302, %p303
      %p306 = scmp.ne.s32.totalorder %s291, %s305
      %p307 = scmp.eq.s32.totalorder %s50, 0
      %p308 = por %p306, %p307
      %s310 = sadd.s32 %s309, 1
      %p313 = scmp.eq.s32.totalorder %s44, 1
      %p314 = scmp.ne.s32.totalorder %s309, %s311
      %p315 = scmp.eq.s32.totalorder %s44, 0
      %p316 = por %p314, %p315
      %p317 = scmp.ne.s32.totalorder %s309, %s311
      %p318 = scmp.eq.s32.totalorder %s49, 1
      %p319 = por %p317, %p318
      %p320 = scmp.ne.s32.totalorder %s311, %s312
      %p321 = scmp.eq.s32.totalorder %s49, 0
      %p322 = por %p320, %p321
      %p323 = scmp.ne.s32.totalorder %s311, %s312
      %p324 = scmp.eq.s32.totalorder %s50, 1
      %p325 = por %p323, %p324
      %p327 = scmp.ne.s32.totalorder %s312, %s326
      %p328 = scmp.eq.s32.totalorder %s50, 0
      %p329 = por %p327, %p328
      %s331 = sadd.s32 %s330, 1
      %p334 = scmp.eq.s32.totalorder %s44, 1
      %p335 = scmp.ne.s32.totalorder %s330, %s332
      %p336 = scmp.eq.s32.totalorder %s44, 0
      %p337 = por %p335, %p336
      %p338 = scmp.ne.s32.totalorder %s330, %s332
      %p339 = scmp.eq.s32.totalorder %s49, 1
      %p340 = por %p338, %p339
      %p341 = scmp.ne.s32.totalorder %s332, %s333
      %p342 = scmp.eq.s32.totalorder %s49, 0
      %p343 = por %p341, %p342
      %p344 = scmp.ne.s32.totalorder %s332, %s333
      %p345 = scmp.eq.s32.totalorder %s50, 1
      %p346 = por %p344, %p345
      %p348 = scmp.ne.s32.totalorder %s333, %s347
      %p349 = scmp.eq.s32.totalorder %s50, 0
      %p350 = por %p348, %p349
      %s351 = ssub.s32 %s44, %s51
      %p352 = scmp.eq.s32.totalorder %s351, 0
      %s354 = sadd.s32 %s353, 1
      %s355 = scalar_select %p352, %s353, %s354
      %p358 = pneg %p352
      %p359 = scmp.eq.s32.totalorder %s44, 1
      %p360 = por %p358, %p359
      %p361 = scmp.ne.s32.totalorder %s353, %s356
      %p362 = scmp.eq.s32.totalorder %s44, 0
      %p363 = por %p361, %p362
      %p364 = scmp.ne.s32.totalorder %s353, %s356
      %p365 = scmp.eq.s32.totalorder %s49, 1
      %p366 = por %p364, %p365
      %p367 = scmp.ne.s32.totalorder %s356, %s357
      %p368 = scmp.eq.s32.totalorder %s49, 0
      %p369 = por %p367, %p368
      %p370 = scmp.ne.s32.totalorder %s356, %s357
      %p371 = scmp.eq.s32.totalorder %s50, 1
      %p372 = por %p370, %p371
      %p374 = scmp.ne.s32.totalorder %s357, %s373
      %p375 = scmp.eq.s32.totalorder %s50, 0
      %p376 = por %p374, %p375
      %s377 = ssub.s32 %s44, %s51
      %p378 = scmp.eq.s32.totalorder %s377, 0
      %s380 = sadd.s32 %s379, 1
      %s381 = scalar_select %p378, %s379, %s380
      %p384 = pneg %p378
      %p385 = scmp.eq.s32.totalorder %s44, 1
      %p386 = por %p384, %p385
      %p387 = scmp.ne.s32.totalorder %s379, %s382
      %p388 = scmp.eq.s32.totalorder %s44, 0
      %p389 = por %p387, %p388
      %p390 = scmp.ne.s32.totalorder %s379, %s382
      %p391 = scmp.eq.s32.totalorder %s49, 1
      %p392 = por %p390, %p391
      %p393 = scmp.ne.s32.totalorder %s382, %s383
      %p394 = scmp.eq.s32.totalorder %s49, 0
      %p395 = por %p393, %p394
      %p396 = scmp.ne.s32.totalorder %s382, %s383
      %p397 = scmp.eq.s32.totalorder %s50, 1
      %p398 = por %p396, %p397
      %p400 = scmp.ne.s32.totalorder %s383, %s399
      %p401 = scmp.eq.s32.totalorder %s50, 0
      %p402 = por %p400, %p401
      %p403 = scmp.le.s32.totalorder 1, %s44
      %p404 = scmp.lt.s32.totalorder %s44, 3
      %p405 = pnand %p403, %p404
      %p406 = pneg %p405
      // Predicated region
      $region9: #{_lambda_.3} parent=5 // pred_check
        _
      $region10: #{_lambda_.3} parent=5 // pred_check_branch
        %408 = sbr.rel (%p405) target = $region12
      $region11: #{_lambda_.3} parent=5 // pred_region
        %s409 = ssub.s32 %s44, 1
        // Predicated region
        $region13: #{_lambda_.3} parent=11 // pred_check
          %p410 = pneg %p91
        $region14: #{_lambda_.3} parent=11 // pred_check_branch
          %412 = sbr.rel (%p410) target = $region16
        $region15: #{_lambda_.3} parent=11 // pred_region
          %s414 = ssub.s32 128, 128
          %415 = vsyncadd [#allocation11], %s414
          %s417 = sshll.u32 [#allocation10], 4
          %s418 = int_to_ptr.vmem [resolvable:$true] %s417
          %420 = dma.hbm_to_vmem [thread:$0]  %s1, 128, %s418, [#allocation11]
        $region16: #{_lambda_.3} parent=11 // pred_fallthru
          _
        // Predicated region
        $region17: #{_lambda_.3} parent=11 // pred_check
          %p421 = pneg %p112
        $region18: #{_lambda_.3} parent=11 // pred_check_branch
          %423 = sbr.rel (%p421) target = $region20
        $region19: #{_lambda_.3} parent=11 // pred_region
          %s425 = ssub.s32 128, 128
          %426 = vsyncadd [#allocation11], %s425
          %s428 = sshll.u32 [#allocation12], 4
          %s429 = int_to_ptr.vmem [resolvable:$true] %s428
          %431 = dma.hbm_to_vmem [thread:$0]  %s2, 128, %s429, [#allocation11]
        $region20: #{_lambda_.3} parent=11 // pred_fallthru
          _
        // Predicated region
        $region21: #{_lambda_.3} parent=11 // pred_check
          %p432 = pneg %p133
        $region22: #{_lambda_.3} parent=11 // pred_check_branch
          %434 = sbr.rel (%p432) target = $region24
        $region23: #{_lambda_.3} parent=11 // pred_region
          %s436 = ssub.s32 128, 128
          %437 = vsyncadd [#allocation14], %s436
          %s439 = sshll.u32 [#allocation13], 4
          %s440 = int_to_ptr.vmem [resolvable:$true] %s439
          %442 = dma.hbm_to_vmem [thread:$0]  %s3, 128, %s440, [#allocation14]
        $region24: #{_lambda_.3} parent=11 // pred_fallthru
          _
        // Predicated region
        $region25: #{_lambda_.3} parent=11 // pred_check
          %p443 = pneg %p154
        $region26: #{_lambda_.3} parent=11 // pred_check_branch
          %445 = sbr.rel (%p443) target = $region28
        $region27: #{_lambda_.3} parent=11 // pred_region
          %s447 = ssub.s32 16, 16
          %448 = vsyncadd [#allocation14], %s447
          %s450 = sshll.u32 [#allocation15], 4
          %s451 = int_to_ptr.vmem [resolvable:$true] %s450
          %453 = dma.hbm_to_vmem [thread:$0]  %s4, 16, %s451, [#allocation14]
        $region28: #{_lambda_.3} parent=11 // pred_fallthru
          _
        // Predicated region
        $region29: #{_lambda_.3} parent=11 // pred_check
          %p454 = pneg %p175
        $region30: #{_lambda_.3} parent=11 // pred_check_branch
          %456 = sbr.rel (%p454) target = $region32
        $region31: #{_lambda_.3} parent=11 // pred_region
          _
        $region32: #{_lambda_.3} parent=11 // pred_fallthru
          _
        // Predicated region
        $region33: #{_lambda_.3} parent=11 // pred_check
          %p457 = pneg %p196
        $region34: #{_lambda_.3} parent=11 // pred_check_branch
          %459 = sbr.rel (%p457) target = $region36
        $region35: #{_lambda_.3} parent=11 // pred_region
          %s461 = ssub.s32 128, 128
          %462 = vsyncadd [#allocation17], %s461
          %s464 = sshll.u32 [#allocation16], 4
          %s465 = int_to_ptr.vmem [resolvable:$true] %s464
          %467 = dma.hbm_to_vmem [thread:$0]  %s6, 128, %s465, [#allocation17]
        $region36: #{_lambda_.3} parent=11 // pred_fallthru
          _
        // Predicated region
        $region37: #{_lambda_.3} parent=11 // pred_check
          %p468 = pneg %p217
        $region38: #{_lambda_.3} parent=11 // pred_check_branch
          %470 = sbr.rel (%p468) target = $region40
        $region39: #{_lambda_.3} parent=11 // pred_region
          %s472 = ssub.s32 128, 128
          %473 = vsyncadd [#allocation17], %s472
          %s475 = sshll.u32 [#allocation18], 4
          %s476 = int_to_ptr.vmem [resolvable:$true] %s475
          %478 = dma.hbm_to_vmem [thread:$0]  %s7, 128, %s476, [#allocation17]
        $region40: #{_lambda_.3} parent=11 // pred_fallthru
          _
        // Predicated region
        $region41: #{_lambda_.3} parent=11 // pred_check
          %p479 = pneg %p238
        $region42: #{_lambda_.3} parent=11 // pred_check_branch
          %481 = sbr.rel (%p479) target = $region44
        $region43: #{_lambda_.3} parent=11 // pred_region
          %s483 = ssub.s32 16, 16
          %484 = vsyncadd [#allocation20], %s483
          %s486 = sshll.u32 [#allocation19], 4
          %s487 = int_to_ptr.vmem [resolvable:$true] %s486
          %489 = dma.hbm_to_vmem [thread:$0]  %s8, 16, %s487, [#allocation20]
        $region44: #{_lambda_.3} parent=11 // pred_fallthru
          _
        // Predicated region
        $region45: #{_lambda_.3} parent=11 // pred_check
          %p490 = pneg %p259
        $region46: #{_lambda_.3} parent=11 // pred_check_branch
          %492 = sbr.rel (%p490) target = $region48
        $region47: #{_lambda_.3} parent=11 // pred_region
          _
        $region48: #{_lambda_.3} parent=11 // pred_fallthru
          _
        // Predicated region
        $region49: #{_lambda_.3} parent=11 // pred_check
          %p493 = pneg %p280
        $region50: #{_lambda_.3} parent=11 // pred_check_branch
          %495 = sbr.rel (%p493) target = $region52
        $region51: #{_lambda_.3} parent=11 // pred_region
          _
        $region52: #{_lambda_.3} parent=11 // pred_fallthru
          _
        // Predicated region
        $region53: #{_lambda_.3} parent=11 // pred_check
          %p496 = pneg %p301
        $region54: #{_lambda_.3} parent=11 // pred_check_branch
          %498 = sbr.rel (%p496) target = $region56
        $region55: #{_lambda_.3} parent=11 // pred_region
          _
        $region56: #{_lambda_.3} parent=11 // pred_fallthru
          _
        // Predicated region
        $region57: #{_lambda_.3} parent=11 // pred_check
          %p499 = pneg %p322
        $region58: #{_lambda_.3} parent=11 // pred_check_branch
          %501 = sbr.rel (%p499) target = $region60
        $region59: #{_lambda_.3} parent=11 // pred_region
          %s503 = ssub.s32 128, 128
          %504 = vsyncadd [#allocation20], %s503
          %s505 = sshll.u32 [#allocation21], 4
          %s506 = int_to_ptr.vmem [resolvable:$true] %s505
          %511 = dma.hbm_to_vmem [thread:$0]  %s12, 128, %s506, [#allocation20], 64, 64, 4
        $region60: #{_lambda_.3} parent=11 // pred_fallthru
          _
        // Predicated region
        $region61: #{_lambda_.3} parent=11 // pred_check
          %p512 = pneg %p343
        $region62: #{_lambda_.3} parent=11 // pred_check_branch
          %514 = sbr.rel (%p512) target = $region64
        $region63: #{_lambda_.3} parent=11 // pred_region
          %s516 = ssub.s32 256, 256
          %517 = vsyncadd [#allocation23], %s516
          %s518 = sshll.u32 [#allocation22], 4
          %s519 = int_to_ptr.vmem [resolvable:$true] %s518
          %524 = dma.hbm_to_vmem [thread:$0]  %s13, 256, %s519, [#allocation23], 128, 128, 8
        $region64: #{_lambda_.3} parent=11 // pred_fallthru
          _
      $region12: #{_lambda_.3} parent=5 // pred_fallthru
        _
      %p525 = scmp.lt.s32.totalorder %s44, 2
      // Predicated region
      $region65: #{_lambda_.3} parent=5 // pred_check
        %p526 = pneg %p525
      $region66: #{_lambda_.3} parent=5 // pred_check_branch
        %528 = sbr.rel (%p526) target = $region68
      $region67: #{_lambda_.3} parent=5 // pred_region
        // Predicated region
        $region69: #{_lambda_.3} parent=67 // pred_check
          %p529 = pneg %p64
        $region70: #{_lambda_.3} parent=67 // pred_check_branch
          %531 = sbr.rel (%p529) target = $region72
        $region71: #{_lambda_.3} parent=67 // pred_region
          %s532 = sand.u32 %s54, 1
          %s533 = scalar_lea.sflag [#allocation8], %s532
          %s534 = sand.u32 %s54, 1
          %s535 = smul.addr %s534, 40
          %s536 = scalar_lea.vmem [#allocation7], %s535
          %s538 = ssub.s32 640, 640
          %539 = vsyncadd %s533, %s538
          %s540 = smul.addr %s44, 10
          %s541 = smul.addr %s540, 64
          %s542 = scalar_lea.hbm %s0, %s541
          %s544 = sshll.u32 %s536, 4
          %s545 = int_to_ptr.vmem [resolvable:$true] %s544
          %547 = dma.hbm_to_vmem [thread:$0]  %s542, 640, %s545, %s533
        $region72: #{_lambda_.3} parent=67 // pred_fallthru
          _
      $region68: #{_lambda_.3} parent=5 // pred_fallthru
        _
      %p548 = scmp.le.s32.totalorder 1, %s44
      %p549 = scmp.lt.s32.totalorder %s44, 3
      %p550 = pnand %p548, %p549
      %p551 = pneg %p550
      // Predicated region
      $region73: #{_lambda_.3} parent=5 // pred_check
        _
      $region74: #{_lambda_.3} parent=5 // pred_check_branch
        %553 = sbr.rel (%p550) target = $region76
      $region75: #{_lambda_.3} parent=5 // pred_region
        %s554 = ssub.s32 %s44, 1
        %s555 = sand.u32 %s57, 1
        %s556 = scalar_lea.sflag [#allocation8], %s555
        %s557 = sand.u32 %s57, 1
        %s558 = smul.addr %s557, 40
        %s559 = scalar_lea.vmem [#allocation7], %s558
        // Predicated region
        $region77: #{_lambda_.3} parent=75 // pred_check
          %p560 = pneg %p70
        $region78: #{_lambda_.3} parent=75 // pred_check_branch
          %562 = sbr.rel (%p560) target = $region80
        $region79: #{_lambda_.3} parent=75 // pred_region
          %563 = dma.done %s556, 640
        $region80: #{_lambda_.3} parent=75 // pred_fallthru
          _
        // Predicated region
        $region81: #{_lambda_.3} parent=75 // pred_check
          %p564 = pneg %p91
        $region82: #{_lambda_.3} parent=75 // pred_check_branch
          %566 = sbr.rel (%p564) target = $region84
        $region83: #{_lambda_.3} parent=75 // pred_region
          %567 = dma.done [#allocation11], 128
        $region84: #{_lambda_.3} parent=75 // pred_fallthru
          _
        // Predicated region
        $region85: #{_lambda_.3} parent=75 // pred_check
          %p568 = pneg %p112
        $region86: #{_lambda_.3} parent=75 // pred_check_branch
          %570 = sbr.rel (%p568) target = $region88
        $region87: #{_lambda_.3} parent=75 // pred_region
          %571 = dma.done [#allocation11], 128
        $region88: #{_lambda_.3} parent=75 // pred_fallthru
          _
        // Predicated region
        $region89: #{_lambda_.3} parent=75 // pred_check
          %p572 = pneg %p133
        $region90: #{_lambda_.3} parent=75 // pred_check_branch
          %574 = sbr.rel (%p572) target = $region92
        $region91: #{_lambda_.3} parent=75 // pred_region
          %575 = dma.done [#allocation14], 128
        $region92: #{_lambda_.3} parent=75 // pred_fallthru
          _
        // Predicated region
        $region93: #{_lambda_.3} parent=75 // pred_check
          %p576 = pneg %p154
        $region94: #{_lambda_.3} parent=75 // pred_check_branch
          %578 = sbr.rel (%p576) target = $region96
        $region95: #{_lambda_.3} parent=75 // pred_region
          %579 = dma.done [#allocation14], 16
        $region96: #{_lambda_.3} parent=75 // pred_fallthru
          _
        // Predicated region
        $region97: #{_lambda_.3} parent=75 // pred_check
          %p580 = pneg %p196
        $region98: #{_lambda_.3} parent=75 // pred_check_branch
          %582 = sbr.rel (%p580) target = $region100
        $region99: #{_lambda_.3} parent=75 // pred_region
          %583 = dma.done [#allocation17], 128
        $region100: #{_lambda_.3} parent=75 // pred_fallthru
          _
        // Predicated region
        $region101: #{_lambda_.3} parent=75 // pred_check
          %p584 = pneg %p217
        $region102: #{_lambda_.3} parent=75 // pred_check_branch
          %586 = sbr.rel (%p584) target = $region104
        $region103: #{_lambda_.3} parent=75 // pred_region
          %587 = dma.done [#allocation17], 128
        $region104: #{_lambda_.3} parent=75 // pred_fallthru
          _
        // Predicated region
        $region105: #{_lambda_.3} parent=75 // pred_check
          %p588 = pneg %p238
        $region106: #{_lambda_.3} parent=75 // pred_check_branch
          %590 = sbr.rel (%p588) target = $region108
        $region107: #{_lambda_.3} parent=75 // pred_region
          %591 = dma.done [#allocation20], 16
        $region108: #{_lambda_.3} parent=75 // pred_fallthru
          _
        // Predicated region
        $region109: #{_lambda_.3} parent=75 // pred_check
          %p592 = pneg %p322
        $region110: #{_lambda_.3} parent=75 // pred_check_branch
          %594 = sbr.rel (%p592) target = $region112
        $region111: #{_lambda_.3} parent=75 // pred_region
          %595 = dma.done [#allocation20], 128
        $region112: #{_lambda_.3} parent=75 // pred_fallthru
          _
        // Predicated region
        $region113: #{_lambda_.3} parent=75 // pred_check
          %p596 = pneg %p343
        $region114: #{_lambda_.3} parent=75 // pred_check_branch
          %598 = sbr.rel (%p596) target = $region116
        $region115: #{_lambda_.3} parent=75 // pred_region
          %599 = dma.done [#allocation23], 256
        $region116: #{_lambda_.3} parent=75 // pred_fallthru
          _
        %s600 = sand.u32 %s57, 1
        %s601 = scalar_lea.sflag [#allocation8], %s600
        %s602 = sand.u32 %s57, 1
        %s603 = smul.addr %s602, 40
        %s604 = scalar_lea.vmem [#allocation7], %s603
        %p605 = pneg %p70
        %p606 = pneg %p67
        %p607 = pneg %p91
        %p608 = pneg %p88
        %p609 = pneg %p112
        %p610 = pneg %p109
        %p611 = pneg %p133
        %p612 = pneg %p130
        %p613 = pneg %p154
        %p614 = pneg %p151
        %p615 = pneg %p175
        %p616 = pneg %p172
        %p617 = pneg %p196
        %p618 = pneg %p193
        %p619 = pneg %p217
        %p620 = pneg %p214
        %p621 = pneg %p238
        %p622 = pneg %p235
        %p623 = pneg %p259
        %p624 = pneg %p256
        %p625 = pneg %p280
        %p626 = pneg %p277
        %p627 = pneg %p301
        %p628 = pneg %p298
        %p629 = pneg %p322
        %p630 = pneg %p319
        %p631 = pneg %p343
        %p632 = pneg %p340
        %p633 = pneg %p369
        %p634 = pneg %p366
        %s635 = sand.u32 %s356, 1
        %s636 = scalar_lea.sflag [#allocation9], %s635
        %s637 = sand.u32 %s356, 1
        %s638 = smul.addr %s637, 64
        %s639 = scalar_lea.vmem [#allocation24], %s638
        %p640 = pneg %p395
        %p641 = pneg %p392
        %s642 = sand.u32 %s382, 1
        %s643 = scalar_lea.sflag [#allocation26], %s642
        %s644 = sand.u32 %s382, 1
        %s645 = scalar_lea.vmem [#allocation25], %s644
        %v647 = vld [vmem:[%s559] sm:$0xff]
        %v648 = vld [vmem:[%s559 + $0x8] sm:$0xff]
        %v649 = vld [vmem:[%s559 + $0x10] sm:$0xff]
        %v650 = vld [vmem:[%s559 + $0x18] sm:$0xff]
        %v651 = vld [vmem:[%s559 + $0x20] sm:$0xff]
        %v652 = vld [vmem:[#allocation10] sm:$0xff]
        %653 = vst [vmem:[#allocation2] sm:$0xff] %v647
        %654 = vst [vmem:[#allocation2 + $0x8] sm:$0xff] %v648
        %655 = vst [vmem:[#allocation2 + $0x10] sm:$0xff] %v649
        %656 = vst [vmem:[#allocation2 + $0x18] sm:$0xff] %v650
        %662 = vrot.lane.b32.xlu0 %v647, 127
        %v663 = vpop.permute.xlu0 %662
        %664 = vrot.lane.b32.xlu0 %v648, 127
        %v665 = vpop.permute.xlu0 %664
        %666 = vrot.lane.b32.xlu0 %v649, 127
        %v667 = vpop.permute.xlu0 %666
        %668 = vrot.lane.b32.xlu0 %v650, 127
        %v669 = vpop.permute.xlu0 %668
        %670 = vrot.lane.b32.xlu0 %v651, 127
        %v671 = vpop.permute.xlu0 %670
        %v672 = vrot.slane %v663, 4
        %v673 = vrot.slane %v665, 4
        %v674 = vrot.slane %v667, 4
        %v675 = vrot.slane %v669, 4
        %v676 = vrot.slane %v671, 4
        %vm677 = vcmask 1043456
        %v678 = vsel %vm677, %v672, %v673
        %vm679 = vcmask 1039360
        %v680 = vsel %vm679, %v663, %v678
        %v681 = vsel %vm677, %v673, %v674
        %v682 = vsel %vm679, %v665, %v681
        %v683 = vsel %vm677, %v674, %v675
        %v684 = vsel %vm679, %v667, %v683
        %v685 = vsel %vm677, %v675, %v676
        %v686 = vsel %vm679, %v669, %v685
        %691 = vst [vmem:[#allocation2 + $0x20] sm:$0xff] %v680
        %692 = vst [vmem:[#allocation2 + $0x28] sm:$0xff] %v682
        %693 = vst [vmem:[#allocation2 + $0x30] sm:$0xff] %v684
        %694 = vst [vmem:[#allocation2 + $0x38] sm:$0xff] %v686
        %695 = vrot.lane.b32.xlu0 %v647, 126
        %v696 = vpop.permute.xlu0 %695
        %697 = vrot.lane.b32.xlu0 %v648, 126
        %v698 = vpop.permute.xlu0 %697
        %699 = vrot.lane.b32.xlu0 %v649, 126
        %v700 = vpop.permute.xlu0 %699
        %701 = vrot.lane.b32.xlu0 %v650, 126
        %v702 = vpop.permute.xlu0 %701
        %703 = vrot.lane.b32.xlu0 %v651, 126
        %v704 = vpop.permute.xlu0 %703
        %v705 = vrot.slane %v696, 4
        %v706 = vrot.slane %v698, 4
        %v707 = vrot.slane %v700, 4
        %v708 = vrot.slane %v702, 4
        %v709 = vrot.slane %v704, 4
        %v710 = vsel %vm677, %v705, %v706
        %vm711 = vcmask 1031168
        %v712 = vsel %vm711, %v696, %v710
        %v713 = vsel %vm677, %v706, %v707
        %v714 = vsel %vm711, %v698, %v713
        %v715 = vsel %vm677, %v707, %v708
        %v716 = vsel %vm711, %v700, %v715
        %v717 = vsel %vm677, %v708, %v709
        %v718 = vsel %vm711, %v702, %v717
        %723 = vst [vmem:[#allocation2 + $0x40] sm:$0xff] %v712
        %724 = vst [vmem:[#allocation2 + $0x48] sm:$0xff] %v714
        %725 = vst [vmem:[#allocation2 + $0x50] sm:$0xff] %v716
        %726 = vst [vmem:[#allocation2 + $0x58] sm:$0xff] %v718
        %727 = vrot.lane.b32.xlu0 %v647, 118
        %v728 = vpop.permute.xlu0 %727
        %729 = vrot.lane.b32.xlu0 %v648, 118
        %v730 = vpop.permute.xlu0 %729
        %731 = vrot.lane.b32.xlu0 %v649, 118
        %v732 = vpop.permute.xlu0 %731
        %733 = vrot.lane.b32.xlu0 %v650, 118
        %v734 = vpop.permute.xlu0 %733
        %735 = vrot.lane.b32.xlu0 %v651, 118
        %v736 = vpop.permute.xlu0 %735
        %v737 = vrot.slane %v728, 4
        %v738 = vrot.slane %v730, 4
        %v739 = vrot.slane %v732, 4
        %v740 = vrot.slane %v734, 4
        %v741 = vrot.slane %v736, 4
        %v742 = vsel %vm677, %v737, %v738
        %vm743 = vcmask 965632
        %v744 = vsel %vm743, %v728, %v742
        %v745 = vsel %vm677, %v738, %v739
        %v746 = vsel %vm743, %v730, %v745
        %v747 = vsel %vm677, %v739, %v740
        %v748 = vsel %vm743, %v732, %v747
        %v749 = vsel %vm677, %v740, %v741
        %v750 = vsel %vm743, %v734, %v749
        %755 = vst [vmem:[#allocation2 + $0x60] sm:$0xff] %v744
        %756 = vst [vmem:[#allocation2 + $0x68] sm:$0xff] %v746
        %757 = vst [vmem:[#allocation2 + $0x70] sm:$0xff] %v748
        %758 = vst [vmem:[#allocation2 + $0x78] sm:$0xff] %v750
        %759 = vrot.lane.b32.xlu0 %v647, 117
        %v760 = vpop.permute.xlu0 %759
        %761 = vrot.lane.b32.xlu0 %v648, 117
        %v762 = vpop.permute.xlu0 %761
        %763 = vrot.lane.b32.xlu0 %v649, 117
        %v764 = vpop.permute.xlu0 %763
        %765 = vrot.lane.b32.xlu0 %v650, 117
        %v766 = vpop.permute.xlu0 %765
        %767 = vrot.lane.b32.xlu0 %v651, 117
        %v768 = vpop.permute.xlu0 %767
        %v769 = vrot.slane %v760, 4
        %v770 = vrot.slane %v762, 4
        %v771 = vrot.slane %v764, 4
        %v772 = vrot.slane %v766, 4
        %v773 = vrot.slane %v768, 4
        %v774 = vsel %vm677, %v769, %v770
        %vm775 = vcmask 957440
        %v776 = vsel %vm775, %v760, %v774
        %v777 = vsel %vm677, %v770, %v771
        %v778 = vsel %vm775, %v762, %v777
        %v779 = vsel %vm677, %v771, %v772
        %v780 = vsel %vm775, %v764, %v779
        %v781 = vsel %vm677, %v772, %v773
        %v782 = vsel %vm775, %v766, %v781
        %787 = vst [vmem:[#allocation2 + $0x80] sm:$0xff] %v776
        %788 = vst [vmem:[#allocation2 + $0x88] sm:$0xff] %v778
        %789 = vst [vmem:[#allocation2 + $0x90] sm:$0xff] %v780
        %790 = vst [vmem:[#allocation2 + $0x98] sm:$0xff] %v782
        %791 = vrot.lane.b32.xlu0 %v647, 116
        %v792 = vpop.permute.xlu0 %791
        %793 = vrot.lane.b32.xlu0 %v648, 116
        %v794 = vpop.permute.xlu0 %793
        %795 = vrot.lane.b32.xlu0 %v649, 116
        %v796 = vpop.permute.xlu0 %795
        %797 = vrot.lane.b32.xlu0 %v650, 116
        %v798 = vpop.permute.xlu0 %797
        %799 = vrot.lane.b32.xlu0 %v651, 116
        %v800 = vpop.permute.xlu0 %799
        %v801 = vrot.slane %v792, 4
        %v802 = vrot.slane %v794, 4
        %v803 = vrot.slane %v796, 4
        %v804 = vrot.slane %v798, 4
        %v805 = vrot.slane %v800, 4
        %v806 = vsel %vm677, %v801, %v802
        %vm807 = vcmask 949248
        %v808 = vsel %vm807, %v792, %v806
        %v809 = vsel %vm677, %v802, %v803
        %v810 = vsel %vm807, %v794, %v809
        %v811 = vsel %vm677, %v803, %v804
        %v812 = vsel %vm807, %v796, %v811
        %v813 = vsel %vm677, %v804, %v805
        %v814 = vsel %vm807, %v798, %v813
        %819 = vst [vmem:[#allocation2 + $0xa0] sm:$0xff] %v808
        %820 = vst [vmem:[#allocation2 + $0xa8] sm:$0xff] %v810
        %821 = vst [vmem:[#allocation2 + $0xb0] sm:$0xff] %v812
        %822 = vst [vmem:[#allocation2 + $0xb8] sm:$0xff] %v814
        %823 = vrot.lane.b32.xlu0 %v647, 108
        %v824 = vpop.permute.xlu0 %823
        %825 = vrot.lane.b32.xlu0 %v648, 108
        %v826 = vpop.permute.xlu0 %825
        %827 = vrot.lane.b32.xlu0 %v649, 108
        %v828 = vpop.permute.xlu0 %827
        %829 = vrot.lane.b32.xlu0 %v650, 108
        %v830 = vpop.permute.xlu0 %829
        %831 = vrot.lane.b32.xlu0 %v651, 108
        %v832 = vpop.permute.xlu0 %831
        %v833 = vrot.slane %v824, 4
        %v834 = vrot.slane %v826, 4
        %v835 = vrot.slane %v828, 4
        %v836 = vrot.slane %v830, 4
        %v837 = vrot.slane %v832, 4
        %v838 = vsel %vm677, %v833, %v834
        %vm839 = vcmask 883712
        %v840 = vsel %vm839, %v824, %v838
        %v841 = vsel %vm677, %v834, %v835
        %v842 = vsel %vm839, %v826, %v841
        %v843 = vsel %vm677, %v835, %v836
        %v844 = vsel %vm839, %v828, %v843
        %v845 = vsel %vm677, %v836, %v837
        %v846 = vsel %vm839, %v830, %v845
        %851 = vst [vmem:[#allocation2 + $0xc0] sm:$0xff] %v840
        %852 = vst [vmem:[#allocation2 + $0xc8] sm:$0xff] %v842
        %853 = vst [vmem:[#allocation2 + $0xd0] sm:$0xff] %v844
        %854 = vst [vmem:[#allocation2 + $0xd8] sm:$0xff] %v846
        %855 = vrot.lane.b32.xlu0 %v647, 107
        %v856 = vpop.permute.xlu0 %855
        %857 = vrot.lane.b32.xlu0 %v648, 107
        %v858 = vpop.permute.xlu0 %857
        %859 = vrot.lane.b32.xlu0 %v649, 107
        %v860 = vpop.permute.xlu0 %859
        %861 = vrot.lane.b32.xlu0 %v650, 107
        %v862 = vpop.permute.xlu0 %861
        %863 = vrot.lane.b32.xlu0 %v651, 107
        %v864 = vpop.permute.xlu0 %863
        %v865 = vrot.slane %v856, 4
        %v866 = vrot.slane %v858, 4
        %v867 = vrot.slane %v860, 4
        %v868 = vrot.slane %v862, 4
        %v869 = vrot.slane %v864, 4
        %v870 = vsel %vm677, %v865, %v866
        %vm871 = vcmask 875520
        %v872 = vsel %vm871, %v856, %v870
        %v873 = vsel %vm677, %v866, %v867
        %v874 = vsel %vm871, %v858, %v873
        %v875 = vsel %vm677, %v867, %v868
        %v876 = vsel %vm871, %v860, %v875
        %v877 = vsel %vm677, %v868, %v869
        %v878 = vsel %vm871, %v862, %v877
        %883 = vst [vmem:[#allocation2 + $0xe0] sm:$0xff] %v872
        %884 = vst [vmem:[#allocation2 + $0xe8] sm:$0xff] %v874
        %885 = vst [vmem:[#allocation2 + $0xf0] sm:$0xff] %v876
        %886 = vst [vmem:[#allocation2 + $0xf8] sm:$0xff] %v878
        %887 = vrot.lane.b32.xlu0 %v647, 106
        %v888 = vpop.permute.xlu0 %887
        %889 = vrot.lane.b32.xlu0 %v648, 106
        %v890 = vpop.permute.xlu0 %889
        %891 = vrot.lane.b32.xlu0 %v649, 106
        %v892 = vpop.permute.xlu0 %891
        %893 = vrot.lane.b32.xlu0 %v650, 106
        %v894 = vpop.permute.xlu0 %893
        %895 = vrot.lane.b32.xlu0 %v651, 106
        %v896 = vpop.permute.xlu0 %895
        %v897 = vrot.slane %v888, 4
        %v898 = vrot.slane %v890, 4
        %v899 = vrot.slane %v892, 4
        %v900 = vrot.slane %v894, 4
        %v901 = vrot.slane %v896, 4
        %v902 = vsel %vm677, %v897, %v898
        %vm903 = vcmask 867328
        %v904 = vsel %vm903, %v888, %v902
        %v905 = vsel %vm677, %v898, %v899
        %v906 = vsel %vm903, %v890, %v905
        %v907 = vsel %vm677, %v899, %v900
        %v908 = vsel %vm903, %v892, %v907
        %v909 = vsel %vm677, %v900, %v901
        %v910 = vsel %vm903, %v894, %v909
        %915 = vst [vmem:[#allocation2 + $0x100] sm:$0xff] %v904
        %916 = vst [vmem:[#allocation2 + $0x108] sm:$0xff] %v906
        %917 = vst [vmem:[#allocation2 + $0x110] sm:$0xff] %v908
        %918 = vst [vmem:[#allocation2 + $0x118] sm:$0xff] %v910
        %919 = vrot.lane.b32.xlu0 %v647, 28
        %v920 = vpop.permute.xlu0 %919
        %921 = vrot.lane.b32.xlu0 %v648, 28
        %v922 = vpop.permute.xlu0 %921
        %923 = vrot.lane.b32.xlu0 %v649, 28
        %v924 = vpop.permute.xlu0 %923
        %925 = vrot.lane.b32.xlu0 %v650, 28
        %v926 = vpop.permute.xlu0 %925
        %927 = vrot.lane.b32.xlu0 %v651, 28
        %v928 = vpop.permute.xlu0 %927
        %v929 = vrot.slane %v920, 4
        %v930 = vrot.slane %v922, 4
        %v931 = vrot.slane %v924, 4
        %v932 = vrot.slane %v926, 4
        %v933 = vrot.slane %v928, 4
        %v934 = vsel %vm677, %v929, %v930
        %vm935 = vcmask 228352
        %v936 = vsel %vm935, %v920, %v934
        %v937 = vsel %vm677, %v930, %v931
        %v938 = vsel %vm935, %v922, %v937
        %v939 = vsel %vm677, %v931, %v932
        %v940 = vsel %vm935, %v924, %v939
        %v941 = vsel %vm677, %v932, %v933
        %v942 = vsel %vm935, %v926, %v941
        %947 = vst [vmem:[#allocation2 + $0x120] sm:$0xff] %v936
        %948 = vst [vmem:[#allocation2 + $0x128] sm:$0xff] %v938
        %949 = vst [vmem:[#allocation2 + $0x130] sm:$0xff] %v940
        %950 = vst [vmem:[#allocation2 + $0x138] sm:$0xff] %v942
        %951 = vrot.lane.b32.xlu0 %v647, 27
        %v952 = vpop.permute.xlu0 %951
        %953 = vrot.lane.b32.xlu0 %v648, 27
        %v954 = vpop.permute.xlu0 %953
        %955 = vrot.lane.b32.xlu0 %v649, 27
        %v956 = vpop.permute.xlu0 %955
        %957 = vrot.lane.b32.xlu0 %v650, 27
        %v958 = vpop.permute.xlu0 %957
        %959 = vrot.lane.b32.xlu0 %v651, 27
        %v960 = vpop.permute.xlu0 %959
        %v961 = vrot.slane %v952, 4
        %v962 = vrot.slane %v954, 4
        %v963 = vrot.slane %v956, 4
        %v964 = vrot.slane %v958, 4
        %v965 = vrot.slane %v960, 4
        %v966 = vsel %vm677, %v961, %v962
        %vm967 = vcmask 220160
        %v968 = vsel %vm967, %v952, %v966
        %v969 = vsel %vm677, %v962, %v963
        %v970 = vsel %vm967, %v954, %v969
        %v971 = vsel %vm677, %v963, %v964
        %v972 = vsel %vm967, %v956, %v971
        %v973 = vsel %vm677, %v964, %v965
        %v974 = vsel %vm967, %v958, %v973
        %979 = vst [vmem:[#allocation2 + $0x140] sm:$0xff] %v968
        %980 = vst [vmem:[#allocation2 + $0x148] sm:$0xff] %v970
        %981 = vst [vmem:[#allocation2 + $0x150] sm:$0xff] %v972
        %982 = vst [vmem:[#allocation2 + $0x158] sm:$0xff] %v974
        %983 = vrot.lane.b32.xlu0 %v647, 26
        %v984 = vpop.permute.xlu0 %983
        %985 = vrot.lane.b32.xlu0 %v648, 26
        %v986 = vpop.permute.xlu0 %985
        %987 = vrot.lane.b32.xlu0 %v649, 26
        %v988 = vpop.permute.xlu0 %987
        %989 = vrot.lane.b32.xlu0 %v650, 26
        %v990 = vpop.permute.xlu0 %989
        %991 = vrot.lane.b32.xlu0 %v651, 26
        %v992 = vpop.permute.xlu0 %991
        %v993 = vrot.slane %v984, 4
        %v994 = vrot.slane %v986, 4
        %v995 = vrot.slane %v988, 4
        %v996 = vrot.slane %v990, 4
        %v997 = vrot.slane %v992, 4
        %v998 = vsel %vm677, %v993, %v994
        %vm999 = vcmask 211968
        %v1000 = vsel %vm999, %v984, %v998
        %v1001 = vsel %vm677, %v994, %v995
        %v1002 = vsel %vm999, %v986, %v1001
        %v1003 = vsel %vm677, %v995, %v996
        %v1004 = vsel %vm999, %v988, %v1003
        %v1005 = vsel %vm677, %v996, %v997
        %v1006 = vsel %vm999, %v990, %v1005
        %1011 = vst [vmem:[#allocation2 + $0x160] sm:$0xff] %v1000
        %1012 = vst [vmem:[#allocation2 + $0x168] sm:$0xff] %v1002
        %1013 = vst [vmem:[#allocation2 + $0x170] sm:$0xff] %v1004
        %1014 = vst [vmem:[#allocation2 + $0x178] sm:$0xff] %v1006
        %1015 = vrot.lane.b32.xlu0 %v647, 18
        %v1016 = vpop.permute.xlu0 %1015
        %1017 = vrot.lane.b32.xlu0 %v648, 18
        %v1018 = vpop.permute.xlu0 %1017
        %1019 = vrot.lane.b32.xlu0 %v649, 18
        %v1020 = vpop.permute.xlu0 %1019
        %1021 = vrot.lane.b32.xlu0 %v650, 18
        %v1022 = vpop.permute.xlu0 %1021
        %1023 = vrot.lane.b32.xlu0 %v651, 18
        %v1024 = vpop.permute.xlu0 %1023
        %v1025 = vrot.slane %v1016, 4
        %v1026 = vrot.slane %v1018, 4
        %v1027 = vrot.slane %v1020, 4
        %v1028 = vrot.slane %v1022, 4
        %v1029 = vrot.slane %v1024, 4
        %v1030 = vsel %vm677, %v1025, %v1026
        %vm1031 = vcmask 146432
        %v1032 = vsel %vm1031, %v1016, %v1030
        %v1033 = vsel %vm677, %v1026, %v1027
        %v1034 = vsel %vm1031, %v1018, %v1033
        %v1035 = vsel %vm677, %v1027, %v1028
        %v1036 = vsel %vm1031, %v1020, %v1035
        %v1037 = vsel %vm677, %v1028, %v1029
        %v1038 = vsel %vm1031, %v1022, %v1037
        %1043 = vst [vmem:[#allocation2 + $0x180] sm:$0xff] %v1032
        %1044 = vst [vmem:[#allocation2 + $0x188] sm:$0xff] %v1034
        %1045 = vst [vmem:[#allocation2 + $0x190] sm:$0xff] %v1036
        %1046 = vst [vmem:[#allocation2 + $0x198] sm:$0xff] %v1038
        %1047 = vrot.lane.b32.xlu0 %v647, 17
        %v1048 = vpop.permute.xlu0 %1047
        %1049 = vrot.lane.b32.xlu0 %v648, 17
        %v1050 = vpop.permute.xlu0 %1049
        %1051 = vrot.lane.b32.xlu0 %v649, 17
        %v1052 = vpop.permute.xlu0 %1051
        %1053 = vrot.lane.b32.xlu0 %v650, 17
        %v1054 = vpop.permute.xlu0 %1053
        %1055 = vrot.lane.b32.xlu0 %v651, 17
        %v1056 = vpop.permute.xlu0 %1055
        %v1057 = vrot.slane %v1048, 4
        %v1058 = vrot.slane %v1050, 4
        %v1059 = vrot.slane %v1052, 4
        %v1060 = vrot.slane %v1054, 4
        %v1061 = vrot.slane %v1056, 4
        %v1062 = vsel %vm677, %v1057, %v1058
        %vm1063 = vcmask 138240
        %v1064 = vsel %vm1063, %v1048, %v1062
        %v1065 = vsel %vm677, %v1058, %v1059
        %v1066 = vsel %vm1063, %v1050, %v1065
        %v1067 = vsel %vm677, %v1059, %v1060
        %v1068 = vsel %vm1063, %v1052, %v1067
        %v1069 = vsel %vm677, %v1060, %v1061
        %v1070 = vsel %vm1063, %v1054, %v1069
        %1075 = vst [vmem:[#allocation2 + $0x1a0] sm:$0xff] %v1064
        %1076 = vst [vmem:[#allocation2 + $0x1a8] sm:$0xff] %v1066
        %1077 = vst [vmem:[#allocation2 + $0x1b0] sm:$0xff] %v1068
        %1078 = vst [vmem:[#allocation2 + $0x1b8] sm:$0xff] %v1070
        %1079 = vrot.lane.b32.xlu0 %v647, 16
        %v1080 = vpop.permute.xlu0 %1079
        %1081 = vrot.lane.b32.xlu0 %v648, 16
        %v1082 = vpop.permute.xlu0 %1081
        %1083 = vrot.lane.b32.xlu0 %v649, 16
        %v1084 = vpop.permute.xlu0 %1083
        %1085 = vrot.lane.b32.xlu0 %v650, 16
        %v1086 = vpop.permute.xlu0 %1085
        %1087 = vrot.lane.b32.xlu0 %v651, 16
        %v1088 = vpop.permute.xlu0 %1087
        %v1089 = vrot.slane %v1080, 4
        %v1090 = vrot.slane %v1082, 4
        %v1091 = vrot.slane %v1084, 4
        %v1092 = vrot.slane %v1086, 4
        %v1093 = vrot.slane %v1088, 4
        %v1094 = vsel %vm677, %v1089, %v1090
        %vm1095 = vcmask 130048
        %v1096 = vsel %vm1095, %v1080, %v1094
        %v1097 = vsel %vm677, %v1090, %v1091
        %v1098 = vsel %vm1095, %v1082, %v1097
        %v1099 = vsel %vm677, %v1091, %v1092
        %v1100 = vsel %vm1095, %v1084, %v1099
        %v1101 = vsel %vm677, %v1092, %v1093
        %v1102 = vsel %vm1095, %v1086, %v1101
        %1107 = vst [vmem:[#allocation2 + $0x1c0] sm:$0xff] %v1096
        %1108 = vst [vmem:[#allocation2 + $0x1c8] sm:$0xff] %v1098
        %1109 = vst [vmem:[#allocation2 + $0x1d0] sm:$0xff] %v1100
        %1110 = vst [vmem:[#allocation2 + $0x1d8] sm:$0xff] %v1102
        %1111 = vrot.lane.b32.xlu0 %v647, 8
        %v1112 = vpop.permute.xlu0 %1111
        %1113 = vrot.lane.b32.xlu0 %v648, 8
        %v1114 = vpop.permute.xlu0 %1113
        %1115 = vrot.lane.b32.xlu0 %v649, 8
        %v1116 = vpop.permute.xlu0 %1115
        %1117 = vrot.lane.b32.xlu0 %v650, 8
        %v1118 = vpop.permute.xlu0 %1117
        %1119 = vrot.lane.b32.xlu0 %v651, 8
        %v1120 = vpop.permute.xlu0 %1119
        %v1121 = vrot.slane %v1112, 4
        %v1122 = vrot.slane %v1114, 4
        %v1123 = vrot.slane %v1116, 4
        %v1124 = vrot.slane %v1118, 4
        %v1125 = vrot.slane %v1120, 4
        %v1126 = vsel %vm677, %v1121, %v1122
        %vm1127 = vcmask 64512
        %v1128 = vsel %vm1127, %v1112, %v1126
        %v1129 = vsel %vm677, %v1122, %v1123
        %v1130 = vsel %vm1127, %v1114, %v1129
        %v1131 = vsel %vm677, %v1123, %v1124
        %v1132 = vsel %vm1127, %v1116, %v1131
        %v1133 = vsel %vm677, %v1124, %v1125
        %v1134 = vsel %vm1127, %v1118, %v1133
        %1139 = vst [vmem:[#allocation2 + $0x1e0] sm:$0xff] %v1128
        %1140 = vst [vmem:[#allocation2 + $0x1e8] sm:$0xff] %v1130
        %1141 = vst [vmem:[#allocation2 + $0x1f0] sm:$0xff] %v1132
        %1142 = vst [vmem:[#allocation2 + $0x1f8] sm:$0xff] %v1134
        %1143 = vrot.lane.b32.xlu0 %v647, 7
        %v1144 = vpop.permute.xlu0 %1143
        %1145 = vrot.lane.b32.xlu0 %v648, 7
        %v1146 = vpop.permute.xlu0 %1145
        %1147 = vrot.lane.b32.xlu0 %v649, 7
        %v1148 = vpop.permute.xlu0 %1147
        %1149 = vrot.lane.b32.xlu0 %v650, 7
        %v1150 = vpop.permute.xlu0 %1149
        %1151 = vrot.lane.b32.xlu0 %v651, 7
        %v1152 = vpop.permute.xlu0 %1151
        %v1153 = vrot.slane %v1144, 4
        %v1154 = vrot.slane %v1146, 4
        %v1155 = vrot.slane %v1148, 4
        %v1156 = vrot.slane %v1150, 4
        %v1157 = vrot.slane %v1152, 4
        %v1158 = vsel %vm677, %v1153, %v1154
        %vm1159 = vcmask 56320
        %v1160 = vsel %vm1159, %v1144, %v1158
        %v1161 = vsel %vm677, %v1154, %v1155
        %v1162 = vsel %vm1159, %v1146, %v1161
        %v1163 = vsel %vm677, %v1155, %v1156
        %v1164 = vsel %vm1159, %v1148, %v1163
        %v1165 = vsel %vm677, %v1156, %v1157
        %v1166 = vsel %vm1159, %v1150, %v1165
        %1171 = vst [vmem:[#allocation2 + $0x200] sm:$0xff] %v1160
        %1172 = vst [vmem:[#allocation2 + $0x208] sm:$0xff] %v1162
        %1173 = vst [vmem:[#allocation2 + $0x210] sm:$0xff] %v1164
        %1174 = vst [vmem:[#allocation2 + $0x218] sm:$0xff] %v1166
        %1175 = vrot.lane.b32.xlu0 %v647, 6
        %v1176 = vpop.permute.xlu0 %1175
        %1177 = vrot.lane.b32.xlu0 %v648, 6
        %v1178 = vpop.permute.xlu0 %1177
        %1179 = vrot.lane.b32.xlu0 %v649, 6
        %v1180 = vpop.permute.xlu0 %1179
        %1181 = vrot.lane.b32.xlu0 %v650, 6
        %v1182 = vpop.permute.xlu0 %1181
        %1183 = vrot.lane.b32.xlu0 %v651, 6
        %v1184 = vpop.permute.xlu0 %1183
        %v1185 = vrot.slane %v1176, 4
        %v1186 = vrot.slane %v1178, 4
        %v1187 = vrot.slane %v1180, 4
        %v1188 = vrot.slane %v1182, 4
        %v1189 = vrot.slane %v1184, 4
        %v1190 = vsel %vm677, %v1185, %v1186
        %vm1191 = vcmask 48128
        %v1192 = vsel %vm1191, %v1176, %v1190
        %v1193 = vsel %vm677, %v1186, %v1187
        %v1194 = vsel %vm1191, %v1178, %v1193
        %v1195 = vsel %vm677, %v1187, %v1188
        %v1196 = vsel %vm1191, %v1180, %v1195
        %v1197 = vsel %vm677, %v1188, %v1189
        %v1198 = vsel %vm1191, %v1182, %v1197
        %1203 = vst [vmem:[#allocation2 + $0x220] sm:$0xff] %v1192
        %1204 = vst [vmem:[#allocation2 + $0x228] sm:$0xff] %v1194
        %1205 = vst [vmem:[#allocation2 + $0x230] sm:$0xff] %v1196
        %1206 = vst [vmem:[#allocation2 + $0x238] sm:$0xff] %v1198
        %1207 = vrot.lane.b32.xlu0 %v647, 56
        %v1208 = vpop.permute.xlu0 %1207
        %1209 = vrot.lane.b32.xlu0 %v648, 56
        %v1210 = vpop.permute.xlu0 %1209
        %1211 = vrot.lane.b32.xlu0 %v649, 56
        %v1212 = vpop.permute.xlu0 %1211
        %1213 = vrot.lane.b32.xlu0 %v650, 56
        %v1214 = vpop.permute.xlu0 %1213
        %1215 = vrot.lane.b32.xlu0 %v651, 56
        %v1216 = vpop.permute.xlu0 %1215
        %v1217 = vrot.slane %v1208, 4
        %v1218 = vrot.slane %v1210, 4
        %v1219 = vrot.slane %v1212, 4
        %v1220 = vrot.slane %v1214, 4
        %v1221 = vrot.slane %v1216, 4
        %v1222 = vsel %vm677, %v1217, %v1218
        %vm1223 = vcmask 457728
        %v1224 = vsel %vm1223, %v1222, %v1210
        %v1225 = vsel %vm677, %v1218, %v1219
        %v1226 = vsel %vm1223, %v1225, %v1212
        %v1227 = vsel %vm677, %v1219, %v1220
        %v1228 = vsel %vm1223, %v1227, %v1214
        %v1229 = vsel %vm677, %v1220, %v1221
        %v1230 = vsel %vm1223, %v1229, %v1216
        %1235 = vst [vmem:[#allocation2 + $0x240] sm:$0xff] %v1224
        %1236 = vst [vmem:[#allocation2 + $0x248] sm:$0xff] %v1226
        %1237 = vst [vmem:[#allocation2 + $0x250] sm:$0xff] %v1228
        %1238 = vst [vmem:[#allocation2 + $0x258] sm:$0xff] %v1230
        %1239 = vrot.lane.b32.xlu0 %v647, 55
        %v1240 = vpop.permute.xlu0 %1239
        %1241 = vrot.lane.b32.xlu0 %v648, 55
        %v1242 = vpop.permute.xlu0 %1241
        %1243 = vrot.lane.b32.xlu0 %v649, 55
        %v1244 = vpop.permute.xlu0 %1243
        %1245 = vrot.lane.b32.xlu0 %v650, 55
        %v1246 = vpop.permute.xlu0 %1245
        %1247 = vrot.lane.b32.xlu0 %v651, 55
        %v1248 = vpop.permute.xlu0 %1247
        %v1249 = vrot.slane %v1240, 4
        %v1250 = vrot.slane %v1242, 4
        %v1251 = vrot.slane %v1244, 4
        %v1252 = vrot.slane %v1246, 4
        %v1253 = vrot.slane %v1248, 4
        %v1254 = vsel %vm677, %v1249, %v1250
        %vm1255 = vcmask 449536
        %v1256 = vsel %vm1255, %v1254, %v1242
        %v1257 = vsel %vm677, %v1250, %v1251
        %v1258 = vsel %vm1255, %v1257, %v1244
        %v1259 = vsel %vm677, %v1251, %v1252
        %v1260 = vsel %vm1255, %v1259, %v1246
        %v1261 = vsel %vm677, %v1252, %v1253
        %v1262 = vsel %vm1255, %v1261, %v1248
        %1267 = vst [vmem:[#allocation2 + $0x260] sm:$0xff] %v1256
        %1268 = vst [vmem:[#allocation2 + $0x268] sm:$0xff] %v1258
        %1269 = vst [vmem:[#allocation2 + $0x270] sm:$0xff] %v1260
        %1270 = vst [vmem:[#allocation2 + $0x278] sm:$0xff] %v1262
        %1271 = vrot.lane.b32.xlu0 %v647, 54
        %v1272 = vpop.permute.xlu0 %1271
        %1273 = vrot.lane.b32.xlu0 %v648, 54
        %v1274 = vpop.permute.xlu0 %1273
        %1275 = vrot.lane.b32.xlu0 %v649, 54
        %v1276 = vpop.permute.xlu0 %1275
        %1277 = vrot.lane.b32.xlu0 %v650, 54
        %v1278 = vpop.permute.xlu0 %1277
        %1279 = vrot.lane.b32.xlu0 %v651, 54
        %v1280 = vpop.permute.xlu0 %1279
        %v1281 = vrot.slane %v1272, 4
        %v1282 = vrot.slane %v1274, 4
        %v1283 = vrot.slane %v1276, 4
        %v1284 = vrot.slane %v1278, 4
        %v1285 = vrot.slane %v1280, 4
        %v1286 = vsel %vm677, %v1281, %v1282
        %vm1287 = vcmask 441344
        %v1288 = vsel %vm1287, %v1286, %v1274
        %v1289 = vsel %vm677, %v1282, %v1283
        %v1290 = vsel %vm1287, %v1289, %v1276
        %v1291 = vsel %vm677, %v1283, %v1284
        %v1292 = vsel %vm1287, %v1291, %v1278
        %v1293 = vsel %vm677, %v1284, %v1285
        %v1294 = vsel %vm1287, %v1293, %v1280
        %1299 = vst [vmem:[#allocation2 + $0x280] sm:$0xff] %v1288
        %1300 = vst [vmem:[#allocation2 + $0x288] sm:$0xff] %v1290
        %1301 = vst [vmem:[#allocation2 + $0x290] sm:$0xff] %v1292
        %1302 = vst [vmem:[#allocation2 + $0x298] sm:$0xff] %v1294
        %1303 = vrot.lane.b32.xlu0 %v647, 46
        %v1304 = vpop.permute.xlu0 %1303
        %1305 = vrot.lane.b32.xlu0 %v648, 46
        %v1306 = vpop.permute.xlu0 %1305
        %1307 = vrot.lane.b32.xlu0 %v649, 46
        %v1308 = vpop.permute.xlu0 %1307
        %1309 = vrot.lane.b32.xlu0 %v650, 46
        %v1310 = vpop.permute.xlu0 %1309
        %1311 = vrot.lane.b32.xlu0 %v651, 46
        %v1312 = vpop.permute.xlu0 %1311
        %v1313 = vrot.slane %v1304, 4
        %v1314 = vrot.slane %v1306, 4
        %v1315 = vrot.slane %v1308, 4
        %v1316 = vrot.slane %v1310, 4
        %v1317 = vrot.slane %v1312, 4
        %v1318 = vsel %vm677, %v1313, %v1314
        %vm1319 = vcmask 375808
        %v1320 = vsel %vm1319, %v1318, %v1306
        %v1321 = vsel %vm677, %v1314, %v1315
        %v1322 = vsel %vm1319, %v1321, %v1308
        %v1323 = vsel %vm677, %v1315, %v1316
        %v1324 = vsel %vm1319, %v1323, %v1310
        %v1325 = vsel %vm677, %v1316, %v1317
        %v1326 = vsel %vm1319, %v1325, %v1312
        %1331 = vst [vmem:[#allocation2 + $0x2a0] sm:$0xff] %v1320
        %1332 = vst [vmem:[#allocation2 + $0x2a8] sm:$0xff] %v1322
        %1333 = vst [vmem:[#allocation2 + $0x2b0] sm:$0xff] %v1324
        %1334 = vst [vmem:[#allocation2 + $0x2b8] sm:$0xff] %v1326
        %1335 = vrot.lane.b32.xlu0 %v647, 45
        %v1336 = vpop.permute.xlu0 %1335
        %1337 = vrot.lane.b32.xlu0 %v648, 45
        %v1338 = vpop.permute.xlu0 %1337
        %1339 = vrot.lane.b32.xlu0 %v649, 45
        %v1340 = vpop.permute.xlu0 %1339
        %1341 = vrot.lane.b32.xlu0 %v650, 45
        %v1342 = vpop.permute.xlu0 %1341
        %1343 = vrot.lane.b32.xlu0 %v651, 45
        %v1344 = vpop.permute.xlu0 %1343
        %v1345 = vrot.slane %v1336, 4
        %v1346 = vrot.slane %v1338, 4
        %v1347 = vrot.slane %v1340, 4
        %v1348 = vrot.slane %v1342, 4
        %v1349 = vrot.slane %v1344, 4
        %v1350 = vsel %vm677, %v1345, %v1346
        %vm1351 = vcmask 367616
        %v1352 = vsel %vm1351, %v1350, %v1338
        %v1353 = vsel %vm677, %v1346, %v1347
        %v1354 = vsel %vm1351, %v1353, %v1340
        %v1355 = vsel %vm677, %v1347, %v1348
        %v1356 = vsel %vm1351, %v1355, %v1342
        %v1357 = vsel %vm677, %v1348, %v1349
        %v1358 = vsel %vm1351, %v1357, %v1344
        %1363 = vst [vmem:[#allocation2 + $0x2c0] sm:$0xff] %v1352
        %1364 = vst [vmem:[#allocation2 + $0x2c8] sm:$0xff] %v1354
        %1365 = vst [vmem:[#allocation2 + $0x2d0] sm:$0xff] %v1356
        %1366 = vst [vmem:[#allocation2 + $0x2d8] sm:$0xff] %v1358
        %1367 = vrot.lane.b32.xlu0 %v647, 44
        %v1368 = vpop.permute.xlu0 %1367
        %1369 = vrot.lane.b32.xlu0 %v648, 44
        %v1370 = vpop.permute.xlu0 %1369
        %1371 = vrot.lane.b32.xlu0 %v649, 44
        %v1372 = vpop.permute.xlu0 %1371
        %1373 = vrot.lane.b32.xlu0 %v650, 44
        %v1374 = vpop.permute.xlu0 %1373
        %1375 = vrot.lane.b32.xlu0 %v651, 44
        %v1376 = vpop.permute.xlu0 %1375
        %v1377 = vrot.slane %v1368, 4
        %v1378 = vrot.slane %v1370, 4
        %v1379 = vrot.slane %v1372, 4
        %v1380 = vrot.slane %v1374, 4
        %v1381 = vrot.slane %v1376, 4
        %v1382 = vsel %vm677, %v1377, %v1378
        %vm1383 = vcmask 359424
        %v1384 = vsel %vm1383, %v1382, %v1370
        %v1385 = vsel %vm677, %v1378, %v1379
        %v1386 = vsel %vm1383, %v1385, %v1372
        %v1387 = vsel %vm677, %v1379, %v1380
        %v1388 = vsel %vm1383, %v1387, %v1374
        %v1389 = vsel %vm677, %v1380, %v1381
        %v1390 = vsel %vm1383, %v1389, %v1376
        %1395 = vst [vmem:[#allocation2 + $0x2e0] sm:$0xff] %v1384
        %1396 = vst [vmem:[#allocation2 + $0x2e8] sm:$0xff] %v1386
        %1397 = vst [vmem:[#allocation2 + $0x2f0] sm:$0xff] %v1388
        %1398 = vst [vmem:[#allocation2 + $0x2f8] sm:$0xff] %v1390
        %1399 = vrot.lane.b32.xlu0 %v647, 36
        %v1400 = vpop.permute.xlu0 %1399
        %1401 = vrot.lane.b32.xlu0 %v648, 36
        %v1402 = vpop.permute.xlu0 %1401
        %1403 = vrot.lane.b32.xlu0 %v649, 36
        %v1404 = vpop.permute.xlu0 %1403
        %1405 = vrot.lane.b32.xlu0 %v650, 36
        %v1406 = vpop.permute.xlu0 %1405
        %1407 = vrot.lane.b32.xlu0 %v651, 36
        %v1408 = vpop.permute.xlu0 %1407
        %v1409 = vrot.slane %v1400, 4
        %v1410 = vrot.slane %v1402, 4
        %v1411 = vrot.slane %v1404, 4
        %v1412 = vrot.slane %v1406, 4
        %v1413 = vrot.slane %v1408, 4
        %v1414 = vsel %vm677, %v1409, %v1410
        %vm1415 = vcmask 293888
        %v1416 = vsel %vm1415, %v1414, %v1402
        %v1417 = vsel %vm677, %v1410, %v1411
        %v1418 = vsel %vm1415, %v1417, %v1404
        %v1419 = vsel %vm677, %v1411, %v1412
        %v1420 = vsel %vm1415, %v1419, %v1406
        %v1421 = vsel %vm677, %v1412, %v1413
        %v1422 = vsel %vm1415, %v1421, %v1408
        %1427 = vst [vmem:[#allocation2 + $0x300] sm:$0xff] %v1416
        %1428 = vst [vmem:[#allocation2 + $0x308] sm:$0xff] %v1418
        %1429 = vst [vmem:[#allocation2 + $0x310] sm:$0xff] %v1420
        %1430 = vst [vmem:[#allocation2 + $0x318] sm:$0xff] %v1422
        %1431 = vrot.lane.b32.xlu0 %v647, 35
        %v1432 = vpop.permute.xlu0 %1431
        %1433 = vrot.lane.b32.xlu0 %v648, 35
        %v1434 = vpop.permute.xlu0 %1433
        %1435 = vrot.lane.b32.xlu0 %v649, 35
        %v1436 = vpop.permute.xlu0 %1435
        %1437 = vrot.lane.b32.xlu0 %v650, 35
        %v1438 = vpop.permute.xlu0 %1437
        %1439 = vrot.lane.b32.xlu0 %v651, 35
        %v1440 = vpop.permute.xlu0 %1439
        %v1441 = vrot.slane %v1432, 4
        %v1442 = vrot.slane %v1434, 4
        %v1443 = vrot.slane %v1436, 4
        %v1444 = vrot.slane %v1438, 4
        %v1445 = vrot.slane %v1440, 4
        %v1446 = vsel %vm677, %v1441, %v1442
        %vm1447 = vcmask 285696
        %v1448 = vsel %vm1447, %v1446, %v1434
        %v1449 = vsel %vm677, %v1442, %v1443
        %v1450 = vsel %vm1447, %v1449, %v1436
        %v1451 = vsel %vm677, %v1443, %v1444
        %v1452 = vsel %vm1447, %v1451, %v1438
        %v1453 = vsel %vm677, %v1444, %v1445
        %v1454 = vsel %vm1447, %v1453, %v1440
        %1459 = vst [vmem:[#allocation2 + $0x320] sm:$0xff] %v1448
        %1460 = vst [vmem:[#allocation2 + $0x328] sm:$0xff] %v1450
        %1461 = vst [vmem:[#allocation2 + $0x330] sm:$0xff] %v1452
        %1462 = vst [vmem:[#allocation2 + $0x338] sm:$0xff] %v1454
        %1463 = vrot.lane.b32.xlu0 %v647, 34
        %v1464 = vpop.permute.xlu0 %1463
        %1465 = vrot.lane.b32.xlu0 %v648, 34
        %v1466 = vpop.permute.xlu0 %1465
        %1467 = vrot.lane.b32.xlu0 %v649, 34
        %v1468 = vpop.permute.xlu0 %1467
        %1469 = vrot.lane.b32.xlu0 %v650, 34
        %v1470 = vpop.permute.xlu0 %1469
        %1471 = vrot.lane.b32.xlu0 %v651, 34
        %v1472 = vpop.permute.xlu0 %1471
        %v1473 = vrot.slane %v1464, 4
        %v1474 = vrot.slane %v1466, 4
        %v1475 = vrot.slane %v1468, 4
        %v1476 = vrot.slane %v1470, 4
        %v1477 = vrot.slane %v1472, 4
        %v1478 = vsel %vm677, %v1473, %v1474
        %vm1479 = vcmask 277504
        %v1480 = vsel %vm1479, %v1478, %v1466
        %v1481 = vsel %vm677, %v1474, %v1475
        %v1482 = vsel %vm1479, %v1481, %v1468
        %v1483 = vsel %vm677, %v1475, %v1476
        %v1484 = vsel %vm1479, %v1483, %v1470
        %v1485 = vsel %vm677, %v1476, %v1477
        %v1486 = vsel %vm1479, %v1485, %v1472
        %1491 = vst [vmem:[#allocation2 + $0x340] sm:$0xff] %v1480
        %1492 = vst [vmem:[#allocation2 + $0x348] sm:$0xff] %v1482
        %1493 = vst [vmem:[#allocation2 + $0x350] sm:$0xff] %v1484
        %1494 = vst [vmem:[#allocation2 + $0x358] sm:$0xff] %v1486
        %v1495 = vld [vmem:[#allocation12] sm:$0xff]
        %v1496 = vld [vmem:[#allocation2] sm:$0xff]
        %v1497 = vld [vmem:[#allocation2 + $0x8] sm:$0xff]
        %v1498 = vld [vmem:[#allocation2 + $0x10] sm:$0xff]
        %v1499 = vld [vmem:[#allocation2 + $0x18] sm:$0xff]
        %v1500 = vld [vmem:[#allocation2 + $0x20] sm:$0xff]
        %v1501 = vld [vmem:[#allocation2 + $0x28] sm:$0xff]
        %v1502 = vld [vmem:[#allocation2 + $0x30] sm:$0xff]
        %v1503 = vld [vmem:[#allocation2 + $0x38] sm:$0xff]
        %v1504 = vld [vmem:[#allocation2 + $0x40] sm:$0xff]
        %v1505 = vld [vmem:[#allocation2 + $0x48] sm:$0xff]
        %v1506 = vld [vmem:[#allocation2 + $0x50] sm:$0xff]
        %v1507 = vld [vmem:[#allocation2 + $0x58] sm:$0xff]
        %v1508 = vld [vmem:[#allocation2 + $0x60] sm:$0xff]
        %v1509 = vld [vmem:[#allocation2 + $0x68] sm:$0xff]
        %v1510 = vld [vmem:[#allocation2 + $0x70] sm:$0xff]
        %v1511 = vld [vmem:[#allocation2 + $0x78] sm:$0xff]
        %v1512 = vld [vmem:[#allocation2 + $0x80] sm:$0xff]
        %v1513 = vld [vmem:[#allocation2 + $0x88] sm:$0xff]
        %v1514 = vld [vmem:[#allocation2 + $0x90] sm:$0xff]
        %v1515 = vld [vmem:[#allocation2 + $0x98] sm:$0xff]
        %v1516 = vld [vmem:[#allocation2 + $0xa0] sm:$0xff]
        %v1517 = vld [vmem:[#allocation2 + $0xa8] sm:$0xff]
        %v1518 = vld [vmem:[#allocation2 + $0xb0] sm:$0xff]
        %v1519 = vld [vmem:[#allocation2 + $0xb8] sm:$0xff]
        %v1520 = vld [vmem:[#allocation2 + $0xc0] sm:$0xff]
        %v1521 = vld [vmem:[#allocation2 + $0xc8] sm:$0xff]
        %v1522 = vld [vmem:[#allocation2 + $0xd0] sm:$0xff]
        %v1523 = vld [vmem:[#allocation2 + $0xd8] sm:$0xff]
        %v1524 = vld [vmem:[#allocation2 + $0xe0] sm:$0xff]
        %v1525 = vld [vmem:[#allocation2 + $0xe8] sm:$0xff]
        %v1526 = vld [vmem:[#allocation2 + $0xf0] sm:$0xff]
        %v1527 = vld [vmem:[#allocation2 + $0xf8] sm:$0xff]
        %v1528 = vld [vmem:[#allocation2 + $0x100] sm:$0xff]
        %v1529 = vld [vmem:[#allocation2 + $0x108] sm:$0xff]
        %v1530 = vld [vmem:[#allocation2 + $0x110] sm:$0xff]
        %v1531 = vld [vmem:[#allocation2 + $0x118] sm:$0xff]
        %v1532 = vld [vmem:[#allocation2 + $0x120] sm:$0xff]
        %v1533 = vld [vmem:[#allocation2 + $0x128] sm:$0xff]
        %v1534 = vld [vmem:[#allocation2 + $0x130] sm:$0xff]
        %v1535 = vld [vmem:[#allocation2 + $0x138] sm:$0xff]
        %v1536 = vld [vmem:[#allocation2 + $0x140] sm:$0xff]
        %v1537 = vld [vmem:[#allocation2 + $0x148] sm:$0xff]
        %v1538 = vld [vmem:[#allocation2 + $0x150] sm:$0xff]
        %v1539 = vld [vmem:[#allocation2 + $0x158] sm:$0xff]
        %v1540 = vld [vmem:[#allocation2 + $0x160] sm:$0xff]
        %v1541 = vld [vmem:[#allocation2 + $0x168] sm:$0xff]
        %v1542 = vld [vmem:[#allocation2 + $0x170] sm:$0xff]
        %v1543 = vld [vmem:[#allocation2 + $0x178] sm:$0xff]
        %v1544 = vld [vmem:[#allocation2 + $0x180] sm:$0xff]
        %v1545 = vld [vmem:[#allocation2 + $0x188] sm:$0xff]
        %v1546 = vld [vmem:[#allocation2 + $0x190] sm:$0xff]
        %v1547 = vld [vmem:[#allocation2 + $0x198] sm:$0xff]
        %v1548 = vld [vmem:[#allocation2 + $0x1a0] sm:$0xff]
        %v1549 = vld [vmem:[#allocation2 + $0x1a8] sm:$0xff]
        %v1550 = vld [vmem:[#allocation2 + $0x1b0] sm:$0xff]
        %v1551 = vld [vmem:[#allocation2 + $0x1b8] sm:$0xff]
        %v1552 = vld [vmem:[#allocation2 + $0x1c0] sm:$0xff]
        %v1553 = vld [vmem:[#allocation2 + $0x1c8] sm:$0xff]
        %v1554 = vld [vmem:[#allocation2 + $0x1d0] sm:$0xff]
        %v1555 = vld [vmem:[#allocation2 + $0x1d8] sm:$0xff]
        %v1556 = vld [vmem:[#allocation2 + $0x1e0] sm:$0xff]
        %v1557 = vld [vmem:[#allocation2 + $0x1e8] sm:$0xff]
        %v1558 = vld [vmem:[#allocation2 + $0x1f0] sm:$0xff]
        %v1559 = vld [vmem:[#allocation2 + $0x1f8] sm:$0xff]
        %v1560 = vld [vmem:[#allocation2 + $0x200] sm:$0xff]
        %v1561 = vld [vmem:[#allocation2 + $0x208] sm:$0xff]
        %v1562 = vld [vmem:[#allocation2 + $0x210] sm:$0xff]
        %v1563 = vld [vmem:[#allocation2 + $0x218] sm:$0xff]
        %v1564 = vld [vmem:[#allocation2 + $0x220] sm:$0xff]
        %v1565 = vld [vmem:[#allocation2 + $0x228] sm:$0xff]
        %v1566 = vld [vmem:[#allocation2 + $0x230] sm:$0xff]
        %v1567 = vld [vmem:[#allocation2 + $0x238] sm:$0xff]
        %v1568 = vld [vmem:[#allocation2 + $0x240] sm:$0xff]
        %v1569 = vld [vmem:[#allocation2 + $0x248] sm:$0xff]
        %v1570 = vld [vmem:[#allocation2 + $0x250] sm:$0xff]
        %v1571 = vld [vmem:[#allocation2 + $0x258] sm:$0xff]
        %v1572 = vld [vmem:[#allocation2 + $0x260] sm:$0xff]
        %v1573 = vld [vmem:[#allocation2 + $0x268] sm:$0xff]
        %v1574 = vld [vmem:[#allocation2 + $0x270] sm:$0xff]
        %v1575 = vld [vmem:[#allocation2 + $0x278] sm:$0xff]
        %v1576 = vld [vmem:[#allocation2 + $0x280] sm:$0xff]
        %v1577 = vld [vmem:[#allocation2 + $0x288] sm:$0xff]
        %v1578 = vld [vmem:[#allocation2 + $0x290] sm:$0xff]
        %v1579 = vld [vmem:[#allocation2 + $0x298] sm:$0xff]
        %v1580 = vld [vmem:[#allocation2 + $0x2a0] sm:$0xff]
        %v1581 = vld [vmem:[#allocation2 + $0x2a8] sm:$0xff]
        %v1582 = vld [vmem:[#allocation2 + $0x2b0] sm:$0xff]
        %v1583 = vld [vmem:[#allocation2 + $0x2b8] sm:$0xff]
        %v1584 = vld [vmem:[#allocation2 + $0x2c0] sm:$0xff]
        %v1585 = vld [vmem:[#allocation2 + $0x2c8] sm:$0xff]
        %v1586 = vld [vmem:[#allocation2 + $0x2d0] sm:$0xff]
        %v1587 = vld [vmem:[#allocation2 + $0x2d8] sm:$0xff]
        %v1588 = vld [vmem:[#allocation2 + $0x2e0] sm:$0xff]
        %v1589 = vld [vmem:[#allocation2 + $0x2e8] sm:$0xff]
        %v1590 = vld [vmem:[#allocation2 + $0x2f0] sm:$0xff]
        %v1591 = vld [vmem:[#allocation2 + $0x2f8] sm:$0xff]
        %v1592 = vld [vmem:[#allocation2 + $0x300] sm:$0xff]
        %v1593 = vld [vmem:[#allocation2 + $0x308] sm:$0xff]
        %v1594 = vld [vmem:[#allocation2 + $0x310] sm:$0xff]
        %v1595 = vld [vmem:[#allocation2 + $0x318] sm:$0xff]
        %v1596 = vld [vmem:[#allocation2 + $0x320] sm:$0xff]
        %v1597 = vld [vmem:[#allocation2 + $0x328] sm:$0xff]
        %v1598 = vld [vmem:[#allocation2 + $0x330] sm:$0xff]
        %v1599 = vld [vmem:[#allocation2 + $0x338] sm:$0xff]
        %v1600 = vld [vmem:[#allocation2 + $0x340] sm:$0xff]
        %v1601 = vld [vmem:[#allocation2 + $0x348] sm:$0xff]
        %v1602 = vld [vmem:[#allocation2 + $0x350] sm:$0xff]
        %v1603 = vld [vmem:[#allocation2 + $0x358] sm:$0xff]
        %v1604 = vld [vmem:[#allocation13] sm:$0xff]
        %1606 = vset.pattern.permute.xlu0 0
        %1607 = vperm.xlu0 %1606, %v1604
        %v1608 = vpop.permute.xlu0 %1607
        %v1611 = vunpack.c.l.b16 %v1495
        %v1612 = vunpack.c.h.b16 %v1495
        %v1613 = vpack.c.b16 %v1611, %v1611
        %v1614 = vpack.c.b16 %v1612, %v1612
        %v1724 = vunpack.c.l.b16 %v1496
        %v1725 = vunpack.c.h.b16 %v1496
        %v1726 = vunpack.c.l.b16 %v1497
        %v1727 = vunpack.c.h.b16 %v1497
        %v1728 = vunpack.c.l.b16 %v1498
        %v1729 = vunpack.c.h.b16 %v1498
        %v1730 = vunpack.c.l.b16 %v1499
        %v1731 = vunpack.c.h.b16 %v1499
        %v1732 = vunpack.c.l.b16 %v1500
        %v1733 = vunpack.c.h.b16 %v1500
        %v1734 = vunpack.c.l.b16 %v1501
        %v1735 = vunpack.c.h.b16 %v1501
        %v1736 = vunpack.c.l.b16 %v1502
        %v1737 = vunpack.c.h.b16 %v1502
        %v1738 = vunpack.c.l.b16 %v1503
        %v1739 = vunpack.c.h.b16 %v1503
        %v1740 = vunpack.c.l.b16 %v1504
        %v1741 = vunpack.c.h.b16 %v1504
        %v1742 = vunpack.c.l.b16 %v1505
        %v1743 = vunpack.c.h.b16 %v1505
        %v1744 = vunpack.c.l.b16 %v1506
        %v1745 = vunpack.c.h.b16 %v1506
        %v1746 = vunpack.c.l.b16 %v1507
        %v1747 = vunpack.c.h.b16 %v1507
        %v1748 = vunpack.c.l.b16 %v1508
        %v1749 = vunpack.c.h.b16 %v1508
        %v1750 = vunpack.c.l.b16 %v1509
        %v1751 = vunpack.c.h.b16 %v1509
        %v1752 = vunpack.c.l.b16 %v1510
        %v1753 = vunpack.c.h.b16 %v1510
        %v1754 = vunpack.c.l.b16 %v1511
        %v1755 = vunpack.c.h.b16 %v1511
        %v1756 = vunpack.c.l.b16 %v1512
        %v1757 = vunpack.c.h.b16 %v1512
        %v1758 = vunpack.c.l.b16 %v1513
        %v1759 = vunpack.c.h.b16 %v1513
        %v1760 = vunpack.c.l.b16 %v1514
        %v1761 = vunpack.c.h.b16 %v1514
        %v1762 = vunpack.c.l.b16 %v1515
        %v1763 = vunpack.c.h.b16 %v1515
        %v1764 = vunpack.c.l.b16 %v1516
        %v1765 = vunpack.c.h.b16 %v1516
        %v1766 = vunpack.c.l.b16 %v1517
        %v1767 = vunpack.c.h.b16 %v1517
        %v1768 = vunpack.c.l.b16 %v1518
        %v1769 = vunpack.c.h.b16 %v1518
        %v1770 = vunpack.c.l.b16 %v1519
        %v1771 = vunpack.c.h.b16 %v1519
        %v1772 = vunpack.c.l.b16 %v1520
        %v1773 = vunpack.c.h.b16 %v1520
        %v1774 = vunpack.c.l.b16 %v1521
        %v1775 = vunpack.c.h.b16 %v1521
        %v1776 = vunpack.c.l.b16 %v1522
        %v1777 = vunpack.c.h.b16 %v1522
        %v1778 = vunpack.c.l.b16 %v1523
        %v1779 = vunpack.c.h.b16 %v1523
        %v1780 = vunpack.c.l.b16 %v1524
        %v1781 = vunpack.c.h.b16 %v1524
        %v1782 = vunpack.c.l.b16 %v1525
        %v1783 = vunpack.c.h.b16 %v1525
        %v1784 = vunpack.c.l.b16 %v1526
        %v1785 = vunpack.c.h.b16 %v1526
        %v1786 = vunpack.c.l.b16 %v1527
        %v1787 = vunpack.c.h.b16 %v1527
        %v1788 = vunpack.c.l.b16 %v1528
        %v1789 = vunpack.c.h.b16 %v1528
        %v1790 = vunpack.c.l.b16 %v1529
        %v1791 = vunpack.c.h.b16 %v1529
        %v1792 = vunpack.c.l.b16 %v1530
        %v1793 = vunpack.c.h.b16 %v1530
        %v1794 = vunpack.c.l.b16 %v1531
        %v1795 = vunpack.c.h.b16 %v1531
        %v1796 = vunpack.c.l.b16 %v1532
        %v1797 = vunpack.c.h.b16 %v1532
        %v1798 = vunpack.c.l.b16 %v1533
        %v1799 = vunpack.c.h.b16 %v1533
        %v1800 = vunpack.c.l.b16 %v1534
        %v1801 = vunpack.c.h.b16 %v1534
        %v1802 = vunpack.c.l.b16 %v1535
        %v1803 = vunpack.c.h.b16 %v1535
        %v1804 = vunpack.c.l.b16 %v1536
        %v1805 = vunpack.c.h.b16 %v1536
        %v1806 = vunpack.c.l.b16 %v1537
        %v1807 = vunpack.c.h.b16 %v1537
        %v1808 = vunpack.c.l.b16 %v1538
        %v1809 = vunpack.c.h.b16 %v1538
        %v1810 = vunpack.c.l.b16 %v1539
        %v1811 = vunpack.c.h.b16 %v1539
        %v1812 = vunpack.c.l.b16 %v1540
        %v1813 = vunpack.c.h.b16 %v1540
        %v1814 = vunpack.c.l.b16 %v1541
        %v1815 = vunpack.c.h.b16 %v1541
        %v1816 = vunpack.c.l.b16 %v1542
        %v1817 = vunpack.c.h.b16 %v1542
        %v1818 = vunpack.c.l.b16 %v1543
        %v1819 = vunpack.c.h.b16 %v1543
        %v1820 = vunpack.c.l.b16 %v1544
        %v1821 = vunpack.c.h.b16 %v1544
        %v1822 = vunpack.c.l.b16 %v1545
        %v1823 = vunpack.c.h.b16 %v1545
        %v1824 = vunpack.c.l.b16 %v1546
        %v1825 = vunpack.c.h.b16 %v1546
        %v1826 = vunpack.c.l.b16 %v1547
        %v1827 = vunpack.c.h.b16 %v1547
        %v1828 = vunpack.c.l.b16 %v1548
        %v1829 = vunpack.c.h.b16 %v1548
        %v1830 = vunpack.c.l.b16 %v1549
        %v1831 = vunpack.c.h.b16 %v1549
        %v1832 = vunpack.c.l.b16 %v1550
        %v1833 = vunpack.c.h.b16 %v1550
        %v1834 = vunpack.c.l.b16 %v1551
        %v1835 = vunpack.c.h.b16 %v1551
        %v1836 = vunpack.c.l.b16 %v1552
        %v1837 = vunpack.c.h.b16 %v1552
        %v1838 = vunpack.c.l.b16 %v1553
        %v1839 = vunpack.c.h.b16 %v1553
        %v1840 = vunpack.c.l.b16 %v1554
        %v1841 = vunpack.c.h.b16 %v1554
        %v1842 = vunpack.c.l.b16 %v1555
        %v1843 = vunpack.c.h.b16 %v1555
        %v1844 = vunpack.c.l.b16 %v1556
        %v1845 = vunpack.c.h.b16 %v1556
        %v1846 = vunpack.c.l.b16 %v1557
        %v1847 = vunpack.c.h.b16 %v1557
        %v1848 = vunpack.c.l.b16 %v1558
        %v1849 = vunpack.c.h.b16 %v1558
        %v1850 = vunpack.c.l.b16 %v1559
        %v1851 = vunpack.c.h.b16 %v1559
        %v1852 = vunpack.c.l.b16 %v1560
        %v1853 = vunpack.c.h.b16 %v1560
        %v1854 = vunpack.c.l.b16 %v1561
        %v1855 = vunpack.c.h.b16 %v1561
        %v1856 = vunpack.c.l.b16 %v1562
        %v1857 = vunpack.c.h.b16 %v1562
        %v1858 = vunpack.c.l.b16 %v1563
        %v1859 = vunpack.c.h.b16 %v1563
        %v1860 = vunpack.c.l.b16 %v1564
        %v1861 = vunpack.c.h.b16 %v1564
        %v1862 = vunpack.c.l.b16 %v1565
        %v1863 = vunpack.c.h.b16 %v1565
        %v1864 = vunpack.c.l.b16 %v1566
        %v1865 = vunpack.c.h.b16 %v1566
        %v1866 = vunpack.c.l.b16 %v1567
        %v1867 = vunpack.c.h.b16 %v1567
        %v1868 = vunpack.c.l.b16 %v1568
        %v1869 = vunpack.c.h.b16 %v1568
        %v1870 = vunpack.c.l.b16 %v1569
        %v1871 = vunpack.c.h.b16 %v1569
        %v1872 = vunpack.c.l.b16 %v1570
        %v1873 = vunpack.c.h.b16 %v1570
        %v1874 = vunpack.c.l.b16 %v1571
        %v1875 = vunpack.c.h.b16 %v1571
        %v1876 = vunpack.c.l.b16 %v1572
        %v1877 = vunpack.c.h.b16 %v1572
        %v1878 = vunpack.c.l.b16 %v1573
        %v1879 = vunpack.c.h.b16 %v1573
        %v1880 = vunpack.c.l.b16 %v1574
        %v1881 = vunpack.c.h.b16 %v1574
        %v1882 = vunpack.c.l.b16 %v1575
        %v1883 = vunpack.c.h.b16 %v1575
        %v1884 = vunpack.c.l.b16 %v1576
        %v1885 = vunpack.c.h.b16 %v1576
        %v1886 = vunpack.c.l.b16 %v1577
        %v1887 = vunpack.c.h.b16 %v1577
        %v1888 = vunpack.c.l.b16 %v1578
        %v1889 = vunpack.c.h.b16 %v1578
        %v1890 = vunpack.c.l.b16 %v1579
        %v1891 = vunpack.c.h.b16 %v1579
        %v1892 = vunpack.c.l.b16 %v1580
        %v1893 = vunpack.c.h.b16 %v1580
        %v1894 = vunpack.c.l.b16 %v1581
        %v1895 = vunpack.c.h.b16 %v1581
        %v1896 = vunpack.c.l.b16 %v1582
        %v1897 = vunpack.c.h.b16 %v1582
        %v1898 = vunpack.c.l.b16 %v1583
        %v1899 = vunpack.c.h.b16 %v1583
        %v1900 = vunpack.c.l.b16 %v1584
        %v1901 = vunpack.c.h.b16 %v1584
        %v1902 = vunpack.c.l.b16 %v1585
        %v1903 = vunpack.c.h.b16 %v1585
        %v1904 = vunpack.c.l.b16 %v1586
        %v1905 = vunpack.c.h.b16 %v1586
        %v1906 = vunpack.c.l.b16 %v1587
        %v1907 = vunpack.c.h.b16 %v1587
        %v1908 = vunpack.c.l.b16 %v1588
        %v1909 = vunpack.c.h.b16 %v1588
        %v1910 = vunpack.c.l.b16 %v1589
        %v1911 = vunpack.c.h.b16 %v1589
        %v1912 = vunpack.c.l.b16 %v1590
        %v1913 = vunpack.c.h.b16 %v1590
        %v1914 = vunpack.c.l.b16 %v1591
        %v1915 = vunpack.c.h.b16 %v1591
        %v1916 = vunpack.c.l.b16 %v1592
        %v1917 = vunpack.c.h.b16 %v1592
        %v1918 = vunpack.c.l.b16 %v1593
        %v1919 = vunpack.c.h.b16 %v1593
        %v1920 = vunpack.c.l.b16 %v1594
        %v1921 = vunpack.c.h.b16 %v1594
        %v1922 = vunpack.c.l.b16 %v1595
        %v1923 = vunpack.c.h.b16 %v1595
        %v1924 = vunpack.c.l.b16 %v1596
        %v1925 = vunpack.c.h.b16 %v1596
        %v1926 = vunpack.c.l.b16 %v1597
        %v1927 = vunpack.c.h.b16 %v1597
        %v1928 = vunpack.c.l.b16 %v1598
        %v1929 = vunpack.c.h.b16 %v1598
        %v1930 = vunpack.c.l.b16 %v1599
        %v1931 = vunpack.c.h.b16 %v1599
        %v1932 = vunpack.c.l.b16 %v1600
        %v1933 = vunpack.c.h.b16 %v1600
        %v1934 = vunpack.c.l.b16 %v1601
        %v1935 = vunpack.c.h.b16 %v1601
        %v1936 = vunpack.c.l.b16 %v1602
        %v1937 = vunpack.c.h.b16 %v1602
        %v1938 = vunpack.c.l.b16 %v1603
        %v1939 = vunpack.c.h.b16 %v1603
        %v1940 = vpack.c.b16 %v1732, %v1724
        %v1941 = vpack.c.b16 %v1733, %v1725
        %v1942 = vpack.c.b16 %v1734, %v1726
        %v1943 = vpack.c.b16 %v1735, %v1727
        %v1944 = vpack.c.b16 %v1736, %v1728
        %v1945 = vpack.c.b16 %v1737, %v1729
        %v1946 = vpack.c.b16 %v1738, %v1730
        %v1947 = vpack.c.b16 %v1739, %v1731
        %v1948 = vpack.c.b16 %v1748, %v1740
        %v1949 = vpack.c.b16 %v1749, %v1741
        %v1950 = vpack.c.b16 %v1750, %v1742
        %v1951 = vpack.c.b16 %v1751, %v1743
        %v1952 = vpack.c.b16 %v1752, %v1744
        %v1953 = vpack.c.b16 %v1753, %v1745
        %v1954 = vpack.c.b16 %v1754, %v1746
        %v1955 = vpack.c.b16 %v1755, %v1747
        %v1956 = vpack.c.b16 %v1764, %v1756
        %v1957 = vpack.c.b16 %v1765, %v1757
        %v1958 = vpack.c.b16 %v1766, %v1758
        %v1959 = vpack.c.b16 %v1767, %v1759
        %v1960 = vpack.c.b16 %v1768, %v1760
        %v1961 = vpack.c.b16 %v1769, %v1761
        %v1962 = vpack.c.b16 %v1770, %v1762
        %v1963 = vpack.c.b16 %v1771, %v1763
        %v1964 = vpack.c.b16 %v1780, %v1772
        %v1965 = vpack.c.b16 %v1781, %v1773
        %v1966 = vpack.c.b16 %v1782, %v1774
        %v1967 = vpack.c.b16 %v1783, %v1775
        %v1968 = vpack.c.b16 %v1784, %v1776
        %v1969 = vpack.c.b16 %v1785, %v1777
        %v1970 = vpack.c.b16 %v1786, %v1778
        %v1971 = vpack.c.b16 %v1787, %v1779
        %v1972 = vpack.c.b16 %v1796, %v1788
        %v1973 = vpack.c.b16 %v1797, %v1789
        %v1974 = vpack.c.b16 %v1798, %v1790
        %v1975 = vpack.c.b16 %v1799, %v1791
        %v1976 = vpack.c.b16 %v1800, %v1792
        %v1977 = vpack.c.b16 %v1801, %v1793
        %v1978 = vpack.c.b16 %v1802, %v1794
        %v1979 = vpack.c.b16 %v1803, %v1795
        %v1980 = vpack.c.b16 %v1812, %v1804
        %v1981 = vpack.c.b16 %v1813, %v1805
        %v1982 = vpack.c.b16 %v1814, %v1806
        %v1983 = vpack.c.b16 %v1815, %v1807
        %v1984 = vpack.c.b16 %v1816, %v1808
        %v1985 = vpack.c.b16 %v1817, %v1809
        %v1986 = vpack.c.b16 %v1818, %v1810
        %v1987 = vpack.c.b16 %v1819, %v1811
        %v1988 = vpack.c.b16 %v1828, %v1820
        %v1989 = vpack.c.b16 %v1829, %v1821
        %v1990 = vpack.c.b16 %v1830, %v1822
        %v1991 = vpack.c.b16 %v1831, %v1823
        %v1992 = vpack.c.b16 %v1832, %v1824
        %v1993 = vpack.c.b16 %v1833, %v1825
        %v1994 = vpack.c.b16 %v1834, %v1826
        %v1995 = vpack.c.b16 %v1835, %v1827
        %v1996 = vpack.c.b16 %v1844, %v1836
        %v1997 = vpack.c.b16 %v1845, %v1837
        %v1998 = vpack.c.b16 %v1846, %v1838
        %v1999 = vpack.c.b16 %v1847, %v1839
        %v2000 = vpack.c.b16 %v1848, %v1840
        %v2001 = vpack.c.b16 %v1849, %v1841
        %v2002 = vpack.c.b16 %v1850, %v1842
        %v2003 = vpack.c.b16 %v1851, %v1843
        %v2004 = vpack.c.b16 %v1860, %v1852
        %v2005 = vpack.c.b16 %v1861, %v1853
        %v2006 = vpack.c.b16 %v1862, %v1854
        %v2007 = vpack.c.b16 %v1863, %v1855
        %v2008 = vpack.c.b16 %v1864, %v1856
        %v2009 = vpack.c.b16 %v1865, %v1857
        %v2010 = vpack.c.b16 %v1866, %v1858
        %v2011 = vpack.c.b16 %v1867, %v1859
        %v2012 = vpack.c.b16 %v1876, %v1868
        %v2013 = vpack.c.b16 %v1877, %v1869
        %v2014 = vpack.c.b16 %v1878, %v1870
        %v2015 = vpack.c.b16 %v1879, %v1871
        %v2016 = vpack.c.b16 %v1880, %v1872
        %v2017 = vpack.c.b16 %v1881, %v1873
        %v2018 = vpack.c.b16 %v1882, %v1874
        %v2019 = vpack.c.b16 %v1883, %v1875
        %v2020 = vpack.c.b16 %v1892, %v1884
        %v2021 = vpack.c.b16 %v1893, %v1885
        %v2022 = vpack.c.b16 %v1894, %v1886
        %v2023 = vpack.c.b16 %v1895, %v1887
        %v2024 = vpack.c.b16 %v1896, %v1888
        %v2025 = vpack.c.b16 %v1897, %v1889
        %v2026 = vpack.c.b16 %v1898, %v1890
        %v2027 = vpack.c.b16 %v1899, %v1891
        %v2028 = vpack.c.b16 %v1908, %v1900
        %v2029 = vpack.c.b16 %v1909, %v1901
        %v2030 = vpack.c.b16 %v1910, %v1902
        %v2031 = vpack.c.b16 %v1911, %v1903
        %v2032 = vpack.c.b16 %v1912, %v1904
        %v2033 = vpack.c.b16 %v1913, %v1905
        %v2034 = vpack.c.b16 %v1914, %v1906
        %v2035 = vpack.c.b16 %v1915, %v1907
        %v2036 = vpack.c.b16 %v1924, %v1916
        %v2037 = vpack.c.b16 %v1925, %v1917
        %v2038 = vpack.c.b16 %v1926, %v1918
        %v2039 = vpack.c.b16 %v1927, %v1919
        %v2040 = vpack.c.b16 %v1928, %v1920
        %v2041 = vpack.c.b16 %v1929, %v1921
        %v2042 = vpack.c.b16 %v1930, %v1922
        %v2043 = vpack.c.b16 %v1931, %v1923
        %v2044 = vpack.c.b16 %v1932, %v1932
        %v2045 = vpack.c.b16 %v1933, %v1933
        %v2046 = vpack.c.b16 %v1934, %v1934
        %v2047 = vpack.c.b16 %v1935, %v1935
        %v2048 = vpack.c.b16 %v1936, %v1936
        %v2049 = vpack.c.b16 %v1937, %v1937
        %v2050 = vpack.c.b16 %v1938, %v1938
        %v2051 = vpack.c.b16 %v1939, %v1939
        %vm2156 = vcmask 719872
        %v2158 = vsel %vm2156, %v1614, 0
        %vm2160 = vcmask 1043456
        %v2162 = vsel %vm2160, %v2044, 0
        %v2165 = vsel %vm2160, %v2045, 0
        %v2168 = vsel %vm2160, %v2046, 0
        %v2171 = vsel %vm2160, %v2047, 0
        %v2174 = vsel %vm2160, %v2048, 0
        %v2177 = vsel %vm2160, %v2049, 0
        %v2180 = vsel %vm2160, %v2050, 0
        %v2183 = vsel %vm2160, %v2051, 0
        %2185 = vmatprep.subr.bf16.mxu0 %v1941
        %2186 = vmatpush1.bf16.msra.mxu0 %v1940
        %2187 = vmatprep.subr.bf16.mxu0 %v1949
        %2188 = vmatpush1.bf16.msra.mxu0 %v1948
        %2189 = vmatprep.subr.bf16.mxu0 %v1957
        %2190 = vmatpush1.bf16.msra.mxu0 %v1956
        %2191 = vmatprep.subr.bf16.mxu0 %v1965
        %2192 = vmatpush1.bf16.msra.mxu0 %v1964
        %2193 = vmatprep.subr.bf16.mxu0 %v1973
        %2194 = vmatpush1.bf16.msra.mxu0 %v1972
        %2195 = vmatprep.subr.bf16.mxu0 %v1981
        %2196 = vmatpush1.bf16.msra.mxu0 %v1980
        %2197 = vmatprep.subr.bf16.mxu0 %v1989
        %2198 = vmatpush1.bf16.msra.mxu0 %v1988
        %2199 = vmatprep.subr.bf16.mxu0 %v1997
        %2200 = vmatpush1.bf16.msra.mxu0 %v1996
        %2201 = vmatprep.subr.bf16.mxu0 %v2005
        %2202 = vmatpush1.bf16.msra.mxu0 %v2004
        %2203 = vmatprep.subr.bf16.mxu0 %v2013
        %2204 = vmatpush1.bf16.msra.mxu0 %v2012
        %2205 = vmatprep.subr.bf16.mxu0 %v2021
        %2206 = vmatpush1.bf16.msra.mxu0 %v2020
        %2207 = vmatprep.subr.bf16.mxu0 %v2029
        %2208 = vmatpush1.bf16.msra.mxu0 %v2028
        %2209 = vmatprep.subr.bf16.mxu0 %v2037
        %2210 = vmatpush1.bf16.msra.mxu0 %v2036
        %2211 = vmatprep.subr.bf16.mxu0 %v2165
        %2212 = vmatpush1.bf16.msra.mxu0 %v2162
        %2213 = vmatprep.subr.bf16.mxu0 0
        %2214 = vmatpush1.bf16.msra.mxu0 0
        %2215 = vmatprep.subr.bf16.mxu0 0
        %2216 = vmatpush1.bf16.msra.mxu0 0
        %2217 = vmatprep.mubr.bf16.mxu0 %v2158
        %2218 = vmatmul.mubr.bf16.gmra.mrb[0].mxu0 %v1613
        %v2219 = vpop.f32.mrb[0].mxu0
        %v2220 = vadd.f32 %v1608, %v2219
        %v2221 = vpop.f32.mrb[0].mxu0
        %v2222 = vadd.f32 %v1608, %v2221
        %v2223 = vpop.f32.mrb[0].mxu0
        %v2224 = vpop.f32.mrb[0].mxu0
        %2225 = vdwg.mxu0
        %2226 = vmatprep.subr.bf16.mxu0 %v1943
        %2227 = vmatpush1.bf16.msra.mxu0 %v1942
        %2228 = vmatprep.subr.bf16.mxu0 %v1951
        %2229 = vmatpush1.bf16.msra.mxu0 %v1950
        %2230 = vmatprep.subr.bf16.mxu0 %v1959
        %2231 = vmatpush1.bf16.msra.mxu0 %v1958
        %2232 = vmatprep.subr.bf16.mxu0 %v1967
        %2233 = vmatpush1.bf16.msra.mxu0 %v1966
        %2234 = vmatprep.subr.bf16.mxu0 %v1975
        %2235 = vmatpush1.bf16.msra.mxu0 %v1974
        %2236 = vmatprep.subr.bf16.mxu0 %v1983
        %2237 = vmatpush1.bf16.msra.mxu0 %v1982
        %2238 = vmatprep.subr.bf16.mxu0 %v1991
        %2239 = vmatpush1.bf16.msra.mxu0 %v1990
        %2240 = vmatprep.subr.bf16.mxu0 %v1999
        %2241 = vmatpush1.bf16.msra.mxu0 %v1998
        %2242 = vmatprep.subr.bf16.mxu0 %v2007
        %2243 = vmatpush1.bf16.msra.mxu0 %v2006
        %2244 = vmatprep.subr.bf16.mxu0 %v2015
        %2245 = vmatpush1.bf16.msra.mxu0 %v2014
        %2246 = vmatprep.subr.bf16.mxu0 %v2023
        %2247 = vmatpush1.bf16.msra.mxu0 %v2022
        %2248 = vmatprep.subr.bf16.mxu0 %v2031
        %2249 = vmatpush1.bf16.msra.mxu0 %v2030
        %2250 = vmatprep.subr.bf16.mxu0 %v2039
        %2251 = vmatpush1.bf16.msra.mxu0 %v2038
        %2252 = vmatprep.subr.bf16.mxu0 %v2171
        %2253 = vmatpush1.bf16.msra.mxu0 %v2168
        %2254 = vmatprep.subr.bf16.mxu0 0
        %2255 = vmatpush1.bf16.msra.mxu0 0
        %2256 = vmatprep.subr.bf16.mxu0 0
        %2257 = vmatpush1.bf16.msra.mxu0 0
        %2258 = vmatprep.mubr.bf16.mxu0 %v2158
        %2259 = vmatmul.mubr.bf16.gmra.mrb[0].mxu0 %v1613
        %v2260 = vpop.f32.mrb[0].mxu0
        %v2261 = vadd.f32 %v1608, %v2260
        %v2262 = vpop.f32.mrb[0].mxu0
        %v2263 = vadd.f32 %v1608, %v2262
        %v2264 = vpop.f32.mrb[0].mxu0
        %v2265 = vpop.f32.mrb[0].mxu0
        %2266 = vdwg.mxu0
        %2267 = vmatprep.subr.bf16.mxu0 %v1945
        %2268 = vmatpush1.bf16.msra.mxu0 %v1944
        %2269 = vmatprep.subr.bf16.mxu0 %v1953
        %2270 = vmatpush1.bf16.msra.mxu0 %v1952
        %2271 = vmatprep.subr.bf16.mxu0 %v1961
        %2272 = vmatpush1.bf16.msra.mxu0 %v1960
        %2273 = vmatprep.subr.bf16.mxu0 %v1969
        %2274 = vmatpush1.bf16.msra.mxu0 %v1968
        %2275 = vmatprep.subr.bf16.mxu0 %v1977
        %2276 = vmatpush1.bf16.msra.mxu0 %v1976
        %2277 = vmatprep.subr.bf16.mxu0 %v1985
        %2278 = vmatpush1.bf16.msra.mxu0 %v1984
        %2279 = vmatprep.subr.bf16.mxu0 %v1993
        %2280 = vmatpush1.bf16.msra.mxu0 %v1992
        %2281 = vmatprep.subr.bf16.mxu0 %v2001
        %2282 = vmatpush1.bf16.msra.mxu0 %v2000
        %2283 = vmatprep.subr.bf16.mxu0 %v2009
        %2284 = vmatpush1.bf16.msra.mxu0 %v2008
        %2285 = vmatprep.subr.bf16.mxu0 %v2017
        %2286 = vmatpush1.bf16.msra.mxu0 %v2016
        %2287 = vmatprep.subr.bf16.mxu0 %v2025
        %2288 = vmatpush1.bf16.msra.mxu0 %v2024
        %2289 = vmatprep.subr.bf16.mxu0 %v2033
        %2290 = vmatpush1.bf16.msra.mxu0 %v2032
        %2291 = vmatprep.subr.bf16.mxu0 %v2041
        %2292 = vmatpush1.bf16.msra.mxu0 %v2040
        %2293 = vmatprep.subr.bf16.mxu0 %v2177
        %2294 = vmatpush1.bf16.msra.mxu0 %v2174
        %2295 = vmatprep.subr.bf16.mxu0 0
        %2296 = vmatpush1.bf16.msra.mxu0 0
        %2297 = vmatprep.subr.bf16.mxu0 0
        %2298 = vmatpush1.bf16.msra.mxu0 0
        %2299 = vmatprep.mubr.bf16.mxu0 %v2158
        %2300 = vmatmul.mubr.bf16.gmra.mrb[0].mxu0 %v1613
        %v2301 = vpop.f32.mrb[0].mxu0
        %v2302 = vadd.f32 %v1608, %v2301
        %v2303 = vpop.f32.mrb[0].mxu0
        %v2304 = vadd.f32 %v1608, %v2303
        %v2305 = vpop.f32.mrb[0].mxu0
        %v2306 = vpop.f32.mrb[0].mxu0
        %2307 = vdwg.mxu0
        %2308 = vmatprep.subr.bf16.mxu0 %v1947
        %2309 = vmatpush1.bf16.msra.mxu0 %v1946
        %2310 = vmatprep.subr.bf16.mxu0 %v1955
        %2311 = vmatpush1.bf16.msra.mxu0 %v1954
        %2312 = vmatprep.subr.bf16.mxu0 %v1963
        %2313 = vmatpush1.bf16.msra.mxu0 %v1962
        %2314 = vmatprep.subr.bf16.mxu0 %v1971
        %2315 = vmatpush1.bf16.msra.mxu0 %v1970
        %2316 = vmatprep.subr.bf16.mxu0 %v1979
        %2317 = vmatpush1.bf16.msra.mxu0 %v1978
        %2318 = vmatprep.subr.bf16.mxu0 %v1987
        %2319 = vmatpush1.bf16.msra.mxu0 %v1986
        %2320 = vmatprep.subr.bf16.mxu0 %v1995
        %2321 = vmatpush1.bf16.msra.mxu0 %v1994
        %2322 = vmatprep.subr.bf16.mxu0 %v2003
        %2323 = vmatpush1.bf16.msra.mxu0 %v2002
        %2324 = vmatprep.subr.bf16.mxu0 %v2011
        %2325 = vmatpush1.bf16.msra.mxu0 %v2010
        %2326 = vmatprep.subr.bf16.mxu0 %v2019
        %2327 = vmatpush1.bf16.msra.mxu0 %v2018
        %2328 = vmatprep.subr.bf16.mxu0 %v2027
        %2329 = vmatpush1.bf16.msra.mxu0 %v2026
        %2330 = vmatprep.subr.bf16.mxu0 %v2035
        %2331 = vmatpush1.bf16.msra.mxu0 %v2034
        %2332 = vmatprep.subr.bf16.mxu0 %v2043
        %2333 = vmatpush1.bf16.msra.mxu0 %v2042
        %2334 = vmatprep.subr.bf16.mxu0 %v2183
        %2335 = vmatpush1.bf16.msra.mxu0 %v2180
        %2336 = vmatprep.subr.bf16.mxu0 0
        %2337 = vmatpush1.bf16.msra.mxu0 0
        %2338 = vmatprep.subr.bf16.mxu0 0
        %2339 = vmatpush1.bf16.msra.mxu0 0
        %2340 = vmatprep.mubr.bf16.mxu0 %v2158
        %2341 = vmatmul.mubr.bf16.gmra.mrb[0].mxu0 %v1613
        %v2342 = vpop.f32.mrb[0].mxu0
        %v2343 = vadd.f32 %v1608, %v2342
        %v2344 = vpop.f32.mrb[0].mxu0
        %v2345 = vadd.f32 %v1608, %v2344
        %v2346 = vpop.f32.mrb[0].mxu0
        %v2347 = vpop.f32.mrb[0].mxu0
        %2348 = vdwg.mxu0
        %v2350 = vlaneseq
        %v2351 = vshrl.u32 %v2350, 7
        %v2352 = vsub.s32 0, %v2351
        %v2353 = vrot.slane %v652, %v2352
        %v2354 = vlaneseq
        %v2355 = vshrl.u32 %v2354, 7
        %v2356 = vsub.s32 1, %v2355
        %v2357 = vrot.slane %v652, %v2356
        %v2358 = vlaneseq
        %v2359 = vshrl.u32 %v2358, 7
        %v2360 = vsub.s32 2, %v2359
        %v2361 = vrot.slane %v652, %v2360
        %v2362 = vlaneseq
        %v2363 = vshrl.u32 %v2362, 7
        %v2364 = vsub.s32 3, %v2363
        %v2365 = vrot.slane %v652, %v2364
        %v2366 = vlaneseq
        %v2367 = vshrl.u32 %v2366, 7
        %v2368 = vsub.s32 4, %v2367
        %v2369 = vrot.slane %v652, %v2368
        %v2370 = vlaneseq
        %v2371 = vshrl.u32 %v2370, 7
        %v2372 = vsub.s32 5, %v2371
        %v2373 = vrot.slane %v652, %v2372
        %v2374 = vlaneseq
        %v2375 = vshrl.u32 %v2374, 7
        %v2376 = vsub.s32 6, %v2375
        %v2377 = vrot.slane %v652, %v2376
        %v2378 = vlaneseq
        %v2379 = vshrl.u32 %v2378, 7
        %v2380 = vsub.s32 7, %v2379
        %v2381 = vrot.slane %v652, %v2380
        %v2390 = vmul.f32 %v2220, %v2353
        %v2391 = vmul.f32 %v2222, %v2357
        %v2392 = vmul.f32 %v2261, %v2361
        %v2393 = vmul.f32 %v2263, %v2365
        %v2394 = vmul.f32 %v2302, %v2369
        %v2395 = vmul.f32 %v2304, %v2373
        %v2396 = vmul.f32 %v2343, %v2377
        %v2397 = vmul.f32 %v2345, %v2381
        %v2398 = vadd.f32 %v2390, %v2391
        %v2399 = vadd.f32 %v2398, %v2392
        %v2400 = vadd.f32 %v2399, %v2393
        %v2401 = vadd.f32 %v2400, %v2394
        %v2402 = vadd.f32 %v2401, %v2395
        %v2403 = vadd.f32 %v2402, %v2396
        %v2404 = vadd.f32 %v2403, %v2397
        %2405 = vadd.xlane.f32.xlu0 %v2404
        %v2406 = vpop.xlane.xlu0 %2405
        %v2407 = vmul.f32 %v2406, 0.001953125
        %v2408 = vsub.f32 %v2220, %v2407
        %v2409 = vsub.f32 %v2222, %v2407
        %v2410 = vsub.f32 %v2261, %v2407
        %v2411 = vsub.f32 %v2263, %v2407
        %v2412 = vsub.f32 %v2302, %v2407
        %v2413 = vsub.f32 %v2304, %v2407
        %v2414 = vsub.f32 %v2343, %v2407
        %v2415 = vsub.f32 %v2345, %v2407
        %v2416 = vmul.f32 %v2408, %v2353
        %v2417 = vmul.f32 %v2409, %v2357
        %v2418 = vmul.f32 %v2410, %v2361
        %v2419 = vmul.f32 %v2411, %v2365
        %v2420 = vmul.f32 %v2412, %v2369
        %v2421 = vmul.f32 %v2413, %v2373
        %v2422 = vmul.f32 %v2414, %v2377
        %v2423 = vmul.f32 %v2415, %v2381
        %v2424 = vmul.f32 %v2416, %v2416
        %v2425 = vmul.f32 %v2417, %v2417
        %v2426 = vmul.f32 %v2418, %v2418
        %v2427 = vmul.f32 %v2419, %v2419
        %v2428 = vmul.f32 %v2420, %v2420
        %v2429 = vmul.f32 %v2421, %v2421
        %v2430 = vmul.f32 %v2422, %v2422
        %v2431 = vmul.f32 %v2423, %v2423
        %v2432 = vadd.f32 %v2424, %v2425
        %v2433 = vadd.f32 %v2432, %v2426
        %v2434 = vadd.f32 %v2433, %v2427
        %v2435 = vadd.f32 %v2434, %v2428
        %v2436 = vadd.f32 %v2435, %v2429
        %v2437 = vadd.f32 %v2436, %v2430
        %v2438 = vadd.f32 %v2437, %v2431
        %2439 = vadd.xlane.f32.xlu0 %v2438
        %v2440 = vpop.xlane.xlu0 %2439
        %v2441 = vmul.f32 %v2440, 0.001953125
        %v2442 = vmax.f32 %v2441, 0.0
        %v2443 = vadd.f32 %v2442, 1e-05
        %v2444 = vrsqrt.pop %v2443
        %v2445 = vmul.f32 %v2408, %v2444
        %v2446 = vmul.f32 %v2409, %v2444
        %v2447 = vmul.f32 %v2410, %v2444
        %v2448 = vmul.f32 %v2411, %v2444
        %v2449 = vmul.f32 %v2412, %v2444
        %v2450 = vmul.f32 %v2413, %v2444
        %v2451 = vmul.f32 %v2414, %v2444
        %v2452 = vmul.f32 %v2415, %v2444
        %vm2453 = vcmp.ge.f32.partialorder %v2445, 0.0
        %vm2454 = vcmp.ge.f32.partialorder %v2446, 0.0
        %vm2455 = vcmp.ge.f32.partialorder %v2447, 0.0
        %vm2456 = vcmp.ge.f32.partialorder %v2448, 0.0
        %vm2457 = vcmp.ge.f32.partialorder %v2449, 0.0
        %vm2458 = vcmp.ge.f32.partialorder %v2450, 0.0
        %vm2459 = vcmp.ge.f32.partialorder %v2451, 0.0
        %vm2460 = vcmp.ge.f32.partialorder %v2452, 0.0
        %v2461 = vmul.f32 %v2445, 0.01
        %v2462 = vmul.f32 %v2446, 0.01
        %v2463 = vmul.f32 %v2447, 0.01
        %v2464 = vmul.f32 %v2448, 0.01
        %v2465 = vmul.f32 %v2449, 0.01
        %v2466 = vmul.f32 %v2450, 0.01
        %v2467 = vmul.f32 %v2451, 0.01
        %v2468 = vmul.f32 %v2452, 0.01
        %v2469 = vsel %vm2453, %v2445, %v2461
        %v2470 = vsel %vm2454, %v2446, %v2462
        %v2471 = vsel %vm2455, %v2447, %v2463
        %v2472 = vsel %vm2456, %v2448, %v2464
        %v2473 = vsel %vm2457, %v2449, %v2465
        %v2474 = vsel %vm2458, %v2450, %v2466
        %v2475 = vsel %vm2459, %v2451, %v2467
        %v2476 = vsel %vm2460, %v2452, %v2468
        %v2477 = vmul.f32 %v2469, %v2353
        %v2478 = vmul.f32 %v2470, %v2357
        %v2479 = vmul.f32 %v2471, %v2361
        %v2480 = vmul.f32 %v2472, %v2365
        %v2481 = vmul.f32 %v2473, %v2369
        %v2482 = vmul.f32 %v2474, %v2373
        %v2483 = vmul.f32 %v2475, %v2377
        %v2484 = vmul.f32 %v2476, %v2381
        %v2485 = vadd.f32 %v2477, %v2478
        %v2486 = vadd.f32 %v2485, %v2479
        %v2487 = vadd.f32 %v2486, %v2480
        %v2488 = vadd.f32 %v2487, %v2481
        %v2489 = vadd.f32 %v2488, %v2482
        %v2490 = vadd.f32 %v2489, %v2483
        %v2491 = vadd.f32 %v2490, %v2484
        %2492 = vadd.xlane.f32.xlu0 %v2491
        %v2493 = vpop.xlane.xlu0 %2492
        %v2494 = vmul.f32 %v2493, 0.001953125
        %v2495 = vld [vmem:[#allocation15] sm:$0x1]
        %2496 = vxpose.xlu0.b32.start [1/16] %v2494, 128
        %2497 = vxpose.xlu0.b32.cont [2/16] 0.0, 128
        %2498 = vxpose.xlu0.b32.cont [3/16] 0.0, 128
        %2499 = vxpose.xlu0.b32.cont [4/16] 0.0, 128
        %2500 = vxpose.xlu0.b32.cont [5/16] 0.0, 128
        %2501 = vxpose.xlu0.b32.cont [6/16] 0.0, 128
        %2502 = vxpose.xlu0.b32.cont [7/16] 0.0, 128
        %2503 = vxpose.xlu0.b32.cont [8/16] 0.0, 128
        %2504 = vxpose.xlu0.b32.cont [9/16] 0.0, 128
        %2505 = vxpose.xlu0.b32.cont [10/16] 0.0, 128
        %2506 = vxpose.xlu0.b32.cont [11/16] 0.0, 128
        %2507 = vxpose.xlu0.b32.cont [12/16] 0.0, 128
        %2508 = vxpose.xlu0.b32.cont [13/16] 0.0, 128
        %2509 = vxpose.xlu0.b32.cont [14/16] 0.0, 128
        %2510 = vxpose.xlu0.b32.cont [15/16] 0.0, 128
        %2511 = vxpose.xlu0.b32.end [16/16] 0.0, 128
        %v2512 = vpop.trf.xlu0
        %v2513 = vpop.trf.xlu0
        %v2514 = vpop.trf.xlu0
        %v2515 = vpop.trf.xlu0
        %v2516 = vpop.trf.xlu0
        %v2517 = vpop.trf.xlu0
        %v2518 = vpop.trf.xlu0
        %v2519 = vpop.trf.xlu0
        %v2520 = vpop.trf.xlu0
        %v2521 = vpop.trf.xlu0
        %v2522 = vpop.trf.xlu0
        %v2523 = vpop.trf.xlu0
        %v2524 = vpop.trf.xlu0
        %v2525 = vpop.trf.xlu0
        %v2526 = vpop.trf.xlu0
        %v2527 = vpop.trf.xlu0
        %v2528 = vmul.f32 %v2495, %v2512
        %vm2529 = vcmask 57344
        %v2530 = vsel %vm2529, %v2528, 0.0
        %2531 = vadd.xlane.f32.xlu0 %v2530
        %v2532 = vpop.xlane.xlu0 %2531
        %v2533 = vld [vmem:[#allocation3] sm:$0x1]
        %v2534 = vadd.f32 %v2532, %v2533
        %v2535 = vmax.f32 %v2534, 0.0
        %v2536 = vld [vmem:[#allocation16] sm:$0xff]
        %2537 = vxpose.xlu0.b32.start [1/16] %v2535, 128
        %2538 = vxpose.xlu0.b32.cont [2/16] 0.0, 128
        %2539 = vxpose.xlu0.b32.cont [3/16] 0.0, 128
        %2540 = vxpose.xlu0.b32.cont [4/16] 0.0, 128
        %2541 = vxpose.xlu0.b32.cont [5/16] 0.0, 128
        %2542 = vxpose.xlu0.b32.cont [6/16] 0.0, 128
        %2543 = vxpose.xlu0.b32.cont [7/16] 0.0, 128
        %2544 = vxpose.xlu0.b32.cont [8/16] 0.0, 128
        %2545 = vxpose.xlu0.b32.cont [9/16] 0.0, 128
        %2546 = vxpose.xlu0.b32.cont [10/16] 0.0, 128
        %2547 = vxpose.xlu0.b32.cont [11/16] 0.0, 128
        %2548 = vxpose.xlu0.b32.cont [12/16] 0.0, 128
        %2549 = vxpose.xlu0.b32.cont [13/16] 0.0, 128
        %2550 = vxpose.xlu0.b32.cont [14/16] 0.0, 128
        %2551 = vxpose.xlu0.b32.cont [15/16] 0.0, 128
        %2552 = vxpose.xlu0.b32.end [16/16] 0.0, 128
        %v2553 = vpop.trf.xlu0
        %v2554 = vpop.trf.xlu0
        %v2555 = vpop.trf.xlu0
        %v2556 = vpop.trf.xlu0
        %v2557 = vpop.trf.xlu0
        %v2558 = vpop.trf.xlu0
        %v2559 = vpop.trf.xlu0
        %v2560 = vpop.trf.xlu0
        %v2561 = vpop.trf.xlu0
        %v2562 = vpop.trf.xlu0
        %v2563 = vpop.trf.xlu0
        %v2564 = vpop.trf.xlu0
        %v2565 = vpop.trf.xlu0
        %v2566 = vpop.trf.xlu0
        %v2567 = vpop.trf.xlu0
        %v2568 = vpop.trf.xlu0
        %v2569 = vlaneseq
        %v2570 = vshrl.u32 %v2569, 7
        %v2571 = vsub.s32 0, %v2570
        %v2572 = vrot.slane %v2553, %v2571
        %v2573 = vmul.f32 %v2536, %v2572
        %v2574 = vadd.f32 %v2573, 0.0
        %v2575 = vld [vmem:[#allocation18] sm:$0xff]
        %v2576 = vadd.f32 %v2574, %v2575
        %v2577 = vxor.u32 %v2576, 2147483648
        %v2578 = vmul.f32 %v2577, 1.442695
        %v2579 = vpow.pop %v2578
        %v2580 = vadd.f32 %v2579, 1.0
        %v2581 = vrcp.pop %v2580
        %v2582 = vmul.f32 1.0, %v2581
        %2584 = vset.pattern.permute.xlu0 0
        %2585 = vperm.xlu0 %2584, %v2582
        %v2586 = vpop.permute.xlu0 %2585
        %v2588 = vmul.f32 %v2469, %v2586
        %v2589 = vmul.f32 %v2470, %v2586
        %v2590 = vmul.f32 %v2471, %v2586
        %v2591 = vmul.f32 %v2472, %v2586
        %v2592 = vmul.f32 %v2473, %v2586
        %v2593 = vmul.f32 %v2474, %v2586
        %v2594 = vmul.f32 %v2475, %v2586
        %v2595 = vmul.f32 %v2476, %v2586
        %v2596 = vld [vmem:[#allocation21] sm:$0xf]
        %v2597 = vld [vmem:[#allocation21 + $0x4] sm:$0xf]
        %v2598 = vpack.c.bf16 %v2588, %v2588
        %v2599 = vpack.c.bf16 %v2589, %v2589
        %v2600 = vpack.c.bf16 %v2590, %v2590
        %v2601 = vpack.c.bf16 %v2591, %v2591
        %v2602 = vpack.c.bf16 %v2592, %v2592
        %v2603 = vpack.c.bf16 %v2593, %v2593
        %v2604 = vpack.c.bf16 %v2594, %v2594
        %v2605 = vpack.c.bf16 %v2595, %v2595
        %v2606 = vld [vmem:[#allocation22] sm:$0xff]
        %v2607 = vld [vmem:[#allocation22 + $0x8] sm:$0xff]
        %2609 = vset.pattern.permute.xlu0 0
        %2610 = vperm.xlu0 %2609, %v2606
        %v2611 = vpop.permute.xlu0 %2610
        %2614 = vset.pattern.permute.xlu0 0
        %2615 = vperm.xlu0 %2614, %v2607
        %v2616 = vpop.permute.xlu0 %2615
        %v2620 = vunpack.c.l.b16 %v2596
        %v2621 = vunpack.c.l.b16 %v2597
        %v2622 = vpack.c.b16 %v2621, %v2620
        %vm2623 = vcmask 64512
        %v2625 = vsel %vm2623, %v2622, 0
        %v2628 = vsel %vm2160, %v2598, 0
        %v2631 = vsel %vm2160, %v2599, 0
        %v2634 = vsel %vm2160, %v2600, 0
        %v2637 = vsel %vm2160, %v2601, 0
        %v2640 = vsel %vm2160, %v2602, 0
        %v2643 = vsel %vm2160, %v2603, 0
        %v2646 = vsel %vm2160, %v2604, 0
        %v2649 = vsel %vm2160, %v2605, 0
        %2651 = vmatprep.subr.bf16.mxu0 %v2631
        %2652 = vmatpush1.bf16.msra.mxu0 %v2628
        %2653 = vmatprep.subr.bf16.mxu0 0
        %2654 = vmatpush1.bf16.msra.mxu0 0
        %2655 = vmatprep.subr.bf16.mxu0 0
        %2656 = vmatpush1.bf16.msra.mxu0 0
        %2657 = vmatprep.subr.bf16.mxu0 0
        %2658 = vmatpush1.bf16.msra.mxu0 0
        %2659 = vmatprep.subr.bf16.mxu0 0
        %2660 = vmatpush1.bf16.msra.mxu0 0
        %2661 = vmatprep.subr.bf16.mxu0 0
        %2662 = vmatpush1.bf16.msra.mxu0 0
        %2663 = vmatprep.subr.bf16.mxu0 0
        %2664 = vmatpush1.bf16.msra.mxu0 0
        %2665 = vmatprep.subr.bf16.mxu0 0
        %2666 = vmatpush1.bf16.msra.mxu0 0
        %2667 = vmatprep.subr.bf16.mxu0 0
        %2668 = vmatpush1.bf16.msra.mxu0 0
        %2669 = vmatprep.subr.bf16.mxu0 0
        %2670 = vmatpush1.bf16.msra.mxu0 0
        %2671 = vmatprep.subr.bf16.mxu0 0
        %2672 = vmatpush1.bf16.msra.mxu0 0
        %2673 = vmatprep.subr.bf16.mxu0 0
        %2674 = vmatpush1.bf16.msra.mxu0 0
        %2675 = vmatprep.subr.bf16.mxu0 0
        %2676 = vmatpush1.bf16.msra.mxu0 0
        %2677 = vmatprep.subr.bf16.mxu0 0
        %2678 = vmatpush1.bf16.msra.mxu0 0
        %2679 = vmatprep.subr.bf16.mxu0 0
        %2680 = vmatpush1.bf16.msra.mxu0 0
        %2681 = vmatprep.subr.bf16.mxu0 0
        %2682 = vmatpush1.bf16.msra.mxu0 0
        %2683 = vmatprep.mubr.bf16.mxu0 0
        %2684 = vmatmul.mubr.bf16.gmra.mrb[0].mxu0 %v2625
        %v2685 = vpop.f32.mrb[0].mxu0
        %v2686 = vadd.f32 %v2611, %v2685
        %v2687 = vpop.f32.mrb[0].mxu0
        %v2688 = vadd.f32 %v2611, %v2687
        %v2689 = vpop.f32.mrb[0].mxu0
        %v2690 = vadd.f32 %v2616, %v2689
        %v2691 = vpop.f32.mrb[0].mxu0
        %v2692 = vadd.f32 %v2616, %v2691
        %2693 = vdwg.mxu0
        %2694 = vmatprep.subr.bf16.mxu0 %v2637
        %2695 = vmatpush1.bf16.msra.mxu0 %v2634
        %2696 = vmatprep.subr.bf16.mxu0 0
        %2697 = vmatpush1.bf16.msra.mxu0 0
        %2698 = vmatprep.subr.bf16.mxu0 0
        %2699 = vmatpush1.bf16.msra.mxu0 0
        %2700 = vmatprep.subr.bf16.mxu0 0
        %2701 = vmatpush1.bf16.msra.mxu0 0
        %2702 = vmatprep.subr.bf16.mxu0 0
        %2703 = vmatpush1.bf16.msra.mxu0 0
        %2704 = vmatprep.subr.bf16.mxu0 0
        %2705 = vmatpush1.bf16.msra.mxu0 0
        %2706 = vmatprep.subr.bf16.mxu0 0
        %2707 = vmatpush1.bf16.msra.mxu0 0
        %2708 = vmatprep.subr.bf16.mxu0 0
        %2709 = vmatpush1.bf16.msra.mxu0 0
        %2710 = vmatprep.subr.bf16.mxu0 0
        %2711 = vmatpush1.bf16.msra.mxu0 0
        %2712 = vmatprep.subr.bf16.mxu0 0
        %2713 = vmatpush1.bf16.msra.mxu0 0
        %2714 = vmatprep.subr.bf16.mxu0 0
        %2715 = vmatpush1.bf16.msra.mxu0 0
        %2716 = vmatprep.subr.bf16.mxu0 0
        %2717 = vmatpush1.bf16.msra.mxu0 0
        %2718 = vmatprep.subr.bf16.mxu0 0
        %2719 = vmatpush1.bf16.msra.mxu0 0
        %2720 = vmatprep.subr.bf16.mxu0 0
        %2721 = vmatpush1.bf16.msra.mxu0 0
        %2722 = vmatprep.subr.bf16.mxu0 0
        %2723 = vmatpush1.bf16.msra.mxu0 0
        %2724 = vmatprep.subr.bf16.mxu0 0
        %2725 = vmatpush1.bf16.msra.mxu0 0
        %2726 = vmatprep.mubr.bf16.mxu0 0
        %2727 = vmatmul.mubr.bf16.gmra.mrb[0].mxu0 %v2625
        %v2728 = vpop.f32.mrb[0].mxu0
        %v2729 = vadd.f32 %v2611, %v2728
        %v2730 = vpop.f32.mrb[0].mxu0
        %v2731 = vadd.f32 %v2611, %v2730
        %v2732 = vpop.f32.mrb[0].mxu0
        %v2733 = vadd.f32 %v2616, %v2732
        %v2734 = vpop.f32.mrb[0].mxu0
        %v2735 = vadd.f32 %v2616, %v2734
        %2736 = vdwg.mxu0
        %2737 = vmatprep.subr.bf16.mxu0 %v2643
        %2738 = vmatpush1.bf16.msra.mxu0 %v2640
        %2739 = vmatprep.subr.bf16.mxu0 0
        %2740 = vmatpush1.bf16.msra.mxu0 0
        %2741 = vmatprep.subr.bf16.mxu0 0
        %2742 = vmatpush1.bf16.msra.mxu0 0
        %2743 = vmatprep.subr.bf16.mxu0 0
        %2744 = vmatpush1.bf16.msra.mxu0 0
        %2745 = vmatprep.subr.bf16.mxu0 0
        %2746 = vmatpush1.bf16.msra.mxu0 0
        %2747 = vmatprep.subr.bf16.mxu0 0
        %2748 = vmatpush1.bf16.msra.mxu0 0
        %2749 = vmatprep.subr.bf16.mxu0 0
        %2750 = vmatpush1.bf16.msra.mxu0 0
        %2751 = vmatprep.subr.bf16.mxu0 0
        %2752 = vmatpush1.bf16.msra.mxu0 0
        %2753 = vmatprep.subr.bf16.mxu0 0
        %2754 = vmatpush1.bf16.msra.mxu0 0
        %2755 = vmatprep.subr.bf16.mxu0 0
        %2756 = vmatpush1.bf16.msra.mxu0 0
        %2757 = vmatprep.subr.bf16.mxu0 0
        %2758 = vmatpush1.bf16.msra.mxu0 0
        %2759 = vmatprep.subr.bf16.mxu0 0
        %2760 = vmatpush1.bf16.msra.mxu0 0
        %2761 = vmatprep.subr.bf16.mxu0 0
        %2762 = vmatpush1.bf16.msra.mxu0 0
        %2763 = vmatprep.subr.bf16.mxu0 0
        %2764 = vmatpush1.bf16.msra.mxu0 0
        %2765 = vmatprep.subr.bf16.mxu0 0
        %2766 = vmatpush1.bf16.msra.mxu0 0
        %2767 = vmatprep.subr.bf16.mxu0 0
        %2768 = vmatpush1.bf16.msra.mxu0 0
        %2769 = vmatprep.mubr.bf16.mxu0 0
        %2770 = vmatmul.mubr.bf16.gmra.mrb[0].mxu0 %v2625
        %v2771 = vpop.f32.mrb[0].mxu0
        %v2772 = vadd.f32 %v2611, %v2771
        %v2773 = vpop.f32.mrb[0].mxu0
        %v2774 = vadd.f32 %v2611, %v2773
        %v2775 = vpop.f32.mrb[0].mxu0
        %v2776 = vadd.f32 %v2616, %v2775
        %v2777 = vpop.f32.mrb[0].mxu0
        %v2778 = vadd.f32 %v2616, %v2777
        %2779 = vdwg.mxu0
        %2780 = vmatprep.subr.bf16.mxu0 %v2649
        %2781 = vmatpush1.bf16.msra.mxu0 %v2646
        %2782 = vmatprep.subr.bf16.mxu0 0
        %2783 = vmatpush1.bf16.msra.mxu0 0
        %2784 = vmatprep.subr.bf16.mxu0 0
        %2785 = vmatpush1.bf16.msra.mxu0 0
        %2786 = vmatprep.subr.bf16.mxu0 0
        %2787 = vmatpush1.bf16.msra.mxu0 0
        %2788 = vmatprep.subr.bf16.mxu0 0
        %2789 = vmatpush1.bf16.msra.mxu0 0
        %2790 = vmatprep.subr.bf16.mxu0 0
        %2791 = vmatpush1.bf16.msra.mxu0 0
        %2792 = vmatprep.subr.bf16.mxu0 0
        %2793 = vmatpush1.bf16.msra.mxu0 0
        %2794 = vmatprep.subr.bf16.mxu0 0
        %2795 = vmatpush1.bf16.msra.mxu0 0
        %2796 = vmatprep.subr.bf16.mxu0 0
        %2797 = vmatpush1.bf16.msra.mxu0 0
        %2798 = vmatprep.subr.bf16.mxu0 0
        %2799 = vmatpush1.bf16.msra.mxu0 0
        %2800 = vmatprep.subr.bf16.mxu0 0
        %2801 = vmatpush1.bf16.msra.mxu0 0
        %2802 = vmatprep.subr.bf16.mxu0 0
        %2803 = vmatpush1.bf16.msra.mxu0 0
        %2804 = vmatprep.subr.bf16.mxu0 0
        %2805 = vmatpush1.bf16.msra.mxu0 0
        %2806 = vmatprep.subr.bf16.mxu0 0
        %2807 = vmatpush1.bf16.msra.mxu0 0
        %2808 = vmatprep.subr.bf16.mxu0 0
        %2809 = vmatpush1.bf16.msra.mxu0 0
        %2810 = vmatprep.subr.bf16.mxu0 0
        %2811 = vmatpush1.bf16.msra.mxu0 0
        %2812 = vmatprep.mubr.bf16.mxu0 0
        %2813 = vmatmul.mubr.bf16.gmra.mrb[0].mxu0 %v2625
        %v2814 = vpop.f32.mrb[0].mxu0
        %v2815 = vadd.f32 %v2611, %v2814
        %v2816 = vpop.f32.mrb[0].mxu0
        %v2817 = vadd.f32 %v2611, %v2816
        %v2818 = vpop.f32.mrb[0].mxu0
        %v2819 = vadd.f32 %v2616, %v2818
        %v2820 = vpop.f32.mrb[0].mxu0
        %v2821 = vadd.f32 %v2616, %v2820
        %2822 = vdwg.mxu0
        %v2823 = vmul.f32 %v2686, %v2353
        %v2824 = vmul.f32 %v2688, %v2357
        %v2825 = vmul.f32 %v2729, %v2361
        %v2826 = vmul.f32 %v2731, %v2365
        %v2827 = vmul.f32 %v2772, %v2369
        %v2828 = vmul.f32 %v2774, %v2373
        %v2829 = vmul.f32 %v2815, %v2377
        %v2830 = vmul.f32 %v2817, %v2381
        %v2831 = vmul.f32 %v2690, %v2353
        %v2832 = vmul.f32 %v2692, %v2357
        %v2833 = vmul.f32 %v2733, %v2361
        %v2834 = vmul.f32 %v2735, %v2365
        %v2835 = vmul.f32 %v2776, %v2369
        %v2836 = vmul.f32 %v2778, %v2373
        %v2837 = vmul.f32 %v2819, %v2377
        %v2838 = vmul.f32 %v2821, %v2381
        %v2839 = vpack.c.bf16 %v2831, %v2823
        %v2840 = vpack.c.bf16 %v2832, %v2824
        %v2841 = vpack.c.bf16 %v2833, %v2825
        %v2842 = vpack.c.bf16 %v2834, %v2826
        %v2843 = vpack.c.bf16 %v2835, %v2827
        %v2844 = vpack.c.bf16 %v2836, %v2828
        %v2845 = vpack.c.bf16 %v2837, %v2829
        %v2846 = vpack.c.bf16 %v2838, %v2830
        %v2855 = vunpack.c.l.b16 %v2839
        %v2856 = vunpack.c.l.b16 %v2840
        %v2857 = vunpack.c.l.b16 %v2841
        %v2858 = vunpack.c.l.b16 %v2842
        %v2859 = vunpack.c.l.b16 %v2843
        %v2860 = vunpack.c.l.b16 %v2844
        %v2861 = vunpack.c.l.b16 %v2845
        %v2862 = vunpack.c.l.b16 %v2846
        %v2863 = vunpack.c.h.b16 %v2839
        %v2864 = vunpack.c.h.b16 %v2840
        %v2865 = vunpack.c.h.b16 %v2841
        %v2866 = vunpack.c.h.b16 %v2842
        %v2867 = vunpack.c.h.b16 %v2843
        %v2868 = vunpack.c.h.b16 %v2844
        %v2869 = vunpack.c.h.b16 %v2845
        %v2870 = vunpack.c.h.b16 %v2846
        %v2871 = vpack.c.b16 %v2856, %v2855
        %v2872 = vpack.c.b16 %v2858, %v2857
        %v2873 = vpack.c.b16 %v2860, %v2859
        %v2874 = vpack.c.b16 %v2862, %v2861
        %v2875 = vpack.c.b16 %v2864, %v2863
        %v2876 = vpack.c.b16 %v2866, %v2865
        %v2877 = vpack.c.b16 %v2868, %v2867
        %v2878 = vpack.c.b16 %v2870, %v2869
        %2887 = vst [vmem:[%s639] sm:$0xff] %v2871
        %2888 = vst [vmem:[%s639 + $0x8] sm:$0xff] %v2872
        %2889 = vst [vmem:[%s639 + $0x10] sm:$0xff] %v2873
        %2890 = vst [vmem:[%s639 + $0x18] sm:$0xff] %v2874
        %2891 = vst [vmem:[%s639 + $0x20] sm:$0xff] %v2875
        %2892 = vst [vmem:[%s639 + $0x28] sm:$0xff] %v2876
        %2893 = vst [vmem:[%s639 + $0x30] sm:$0xff] %v2877
        %2894 = vst [vmem:[%s639 + $0x38] sm:$0xff] %v2878
        %v2895 = vmul.f32 %v2582, %v2494
        %v2896 = vld [vmem:[#allocation19] sm:$0x1]
        %2897 = vxpose.xlu0.b32.start [1/16] %v2895, 128
        %2898 = vxpose.xlu0.b32.cont [2/16] 0.0, 128
        %2899 = vxpose.xlu0.b32.cont [3/16] 0.0, 128
        %2900 = vxpose.xlu0.b32.cont [4/16] 0.0, 128
        %2901 = vxpose.xlu0.b32.cont [5/16] 0.0, 128
        %2902 = vxpose.xlu0.b32.cont [6/16] 0.0, 128
        %2903 = vxpose.xlu0.b32.cont [7/16] 0.0, 128
        %2904 = vxpose.xlu0.b32.cont [8/16] 0.0, 128
        %2905 = vxpose.xlu0.b32.cont [9/16] 0.0, 128
        %2906 = vxpose.xlu0.b32.cont [10/16] 0.0, 128
        %2907 = vxpose.xlu0.b32.cont [11/16] 0.0, 128
        %2908 = vxpose.xlu0.b32.cont [12/16] 0.0, 128
        %2909 = vxpose.xlu0.b32.cont [13/16] 0.0, 128
        %2910 = vxpose.xlu0.b32.cont [14/16] 0.0, 128
        %2911 = vxpose.xlu0.b32.cont [15/16] 0.0, 128
        %2912 = vxpose.xlu0.b32.end [16/16] 0.0, 128
        %v2913 = vpop.trf.xlu0
        %v2914 = vpop.trf.xlu0
        %v2915 = vpop.trf.xlu0
        %v2916 = vpop.trf.xlu0
        %v2917 = vpop.trf.xlu0
        %v2918 = vpop.trf.xlu0
        %v2919 = vpop.trf.xlu0
        %v2920 = vpop.trf.xlu0
        %v2921 = vpop.trf.xlu0
        %v2922 = vpop.trf.xlu0
        %v2923 = vpop.trf.xlu0
        %v2924 = vpop.trf.xlu0
        %v2925 = vpop.trf.xlu0
        %v2926 = vpop.trf.xlu0
        %v2927 = vpop.trf.xlu0
        %v2928 = vpop.trf.xlu0
        %v2929 = vmul.f32 %v2896, %v2913
        %v2930 = vsel %vm2529, %v2929, 0.0
        %2931 = vadd.xlane.f32.xlu0 %v2930
        %v2932 = vpop.xlane.xlu0 %2931
        %v2933 = vld [vmem:[#allocation4] sm:$0x1]
        %v2934 = vadd.f32 %v2932, %v2933
        %vm2935 = vcmp.ge.f32.partialorder %v2934, 0.0
        %v2936 = vmul.f32 %v2934, 0.01
        %v2937 = vsel %vm2935, %v2934, %v2936
        %v2938 = vld [vmem:[#allocation5] sm:$0x1]
        %2939 = vxpose.xlu0.b32.start [1/16] %v2937, 128
        %2940 = vxpose.xlu0.b32.cont [2/16] 0.0, 128
        %2941 = vxpose.xlu0.b32.cont [3/16] 0.0, 128
        %2942 = vxpose.xlu0.b32.cont [4/16] 0.0, 128
        %2943 = vxpose.xlu0.b32.cont [5/16] 0.0, 128
        %2944 = vxpose.xlu0.b32.cont [6/16] 0.0, 128
        %2945 = vxpose.xlu0.b32.cont [7/16] 0.0, 128
        %2946 = vxpose.xlu0.b32.cont [8/16] 0.0, 128
        %2947 = vxpose.xlu0.b32.cont [9/16] 0.0, 128
        %2948 = vxpose.xlu0.b32.cont [10/16] 0.0, 128
        %2949 = vxpose.xlu0.b32.cont [11/16] 0.0, 128
        %2950 = vxpose.xlu0.b32.cont [12/16] 0.0, 128
        %2951 = vxpose.xlu0.b32.cont [13/16] 0.0, 128
        %2952 = vxpose.xlu0.b32.cont [14/16] 0.0, 128
        %2953 = vxpose.xlu0.b32.cont [15/16] 0.0, 128
        %2954 = vxpose.xlu0.b32.end [16/16] 0.0, 128
        %v2955 = vpop.trf.xlu0
        %v2956 = vpop.trf.xlu0
        %v2957 = vpop.trf.xlu0
        %v2958 = vpop.trf.xlu0
        %v2959 = vpop.trf.xlu0
        %v2960 = vpop.trf.xlu0
        %v2961 = vpop.trf.xlu0
        %v2962 = vpop.trf.xlu0
        %v2963 = vpop.trf.xlu0
        %v2964 = vpop.trf.xlu0
        %v2965 = vpop.trf.xlu0
        %v2966 = vpop.trf.xlu0
        %v2967 = vpop.trf.xlu0
        %v2968 = vpop.trf.xlu0
        %v2969 = vpop.trf.xlu0
        %v2970 = vpop.trf.xlu0
        %v2971 = vmul.f32 %v2938, %v2955
        %v2972 = vadd.f32 %v2971, 0.0
        %v2973 = vld [vmem:[#allocation6] sm:$0x1]
        %v2974 = vadd.f32 %v2972, %v2973
        %vm2975 = vcmask 0
        %2976 = vst.msk [vmem:[%s645] sm:$0x1] %vm2975, %v2974
        %s2977 = sand.u32 %s356, 1
        %s2978 = scalar_lea.sflag [#allocation9], %s2977
        %s2979 = sand.u32 %s356, 1
        %s2980 = smul.addr %s2979, 64
        %s2981 = scalar_lea.vmem [#allocation24], %s2980
        %s2982 = sand.u32 %s382, 1
        %s2983 = scalar_lea.sflag [#allocation26], %s2982
        %s2984 = sand.u32 %s382, 1
        %s2985 = scalar_lea.vmem [#allocation25], %s2984
        // Predicated region
        $region117: #{_lambda_.3} parent=75 // pred_check
          %p2986 = pneg %p366
        $region118: #{_lambda_.3} parent=75 // pred_check_branch
          %2988 = sbr.rel (%p2986) target = $region120
        $region119: #{_lambda_.3} parent=75 // pred_region
          %s2990 = ssub.s32 1024, 1024
          %2991 = vsyncadd %s2978, %s2990
          %s2992 = smul.addr %s49, 16
          %s2993 = smul.addr %s2992, 64
          %s2994 = scalar_lea.hbm %s14, %s2993
          %s2995 = sshll.u32 %s2981, 4
          %s2996 = int_to_ptr.vmem [resolvable:$true] %s2995
          %3001 = dma.vmem_to_hbm [thread:$0]  %s2996, 1024, %s2994, %s2978, 512, 512, 32
        $region120: #{_lambda_.3} parent=75 // pred_fallthru
          _
        // Predicated region
        $region121: #{_lambda_.3} parent=75 // pred_check
          %p3002 = pneg %p392
        $region122: #{_lambda_.3} parent=75 // pred_check_branch
          %3004 = sbr.rel (%p3002) target = $region124
        $region123: #{_lambda_.3} parent=75 // pred_region
          %s3006 = ssub.s32 16, 16
          %3007 = vsyncadd %s2983, %s3006
          %s3008 = smul.addr %s49, 16
          %s3009 = scalar_lea.hbm %s15, %s3008
          %s3011 = sshll.u32 %s2985, 4
          %s3012 = int_to_ptr.vmem [resolvable:$true] %s3011
          %3014 = dma.vmem_to_hbm [thread:$0]  %s3012, 16, %s3009, %s2983
        $region124: #{_lambda_.3} parent=75 // pred_fallthru
          _
      $region76: #{_lambda_.3} parent=5 // pred_fallthru
        _
      %p3015 = scmp.le.s32.totalorder 2, %s44
      // Predicated region
      $region125: #{_lambda_.3} parent=5 // pred_check
        %p3016 = pneg %p3015
      $region126: #{_lambda_.3} parent=5 // pred_check_branch
        %3018 = sbr.rel (%p3016) target = $region128
      $region127: #{_lambda_.3} parent=5 // pred_region
        %s3019 = ssub.s32 %s44, 2
        // Predicated region
        $region129: #{_lambda_.3} parent=127 // pred_check
          %p3020 = pneg %p372
        $region130: #{_lambda_.3} parent=127 // pred_check_branch
          %3022 = sbr.rel (%p3020) target = $region132
        $region131: #{_lambda_.3} parent=127 // pred_region
          %s3023 = sand.u32 %s357, 1
          %s3024 = scalar_lea.sflag [#allocation9], %s3023
          %s3025 = sand.u32 %s357, 1
          %s3026 = smul.addr %s3025, 64
          %s3027 = scalar_lea.vmem [#allocation24], %s3026
          %3028 = dma.done %s3024, 1024
        $region132: #{_lambda_.3} parent=127 // pred_fallthru
          _
        // Predicated region
        $region133: #{_lambda_.3} parent=127 // pred_check
          %p3029 = pneg %p398
        $region134: #{_lambda_.3} parent=127 // pred_check_branch
          %3031 = sbr.rel (%p3029) target = $region136
        $region135: #{_lambda_.3} parent=127 // pred_region
          %s3032 = sand.u32 %s383, 1
          %s3033 = scalar_lea.sflag [#allocation26], %s3032
          %s3034 = sand.u32 %s383, 1
          %s3035 = scalar_lea.vmem [#allocation25], %s3034
          %3036 = dma.done %s3033, 16
        $region136: #{_lambda_.3} parent=127 // pred_fallthru
          _
      $region128: #{_lambda_.3} parent=5 // pred_fallthru
        _
    $region6: #{_lambda_.3} parent=1 // loop_footer
      %s48 = sadd.s32 1, %s44
    $region7: #{_lambda_.3} parent=1 // loop_footer_branch
      %43 = sbr.rel target = $region3
    $region8: #{_lambda_.3} parent=1 // loop_exit
      _
    %3037 = vsyncpa [#allocation8], 1
    %s3038 = scalar_lea.sflag [#allocation8], 1
    %3039 = vsyncpa %s3038, 1
    %3040 = vsyncpa [#allocation11], 1
    %3041 = vsyncpa [#allocation14], 1
    %3042 = vsyncpa [#allocation17], 1
    %3043 = vsyncpa [#allocation20], 1
    %3044 = vsyncpa [#allocation23], 1
    %3045 = vsyncpa [#allocation9], 1
    %s3046 = scalar_lea.sflag [#allocation9], 1
    %3047 = vsyncpa %s3046, 1
    %3048 = vsyncpa [#allocation26], 1
    %s3049 = scalar_lea.sflag [#allocation26], 1
    %3050 = vsyncpa %s3049, 1

// kernel: _lambda_.5
$region0: #{_lambda_.5}
  #allocation0 [shape = 'u32[]', space=smem, size = 0x4, offset = 0x4, fixed_abs, tag = 'smem constant byte address 0x4 - core index']
  #allocation1 [shape = 'u32[144,128]{1,0:T(1,128)}', space=vmem, size = 0x12000, scoped, tag = 'internal scratch']
  #allocation2 [shape = 'bf16[432,1024]{1,0:T(16,128)(2,1)}', space=vmem, size = 0xd8000, scoped, tag = 'scratch operand']
  %s0 = inlined_call_operand.hbm [shape: bf16[2,16,1024], index: 0, kind: input, shape index: {}]
  %s1 = inlined_call_operand.hbm [shape: bf16[2,16,1024], index: 1, kind: input, shape index: {}]
  %s2 = inlined_call_operand.hbm [shape: f32[2,2], index: 2, kind: input, shape index: {}]
  %s3 = inlined_call_operand.hbm [shape: f32[1,1024], index: 3, kind: input, shape index: {}]
  %s4 = inlined_call_operand.hbm [shape: bf16[16,432], index: 4, kind: input, shape index: {}]
  %s5 = inlined_call_operand.hbm [shape: f32[16,1], index: 5, kind: input, shape index: {}]
  %s6 = inlined_call_operand.hbm [shape: f32[2,16,1024], index: 6, kind: output, shape index: {}]
  %s7 = sld [smem:[#allocation0]]
  $region81: #{_lambda_.5} parent=0
    _
  %s9 = ssub.s32 1, %s7
  %s10 = scalar_select 0, %s9, %s7
  $region1: #{_lambda_.5} parent=0
    #allocation3 [shape = 'u8[65536]{0}', space=vmem, size = 0x10000, scoped, tag = 'input window, operand 0']
    #allocation4 [shape = 's32[2]{0}', space=sflag, size = 0x8, scoped, tag = 'scoped memory for _lambda_.5']
    #allocation5 [shape = 's32[2]{0}', space=sflag, size = 0x8, scoped, tag = 'scoped memory for _lambda_.5']
    #allocation6 [shape = 's32[2]{0}', space=sflag, size = 0x8, scoped, tag = 'scoped memory for _lambda_.5']
    #allocation7 [shape = 'u8[65536]{0}', space=vmem, size = 0x10000, scoped, tag = 'input window, operand 1']
    #allocation8 [shape = 's32[2]{0}', space=sflag, size = 0x8, scoped, tag = 'scoped memory for _lambda_.5']
    #allocation9 [shape = 'u8[1024]{0}', space=smem, size = 0x400, scoped, tag = 'input window, operand 2, single buffered']
    #allocation10 [shape = 'u8[4096]{0}', space=vmem, size = 0x1000, scoped, tag = 'input window, operand 3, single buffered']
    #allocation11 [shape = 'u8[16384]{0}', space=vmem, size = 0x4000, scoped, tag = 'input window, operand 4, single buffered']
    #allocation12 [shape = 's32[1]{0}', space=sflag, size = 0x4, scoped, tag = 'scoped memory for _lambda_.5']
    #allocation13 [shape = 'u8[8192]{0}', space=vmem, size = 0x2000, scoped, tag = 'input window, operand 5, single buffered']
    #allocation14 [shape = 'u8[131072]{0}', space=vmem, size = 0x20000, scoped, tag = 'output window, operand 0']
    %11 = vsyncpa [#allocation4], 0
    %s12 = scalar_lea.sflag [#allocation4], 1
    %13 = vsyncpa %s12, 0
    %14 = vsyncpa [#allocation8], 0
    %s15 = scalar_lea.sflag [#allocation8], 1
    %16 = vsyncpa %s15, 0
    %17 = vsyncpa [#allocation6], 0
    %18 = vsyncpa [#allocation12], 0
    %19 = vsyncpa [#allocation5], 0
    %s20 = scalar_lea.sflag [#allocation5], 1
    %21 = vsyncpa %s20, 0
    loop: start=0, step=1, limit=4
    $region2: #{_lambda_.5} parent=1 // loop_pre_header
      _
    $region3: #{_lambda_.5} parent=1 // loop_header
      %s23 = sphi 0, %s27
      %p24 = scmp.ge.s32.totalorder %s23, 4
      %s33 = sphi 0, %s35
      %s36 = sphi 0, %s33
      %s37 = sphi 0, %s36
      %s53 = sphi 0, %s37
      %s59 = sphi 0, %s61
      %s62 = sphi 0, %s59
      %s63 = sphi 0, %s62
      %s79 = sphi 0, %s63
      %s83 = sphi 0, %s83
      %s85 = sphi 0, %s83
      %s86 = sphi 0, %s85
      %s100 = sphi 0, %s86
      %s104 = sphi 0, %s104
      %s106 = sphi 0, %s104
      %s107 = sphi 0, %s106
      %s121 = sphi 0, %s107
      %s125 = sphi 0, %s125
      %s127 = sphi 0, %s125
      %s128 = sphi 0, %s127
      %s142 = sphi 0, %s128
      %s146 = sphi 0, %s146
      %s148 = sphi 0, %s146
      %s149 = sphi 0, %s148
      %s163 = sphi 0, %s149
      %s169 = sphi 0, %s171
      %s172 = sphi 0, %s169
      %s173 = sphi 0, %s172
      %s189 = sphi 0, %s173
    $region4: #{_lambda_.5} parent=1 // loop_header_branch
      %26 = sbr.rel (%p24) target = $region8
    $region5: #{_lambda_.5} parent=1 // loop_body
      %s28 = ssub.s32 %s23, 1
      %s29 = ssub.s32 %s23, 2
      %s30 = sadd.s32 %s23, 1
      %s31 = ssub.s32 %s23, %s30
      %p32 = scmp.eq.s32.totalorder %s31, 0
      %s34 = sadd.s32 %s33, 1
      %s35 = scalar_select %p32, %s33, %s34
      %p38 = pneg %p32
      %p39 = scmp.eq.s32.totalorder %s23, 1
      %p40 = por %p38, %p39
      %p41 = scmp.ne.s32.totalorder %s33, %s36
      %p42 = scmp.eq.s32.totalorder %s23, 0
      %p43 = por %p41, %p42
      %p44 = scmp.ne.s32.totalorder %s33, %s36
      %p45 = scmp.eq.s32.totalorder %s28, 1
      %p46 = por %p44, %p45
      %p47 = scmp.ne.s32.totalorder %s36, %s37
      %p48 = scmp.eq.s32.totalorder %s28, 0
      %p49 = por %p47, %p48
      %p50 = scmp.ne.s32.totalorder %s36, %s37
      %p51 = scmp.eq.s32.totalorder %s29, 1
      %p52 = por %p50, %p51
      %p54 = scmp.ne.s32.totalorder %s37, %s53
      %p55 = scmp.eq.s32.totalorder %s29, 0
      %p56 = por %p54, %p55
      %s57 = ssub.s32 %s23, %s30
      %p58 = scmp.eq.s32.totalorder %s57, 0
      %s60 = sadd.s32 %s59, 1
      %s61 = scalar_select %p58, %s59, %s60
      %p64 = pneg %p58
      %p65 = scmp.eq.s32.totalorder %s23, 1
      %p66 = por %p64, %p65
      %p67 = scmp.ne.s32.totalorder %s59, %s62
      %p68 = scmp.eq.s32.totalorder %s23, 0
      %p69 = por %p67, %p68
      %p70 = scmp.ne.s32.totalorder %s59, %s62
      %p71 = scmp.eq.s32.totalorder %s28, 1
      %p72 = por %p70, %p71
      %p73 = scmp.ne.s32.totalorder %s62, %s63
      %p74 = scmp.eq.s32.totalorder %s28, 0
      %p75 = por %p73, %p74
      %p76 = scmp.ne.s32.totalorder %s62, %s63
      %p77 = scmp.eq.s32.totalorder %s29, 1
      %p78 = por %p76, %p77
      %p80 = scmp.ne.s32.totalorder %s63, %s79
      %p81 = scmp.eq.s32.totalorder %s29, 0
      %p82 = por %p80, %p81
      %s84 = sadd.s32 %s83, 1
      %p87 = scmp.eq.s32.totalorder %s23, 1
      %p88 = scmp.ne.s32.totalorder %s83, %s85
      %p89 = scmp.eq.s32.totalorder %s23, 0
      %p90 = por %p88, %p89
      %p91 = scmp.ne.s32.totalorder %s83, %s85
      %p92 = scmp.eq.s32.totalorder %s28, 1
      %p93 = por %p91, %p92
      %p94 = scmp.ne.s32.totalorder %s85, %s86
      %p95 = scmp.eq.s32.totalorder %s28, 0
      %p96 = por %p94, %p95
      %p97 = scmp.ne.s32.totalorder %s85, %s86
      %p98 = scmp.eq.s32.totalorder %s29, 1
      %p99 = por %p97, %p98
      %p101 = scmp.ne.s32.totalorder %s86, %s100
      %p102 = scmp.eq.s32.totalorder %s29, 0
      %p103 = por %p101, %p102
      %s105 = sadd.s32 %s104, 1
      %p108 = scmp.eq.s32.totalorder %s23, 1
      %p109 = scmp.ne.s32.totalorder %s104, %s106
      %p110 = scmp.eq.s32.totalorder %s23, 0
      %p111 = por %p109, %p110
      %p112 = scmp.ne.s32.totalorder %s104, %s106
      %p113 = scmp.eq.s32.totalorder %s28, 1
      %p114 = por %p112, %p113
      %p115 = scmp.ne.s32.totalorder %s106, %s107
      %p116 = scmp.eq.s32.totalorder %s28, 0
      %p117 = por %p115, %p116
      %p118 = scmp.ne.s32.totalorder %s106, %s107
      %p119 = scmp.eq.s32.totalorder %s29, 1
      %p120 = por %p118, %p119
      %p122 = scmp.ne.s32.totalorder %s107, %s121
      %p123 = scmp.eq.s32.totalorder %s29, 0
      %p124 = por %p122, %p123
      %s126 = sadd.s32 %s125, 1
      %p129 = scmp.eq.s32.totalorder %s23, 1
      %p130 = scmp.ne.s32.totalorder %s125, %s127
      %p131 = scmp.eq.s32.totalorder %s23, 0
      %p132 = por %p130, %p131
      %p133 = scmp.ne.s32.totalorder %s125, %s127
      %p134 = scmp.eq.s32.totalorder %s28, 1
      %p135 = por %p133, %p134
      %p136 = scmp.ne.s32.totalorder %s127, %s128
      %p137 = scmp.eq.s32.totalorder %s28, 0
      %p138 = por %p136, %p137
      %p139 = scmp.ne.s32.totalorder %s127, %s128
      %p140 = scmp.eq.s32.totalorder %s29, 1
      %p141 = por %p139, %p140
      %p143 = scmp.ne.s32.totalorder %s128, %s142
      %p144 = scmp.eq.s32.totalorder %s29, 0
      %p145 = por %p143, %p144
      %s147 = sadd.s32 %s146, 1
      %p150 = scmp.eq.s32.totalorder %s23, 1
      %p151 = scmp.ne.s32.totalorder %s146, %s148
      %p152 = scmp.eq.s32.totalorder %s23, 0
      %p153 = por %p151, %p152
      %p154 = scmp.ne.s32.totalorder %s146, %s148
      %p155 = scmp.eq.s32.totalorder %s28, 1
      %p156 = por %p154, %p155
      %p157 = scmp.ne.s32.totalorder %s148, %s149
      %p158 = scmp.eq.s32.totalorder %s28, 0
      %p159 = por %p157, %p158
      %p160 = scmp.ne.s32.totalorder %s148, %s149
      %p161 = scmp.eq.s32.totalorder %s29, 1
      %p162 = por %p160, %p161
      %p164 = scmp.ne.s32.totalorder %s149, %s163
      %p165 = scmp.eq.s32.totalorder %s29, 0
      %p166 = por %p164, %p165
      %s167 = ssub.s32 %s23, %s30
      %p168 = scmp.eq.s32.totalorder %s167, 0
      %s170 = sadd.s32 %s169, 1
      %s171 = scalar_select %p168, %s169, %s170
      %p174 = pneg %p168
      %p175 = scmp.eq.s32.totalorder %s23, 1
      %p176 = por %p174, %p175
      %p177 = scmp.ne.s32.totalorder %s169, %s172
      %p178 = scmp.eq.s32.totalorder %s23, 0
      %p179 = por %p177, %p178
      %p180 = scmp.ne.s32.totalorder %s169, %s172
      %p181 = scmp.eq.s32.totalorder %s28, 1
      %p182 = por %p180, %p181
      %p183 = scmp.ne.s32.totalorder %s172, %s173
      %p184 = scmp.eq.s32.totalorder %s28, 0
      %p185 = por %p183, %p184
      %p186 = scmp.ne.s32.totalorder %s172, %s173
      %p187 = scmp.eq.s32.totalorder %s29, 1
      %p188 = por %p186, %p187
      %p190 = scmp.ne.s32.totalorder %s173, %s189
      %p191 = scmp.eq.s32.totalorder %s29, 0
      %p192 = por %p190, %p191
      %p193 = scmp.le.s32.totalorder 1, %s23
      %p194 = scmp.lt.s32.totalorder %s23, 3
      %p195 = pnand %p193, %p194
      %p196 = pneg %p195
      // Predicated region
      $region9: #{_lambda_.5} parent=5 // pred_check
        _
      $region10: #{_lambda_.5} parent=5 // pred_check_branch
        %198 = sbr.rel (%p195) target = $region12
      $region11: #{_lambda_.5} parent=5 // pred_region
        %s199 = ssub.s32 %s23, 1
        // Predicated region
        $region13: #{_lambda_.5} parent=11 // pred_check
          %p200 = pneg %p96
        $region14: #{_lambda_.5} parent=11 // pred_check_branch
          %202 = sbr.rel (%p200) target = $region16
        $region15: #{_lambda_.5} parent=11 // pred_region
          %s204 = ssub.s32 32, 32
          %205 = vsyncadd [#allocation6], %s204
          %208 = dma.hbm_to_smem %s2, 32, [#allocation9], [#allocation6]
        $region16: #{_lambda_.5} parent=11 // pred_fallthru
          _
        // Predicated region
        $region17: #{_lambda_.5} parent=11 // pred_check
          %p209 = pneg %p117
        $region18: #{_lambda_.5} parent=11 // pred_check_branch
          %211 = sbr.rel (%p209) target = $region20
        $region19: #{_lambda_.5} parent=11 // pred_region
          %s213 = ssub.s32 128, 128
          %214 = vsyncadd [#allocation8], %s213
          %s216 = sshll.u32 [#allocation10], 4
          %s217 = int_to_ptr.vmem [resolvable:$true] %s216
          %219 = dma.hbm_to_vmem [thread:$0]  %s3, 128, %s217, [#allocation8]
        $region20: #{_lambda_.5} parent=11 // pred_fallthru
          _
        // Predicated region
        $region21: #{_lambda_.5} parent=11 // pred_check
          %p220 = pneg %p138
        $region22: #{_lambda_.5} parent=11 // pred_check_branch
          %222 = sbr.rel (%p220) target = $region24
        $region23: #{_lambda_.5} parent=11 // pred_region
          %s224 = ssub.s32 512, 512
          %225 = vsyncadd [#allocation12], %s224
          %s226 = sshll.u32 [#allocation11], 4
          %s227 = int_to_ptr.vmem [resolvable:$true] %s226
          %232 = dma.hbm_to_vmem [thread:$0]  %s4, 512, %s227, [#allocation12], 256, 256, 16
        $region24: #{_lambda_.5} parent=11 // pred_fallthru
          _
        // Predicated region
        $region25: #{_lambda_.5} parent=11 // pred_check
          %p233 = pneg %p159
        $region26: #{_lambda_.5} parent=11 // pred_check_branch
          %235 = sbr.rel (%p233) target = $region28
        $region27: #{_lambda_.5} parent=11 // pred_region
          %s237 = ssub.s32 256, 256
          %238 = vsyncadd [#allocation12], %s237
          %s239 = sshll.u32 [#allocation13], 4
          %s240 = int_to_ptr.vmem [resolvable:$true] %s239
          %245 = dma.hbm_to_vmem [thread:$0]  %s5, 256, %s240, [#allocation12], 128, 128, 8
        $region28: #{_lambda_.5} parent=11 // pred_fallthru
          _
      $region12: #{_lambda_.5} parent=5 // pred_fallthru
        _
      %p246 = scmp.lt.s32.totalorder %s23, 2
      // Predicated region
      $region29: #{_lambda_.5} parent=5 // pred_check
        %p247 = pneg %p246
      $region30: #{_lambda_.5} parent=5 // pred_check_branch
        %249 = sbr.rel (%p247) target = $region32
      $region31: #{_lambda_.5} parent=5 // pred_region
        // Predicated region
        $region33: #{_lambda_.5} parent=31 // pred_check
          %p250 = pneg %p43
        $region34: #{_lambda_.5} parent=31 // pred_check_branch
          %252 = sbr.rel (%p250) target = $region36
        $region35: #{_lambda_.5} parent=31 // pred_region
          %s253 = sand.u32 %s33, 1
          %s254 = scalar_lea.sflag [#allocation4], %s253
          %s255 = sand.u32 %s33, 1
          %s256 = smul.addr %s255, 64
          %s257 = scalar_lea.vmem [#allocation3], %s256
          %s259 = ssub.s32 1024, 1024
          %260 = vsyncadd %s254, %s259
          %s261 = smul.addr %s23, 16
          %s262 = smul.addr %s261, 64
          %s263 = scalar_lea.hbm %s0, %s262
          %s264 = sshll.u32 %s257, 4
          %s265 = int_to_ptr.vmem [resolvable:$true] %s264
          %270 = dma.hbm_to_vmem [thread:$0]  %s263, 1024, %s265, %s254, 512, 512, 32
        $region36: #{_lambda_.5} parent=31 // pred_fallthru
          _
        // Predicated region
        $region37: #{_lambda_.5} parent=31 // pred_check
          %p271 = pneg %p69
        $region38: #{_lambda_.5} parent=31 // pred_check_branch
          %273 = sbr.rel (%p271) target = $region40
        $region39: #{_lambda_.5} parent=31 // pred_region
          %s274 = sand.u32 %s23, 1
          %s275 = scalar_lea.sflag [#allocation8], %s274
          %s276 = sand.u32 %s59, 1
          %s277 = smul.addr %s276, 64
          %s278 = scalar_lea.vmem [#allocation7], %s277
          %s280 = ssub.s32 1024, 1024
          %281 = vsyncadd %s275, %s280
          %s282 = smul.addr %s23, 16
          %s283 = smul.addr %s282, 64
          %s284 = scalar_lea.hbm %s1, %s283
          %s285 = sshll.u32 %s278, 4
          %s286 = int_to_ptr.vmem [resolvable:$true] %s285
          %291 = dma.hbm_to_vmem [thread:$0]  %s284, 1024, %s286, %s275, 512, 512, 32
        $region40: #{_lambda_.5} parent=31 // pred_fallthru
          _
      $region32: #{_lambda_.5} parent=5 // pred_fallthru
        _
      %p292 = scmp.le.s32.totalorder 1, %s23
      %p293 = scmp.lt.s32.totalorder %s23, 3
      %p294 = pnand %p292, %p293
      %p295 = pneg %p294
      // Predicated region
      $region41: #{_lambda_.5} parent=5 // pred_check
        _
      $region42: #{_lambda_.5} parent=5 // pred_check_branch
        %297 = sbr.rel (%p294) target = $region44
      $region43: #{_lambda_.5} parent=5 // pred_region
        %s298 = ssub.s32 %s23, 1
        %s299 = sand.u32 %s36, 1
        %s300 = scalar_lea.sflag [#allocation4], %s299
        %s301 = sand.u32 %s36, 1
        %s302 = smul.addr %s301, 64
        %s303 = scalar_lea.vmem [#allocation3], %s302
        // Predicated region
        $region45: #{_lambda_.5} parent=43 // pred_check
          %p304 = pneg %p49
        $region46: #{_lambda_.5} parent=43 // pred_check_branch
          %306 = sbr.rel (%p304) target = $region48
        $region47: #{_lambda_.5} parent=43 // pred_region
          %307 = dma.done %s300, 1024
        $region48: #{_lambda_.5} parent=43 // pred_fallthru
          _
        %s308 = sand.u32 %s28, 1
        %s309 = scalar_lea.sflag [#allocation8], %s308
        %s310 = sand.u32 %s62, 1
        %s311 = smul.addr %s310, 64
        %s312 = scalar_lea.vmem [#allocation7], %s311
        // Predicated region
        $region49: #{_lambda_.5} parent=43 // pred_check
          %p313 = pneg %p75
        $region50: #{_lambda_.5} parent=43 // pred_check_branch
          %315 = sbr.rel (%p313) target = $region52
        $region51: #{_lambda_.5} parent=43 // pred_region
          %316 = dma.done %s309, 1024
        $region52: #{_lambda_.5} parent=43 // pred_fallthru
          _
        // Predicated region
        $region53: #{_lambda_.5} parent=43 // pred_check
          %p317 = pneg %p96
        $region54: #{_lambda_.5} parent=43 // pred_check_branch
          %319 = sbr.rel (%p317) target = $region56
        $region55: #{_lambda_.5} parent=43 // pred_region
          %320 = dma.done [#allocation6], 32
        $region56: #{_lambda_.5} parent=43 // pred_fallthru
          _
        // Predicated region
        $region57: #{_lambda_.5} parent=43 // pred_check
          %p321 = pneg %p117
        $region58: #{_lambda_.5} parent=43 // pred_check_branch
          %323 = sbr.rel (%p321) target = $region60
        $region59: #{_lambda_.5} parent=43 // pred_region
          %324 = dma.done [#allocation8], 128
        $region60: #{_lambda_.5} parent=43 // pred_fallthru
          _
        // Predicated region
        $region61: #{_lambda_.5} parent=43 // pred_check
          %p325 = pneg %p138
        $region62: #{_lambda_.5} parent=43 // pred_check_branch
          %327 = sbr.rel (%p325) target = $region64
        $region63: #{_lambda_.5} parent=43 // pred_region
          %328 = dma.done [#allocation12], 512
        $region64: #{_lambda_.5} parent=43 // pred_fallthru
          _
        // Predicated region
        $region65: #{_lambda_.5} parent=43 // pred_check
          %p329 = pneg %p159
        $region66: #{_lambda_.5} parent=43 // pred_check_branch
          %331 = sbr.rel (%p329) target = $region68
        $region67: #{_lambda_.5} parent=43 // pred_region
          %332 = dma.done [#allocation12], 256
        $region68: #{_lambda_.5} parent=43 // pred_fallthru
          _
        %333 = sfence
        %s334 = sand.u32 %s36, 1
        %s335 = scalar_lea.sflag [#allocation4], %s334
        %s336 = sand.u32 %s36, 1
        %s337 = smul.addr %s336, 64
        %s338 = scalar_lea.vmem [#allocation3], %s337
        %p339 = pneg %p49
        %p340 = pneg %p46
        %s341 = sand.u32 %s28, 1
        %s342 = scalar_lea.sflag [#allocation8], %s341
        %s343 = sand.u32 %s62, 1
        %s344 = smul.addr %s343, 64
        %s345 = scalar_lea.vmem [#allocation7], %s344
        %p346 = pneg %p75
        %p347 = pneg %p72
        %p348 = pneg %p96
        %p349 = pneg %p93
        %p350 = pneg %p117
        %p351 = pneg %p114
        %p352 = pneg %p138
        %p353 = pneg %p135
        %p354 = pneg %p159
        %p355 = pneg %p156
        %p356 = pneg %p185
        %p357 = pneg %p182
        %s358 = sand.u32 %s172, 1
        %s359 = scalar_lea.sflag [#allocation5], %s358
        %s360 = sand.u32 %s172, 1
        %s361 = smul.addr %s360, 128
        %s362 = scalar_lea.vmem [#allocation14], %s361
        %s364 = smul.u32 %s28, 128
        %s365 = sld [smem:[#allocation9 + %s364]]
        %v366 = vld [vmem:[%s303] sm:$0xff]
        %v367 = vld [vmem:[%s303 + $0x8] sm:$0xff]
        %v368 = vld [vmem:[%s303 + $0x10] sm:$0xff]
        %v369 = vld [vmem:[%s303 + $0x18] sm:$0xff]
        %v370 = vld [vmem:[%s303 + $0x20] sm:$0xff]
        %v371 = vld [vmem:[%s303 + $0x28] sm:$0xff]
        %v372 = vld [vmem:[%s303 + $0x30] sm:$0xff]
        %v373 = vld [vmem:[%s303 + $0x38] sm:$0xff]
        %v374 = vunpack.c.l.bf16 %v366
        %v375 = vunpack.c.h.bf16 %v366
        %v376 = vunpack.c.l.bf16 %v367
        %v377 = vunpack.c.h.bf16 %v367
        %v378 = vunpack.c.l.bf16 %v368
        %v379 = vunpack.c.h.bf16 %v368
        %v380 = vunpack.c.l.bf16 %v369
        %v381 = vunpack.c.h.bf16 %v369
        %v382 = vunpack.c.l.bf16 %v370
        %v383 = vunpack.c.h.bf16 %v370
        %v384 = vunpack.c.l.bf16 %v371
        %v385 = vunpack.c.h.bf16 %v371
        %v386 = vunpack.c.l.bf16 %v372
        %v387 = vunpack.c.h.bf16 %v372
        %v388 = vunpack.c.l.bf16 %v373
        %v389 = vunpack.c.h.bf16 %v373
        %v390 = vstv %s365
        %v391 = vmul.f32 %v390, %v374
        %v392 = vmul.f32 %v390, %v375
        %v393 = vmul.f32 %v390, %v376
        %v394 = vmul.f32 %v390, %v377
        %v395 = vmul.f32 %v390, %v378
        %v396 = vmul.f32 %v390, %v379
        %v397 = vmul.f32 %v390, %v380
        %v398 = vmul.f32 %v390, %v381
        %v399 = vmul.f32 %v390, %v382
        %v400 = vmul.f32 %v390, %v383
        %v401 = vmul.f32 %v390, %v384
        %v402 = vmul.f32 %v390, %v385
        %v403 = vmul.f32 %v390, %v386
        %v404 = vmul.f32 %v390, %v387
        %v405 = vmul.f32 %v390, %v388
        %v406 = vmul.f32 %v390, %v389
        %s407 = sadd.s32 %s364, 1
        %s408 = sld [smem:[#allocation9 + %s407]]
        %v409 = vld [vmem:[%s312] sm:$0xff]
        %v410 = vld [vmem:[%s312 + $0x8] sm:$0xff]
        %v411 = vld [vmem:[%s312 + $0x10] sm:$0xff]
        %v412 = vld [vmem:[%s312 + $0x18] sm:$0xff]
        %v413 = vld [vmem:[%s312 + $0x20] sm:$0xff]
        %v414 = vld [vmem:[%s312 + $0x28] sm:$0xff]
        %v415 = vld [vmem:[%s312 + $0x30] sm:$0xff]
        %v416 = vld [vmem:[%s312 + $0x38] sm:$0xff]
        %v417 = vunpack.c.l.bf16 %v409
        %v418 = vunpack.c.h.bf16 %v409
        %v419 = vunpack.c.l.bf16 %v410
        %v420 = vunpack.c.h.bf16 %v410
        %v421 = vunpack.c.l.bf16 %v411
        %v422 = vunpack.c.h.bf16 %v411
        %v423 = vunpack.c.l.bf16 %v412
        %v424 = vunpack.c.h.bf16 %v412
        %v425 = vunpack.c.l.bf16 %v413
        %v426 = vunpack.c.h.bf16 %v413
        %v427 = vunpack.c.l.bf16 %v414
        %v428 = vunpack.c.h.bf16 %v414
        %v429 = vunpack.c.l.bf16 %v415
        %v430 = vunpack.c.h.bf16 %v415
        %v431 = vunpack.c.l.bf16 %v416
        %v432 = vunpack.c.h.bf16 %v416
        %v433 = vstv %s408
        %v434 = vmul.f32 %v433, %v417
        %v435 = vmul.f32 %v433, %v418
        %v436 = vmul.f32 %v433, %v419
        %v437 = vmul.f32 %v433, %v420
        %v438 = vmul.f32 %v433, %v421
        %v439 = vmul.f32 %v433, %v422
        %v440 = vmul.f32 %v433, %v423
        %v441 = vmul.f32 %v433, %v424
        %v442 = vmul.f32 %v433, %v425
        %v443 = vmul.f32 %v433, %v426
        %v444 = vmul.f32 %v433, %v427
        %v445 = vmul.f32 %v433, %v428
        %v446 = vmul.f32 %v433, %v429
        %v447 = vmul.f32 %v433, %v430
        %v448 = vmul.f32 %v433, %v431
        %v449 = vmul.f32 %v433, %v432
        %v450 = vadd.f32 %v391, %v434
        %v451 = vadd.f32 %v392, %v435
        %v452 = vadd.f32 %v393, %v436
        %v453 = vadd.f32 %v394, %v437
        %v454 = vadd.f32 %v395, %v438
        %v455 = vadd.f32 %v396, %v439
        %v456 = vadd.f32 %v397, %v440
        %v457 = vadd.f32 %v398, %v441
        %v458 = vadd.f32 %v399, %v442
        %v459 = vadd.f32 %v400, %v443
        %v460 = vadd.f32 %v401, %v444
        %v461 = vadd.f32 %v402, %v445
        %v462 = vadd.f32 %v403, %v446
        %v463 = vadd.f32 %v404, %v447
        %v464 = vadd.f32 %v405, %v448
        %v465 = vadd.f32 %v406, %v449
        %v466 = vpack.c.bf16 %v458, %v450
        %v467 = vpack.c.bf16 %v459, %v451
        %v468 = vpack.c.bf16 %v460, %v452
        %v469 = vpack.c.bf16 %v461, %v453
        %v470 = vpack.c.bf16 %v462, %v454
        %v471 = vpack.c.bf16 %v463, %v455
        %v472 = vpack.c.bf16 %v464, %v456
        %v473 = vpack.c.bf16 %v465, %v457
        %482 = vrot.lane.b32.xlu0 %v466, 111
        %v483 = vpop.permute.xlu0 %482
        %484 = vrot.lane.b32.xlu0 %v467, 111
        %v485 = vpop.permute.xlu0 %484
        %486 = vrot.lane.b32.xlu0 %v468, 111
        %v487 = vpop.permute.xlu0 %486
        %488 = vrot.lane.b32.xlu0 %v469, 111
        %v489 = vpop.permute.xlu0 %488
        %490 = vrot.lane.b32.xlu0 %v470, 111
        %v491 = vpop.permute.xlu0 %490
        %492 = vrot.lane.b32.xlu0 %v471, 111
        %v493 = vpop.permute.xlu0 %492
        %494 = vrot.lane.b32.xlu0 %v472, 111
        %v495 = vpop.permute.xlu0 %494
        %496 = vrot.lane.b32.xlu0 %v473, 111
        %v497 = vpop.permute.xlu0 %496
        %vm498 = vcmask 908288
        %v499 = vsel %vm498, %v483, %v485
        %v500 = vsel %vm498, %v485, %v487
        %v501 = vsel %vm498, %v487, %v489
        %v502 = vsel %vm498, %v489, %v491
        %v503 = vsel %vm498, %v491, %v493
        %v504 = vsel %vm498, %v493, %v495
        %v505 = vsel %vm498, %v495, %v497
        %vm513 = vcmask 908288
        %v516 = vsel %vm513, 0, %v483
        %v519 = vsel %vm513, %v497, 0
        %520 = vst [vmem:[#allocation2] sm:$0xff] %v516
        %521 = vst [vmem:[#allocation2 + $0x8] sm:$0xff] %v499
        %522 = vst [vmem:[#allocation2 + $0x10] sm:$0xff] %v500
        %523 = vst [vmem:[#allocation2 + $0x18] sm:$0xff] %v501
        %524 = vst [vmem:[#allocation2 + $0x20] sm:$0xff] %v502
        %525 = vst [vmem:[#allocation2 + $0x28] sm:$0xff] %v503
        %526 = vst [vmem:[#allocation2 + $0x30] sm:$0xff] %v504
        %527 = vst [vmem:[#allocation2 + $0x38] sm:$0xff] %v505
        %530 = vrot.lane.b32.xlu0 %v516, 127
        %v531 = vpop.permute.xlu0 %530
        %532 = vrot.lane.b32.xlu0 %v499, 127
        %v533 = vpop.permute.xlu0 %532
        %534 = vrot.lane.b32.xlu0 %v500, 127
        %v535 = vpop.permute.xlu0 %534
        %536 = vrot.lane.b32.xlu0 %v501, 127
        %v537 = vpop.permute.xlu0 %536
        %538 = vrot.lane.b32.xlu0 %v502, 127
        %v539 = vpop.permute.xlu0 %538
        %540 = vrot.lane.b32.xlu0 %v503, 127
        %v541 = vpop.permute.xlu0 %540
        %542 = vrot.lane.b32.xlu0 %v504, 127
        %v543 = vpop.permute.xlu0 %542
        %544 = vrot.lane.b32.xlu0 %v505, 127
        %v545 = vpop.permute.xlu0 %544
        %546 = vrot.lane.b32.xlu0 %v519, 127
        %v547 = vpop.permute.xlu0 %546
        %vm548 = vcmask 1039360
        %v549 = vsel %vm548, %v531, %v533
        %v550 = vsel %vm548, %v533, %v535
        %v551 = vsel %vm548, %v535, %v537
        %v552 = vsel %vm548, %v537, %v539
        %v553 = vsel %vm548, %v539, %v541
        %v554 = vsel %vm548, %v541, %v543
        %v555 = vsel %vm548, %v543, %v545
        %v556 = vsel %vm548, %v545, %v547
        %565 = vst [vmem:[#allocation2 + $0x40] sm:$0xff] %v549
        %566 = vst [vmem:[#allocation2 + $0x48] sm:$0xff] %v550
        %567 = vst [vmem:[#allocation2 + $0x50] sm:$0xff] %v551
        %568 = vst [vmem:[#allocation2 + $0x58] sm:$0xff] %v552
        %569 = vst [vmem:[#allocation2 + $0x60] sm:$0xff] %v553
        %570 = vst [vmem:[#allocation2 + $0x68] sm:$0xff] %v554
        %571 = vst [vmem:[#allocation2 + $0x70] sm:$0xff] %v555
        %572 = vst [vmem:[#allocation2 + $0x78] sm:$0xff] %v556
        %573 = vrot.lane.b32.xlu0 %v516, 126
        %v574 = vpop.permute.xlu0 %573
        %575 = vrot.lane.b32.xlu0 %v499, 126
        %v576 = vpop.permute.xlu0 %575
        %577 = vrot.lane.b32.xlu0 %v500, 126
        %v578 = vpop.permute.xlu0 %577
        %579 = vrot.lane.b32.xlu0 %v501, 126
        %v580 = vpop.permute.xlu0 %579
        %581 = vrot.lane.b32.xlu0 %v502, 126
        %v582 = vpop.permute.xlu0 %581
        %583 = vrot.lane.b32.xlu0 %v503, 126
        %v584 = vpop.permute.xlu0 %583
        %585 = vrot.lane.b32.xlu0 %v504, 126
        %v586 = vpop.permute.xlu0 %585
        %587 = vrot.lane.b32.xlu0 %v505, 126
        %v588 = vpop.permute.xlu0 %587
        %589 = vrot.lane.b32.xlu0 %v519, 126
        %v590 = vpop.permute.xlu0 %589
        %vm591 = vcmask 1031168
        %v592 = vsel %vm591, %v574, %v576
        %v593 = vsel %vm591, %v576, %v578
        %v594 = vsel %vm591, %v578, %v580
        %v595 = vsel %vm591, %v580, %v582
        %v596 = vsel %vm591, %v582, %v584
        %v597 = vsel %vm591, %v584, %v586
        %v598 = vsel %vm591, %v586, %v588
        %v599 = vsel %vm591, %v588, %v590
        %608 = vst [vmem:[#allocation2 + $0x80] sm:$0xff] %v592
        %609 = vst [vmem:[#allocation2 + $0x88] sm:$0xff] %v593
        %610 = vst [vmem:[#allocation2 + $0x90] sm:$0xff] %v594
        %611 = vst [vmem:[#allocation2 + $0x98] sm:$0xff] %v595
        %612 = vst [vmem:[#allocation2 + $0xa0] sm:$0xff] %v596
        %613 = vst [vmem:[#allocation2 + $0xa8] sm:$0xff] %v597
        %614 = vst [vmem:[#allocation2 + $0xb0] sm:$0xff] %v598
        %615 = vst [vmem:[#allocation2 + $0xb8] sm:$0xff] %v599
        %616 = vrot.lane.b32.xlu0 %v516, 118
        %v617 = vpop.permute.xlu0 %616
        %618 = vrot.lane.b32.xlu0 %v499, 118
        %v619 = vpop.permute.xlu0 %618
        %620 = vrot.lane.b32.xlu0 %v500, 118
        %v621 = vpop.permute.xlu0 %620
        %622 = vrot.lane.b32.xlu0 %v501, 118
        %v623 = vpop.permute.xlu0 %622
        %624 = vrot.lane.b32.xlu0 %v502, 118
        %v625 = vpop.permute.xlu0 %624
        %626 = vrot.lane.b32.xlu0 %v503, 118
        %v627 = vpop.permute.xlu0 %626
        %628 = vrot.lane.b32.xlu0 %v504, 118
        %v629 = vpop.permute.xlu0 %628
        %630 = vrot.lane.b32.xlu0 %v505, 118
        %v631 = vpop.permute.xlu0 %630
        %632 = vrot.lane.b32.xlu0 %v519, 118
        %v633 = vpop.permute.xlu0 %632
        %vm634 = vcmask 965632
        %v635 = vsel %vm634, %v617, %v619
        %v636 = vsel %vm634, %v619, %v621
        %v637 = vsel %vm634, %v621, %v623
        %v638 = vsel %vm634, %v623, %v625
        %v639 = vsel %vm634, %v625, %v627
        %v640 = vsel %vm634, %v627, %v629
        %v641 = vsel %vm634, %v629, %v631
        %v642 = vsel %vm634, %v631, %v633
        %651 = vst [vmem:[#allocation2 + $0xc0] sm:$0xff] %v635
        %652 = vst [vmem:[#allocation2 + $0xc8] sm:$0xff] %v636
        %653 = vst [vmem:[#allocation2 + $0xd0] sm:$0xff] %v637
        %654 = vst [vmem:[#allocation2 + $0xd8] sm:$0xff] %v638
        %655 = vst [vmem:[#allocation2 + $0xe0] sm:$0xff] %v639
        %656 = vst [vmem:[#allocation2 + $0xe8] sm:$0xff] %v640
        %657 = vst [vmem:[#allocation2 + $0xf0] sm:$0xff] %v641
        %658 = vst [vmem:[#allocation2 + $0xf8] sm:$0xff] %v642
        %659 = vrot.lane.b32.xlu0 %v516, 117
        %v660 = vpop.permute.xlu0 %659
        %661 = vrot.lane.b32.xlu0 %v499, 117
        %v662 = vpop.permute.xlu0 %661
        %663 = vrot.lane.b32.xlu0 %v500, 117
        %v664 = vpop.permute.xlu0 %663
        %665 = vrot.lane.b32.xlu0 %v501, 117
        %v666 = vpop.permute.xlu0 %665
        %667 = vrot.lane.b32.xlu0 %v502, 117
        %v668 = vpop.permute.xlu0 %667
        %669 = vrot.lane.b32.xlu0 %v503, 117
        %v670 = vpop.permute.xlu0 %669
        %671 = vrot.lane.b32.xlu0 %v504, 117
        %v672 = vpop.permute.xlu0 %671
        %673 = vrot.lane.b32.xlu0 %v505, 117
        %v674 = vpop.permute.xlu0 %673
        %675 = vrot.lane.b32.xlu0 %v519, 117
        %v676 = vpop.permute.xlu0 %675
        %vm677 = vcmask 957440
        %v678 = vsel %vm677, %v660, %v662
        %v679 = vsel %vm677, %v662, %v664
        %v680 = vsel %vm677, %v664, %v666
        %v681 = vsel %vm677, %v666, %v668
        %v682 = vsel %vm677, %v668, %v670
        %v683 = vsel %vm677, %v670, %v672
        %v684 = vsel %vm677, %v672, %v674
        %v685 = vsel %vm677, %v674, %v676
        %694 = vst [vmem:[#allocation2 + $0x100] sm:$0xff] %v678
        %695 = vst [vmem:[#allocation2 + $0x108] sm:$0xff] %v679
        %696 = vst [vmem:[#allocation2 + $0x110] sm:$0xff] %v680
        %697 = vst [vmem:[#allocation2 + $0x118] sm:$0xff] %v681
        %698 = vst [vmem:[#allocation2 + $0x120] sm:$0xff] %v682
        %699 = vst [vmem:[#allocation2 + $0x128] sm:$0xff] %v683
        %700 = vst [vmem:[#allocation2 + $0x130] sm:$0xff] %v684
        %701 = vst [vmem:[#allocation2 + $0x138] sm:$0xff] %v685
        %702 = vrot.lane.b32.xlu0 %v516, 116
        %v703 = vpop.permute.xlu0 %702
        %704 = vrot.lane.b32.xlu0 %v499, 116
        %v705 = vpop.permute.xlu0 %704
        %706 = vrot.lane.b32.xlu0 %v500, 116
        %v707 = vpop.permute.xlu0 %706
        %708 = vrot.lane.b32.xlu0 %v501, 116
        %v709 = vpop.permute.xlu0 %708
        %710 = vrot.lane.b32.xlu0 %v502, 116
        %v711 = vpop.permute.xlu0 %710
        %712 = vrot.lane.b32.xlu0 %v503, 116
        %v713 = vpop.permute.xlu0 %712
        %714 = vrot.lane.b32.xlu0 %v504, 116
        %v715 = vpop.permute.xlu0 %714
        %716 = vrot.lane.b32.xlu0 %v505, 116
        %v717 = vpop.permute.xlu0 %716
        %718 = vrot.lane.b32.xlu0 %v519, 116
        %v719 = vpop.permute.xlu0 %718
        %vm720 = vcmask 949248
        %v721 = vsel %vm720, %v703, %v705
        %v722 = vsel %vm720, %v705, %v707
        %v723 = vsel %vm720, %v707, %v709
        %v724 = vsel %vm720, %v709, %v711
        %v725 = vsel %vm720, %v711, %v713
        %v726 = vsel %vm720, %v713, %v715
        %v727 = vsel %vm720, %v715, %v717
        %v728 = vsel %vm720, %v717, %v719
        %737 = vst [vmem:[#allocation2 + $0x140] sm:$0xff] %v721
        %738 = vst [vmem:[#allocation2 + $0x148] sm:$0xff] %v722
        %739 = vst [vmem:[#allocation2 + $0x150] sm:$0xff] %v723
        %740 = vst [vmem:[#allocation2 + $0x158] sm:$0xff] %v724
        %741 = vst [vmem:[#allocation2 + $0x160] sm:$0xff] %v725
        %742 = vst [vmem:[#allocation2 + $0x168] sm:$0xff] %v726
        %743 = vst [vmem:[#allocation2 + $0x170] sm:$0xff] %v727
        %744 = vst [vmem:[#allocation2 + $0x178] sm:$0xff] %v728
        %745 = vrot.lane.b32.xlu0 %v516, 108
        %v746 = vpop.permute.xlu0 %745
        %747 = vrot.lane.b32.xlu0 %v499, 108
        %v748 = vpop.permute.xlu0 %747
        %749 = vrot.lane.b32.xlu0 %v500, 108
        %v750 = vpop.permute.xlu0 %749
        %751 = vrot.lane.b32.xlu0 %v501, 108
        %v752 = vpop.permute.xlu0 %751
        %753 = vrot.lane.b32.xlu0 %v502, 108
        %v754 = vpop.permute.xlu0 %753
        %755 = vrot.lane.b32.xlu0 %v503, 108
        %v756 = vpop.permute.xlu0 %755
        %757 = vrot.lane.b32.xlu0 %v504, 108
        %v758 = vpop.permute.xlu0 %757
        %759 = vrot.lane.b32.xlu0 %v505, 108
        %v760 = vpop.permute.xlu0 %759
        %761 = vrot.lane.b32.xlu0 %v519, 108
        %v762 = vpop.permute.xlu0 %761
        %vm763 = vcmask 883712
        %v764 = vsel %vm763, %v746, %v748
        %v765 = vsel %vm763, %v748, %v750
        %v766 = vsel %vm763, %v750, %v752
        %v767 = vsel %vm763, %v752, %v754
        %v768 = vsel %vm763, %v754, %v756
        %v769 = vsel %vm763, %v756, %v758
        %v770 = vsel %vm763, %v758, %v760
        %v771 = vsel %vm763, %v760, %v762
        %780 = vst [vmem:[#allocation2 + $0x180] sm:$0xff] %v764
        %781 = vst [vmem:[#allocation2 + $0x188] sm:$0xff] %v765
        %782 = vst [vmem:[#allocation2 + $0x190] sm:$0xff] %v766
        %783 = vst [vmem:[#allocation2 + $0x198] sm:$0xff] %v767
        %784 = vst [vmem:[#allocation2 + $0x1a0] sm:$0xff] %v768
        %785 = vst [vmem:[#allocation2 + $0x1a8] sm:$0xff] %v769
        %786 = vst [vmem:[#allocation2 + $0x1b0] sm:$0xff] %v770
        %787 = vst [vmem:[#allocation2 + $0x1b8] sm:$0xff] %v771
        %788 = vrot.lane.b32.xlu0 %v516, 107
        %v789 = vpop.permute.xlu0 %788
        %790 = vrot.lane.b32.xlu0 %v499, 107
        %v791 = vpop.permute.xlu0 %790
        %792 = vrot.lane.b32.xlu0 %v500, 107
        %v793 = vpop.permute.xlu0 %792
        %794 = vrot.lane.b32.xlu0 %v501, 107
        %v795 = vpop.permute.xlu0 %794
        %796 = vrot.lane.b32.xlu0 %v502, 107
        %v797 = vpop.permute.xlu0 %796
        %798 = vrot.lane.b32.xlu0 %v503, 107
        %v799 = vpop.permute.xlu0 %798
        %800 = vrot.lane.b32.xlu0 %v504, 107
        %v801 = vpop.permute.xlu0 %800
        %802 = vrot.lane.b32.xlu0 %v505, 107
        %v803 = vpop.permute.xlu0 %802
        %804 = vrot.lane.b32.xlu0 %v519, 107
        %v805 = vpop.permute.xlu0 %804
        %vm806 = vcmask 875520
        %v807 = vsel %vm806, %v789, %v791
        %v808 = vsel %vm806, %v791, %v793
        %v809 = vsel %vm806, %v793, %v795
        %v810 = vsel %vm806, %v795, %v797
        %v811 = vsel %vm806, %v797, %v799
        %v812 = vsel %vm806, %v799, %v801
        %v813 = vsel %vm806, %v801, %v803
        %v814 = vsel %vm806, %v803, %v805
        %823 = vst [vmem:[#allocation2 + $0x1c0] sm:$0xff] %v807
        %824 = vst [vmem:[#allocation2 + $0x1c8] sm:$0xff] %v808
        %825 = vst [vmem:[#allocation2 + $0x1d0] sm:$0xff] %v809
        %826 = vst [vmem:[#allocation2 + $0x1d8] sm:$0xff] %v810
        %827 = vst [vmem:[#allocation2 + $0x1e0] sm:$0xff] %v811
        %828 = vst [vmem:[#allocation2 + $0x1e8] sm:$0xff] %v812
        %829 = vst [vmem:[#allocation2 + $0x1f0] sm:$0xff] %v813
        %830 = vst [vmem:[#allocation2 + $0x1f8] sm:$0xff] %v814
        %831 = vrot.lane.b32.xlu0 %v516, 106
        %v832 = vpop.permute.xlu0 %831
        %833 = vrot.lane.b32.xlu0 %v499, 106
        %v834 = vpop.permute.xlu0 %833
        %835 = vrot.lane.b32.xlu0 %v500, 106
        %v836 = vpop.permute.xlu0 %835
        %837 = vrot.lane.b32.xlu0 %v501, 106
        %v838 = vpop.permute.xlu0 %837
        %839 = vrot.lane.b32.xlu0 %v502, 106
        %v840 = vpop.permute.xlu0 %839
        %841 = vrot.lane.b32.xlu0 %v503, 106
        %v842 = vpop.permute.xlu0 %841
        %843 = vrot.lane.b32.xlu0 %v504, 106
        %v844 = vpop.permute.xlu0 %843
        %845 = vrot.lane.b32.xlu0 %v505, 106
        %v846 = vpop.permute.xlu0 %845
        %847 = vrot.lane.b32.xlu0 %v519, 106
        %v848 = vpop.permute.xlu0 %847
        %vm849 = vcmask 867328
        %v850 = vsel %vm849, %v832, %v834
        %v851 = vsel %vm849, %v834, %v836
        %v852 = vsel %vm849, %v836, %v838
        %v853 = vsel %vm849, %v838, %v840
        %v854 = vsel %vm849, %v840, %v842
        %v855 = vsel %vm849, %v842, %v844
        %v856 = vsel %vm849, %v844, %v846
        %v857 = vsel %vm849, %v846, %v848
        %866 = vst [vmem:[#allocation2 + $0x200] sm:$0xff] %v850
        %867 = vst [vmem:[#allocation2 + $0x208] sm:$0xff] %v851
        %868 = vst [vmem:[#allocation2 + $0x210] sm:$0xff] %v852
        %869 = vst [vmem:[#allocation2 + $0x218] sm:$0xff] %v853
        %870 = vst [vmem:[#allocation2 + $0x220] sm:$0xff] %v854
        %871 = vst [vmem:[#allocation2 + $0x228] sm:$0xff] %v855
        %872 = vst [vmem:[#allocation2 + $0x230] sm:$0xff] %v856
        %873 = vst [vmem:[#allocation2 + $0x238] sm:$0xff] %v857
        %874 = vrot.lane.b32.xlu0 %v516, 28
        %v875 = vpop.permute.xlu0 %874
        %876 = vrot.lane.b32.xlu0 %v499, 28
        %v877 = vpop.permute.xlu0 %876
        %878 = vrot.lane.b32.xlu0 %v500, 28
        %v879 = vpop.permute.xlu0 %878
        %880 = vrot.lane.b32.xlu0 %v501, 28
        %v881 = vpop.permute.xlu0 %880
        %882 = vrot.lane.b32.xlu0 %v502, 28
        %v883 = vpop.permute.xlu0 %882
        %884 = vrot.lane.b32.xlu0 %v503, 28
        %v885 = vpop.permute.xlu0 %884
        %886 = vrot.lane.b32.xlu0 %v504, 28
        %v887 = vpop.permute.xlu0 %886
        %888 = vrot.lane.b32.xlu0 %v505, 28
        %v889 = vpop.permute.xlu0 %888
        %890 = vrot.lane.b32.xlu0 %v519, 28
        %v891 = vpop.permute.xlu0 %890
        %vm892 = vcmask 228352
        %v893 = vsel %vm892, %v875, %v877
        %v894 = vsel %vm892, %v877, %v879
        %v895 = vsel %vm892, %v879, %v881
        %v896 = vsel %vm892, %v881, %v883
        %v897 = vsel %vm892, %v883, %v885
        %v898 = vsel %vm892, %v885, %v887
        %v899 = vsel %vm892, %v887, %v889
        %v900 = vsel %vm892, %v889, %v891
        %909 = vst [vmem:[#allocation2 + $0x240] sm:$0xff] %v893
        %910 = vst [vmem:[#allocation2 + $0x248] sm:$0xff] %v894
        %911 = vst [vmem:[#allocation2 + $0x250] sm:$0xff] %v895
        %912 = vst [vmem:[#allocation2 + $0x258] sm:$0xff] %v896
        %913 = vst [vmem:[#allocation2 + $0x260] sm:$0xff] %v897
        %914 = vst [vmem:[#allocation2 + $0x268] sm:$0xff] %v898
        %915 = vst [vmem:[#allocation2 + $0x270] sm:$0xff] %v899
        %916 = vst [vmem:[#allocation2 + $0x278] sm:$0xff] %v900
        %917 = vrot.lane.b32.xlu0 %v516, 27
        %v918 = vpop.permute.xlu0 %917
        %919 = vrot.lane.b32.xlu0 %v499, 27
        %v920 = vpop.permute.xlu0 %919
        %921 = vrot.lane.b32.xlu0 %v500, 27
        %v922 = vpop.permute.xlu0 %921
        %923 = vrot.lane.b32.xlu0 %v501, 27
        %v924 = vpop.permute.xlu0 %923
        %925 = vrot.lane.b32.xlu0 %v502, 27
        %v926 = vpop.permute.xlu0 %925
        %927 = vrot.lane.b32.xlu0 %v503, 27
        %v928 = vpop.permute.xlu0 %927
        %929 = vrot.lane.b32.xlu0 %v504, 27
        %v930 = vpop.permute.xlu0 %929
        %931 = vrot.lane.b32.xlu0 %v505, 27
        %v932 = vpop.permute.xlu0 %931
        %933 = vrot.lane.b32.xlu0 %v519, 27
        %v934 = vpop.permute.xlu0 %933
        %vm935 = vcmask 220160
        %v936 = vsel %vm935, %v918, %v920
        %v937 = vsel %vm935, %v920, %v922
        %v938 = vsel %vm935, %v922, %v924
        %v939 = vsel %vm935, %v924, %v926
        %v940 = vsel %vm935, %v926, %v928
        %v941 = vsel %vm935, %v928, %v930
        %v942 = vsel %vm935, %v930, %v932
        %v943 = vsel %vm935, %v932, %v934
        %952 = vst [vmem:[#allocation2 + $0x280] sm:$0xff] %v936
        %953 = vst [vmem:[#allocation2 + $0x288] sm:$0xff] %v937
        %954 = vst [vmem:[#allocation2 + $0x290] sm:$0xff] %v938
        %955 = vst [vmem:[#allocation2 + $0x298] sm:$0xff] %v939
        %956 = vst [vmem:[#allocation2 + $0x2a0] sm:$0xff] %v940
        %957 = vst [vmem:[#allocation2 + $0x2a8] sm:$0xff] %v941
        %958 = vst [vmem:[#allocation2 + $0x2b0] sm:$0xff] %v942
        %959 = vst [vmem:[#allocation2 + $0x2b8] sm:$0xff] %v943
        %960 = vrot.lane.b32.xlu0 %v516, 26
        %v961 = vpop.permute.xlu0 %960
        %962 = vrot.lane.b32.xlu0 %v499, 26
        %v963 = vpop.permute.xlu0 %962
        %964 = vrot.lane.b32.xlu0 %v500, 26
        %v965 = vpop.permute.xlu0 %964
        %966 = vrot.lane.b32.xlu0 %v501, 26
        %v967 = vpop.permute.xlu0 %966
        %968 = vrot.lane.b32.xlu0 %v502, 26
        %v969 = vpop.permute.xlu0 %968
        %970 = vrot.lane.b32.xlu0 %v503, 26
        %v971 = vpop.permute.xlu0 %970
        %972 = vrot.lane.b32.xlu0 %v504, 26
        %v973 = vpop.permute.xlu0 %972
        %974 = vrot.lane.b32.xlu0 %v505, 26
        %v975 = vpop.permute.xlu0 %974
        %976 = vrot.lane.b32.xlu0 %v519, 26
        %v977 = vpop.permute.xlu0 %976
        %vm978 = vcmask 211968
        %v979 = vsel %vm978, %v961, %v963
        %v980 = vsel %vm978, %v963, %v965
        %v981 = vsel %vm978, %v965, %v967
        %v982 = vsel %vm978, %v967, %v969
        %v983 = vsel %vm978, %v969, %v971
        %v984 = vsel %vm978, %v971, %v973
        %v985 = vsel %vm978, %v973, %v975
        %v986 = vsel %vm978, %v975, %v977
        %995 = vst [vmem:[#allocation2 + $0x2c0] sm:$0xff] %v979
        %996 = vst [vmem:[#allocation2 + $0x2c8] sm:$0xff] %v980
        %997 = vst [vmem:[#allocation2 + $0x2d0] sm:$0xff] %v981
        %998 = vst [vmem:[#allocation2 + $0x2d8] sm:$0xff] %v982
        %999 = vst [vmem:[#allocation2 + $0x2e0] sm:$0xff] %v983
        %1000 = vst [vmem:[#allocation2 + $0x2e8] sm:$0xff] %v984
        %1001 = vst [vmem:[#allocation2 + $0x2f0] sm:$0xff] %v985
        %1002 = vst [vmem:[#allocation2 + $0x2f8] sm:$0xff] %v986
        %1003 = vrot.lane.b32.xlu0 %v516, 18
        %v1004 = vpop.permute.xlu0 %1003
        %1005 = vrot.lane.b32.xlu0 %v499, 18
        %v1006 = vpop.permute.xlu0 %1005
        %1007 = vrot.lane.b32.xlu0 %v500, 18
        %v1008 = vpop.permute.xlu0 %1007
        %1009 = vrot.lane.b32.xlu0 %v501, 18
        %v1010 = vpop.permute.xlu0 %1009
        %1011 = vrot.lane.b32.xlu0 %v502, 18
        %v1012 = vpop.permute.xlu0 %1011
        %1013 = vrot.lane.b32.xlu0 %v503, 18
        %v1014 = vpop.permute.xlu0 %1013
        %1015 = vrot.lane.b32.xlu0 %v504, 18
        %v1016 = vpop.permute.xlu0 %1015
        %1017 = vrot.lane.b32.xlu0 %v505, 18
        %v1018 = vpop.permute.xlu0 %1017
        %1019 = vrot.lane.b32.xlu0 %v519, 18
        %v1020 = vpop.permute.xlu0 %1019
        %vm1021 = vcmask 146432
        %v1022 = vsel %vm1021, %v1004, %v1006
        %v1023 = vsel %vm1021, %v1006, %v1008
        %v1024 = vsel %vm1021, %v1008, %v1010
        %v1025 = vsel %vm1021, %v1010, %v1012
        %v1026 = vsel %vm1021, %v1012, %v1014
        %v1027 = vsel %vm1021, %v1014, %v1016
        %v1028 = vsel %vm1021, %v1016, %v1018
        %v1029 = vsel %vm1021, %v1018, %v1020
        %1038 = vst [vmem:[#allocation2 + $0x300] sm:$0xff] %v1022
        %1039 = vst [vmem:[#allocation2 + $0x308] sm:$0xff] %v1023
        %1040 = vst [vmem:[#allocation2 + $0x310] sm:$0xff] %v1024
        %1041 = vst [vmem:[#allocation2 + $0x318] sm:$0xff] %v1025
        %1042 = vst [vmem:[#allocation2 + $0x320] sm:$0xff] %v1026
        %1043 = vst [vmem:[#allocation2 + $0x328] sm:$0xff] %v1027
        %1044 = vst [vmem:[#allocation2 + $0x330] sm:$0xff] %v1028
        %1045 = vst [vmem:[#allocation2 + $0x338] sm:$0xff] %v1029
        %1046 = vrot.lane.b32.xlu0 %v516, 17
        %v1047 = vpop.permute.xlu0 %1046
        %1048 = vrot.lane.b32.xlu0 %v499, 17
        %v1049 = vpop.permute.xlu0 %1048
        %1050 = vrot.lane.b32.xlu0 %v500, 17
        %v1051 = vpop.permute.xlu0 %1050
        %1052 = vrot.lane.b32.xlu0 %v501, 17
        %v1053 = vpop.permute.xlu0 %1052
        %1054 = vrot.lane.b32.xlu0 %v502, 17
        %v1055 = vpop.permute.xlu0 %1054
        %1056 = vrot.lane.b32.xlu0 %v503, 17
        %v1057 = vpop.permute.xlu0 %1056
        %1058 = vrot.lane.b32.xlu0 %v504, 17
        %v1059 = vpop.permute.xlu0 %1058
        %1060 = vrot.lane.b32.xlu0 %v505, 17
        %v1061 = vpop.permute.xlu0 %1060
        %1062 = vrot.lane.b32.xlu0 %v519, 17
        %v1063 = vpop.permute.xlu0 %1062
        %vm1064 = vcmask 138240
        %v1065 = vsel %vm1064, %v1047, %v1049
        %v1066 = vsel %vm1064, %v1049, %v1051
        %v1067 = vsel %vm1064, %v1051, %v1053
        %v1068 = vsel %vm1064, %v1053, %v1055
        %v1069 = vsel %vm1064, %v1055, %v1057
        %v1070 = vsel %vm1064, %v1057, %v1059
        %v1071 = vsel %vm1064, %v1059, %v1061
        %v1072 = vsel %vm1064, %v1061, %v1063
        %1081 = vst [vmem:[#allocation2 + $0x340] sm:$0xff] %v1065
        %1082 = vst [vmem:[#allocation2 + $0x348] sm:$0xff] %v1066
        %1083 = vst [vmem:[#allocation2 + $0x350] sm:$0xff] %v1067
        %1084 = vst [vmem:[#allocation2 + $0x358] sm:$0xff] %v1068
        %1085 = vst [vmem:[#allocation2 + $0x360] sm:$0xff] %v1069
        %1086 = vst [vmem:[#allocation2 + $0x368] sm:$0xff] %v1070
        %1087 = vst [vmem:[#allocation2 + $0x370] sm:$0xff] %v1071
        %1088 = vst [vmem:[#allocation2 + $0x378] sm:$0xff] %v1072
        %1089 = vrot.lane.b32.xlu0 %v516, 16
        %v1090 = vpop.permute.xlu0 %1089
        %1091 = vrot.lane.b32.xlu0 %v499, 16
        %v1092 = vpop.permute.xlu0 %1091
        %1093 = vrot.lane.b32.xlu0 %v500, 16
        %v1094 = vpop.permute.xlu0 %1093
        %1095 = vrot.lane.b32.xlu0 %v501, 16
        %v1096 = vpop.permute.xlu0 %1095
        %1097 = vrot.lane.b32.xlu0 %v502, 16
        %v1098 = vpop.permute.xlu0 %1097
        %1099 = vrot.lane.b32.xlu0 %v503, 16
        %v1100 = vpop.permute.xlu0 %1099
        %1101 = vrot.lane.b32.xlu0 %v504, 16
        %v1102 = vpop.permute.xlu0 %1101
        %1103 = vrot.lane.b32.xlu0 %v505, 16
        %v1104 = vpop.permute.xlu0 %1103
        %1105 = vrot.lane.b32.xlu0 %v519, 16
        %v1106 = vpop.permute.xlu0 %1105
        %vm1107 = vcmask 130048
        %v1108 = vsel %vm1107, %v1090, %v1092
        %v1109 = vsel %vm1107, %v1092, %v1094
        %v1110 = vsel %vm1107, %v1094, %v1096
        %v1111 = vsel %vm1107, %v1096, %v1098
        %v1112 = vsel %vm1107, %v1098, %v1100
        %v1113 = vsel %vm1107, %v1100, %v1102
        %v1114 = vsel %vm1107, %v1102, %v1104
        %v1115 = vsel %vm1107, %v1104, %v1106
        %1124 = vst [vmem:[#allocation2 + $0x380] sm:$0xff] %v1108
        %1125 = vst [vmem:[#allocation2 + $0x388] sm:$0xff] %v1109
        %1126 = vst [vmem:[#allocation2 + $0x390] sm:$0xff] %v1110
        %1127 = vst [vmem:[#allocation2 + $0x398] sm:$0xff] %v1111
        %1128 = vst [vmem:[#allocation2 + $0x3a0] sm:$0xff] %v1112
        %1129 = vst [vmem:[#allocation2 + $0x3a8] sm:$0xff] %v1113
        %1130 = vst [vmem:[#allocation2 + $0x3b0] sm:$0xff] %v1114
        %1131 = vst [vmem:[#allocation2 + $0x3b8] sm:$0xff] %v1115
        %1132 = vrot.lane.b32.xlu0 %v516, 8
        %v1133 = vpop.permute.xlu0 %1132
        %1134 = vrot.lane.b32.xlu0 %v499, 8
        %v1135 = vpop.permute.xlu0 %1134
        %1136 = vrot.lane.b32.xlu0 %v500, 8
        %v1137 = vpop.permute.xlu0 %1136
        %1138 = vrot.lane.b32.xlu0 %v501, 8
        %v1139 = vpop.permute.xlu0 %1138
        %1140 = vrot.lane.b32.xlu0 %v502, 8
        %v1141 = vpop.permute.xlu0 %1140
        %1142 = vrot.lane.b32.xlu0 %v503, 8
        %v1143 = vpop.permute.xlu0 %1142
        %1144 = vrot.lane.b32.xlu0 %v504, 8
        %v1145 = vpop.permute.xlu0 %1144
        %1146 = vrot.lane.b32.xlu0 %v505, 8
        %v1147 = vpop.permute.xlu0 %1146
        %1148 = vrot.lane.b32.xlu0 %v519, 8
        %v1149 = vpop.permute.xlu0 %1148
        %vm1150 = vcmask 64512
        %v1151 = vsel %vm1150, %v1133, %v1135
        %v1152 = vsel %vm1150, %v1135, %v1137
        %v1153 = vsel %vm1150, %v1137, %v1139
        %v1154 = vsel %vm1150, %v1139, %v1141
        %v1155 = vsel %vm1150, %v1141, %v1143
        %v1156 = vsel %vm1150, %v1143, %v1145
        %v1157 = vsel %vm1150, %v1145, %v1147
        %v1158 = vsel %vm1150, %v1147, %v1149
        %1167 = vst [vmem:[#allocation2 + $0x3c0] sm:$0xff] %v1151
        %1168 = vst [vmem:[#allocation2 + $0x3c8] sm:$0xff] %v1152
        %1169 = vst [vmem:[#allocation2 + $0x3d0] sm:$0xff] %v1153
        %1170 = vst [vmem:[#allocation2 + $0x3d8] sm:$0xff] %v1154
        %1171 = vst [vmem:[#allocation2 + $0x3e0] sm:$0xff] %v1155
        %1172 = vst [vmem:[#allocation2 + $0x3e8] sm:$0xff] %v1156
        %1173 = vst [vmem:[#allocation2 + $0x3f0] sm:$0xff] %v1157
        %1174 = vst [vmem:[#allocation2 + $0x3f8] sm:$0xff] %v1158
        %1175 = vrot.lane.b32.xlu0 %v516, 7
        %v1176 = vpop.permute.xlu0 %1175
        %1177 = vrot.lane.b32.xlu0 %v499, 7
        %v1178 = vpop.permute.xlu0 %1177
        %1179 = vrot.lane.b32.xlu0 %v500, 7
        %v1180 = vpop.permute.xlu0 %1179
        %1181 = vrot.lane.b32.xlu0 %v501, 7
        %v1182 = vpop.permute.xlu0 %1181
        %1183 = vrot.lane.b32.xlu0 %v502, 7
        %v1184 = vpop.permute.xlu0 %1183
        %1185 = vrot.lane.b32.xlu0 %v503, 7
        %v1186 = vpop.permute.xlu0 %1185
        %1187 = vrot.lane.b32.xlu0 %v504, 7
        %v1188 = vpop.permute.xlu0 %1187
        %1189 = vrot.lane.b32.xlu0 %v505, 7
        %v1190 = vpop.permute.xlu0 %1189
        %1191 = vrot.lane.b32.xlu0 %v519, 7
        %v1192 = vpop.permute.xlu0 %1191
        %vm1193 = vcmask 56320
        %v1194 = vsel %vm1193, %v1176, %v1178
        %v1195 = vsel %vm1193, %v1178, %v1180
        %v1196 = vsel %vm1193, %v1180, %v1182
        %v1197 = vsel %vm1193, %v1182, %v1184
        %v1198 = vsel %vm1193, %v1184, %v1186
        %v1199 = vsel %vm1193, %v1186, %v1188
        %v1200 = vsel %vm1193, %v1188, %v1190
        %v1201 = vsel %vm1193, %v1190, %v1192
        %1210 = vst [vmem:[#allocation2 + $0x400] sm:$0xff] %v1194
        %1211 = vst [vmem:[#allocation2 + $0x408] sm:$0xff] %v1195
        %1212 = vst [vmem:[#allocation2 + $0x410] sm:$0xff] %v1196
        %1213 = vst [vmem:[#allocation2 + $0x418] sm:$0xff] %v1197
        %1214 = vst [vmem:[#allocation2 + $0x420] sm:$0xff] %v1198
        %1215 = vst [vmem:[#allocation2 + $0x428] sm:$0xff] %v1199
        %1216 = vst [vmem:[#allocation2 + $0x430] sm:$0xff] %v1200
        %1217 = vst [vmem:[#allocation2 + $0x438] sm:$0xff] %v1201
        %1218 = vrot.lane.b32.xlu0 %v516, 6
        %v1219 = vpop.permute.xlu0 %1218
        %1220 = vrot.lane.b32.xlu0 %v499, 6
        %v1221 = vpop.permute.xlu0 %1220
        %1222 = vrot.lane.b32.xlu0 %v500, 6
        %v1223 = vpop.permute.xlu0 %1222
        %1224 = vrot.lane.b32.xlu0 %v501, 6
        %v1225 = vpop.permute.xlu0 %1224
        %1226 = vrot.lane.b32.xlu0 %v502, 6
        %v1227 = vpop.permute.xlu0 %1226
        %1228 = vrot.lane.b32.xlu0 %v503, 6
        %v1229 = vpop.permute.xlu0 %1228
        %1230 = vrot.lane.b32.xlu0 %v504, 6
        %v1231 = vpop.permute.xlu0 %1230
        %1232 = vrot.lane.b32.xlu0 %v505, 6
        %v1233 = vpop.permute.xlu0 %1232
        %1234 = vrot.lane.b32.xlu0 %v519, 6
        %v1235 = vpop.permute.xlu0 %1234
        %vm1236 = vcmask 48128
        %v1237 = vsel %vm1236, %v1219, %v1221
        %v1238 = vsel %vm1236, %v1221, %v1223
        %v1239 = vsel %vm1236, %v1223, %v1225
        %v1240 = vsel %vm1236, %v1225, %v1227
        %v1241 = vsel %vm1236, %v1227, %v1229
        %v1242 = vsel %vm1236, %v1229, %v1231
        %v1243 = vsel %vm1236, %v1231, %v1233
        %v1244 = vsel %vm1236, %v1233, %v1235
        %1253 = vst [vmem:[#allocation2 + $0x440] sm:$0xff] %v1237
        %1254 = vst [vmem:[#allocation2 + $0x448] sm:$0xff] %v1238
        %1255 = vst [vmem:[#allocation2 + $0x450] sm:$0xff] %v1239
        %1256 = vst [vmem:[#allocation2 + $0x458] sm:$0xff] %v1240
        %1257 = vst [vmem:[#allocation2 + $0x460] sm:$0xff] %v1241
        %1258 = vst [vmem:[#allocation2 + $0x468] sm:$0xff] %v1242
        %1259 = vst [vmem:[#allocation2 + $0x470] sm:$0xff] %v1243
        %1260 = vst [vmem:[#allocation2 + $0x478] sm:$0xff] %v1244
        %1262 = vrot.lane.b32.xlu0 %v499, 56
        %v1263 = vpop.permute.xlu0 %1262
        %1264 = vrot.lane.b32.xlu0 %v500, 56
        %v1265 = vpop.permute.xlu0 %1264
        %1266 = vrot.lane.b32.xlu0 %v501, 56
        %v1267 = vpop.permute.xlu0 %1266
        %1268 = vrot.lane.b32.xlu0 %v502, 56
        %v1269 = vpop.permute.xlu0 %1268
        %1270 = vrot.lane.b32.xlu0 %v503, 56
        %v1271 = vpop.permute.xlu0 %1270
        %1272 = vrot.lane.b32.xlu0 %v504, 56
        %v1273 = vpop.permute.xlu0 %1272
        %1274 = vrot.lane.b32.xlu0 %v505, 56
        %v1275 = vpop.permute.xlu0 %1274
        %1276 = vrot.lane.b32.xlu0 %v519, 56
        %v1277 = vpop.permute.xlu0 %1276
        %1278 = vrot.lane.b32.xlu0 0, 56
        %v1279 = vpop.permute.xlu0 %1278
        %vm1280 = vcmask 457728
        %v1281 = vsel %vm1280, %v1263, %v1265
        %v1282 = vsel %vm1280, %v1265, %v1267
        %v1283 = vsel %vm1280, %v1267, %v1269
        %v1284 = vsel %vm1280, %v1269, %v1271
        %v1285 = vsel %vm1280, %v1271, %v1273
        %v1286 = vsel %vm1280, %v1273, %v1275
        %v1287 = vsel %vm1280, %v1275, %v1277
        %v1288 = vsel %vm1280, %v1277, %v1279
        %1297 = vst [vmem:[#allocation2 + $0x480] sm:$0xff] %v1281
        %1298 = vst [vmem:[#allocation2 + $0x488] sm:$0xff] %v1282
        %1299 = vst [vmem:[#allocation2 + $0x490] sm:$0xff] %v1283
        %1300 = vst [vmem:[#allocation2 + $0x498] sm:$0xff] %v1284
        %1301 = vst [vmem:[#allocation2 + $0x4a0] sm:$0xff] %v1285
        %1302 = vst [vmem:[#allocation2 + $0x4a8] sm:$0xff] %v1286
        %1303 = vst [vmem:[#allocation2 + $0x4b0] sm:$0xff] %v1287
        %1304 = vst [vmem:[#allocation2 + $0x4b8] sm:$0xff] %v1288
        %1305 = vrot.lane.b32.xlu0 %v499, 55
        %v1306 = vpop.permute.xlu0 %1305
        %1307 = vrot.lane.b32.xlu0 %v500, 55
        %v1308 = vpop.permute.xlu0 %1307
        %1309 = vrot.lane.b32.xlu0 %v501, 55
        %v1310 = vpop.permute.xlu0 %1309
        %1311 = vrot.lane.b32.xlu0 %v502, 55
        %v1312 = vpop.permute.xlu0 %1311
        %1313 = vrot.lane.b32.xlu0 %v503, 55
        %v1314 = vpop.permute.xlu0 %1313
        %1315 = vrot.lane.b32.xlu0 %v504, 55
        %v1316 = vpop.permute.xlu0 %1315
        %1317 = vrot.lane.b32.xlu0 %v505, 55
        %v1318 = vpop.permute.xlu0 %1317
        %1319 = vrot.lane.b32.xlu0 %v519, 55
        %v1320 = vpop.permute.xlu0 %1319
        %1321 = vrot.lane.b32.xlu0 0, 55
        %v1322 = vpop.permute.xlu0 %1321
        %vm1323 = vcmask 449536
        %v1324 = vsel %vm1323, %v1306, %v1308
        %v1325 = vsel %vm1323, %v1308, %v1310
        %v1326 = vsel %vm1323, %v1310, %v1312
        %v1327 = vsel %vm1323, %v1312, %v1314
        %v1328 = vsel %vm1323, %v1314, %v1316
        %v1329 = vsel %vm1323, %v1316, %v1318
        %v1330 = vsel %vm1323, %v1318, %v1320
        %v1331 = vsel %vm1323, %v1320, %v1322
        %1340 = vst [vmem:[#allocation2 + $0x4c0] sm:$0xff] %v1324
        %1341 = vst [vmem:[#allocation2 + $0x4c8] sm:$0xff] %v1325
        %1342 = vst [vmem:[#allocation2 + $0x4d0] sm:$0xff] %v1326
        %1343 = vst [vmem:[#allocation2 + $0x4d8] sm:$0xff] %v1327
        %1344 = vst [vmem:[#allocation2 + $0x4e0] sm:$0xff] %v1328
        %1345 = vst [vmem:[#allocation2 + $0x4e8] sm:$0xff] %v1329
        %1346 = vst [vmem:[#allocation2 + $0x4f0] sm:$0xff] %v1330
        %1347 = vst [vmem:[#allocation2 + $0x4f8] sm:$0xff] %v1331
        %1348 = vrot.lane.b32.xlu0 %v499, 54
        %v1349 = vpop.permute.xlu0 %1348
        %1350 = vrot.lane.b32.xlu0 %v500, 54
        %v1351 = vpop.permute.xlu0 %1350
        %1352 = vrot.lane.b32.xlu0 %v501, 54
        %v1353 = vpop.permute.xlu0 %1352
        %1354 = vrot.lane.b32.xlu0 %v502, 54
        %v1355 = vpop.permute.xlu0 %1354
        %1356 = vrot.lane.b32.xlu0 %v503, 54
        %v1357 = vpop.permute.xlu0 %1356
        %1358 = vrot.lane.b32.xlu0 %v504, 54
        %v1359 = vpop.permute.xlu0 %1358
        %1360 = vrot.lane.b32.xlu0 %v505, 54
        %v1361 = vpop.permute.xlu0 %1360
        %1362 = vrot.lane.b32.xlu0 %v519, 54
        %v1363 = vpop.permute.xlu0 %1362
        %1364 = vrot.lane.b32.xlu0 0, 54
        %v1365 = vpop.permute.xlu0 %1364
        %vm1366 = vcmask 441344
        %v1367 = vsel %vm1366, %v1349, %v1351
        %v1368 = vsel %vm1366, %v1351, %v1353
        %v1369 = vsel %vm1366, %v1353, %v1355
        %v1370 = vsel %vm1366, %v1355, %v1357
        %v1371 = vsel %vm1366, %v1357, %v1359
        %v1372 = vsel %vm1366, %v1359, %v1361
        %v1373 = vsel %vm1366, %v1361, %v1363
        %v1374 = vsel %vm1366, %v1363, %v1365
        %1383 = vst [vmem:[#allocation2 + $0x500] sm:$0xff] %v1367
        %1384 = vst [vmem:[#allocation2 + $0x508] sm:$0xff] %v1368
        %1385 = vst [vmem:[#allocation2 + $0x510] sm:$0xff] %v1369
        %1386 = vst [vmem:[#allocation2 + $0x518] sm:$0xff] %v1370
        %1387 = vst [vmem:[#allocation2 + $0x520] sm:$0xff] %v1371
        %1388 = vst [vmem:[#allocation2 + $0x528] sm:$0xff] %v1372
        %1389 = vst [vmem:[#allocation2 + $0x530] sm:$0xff] %v1373
        %1390 = vst [vmem:[#allocation2 + $0x538] sm:$0xff] %v1374
        %1391 = vrot.lane.b32.xlu0 %v499, 46
        %v1392 = vpop.permute.xlu0 %1391
        %1393 = vrot.lane.b32.xlu0 %v500, 46
        %v1394 = vpop.permute.xlu0 %1393
        %1395 = vrot.lane.b32.xlu0 %v501, 46
        %v1396 = vpop.permute.xlu0 %1395
        %1397 = vrot.lane.b32.xlu0 %v502, 46
        %v1398 = vpop.permute.xlu0 %1397
        %1399 = vrot.lane.b32.xlu0 %v503, 46
        %v1400 = vpop.permute.xlu0 %1399
        %1401 = vrot.lane.b32.xlu0 %v504, 46
        %v1402 = vpop.permute.xlu0 %1401
        %1403 = vrot.lane.b32.xlu0 %v505, 46
        %v1404 = vpop.permute.xlu0 %1403
        %1405 = vrot.lane.b32.xlu0 %v519, 46
        %v1406 = vpop.permute.xlu0 %1405
        %1407 = vrot.lane.b32.xlu0 0, 46
        %v1408 = vpop.permute.xlu0 %1407
        %vm1409 = vcmask 375808
        %v1410 = vsel %vm1409, %v1392, %v1394
        %v1411 = vsel %vm1409, %v1394, %v1396
        %v1412 = vsel %vm1409, %v1396, %v1398
        %v1413 = vsel %vm1409, %v1398, %v1400
        %v1414 = vsel %vm1409, %v1400, %v1402
        %v1415 = vsel %vm1409, %v1402, %v1404
        %v1416 = vsel %vm1409, %v1404, %v1406
        %v1417 = vsel %vm1409, %v1406, %v1408
        %1426 = vst [vmem:[#allocation2 + $0x540] sm:$0xff] %v1410
        %1427 = vst [vmem:[#allocation2 + $0x548] sm:$0xff] %v1411
        %1428 = vst [vmem:[#allocation2 + $0x550] sm:$0xff] %v1412
        %1429 = vst [vmem:[#allocation2 + $0x558] sm:$0xff] %v1413
        %1430 = vst [vmem:[#allocation2 + $0x560] sm:$0xff] %v1414
        %1431 = vst [vmem:[#allocation2 + $0x568] sm:$0xff] %v1415
        %1432 = vst [vmem:[#allocation2 + $0x570] sm:$0xff] %v1416
        %1433 = vst [vmem:[#allocation2 + $0x578] sm:$0xff] %v1417
        %1434 = vrot.lane.b32.xlu0 %v499, 45
        %v1435 = vpop.permute.xlu0 %1434
        %1436 = vrot.lane.b32.xlu0 %v500, 45
        %v1437 = vpop.permute.xlu0 %1436
        %1438 = vrot.lane.b32.xlu0 %v501, 45
        %v1439 = vpop.permute.xlu0 %1438
        %1440 = vrot.lane.b32.xlu0 %v502, 45
        %v1441 = vpop.permute.xlu0 %1440
        %1442 = vrot.lane.b32.xlu0 %v503, 45
        %v1443 = vpop.permute.xlu0 %1442
        %1444 = vrot.lane.b32.xlu0 %v504, 45
        %v1445 = vpop.permute.xlu0 %1444
        %1446 = vrot.lane.b32.xlu0 %v505, 45
        %v1447 = vpop.permute.xlu0 %1446
        %1448 = vrot.lane.b32.xlu0 %v519, 45
        %v1449 = vpop.permute.xlu0 %1448
        %1450 = vrot.lane.b32.xlu0 0, 45
        %v1451 = vpop.permute.xlu0 %1450
        %vm1452 = vcmask 367616
        %v1453 = vsel %vm1452, %v1435, %v1437
        %v1454 = vsel %vm1452, %v1437, %v1439
        %v1455 = vsel %vm1452, %v1439, %v1441
        %v1456 = vsel %vm1452, %v1441, %v1443
        %v1457 = vsel %vm1452, %v1443, %v1445
        %v1458 = vsel %vm1452, %v1445, %v1447
        %v1459 = vsel %vm1452, %v1447, %v1449
        %v1460 = vsel %vm1452, %v1449, %v1451
        %1469 = vst [vmem:[#allocation2 + $0x580] sm:$0xff] %v1453
        %1470 = vst [vmem:[#allocation2 + $0x588] sm:$0xff] %v1454
        %1471 = vst [vmem:[#allocation2 + $0x590] sm:$0xff] %v1455
        %1472 = vst [vmem:[#allocation2 + $0x598] sm:$0xff] %v1456
        %1473 = vst [vmem:[#allocation2 + $0x5a0] sm:$0xff] %v1457
        %1474 = vst [vmem:[#allocation2 + $0x5a8] sm:$0xff] %v1458
        %1475 = vst [vmem:[#allocation2 + $0x5b0] sm:$0xff] %v1459
        %1476 = vst [vmem:[#allocation2 + $0x5b8] sm:$0xff] %v1460
        %1477 = vrot.lane.b32.xlu0 %v499, 44
        %v1478 = vpop.permute.xlu0 %1477
        %1479 = vrot.lane.b32.xlu0 %v500, 44
        %v1480 = vpop.permute.xlu0 %1479
        %1481 = vrot.lane.b32.xlu0 %v501, 44
        %v1482 = vpop.permute.xlu0 %1481
        %1483 = vrot.lane.b32.xlu0 %v502, 44
        %v1484 = vpop.permute.xlu0 %1483
        %1485 = vrot.lane.b32.xlu0 %v503, 44
        %v1486 = vpop.permute.xlu0 %1485
        %1487 = vrot.lane.b32.xlu0 %v504, 44
        %v1488 = vpop.permute.xlu0 %1487
        %1489 = vrot.lane.b32.xlu0 %v505, 44
        %v1490 = vpop.permute.xlu0 %1489
        %1491 = vrot.lane.b32.xlu0 %v519, 44
        %v1492 = vpop.permute.xlu0 %1491
        %1493 = vrot.lane.b32.xlu0 0, 44
        %v1494 = vpop.permute.xlu0 %1493
        %vm1495 = vcmask 359424
        %v1496 = vsel %vm1495, %v1478, %v1480
        %v1497 = vsel %vm1495, %v1480, %v1482
        %v1498 = vsel %vm1495, %v1482, %v1484
        %v1499 = vsel %vm1495, %v1484, %v1486
        %v1500 = vsel %vm1495, %v1486, %v1488
        %v1501 = vsel %vm1495, %v1488, %v1490
        %v1502 = vsel %vm1495, %v1490, %v1492
        %v1503 = vsel %vm1495, %v1492, %v1494
        %1512 = vst [vmem:[#allocation2 + $0x5c0] sm:$0xff] %v1496
        %1513 = vst [vmem:[#allocation2 + $0x5c8] sm:$0xff] %v1497
        %1514 = vst [vmem:[#allocation2 + $0x5d0] sm:$0xff] %v1498
        %1515 = vst [vmem:[#allocation2 + $0x5d8] sm:$0xff] %v1499
        %1516 = vst [vmem:[#allocation2 + $0x5e0] sm:$0xff] %v1500
        %1517 = vst [vmem:[#allocation2 + $0x5e8] sm:$0xff] %v1501
        %1518 = vst [vmem:[#allocation2 + $0x5f0] sm:$0xff] %v1502
        %1519 = vst [vmem:[#allocation2 + $0x5f8] sm:$0xff] %v1503
        %1520 = vrot.lane.b32.xlu0 %v499, 36
        %v1521 = vpop.permute.xlu0 %1520
        %1522 = vrot.lane.b32.xlu0 %v500, 36
        %v1523 = vpop.permute.xlu0 %1522
        %1524 = vrot.lane.b32.xlu0 %v501, 36
        %v1525 = vpop.permute.xlu0 %1524
        %1526 = vrot.lane.b32.xlu0 %v502, 36
        %v1527 = vpop.permute.xlu0 %1526
        %1528 = vrot.lane.b32.xlu0 %v503, 36
        %v1529 = vpop.permute.xlu0 %1528
        %1530 = vrot.lane.b32.xlu0 %v504, 36
        %v1531 = vpop.permute.xlu0 %1530
        %1532 = vrot.lane.b32.xlu0 %v505, 36
        %v1533 = vpop.permute.xlu0 %1532
        %1534 = vrot.lane.b32.xlu0 %v519, 36
        %v1535 = vpop.permute.xlu0 %1534
        %1536 = vrot.lane.b32.xlu0 0, 36
        %v1537 = vpop.permute.xlu0 %1536
        %vm1538 = vcmask 293888
        %v1539 = vsel %vm1538, %v1521, %v1523
        %v1540 = vsel %vm1538, %v1523, %v1525
        %v1541 = vsel %vm1538, %v1525, %v1527
        %v1542 = vsel %vm1538, %v1527, %v1529
        %v1543 = vsel %vm1538, %v1529, %v1531
        %v1544 = vsel %vm1538, %v1531, %v1533
        %v1545 = vsel %vm1538, %v1533, %v1535
        %v1546 = vsel %vm1538, %v1535, %v1537
        %1555 = vst [vmem:[#allocation2 + $0x600] sm:$0xff] %v1539
        %1556 = vst [vmem:[#allocation2 + $0x608] sm:$0xff] %v1540
        %1557 = vst [vmem:[#allocation2 + $0x610] sm:$0xff] %v1541
        %1558 = vst [vmem:[#allocation2 + $0x618] sm:$0xff] %v1542
        %1559 = vst [vmem:[#allocation2 + $0x620] sm:$0xff] %v1543
        %1560 = vst [vmem:[#allocation2 + $0x628] sm:$0xff] %v1544
        %1561 = vst [vmem:[#allocation2 + $0x630] sm:$0xff] %v1545
        %1562 = vst [vmem:[#allocation2 + $0x638] sm:$0xff] %v1546
        %1563 = vrot.lane.b32.xlu0 %v499, 35
        %v1564 = vpop.permute.xlu0 %1563
        %1565 = vrot.lane.b32.xlu0 %v500, 35
        %v1566 = vpop.permute.xlu0 %1565
        %1567 = vrot.lane.b32.xlu0 %v501, 35
        %v1568 = vpop.permute.xlu0 %1567
        %1569 = vrot.lane.b32.xlu0 %v502, 35
        %v1570 = vpop.permute.xlu0 %1569
        %1571 = vrot.lane.b32.xlu0 %v503, 35
        %v1572 = vpop.permute.xlu0 %1571
        %1573 = vrot.lane.b32.xlu0 %v504, 35
        %v1574 = vpop.permute.xlu0 %1573
        %1575 = vrot.lane.b32.xlu0 %v505, 35
        %v1576 = vpop.permute.xlu0 %1575
        %1577 = vrot.lane.b32.xlu0 %v519, 35
        %v1578 = vpop.permute.xlu0 %1577
        %1579 = vrot.lane.b32.xlu0 0, 35
        %v1580 = vpop.permute.xlu0 %1579
        %vm1581 = vcmask 285696
        %v1582 = vsel %vm1581, %v1564, %v1566
        %v1583 = vsel %vm1581, %v1566, %v1568
        %v1584 = vsel %vm1581, %v1568, %v1570
        %v1585 = vsel %vm1581, %v1570, %v1572
        %v1586 = vsel %vm1581, %v1572, %v1574
        %v1587 = vsel %vm1581, %v1574, %v1576
        %v1588 = vsel %vm1581, %v1576, %v1578
        %v1589 = vsel %vm1581, %v1578, %v1580
        %1598 = vst [vmem:[#allocation2 + $0x640] sm:$0xff] %v1582
        %1599 = vst [vmem:[#allocation2 + $0x648] sm:$0xff] %v1583
        %1600 = vst [vmem:[#allocation2 + $0x650] sm:$0xff] %v1584
        %1601 = vst [vmem:[#allocation2 + $0x658] sm:$0xff] %v1585
        %1602 = vst [vmem:[#allocation2 + $0x660] sm:$0xff] %v1586
        %1603 = vst [vmem:[#allocation2 + $0x668] sm:$0xff] %v1587
        %1604 = vst [vmem:[#allocation2 + $0x670] sm:$0xff] %v1588
        %1605 = vst [vmem:[#allocation2 + $0x678] sm:$0xff] %v1589
        %1606 = vrot.lane.b32.xlu0 %v499, 34
        %v1607 = vpop.permute.xlu0 %1606
        %1608 = vrot.lane.b32.xlu0 %v500, 34
        %v1609 = vpop.permute.xlu0 %1608
        %1610 = vrot.lane.b32.xlu0 %v501, 34
        %v1611 = vpop.permute.xlu0 %1610
        %1612 = vrot.lane.b32.xlu0 %v502, 34
        %v1613 = vpop.permute.xlu0 %1612
        %1614 = vrot.lane.b32.xlu0 %v503, 34
        %v1615 = vpop.permute.xlu0 %1614
        %1616 = vrot.lane.b32.xlu0 %v504, 34
        %v1617 = vpop.permute.xlu0 %1616
        %1618 = vrot.lane.b32.xlu0 %v505, 34
        %v1619 = vpop.permute.xlu0 %1618
        %1620 = vrot.lane.b32.xlu0 %v519, 34
        %v1621 = vpop.permute.xlu0 %1620
        %1622 = vrot.lane.b32.xlu0 0, 34
        %v1623 = vpop.permute.xlu0 %1622
        %vm1624 = vcmask 277504
        %v1625 = vsel %vm1624, %v1607, %v1609
        %v1626 = vsel %vm1624, %v1609, %v1611
        %v1627 = vsel %vm1624, %v1611, %v1613
        %v1628 = vsel %vm1624, %v1613, %v1615
        %v1629 = vsel %vm1624, %v1615, %v1617
        %v1630 = vsel %vm1624, %v1617, %v1619
        %v1631 = vsel %vm1624, %v1619, %v1621
        %v1632 = vsel %vm1624, %v1621, %v1623
        %1641 = vst [vmem:[#allocation2 + $0x680] sm:$0xff] %v1625
        %1642 = vst [vmem:[#allocation2 + $0x688] sm:$0xff] %v1626
        %1643 = vst [vmem:[#allocation2 + $0x690] sm:$0xff] %v1627
        %1644 = vst [vmem:[#allocation2 + $0x698] sm:$0xff] %v1628
        %1645 = vst [vmem:[#allocation2 + $0x6a0] sm:$0xff] %v1629
        %1646 = vst [vmem:[#allocation2 + $0x6a8] sm:$0xff] %v1630
        %1647 = vst [vmem:[#allocation2 + $0x6b0] sm:$0xff] %v1631
        %1648 = vst [vmem:[#allocation2 + $0x6b8] sm:$0xff] %v1632
        %v1649 = vld [vmem:[#allocation11] sm:$0xff]
        %v1650 = vld [vmem:[#allocation11 + $0x8] sm:$0xff]
        %v1651 = vld [vmem:[#allocation11 + $0x10] sm:$0xff]
        %v1652 = vld [vmem:[#allocation11 + $0x18] sm:$0xff]
        %v1653 = vld [vmem:[#allocation2] sm:$0xff]
        %v1654 = vld [vmem:[#allocation2 + $0x8] sm:$0xff]
        %v1655 = vld [vmem:[#allocation2 + $0x10] sm:$0xff]
        %v1656 = vld [vmem:[#allocation2 + $0x18] sm:$0xff]
        %v1657 = vld [vmem:[#allocation2 + $0x20] sm:$0xff]
        %v1658 = vld [vmem:[#allocation2 + $0x28] sm:$0xff]
        %v1659 = vld [vmem:[#allocation2 + $0x30] sm:$0xff]
        %v1660 = vld [vmem:[#allocation2 + $0x38] sm:$0xff]
        %v1661 = vld [vmem:[#allocation2 + $0x40] sm:$0xff]
        %v1662 = vld [vmem:[#allocation2 + $0x48] sm:$0xff]
        %v1663 = vld [vmem:[#allocation2 + $0x50] sm:$0xff]
        %v1664 = vld [vmem:[#allocation2 + $0x58] sm:$0xff]
        %v1665 = vld [vmem:[#allocation2 + $0x60] sm:$0xff]
        %v1666 = vld [vmem:[#allocation2 + $0x68] sm:$0xff]
        %v1667 = vld [vmem:[#allocation2 + $0x70] sm:$0xff]
        %v1668 = vld [vmem:[#allocation2 + $0x78] sm:$0xff]
        %v1669 = vld [vmem:[#allocation2 + $0x80] sm:$0xff]
        %v1670 = vld [vmem:[#allocation2 + $0x88] sm:$0xff]
        %v1671 = vld [vmem:[#allocation2 + $0x90] sm:$0xff]
        %v1672 = vld [vmem:[#allocation2 + $0x98] sm:$0xff]
        %v1673 = vld [vmem:[#allocation2 + $0xa0] sm:$0xff]
        %v1674 = vld [vmem:[#allocation2 + $0xa8] sm:$0xff]
        %v1675 = vld [vmem:[#allocation2 + $0xb0] sm:$0xff]
        %v1676 = vld [vmem:[#allocation2 + $0xb8] sm:$0xff]
        %v1677 = vld [vmem:[#allocation2 + $0xc0] sm:$0xff]
        %v1678 = vld [vmem:[#allocation2 + $0xc8] sm:$0xff]
        %v1679 = vld [vmem:[#allocation2 + $0xd0] sm:$0xff]
        %v1680 = vld [vmem:[#allocation2 + $0xd8] sm:$0xff]
        %v1681 = vld [vmem:[#allocation2 + $0xe0] sm:$0xff]
        %v1682 = vld [vmem:[#allocation2 + $0xe8] sm:$0xff]
        %v1683 = vld [vmem:[#allocation2 + $0xf0] sm:$0xff]
        %v1684 = vld [vmem:[#allocation2 + $0xf8] sm:$0xff]
        %v1685 = vld [vmem:[#allocation2 + $0x100] sm:$0xff]
        %v1686 = vld [vmem:[#allocation2 + $0x108] sm:$0xff]
        %v1687 = vld [vmem:[#allocation2 + $0x110] sm:$0xff]
        %v1688 = vld [vmem:[#allocation2 + $0x118] sm:$0xff]
        %v1689 = vld [vmem:[#allocation2 + $0x120] sm:$0xff]
        %v1690 = vld [vmem:[#allocation2 + $0x128] sm:$0xff]
        %v1691 = vld [vmem:[#allocation2 + $0x130] sm:$0xff]
        %v1692 = vld [vmem:[#allocation2 + $0x138] sm:$0xff]
        %v1693 = vld [vmem:[#allocation2 + $0x140] sm:$0xff]
        %v1694 = vld [vmem:[#allocation2 + $0x148] sm:$0xff]
        %v1695 = vld [vmem:[#allocation2 + $0x150] sm:$0xff]
        %v1696 = vld [vmem:[#allocation2 + $0x158] sm:$0xff]
        %v1697 = vld [vmem:[#allocation2 + $0x160] sm:$0xff]
        %v1698 = vld [vmem:[#allocation2 + $0x168] sm:$0xff]
        %v1699 = vld [vmem:[#allocation2 + $0x170] sm:$0xff]
        %v1700 = vld [vmem:[#allocation2 + $0x178] sm:$0xff]
        %v1701 = vld [vmem:[#allocation2 + $0x180] sm:$0xff]
        %v1702 = vld [vmem:[#allocation2 + $0x188] sm:$0xff]
        %v1703 = vld [vmem:[#allocation2 + $0x190] sm:$0xff]
        %v1704 = vld [vmem:[#allocation2 + $0x198] sm:$0xff]
        %v1705 = vld [vmem:[#allocation2 + $0x1a0] sm:$0xff]
        %v1706 = vld [vmem:[#allocation2 + $0x1a8] sm:$0xff]
        %v1707 = vld [vmem:[#allocation2 + $0x1b0] sm:$0xff]
        %v1708 = vld [vmem:[#allocation2 + $0x1b8] sm:$0xff]
        %v1709 = vld [vmem:[#allocation2 + $0x1c0] sm:$0xff]
        %v1710 = vld [vmem:[#allocation2 + $0x1c8] sm:$0xff]
        %v1711 = vld [vmem:[#allocation2 + $0x1d0] sm:$0xff]
        %v1712 = vld [vmem:[#allocation2 + $0x1d8] sm:$0xff]
        %v1713 = vld [vmem:[#allocation2 + $0x1e0] sm:$0xff]
        %v1714 = vld [vmem:[#allocation2 + $0x1e8] sm:$0xff]
        %v1715 = vld [vmem:[#allocation2 + $0x1f0] sm:$0xff]
        %v1716 = vld [vmem:[#allocation2 + $0x1f8] sm:$0xff]
        %v1717 = vld [vmem:[#allocation2 + $0x200] sm:$0xff]
        %v1718 = vld [vmem:[#allocation2 + $0x208] sm:$0xff]
        %v1719 = vld [vmem:[#allocation2 + $0x210] sm:$0xff]
        %v1720 = vld [vmem:[#allocation2 + $0x218] sm:$0xff]
        %v1721 = vld [vmem:[#allocation2 + $0x220] sm:$0xff]
        %v1722 = vld [vmem:[#allocation2 + $0x228] sm:$0xff]
        %v1723 = vld [vmem:[#allocation2 + $0x230] sm:$0xff]
        %v1724 = vld [vmem:[#allocation2 + $0x238] sm:$0xff]
        %v1725 = vld [vmem:[#allocation2 + $0x240] sm:$0xff]
        %v1726 = vld [vmem:[#allocation2 + $0x248] sm:$0xff]
        %v1727 = vld [vmem:[#allocation2 + $0x250] sm:$0xff]
        %v1728 = vld [vmem:[#allocation2 + $0x258] sm:$0xff]
        %v1729 = vld [vmem:[#allocation2 + $0x260] sm:$0xff]
        %v1730 = vld [vmem:[#allocation2 + $0x268] sm:$0xff]
        %v1731 = vld [vmem:[#allocation2 + $0x270] sm:$0xff]
        %v1732 = vld [vmem:[#allocation2 + $0x278] sm:$0xff]
        %v1733 = vld [vmem:[#allocation2 + $0x280] sm:$0xff]
        %v1734 = vld [vmem:[#allocation2 + $0x288] sm:$0xff]
        %v1735 = vld [vmem:[#allocation2 + $0x290] sm:$0xff]
        %v1736 = vld [vmem:[#allocation2 + $0x298] sm:$0xff]
        %v1737 = vld [vmem:[#allocation2 + $0x2a0] sm:$0xff]
        %v1738 = vld [vmem:[#allocation2 + $0x2a8] sm:$0xff]
        %v1739 = vld [vmem:[#allocation2 + $0x2b0] sm:$0xff]
        %v1740 = vld [vmem:[#allocation2 + $0x2b8] sm:$0xff]
        %v1741 = vld [vmem:[#allocation2 + $0x2c0] sm:$0xff]
        %v1742 = vld [vmem:[#allocation2 + $0x2c8] sm:$0xff]
        %v1743 = vld [vmem:[#allocation2 + $0x2d0] sm:$0xff]
        %v1744 = vld [vmem:[#allocation2 + $0x2d8] sm:$0xff]
        %v1745 = vld [vmem:[#allocation2 + $0x2e0] sm:$0xff]
        %v1746 = vld [vmem:[#allocation2 + $0x2e8] sm:$0xff]
        %v1747 = vld [vmem:[#allocation2 + $0x2f0] sm:$0xff]
        %v1748 = vld [vmem:[#allocation2 + $0x2f8] sm:$0xff]
        %v1749 = vld [vmem:[#allocation2 + $0x300] sm:$0xff]
        %v1750 = vld [vmem:[#allocation2 + $0x308] sm:$0xff]
        %v1751 = vld [vmem:[#allocation2 + $0x310] sm:$0xff]
        %v1752 = vld [vmem:[#allocation2 + $0x318] sm:$0xff]
        %v1753 = vld [vmem:[#allocation2 + $0x320] sm:$0xff]
        %v1754 = vld [vmem:[#allocation2 + $0x328] sm:$0xff]
        %v1755 = vld [vmem:[#allocation2 + $0x330] sm:$0xff]
        %v1756 = vld [vmem:[#allocation2 + $0x338] sm:$0xff]
        %v1757 = vld [vmem:[#allocation2 + $0x340] sm:$0xff]
        %v1758 = vld [vmem:[#allocation2 + $0x348] sm:$0xff]
        %v1759 = vld [vmem:[#allocation2 + $0x350] sm:$0xff]
        %v1760 = vld [vmem:[#allocation2 + $0x358] sm:$0xff]
        %v1761 = vld [vmem:[#allocation2 + $0x360] sm:$0xff]
        %v1762 = vld [vmem:[#allocation2 + $0x368] sm:$0xff]
        %v1763 = vld [vmem:[#allocation2 + $0x370] sm:$0xff]
        %v1764 = vld [vmem:[#allocation2 + $0x378] sm:$0xff]
        %v1765 = vld [vmem:[#allocation2 + $0x380] sm:$0xff]
        %v1766 = vld [vmem:[#allocation2 + $0x388] sm:$0xff]
        %v1767 = vld [vmem:[#allocation2 + $0x390] sm:$0xff]
        %v1768 = vld [vmem:[#allocation2 + $0x398] sm:$0xff]
        %v1769 = vld [vmem:[#allocation2 + $0x3a0] sm:$0xff]
        %v1770 = vld [vmem:[#allocation2 + $0x3a8] sm:$0xff]
        %v1771 = vld [vmem:[#allocation2 + $0x3b0] sm:$0xff]
        %v1772 = vld [vmem:[#allocation2 + $0x3b8] sm:$0xff]
        %v1773 = vld [vmem:[#allocation2 + $0x3c0] sm:$0xff]
        %v1774 = vld [vmem:[#allocation2 + $0x3c8] sm:$0xff]
        %v1775 = vld [vmem:[#allocation2 + $0x3d0] sm:$0xff]
        %v1776 = vld [vmem:[#allocation2 + $0x3d8] sm:$0xff]
        %v1777 = vld [vmem:[#allocation2 + $0x3e0] sm:$0xff]
        %v1778 = vld [vmem:[#allocation2 + $0x3e8] sm:$0xff]
        %v1779 = vld [vmem:[#allocation2 + $0x3f0] sm:$0xff]
        %v1780 = vld [vmem:[#allocation2 + $0x3f8] sm:$0xff]
        %v1781 = vld [vmem:[#allocation2 + $0x400] sm:$0xff]
        %v1782 = vld [vmem:[#allocation2 + $0x408] sm:$0xff]
        %v1783 = vld [vmem:[#allocation2 + $0x410] sm:$0xff]
        %v1784 = vld [vmem:[#allocation2 + $0x418] sm:$0xff]
        %v1785 = vld [vmem:[#allocation2 + $0x420] sm:$0xff]
        %v1786 = vld [vmem:[#allocation2 + $0x428] sm:$0xff]
        %v1787 = vld [vmem:[#allocation2 + $0x430] sm:$0xff]
        %v1788 = vld [vmem:[#allocation2 + $0x438] sm:$0xff]
        %v1789 = vld [vmem:[#allocation2 + $0x440] sm:$0xff]
        %v1790 = vld [vmem:[#allocation2 + $0x448] sm:$0xff]
        %v1791 = vld [vmem:[#allocation2 + $0x450] sm:$0xff]
        %v1792 = vld [vmem:[#allocation2 + $0x458] sm:$0xff]
        %v1793 = vld [vmem:[#allocation2 + $0x460] sm:$0xff]
        %v1794 = vld [vmem:[#allocation2 + $0x468] sm:$0xff]
        %v1795 = vld [vmem:[#allocation2 + $0x470] sm:$0xff]
        %v1796 = vld [vmem:[#allocation2 + $0x478] sm:$0xff]
        %v1797 = vld [vmem:[#allocation2 + $0x480] sm:$0xff]
        %v1798 = vld [vmem:[#allocation2 + $0x488] sm:$0xff]
        %v1799 = vld [vmem:[#allocation2 + $0x490] sm:$0xff]
        %v1800 = vld [vmem:[#allocation2 + $0x498] sm:$0xff]
        %v1801 = vld [vmem:[#allocation2 + $0x4a0] sm:$0xff]
        %v1802 = vld [vmem:[#allocation2 + $0x4a8] sm:$0xff]
        %v1803 = vld [vmem:[#allocation2 + $0x4b0] sm:$0xff]
        %v1804 = vld [vmem:[#allocation2 + $0x4b8] sm:$0xff]
        %v1805 = vld [vmem:[#allocation2 + $0x4c0] sm:$0xff]
        %v1806 = vld [vmem:[#allocation2 + $0x4c8] sm:$0xff]
        %v1807 = vld [vmem:[#allocation2 + $0x4d0] sm:$0xff]
        %v1808 = vld [vmem:[#allocation2 + $0x4d8] sm:$0xff]
        %v1809 = vld [vmem:[#allocation2 + $0x4e0] sm:$0xff]
        %v1810 = vld [vmem:[#allocation2 + $0x4e8] sm:$0xff]
        %v1811 = vld [vmem:[#allocation2 + $0x4f0] sm:$0xff]
        %v1812 = vld [vmem:[#allocation2 + $0x4f8] sm:$0xff]
        %v1813 = vld [vmem:[#allocation2 + $0x500] sm:$0xff]
        %v1814 = vld [vmem:[#allocation2 + $0x508] sm:$0xff]
        %v1815 = vld [vmem:[#allocation2 + $0x510] sm:$0xff]
        %v1816 = vld [vmem:[#allocation2 + $0x518] sm:$0xff]
        %v1817 = vld [vmem:[#allocation2 + $0x520] sm:$0xff]
        %v1818 = vld [vmem:[#allocation2 + $0x528] sm:$0xff]
        %v1819 = vld [vmem:[#allocation2 + $0x530] sm:$0xff]
        %v1820 = vld [vmem:[#allocation2 + $0x538] sm:$0xff]
        %v1821 = vld [vmem:[#allocation2 + $0x540] sm:$0xff]
        %v1822 = vld [vmem:[#allocation2 + $0x548] sm:$0xff]
        %v1823 = vld [vmem:[#allocation2 + $0x550] sm:$0xff]
        %v1824 = vld [vmem:[#allocation2 + $0x558] sm:$0xff]
        %v1825 = vld [vmem:[#allocation2 + $0x560] sm:$0xff]
        %v1826 = vld [vmem:[#allocation2 + $0x568] sm:$0xff]
        %v1827 = vld [vmem:[#allocation2 + $0x570] sm:$0xff]
        %v1828 = vld [vmem:[#allocation2 + $0x578] sm:$0xff]
        %v1829 = vld [vmem:[#allocation2 + $0x580] sm:$0xff]
        %v1830 = vld [vmem:[#allocation2 + $0x588] sm:$0xff]
        %v1831 = vld [vmem:[#allocation2 + $0x590] sm:$0xff]
        %v1832 = vld [vmem:[#allocation2 + $0x598] sm:$0xff]
        %v1833 = vld [vmem:[#allocation2 + $0x5a0] sm:$0xff]
        %v1834 = vld [vmem:[#allocation2 + $0x5a8] sm:$0xff]
        %v1835 = vld [vmem:[#allocation2 + $0x5b0] sm:$0xff]
        %v1836 = vld [vmem:[#allocation2 + $0x5b8] sm:$0xff]
        %v1837 = vld [vmem:[#allocation2 + $0x5c0] sm:$0xff]
        %v1838 = vld [vmem:[#allocation2 + $0x5c8] sm:$0xff]
        %v1839 = vld [vmem:[#allocation2 + $0x5d0] sm:$0xff]
        %v1840 = vld [vmem:[#allocation2 + $0x5d8] sm:$0xff]
        %v1841 = vld [vmem:[#allocation2 + $0x5e0] sm:$0xff]
        %v1842 = vld [vmem:[#allocation2 + $0x5e8] sm:$0xff]
        %v1843 = vld [vmem:[#allocation2 + $0x5f0] sm:$0xff]
        %v1844 = vld [vmem:[#allocation2 + $0x5f8] sm:$0xff]
        %v1845 = vld [vmem:[#allocation2 + $0x600] sm:$0xff]
        %v1846 = vld [vmem:[#allocation2 + $0x608] sm:$0xff]
        %v1847 = vld [vmem:[#allocation2 + $0x610] sm:$0xff]
        %v1848 = vld [vmem:[#allocation2 + $0x618] sm:$0xff]
        %v1849 = vld [vmem:[#allocation2 + $0x620] sm:$0xff]
        %v1850 = vld [vmem:[#allocation2 + $0x628] sm:$0xff]
        %v1851 = vld [vmem:[#allocation2 + $0x630] sm:$0xff]
        %v1852 = vld [vmem:[#allocation2 + $0x638] sm:$0xff]
        %v1853 = vld [vmem:[#allocation2 + $0x640] sm:$0xff]
        %v1854 = vld [vmem:[#allocation2 + $0x648] sm:$0xff]
        %v1855 = vld [vmem:[#allocation2 + $0x650] sm:$0xff]
        %v1856 = vld [vmem:[#allocation2 + $0x658] sm:$0xff]
        %v1857 = vld [vmem:[#allocation2 + $0x660] sm:$0xff]
        %v1858 = vld [vmem:[#allocation2 + $0x668] sm:$0xff]
        %v1859 = vld [vmem:[#allocation2 + $0x670] sm:$0xff]
        %v1860 = vld [vmem:[#allocation2 + $0x678] sm:$0xff]
        %v1861 = vld [vmem:[#allocation2 + $0x680] sm:$0xff]
        %v1862 = vld [vmem:[#allocation2 + $0x688] sm:$0xff]
        %v1863 = vld [vmem:[#allocation2 + $0x690] sm:$0xff]
        %v1864 = vld [vmem:[#allocation2 + $0x698] sm:$0xff]
        %v1865 = vld [vmem:[#allocation2 + $0x6a0] sm:$0xff]
        %v1866 = vld [vmem:[#allocation2 + $0x6a8] sm:$0xff]
        %v1867 = vld [vmem:[#allocation2 + $0x6b0] sm:$0xff]
        %v1868 = vld [vmem:[#allocation2 + $0x6b8] sm:$0xff]
        %v1869 = vld [vmem:[#allocation13] sm:$0xff]
        %v1870 = vld [vmem:[#allocation13 + $0x8] sm:$0xff]
        %1872 = vset.pattern.permute.xlu0 0
        %1873 = vperm.xlu0 %1872, %v1869
        %v1874 = vpop.permute.xlu0 %1873
        %1877 = vset.pattern.permute.xlu0 0
        %1878 = vperm.xlu0 %1877, %v1870
        %v1879 = vpop.permute.xlu0 %1878
        %v1885 = vunpack.c.l.b16 %v1649
        %v1886 = vunpack.c.h.b16 %v1649
        %v1887 = vunpack.c.l.b16 %v1650
        %v1888 = vunpack.c.h.b16 %v1650
        %v1889 = vunpack.c.l.b16 %v1651
        %v1890 = vunpack.c.h.b16 %v1651
        %v1891 = vunpack.c.l.b16 %v1652
        %v1892 = vunpack.c.h.b16 %v1652
        %v1893 = vpack.c.b16 %v1889, %v1885
        %v1894 = vpack.c.b16 %v1890, %v1886
        %v1895 = vpack.c.b16 %v1891, %v1887
        %v1896 = vpack.c.b16 %v1892, %v1888
        %vm1900 = vcmask 392192
        %v1902 = vsel %vm1900, %v1896, 0
        %1904 = vmatprep.subr.bf16.mxu0 %v1654
        %1905 = vmatpush1.bf16.msra.mxu0 %v1653
        %1906 = vmatprep.subr.bf16.mxu0 %v1662
        %1907 = vmatpush1.bf16.msra.mxu0 %v1661
        %1908 = vmatprep.subr.bf16.mxu0 %v1670
        %1909 = vmatpush1.bf16.msra.mxu0 %v1669
        %1910 = vmatprep.subr.bf16.mxu0 %v1678
        %1911 = vmatpush1.bf16.msra.mxu0 %v1677
        %1912 = vmatprep.subr.bf16.mxu0 %v1686
        %1913 = vmatpush1.bf16.msra.mxu0 %v1685
        %1914 = vmatprep.subr.bf16.mxu0 %v1694
        %1915 = vmatpush1.bf16.msra.mxu0 %v1693
        %1916 = vmatprep.subr.bf16.mxu0 %v1702
        %1917 = vmatpush1.bf16.msra.mxu0 %v1701
        %1918 = vmatprep.subr.bf16.mxu0 %v1710
        %1919 = vmatpush1.bf16.msra.mxu0 %v1709
        %1920 = vmatprep.subr.bf16.mxu0 %v1718
        %1921 = vmatpush1.bf16.msra.mxu0 %v1717
        %1922 = vmatprep.subr.bf16.mxu0 %v1726
        %1923 = vmatpush1.bf16.msra.mxu0 %v1725
        %1924 = vmatprep.subr.bf16.mxu0 %v1734
        %1925 = vmatpush1.bf16.msra.mxu0 %v1733
        %1926 = vmatprep.subr.bf16.mxu0 %v1742
        %1927 = vmatpush1.bf16.msra.mxu0 %v1741
        %1928 = vmatprep.subr.bf16.mxu0 %v1750
        %1929 = vmatpush1.bf16.msra.mxu0 %v1749
        %1930 = vmatprep.subr.bf16.mxu0 %v1758
        %1931 = vmatpush1.bf16.msra.mxu0 %v1757
        %1932 = vmatprep.subr.bf16.mxu0 %v1766
        %1933 = vmatpush1.bf16.msra.mxu0 %v1765
        %1934 = vmatprep.subr.bf16.mxu0 %v1774
        %1935 = vmatpush1.bf16.msra.mxu0 %v1773
        %1936 = vmatprep.mubr.bf16.mxu0 %v1894
        %1937 = vmatmul.mubr.bf16.gmra.mrb[0].mxu0 %v1893
        %v1938 = vpop.f32.mrb[0].mxu0
        %v1939 = vadd.f32 %v1874, %v1938
        %v1940 = vpop.f32.mrb[0].mxu0
        %v1941 = vadd.f32 %v1874, %v1940
        %v1942 = vpop.f32.mrb[0].mxu0
        %v1943 = vadd.f32 %v1879, %v1942
        %v1944 = vpop.f32.mrb[0].mxu0
        %v1945 = vadd.f32 %v1879, %v1944
        %1946 = vdwg.mxu0
        %1947 = vmatprep.subr.bf16.mxu0 %v1782
        %1948 = vmatpush1.bf16.msra.mxu0 %v1781
        %1949 = vmatprep.subr.bf16.mxu0 %v1790
        %1950 = vmatpush1.bf16.msra.mxu0 %v1789
        %1951 = vmatprep.subr.bf16.mxu0 %v1798
        %1952 = vmatpush1.bf16.msra.mxu0 %v1797
        %1953 = vmatprep.subr.bf16.mxu0 %v1806
        %1954 = vmatpush1.bf16.msra.mxu0 %v1805
        %1955 = vmatprep.subr.bf16.mxu0 %v1814
        %1956 = vmatpush1.bf16.msra.mxu0 %v1813
        %1957 = vmatprep.subr.bf16.mxu0 %v1822
        %1958 = vmatpush1.bf16.msra.mxu0 %v1821
        %1959 = vmatprep.subr.bf16.mxu0 %v1830
        %1960 = vmatpush1.bf16.msra.mxu0 %v1829
        %1961 = vmatprep.subr.bf16.mxu0 %v1838
        %1962 = vmatpush1.bf16.msra.mxu0 %v1837
        %1963 = vmatprep.subr.bf16.mxu0 %v1846
        %1964 = vmatpush1.bf16.msra.mxu0 %v1845
        %1965 = vmatprep.subr.bf16.mxu0 %v1854
        %1966 = vmatpush1.bf16.msra.mxu0 %v1853
        %1967 = vmatprep.subr.bf16.mxu0 %v1862
        %1968 = vmatpush1.bf16.msra.mxu0 %v1861
        %1969 = vmatprep.subr.bf16.mxu0 0
        %1970 = vmatpush1.bf16.msra.mxu0 0
        %1971 = vmatprep.subr.bf16.mxu0 0
        %1972 = vmatpush1.bf16.msra.mxu0 0
        %1973 = vmatprep.subr.bf16.mxu0 0
        %1974 = vmatpush1.bf16.msra.mxu0 0
        %1975 = vmatprep.subr.bf16.mxu0 0
        %1976 = vmatpush1.bf16.msra.mxu0 0
        %1977 = vmatprep.subr.bf16.mxu0 0
        %1978 = vmatpush1.bf16.msra.mxu0 0
        %1979 = vmatprep.mubr.bf16.mxu0 %v1902
        %1980 = vmatmul.mubr.bf16.gmra.mrb[0].mxu0 %v1895
        %v1981 = vpop.f32.mrb[0].mxu0
        %v1982 = vadd.f32 %v1939, %v1981
        %v1983 = vpop.f32.mrb[0].mxu0
        %v1984 = vadd.f32 %v1941, %v1983
        %v1985 = vpop.f32.mrb[0].mxu0
        %v1986 = vadd.f32 %v1943, %v1985
        %v1987 = vpop.f32.mrb[0].mxu0
        %v1988 = vadd.f32 %v1945, %v1987
        %1989 = vdwg.mxu0
        %1990 = vmatprep.subr.bf16.mxu0 %v1656
        %1991 = vmatpush1.bf16.msra.mxu0 %v1655
        %1992 = vmatprep.subr.bf16.mxu0 %v1664
        %1993 = vmatpush1.bf16.msra.mxu0 %v1663
        %1994 = vmatprep.subr.bf16.mxu0 %v1672
        %1995 = vmatpush1.bf16.msra.mxu0 %v1671
        %1996 = vmatprep.subr.bf16.mxu0 %v1680
        %1997 = vmatpush1.bf16.msra.mxu0 %v1679
        %1998 = vmatprep.subr.bf16.mxu0 %v1688
        %1999 = vmatpush1.bf16.msra.mxu0 %v1687
        %2000 = vmatprep.subr.bf16.mxu0 %v1696
        %2001 = vmatpush1.bf16.msra.mxu0 %v1695
        %2002 = vmatprep.subr.bf16.mxu0 %v1704
        %2003 = vmatpush1.bf16.msra.mxu0 %v1703
        %2004 = vmatprep.subr.bf16.mxu0 %v1712
        %2005 = vmatpush1.bf16.msra.mxu0 %v1711
        %2006 = vmatprep.subr.bf16.mxu0 %v1720
        %2007 = vmatpush1.bf16.msra.mxu0 %v1719
        %2008 = vmatprep.subr.bf16.mxu0 %v1728
        %2009 = vmatpush1.bf16.msra.mxu0 %v1727
        %2010 = vmatprep.subr.bf16.mxu0 %v1736
        %2011 = vmatpush1.bf16.msra.mxu0 %v1735
        %2012 = vmatprep.subr.bf16.mxu0 %v1744
        %2013 = vmatpush1.bf16.msra.mxu0 %v1743
        %2014 = vmatprep.subr.bf16.mxu0 %v1752
        %2015 = vmatpush1.bf16.msra.mxu0 %v1751
        %2016 = vmatprep.subr.bf16.mxu0 %v1760
        %2017 = vmatpush1.bf16.msra.mxu0 %v1759
        %2018 = vmatprep.subr.bf16.mxu0 %v1768
        %2019 = vmatpush1.bf16.msra.mxu0 %v1767
        %2020 = vmatprep.subr.bf16.mxu0 %v1776
        %2021 = vmatpush1.bf16.msra.mxu0 %v1775
        %2022 = vmatprep.mubr.bf16.mxu0 %v1894
        %2023 = vmatmul.mubr.bf16.gmra.mrb[0].mxu0 %v1893
        %v2024 = vpop.f32.mrb[0].mxu0
        %v2025 = vadd.f32 %v1874, %v2024
        %v2026 = vpop.f32.mrb[0].mxu0
        %v2027 = vadd.f32 %v1874, %v2026
        %v2028 = vpop.f32.mrb[0].mxu0
        %v2029 = vadd.f32 %v1879, %v2028
        %v2030 = vpop.f32.mrb[0].mxu0
        %v2031 = vadd.f32 %v1879, %v2030
        %2032 = vdwg.mxu0
        %2033 = vmatprep.subr.bf16.mxu0 %v1784
        %2034 = vmatpush1.bf16.msra.mxu0 %v1783
        %2035 = vmatprep.subr.bf16.mxu0 %v1792
        %2036 = vmatpush1.bf16.msra.mxu0 %v1791
        %2037 = vmatprep.subr.bf16.mxu0 %v1800
        %2038 = vmatpush1.bf16.msra.mxu0 %v1799
        %2039 = vmatprep.subr.bf16.mxu0 %v1808
        %2040 = vmatpush1.bf16.msra.mxu0 %v1807
        %2041 = vmatprep.subr.bf16.mxu0 %v1816
        %2042 = vmatpush1.bf16.msra.mxu0 %v1815
        %2043 = vmatprep.subr.bf16.mxu0 %v1824
        %2044 = vmatpush1.bf16.msra.mxu0 %v1823
        %2045 = vmatprep.subr.bf16.mxu0 %v1832
        %2046 = vmatpush1.bf16.msra.mxu0 %v1831
        %2047 = vmatprep.subr.bf16.mxu0 %v1840
        %2048 = vmatpush1.bf16.msra.mxu0 %v1839
        %2049 = vmatprep.subr.bf16.mxu0 %v1848
        %2050 = vmatpush1.bf16.msra.mxu0 %v1847
        %2051 = vmatprep.subr.bf16.mxu0 %v1856
        %2052 = vmatpush1.bf16.msra.mxu0 %v1855
        %2053 = vmatprep.subr.bf16.mxu0 %v1864
        %2054 = vmatpush1.bf16.msra.mxu0 %v1863
        %2055 = vmatprep.subr.bf16.mxu0 0
        %2056 = vmatpush1.bf16.msra.mxu0 0
        %2057 = vmatprep.subr.bf16.mxu0 0
        %2058 = vmatpush1.bf16.msra.mxu0 0
        %2059 = vmatprep.subr.bf16.mxu0 0
        %2060 = vmatpush1.bf16.msra.mxu0 0
        %2061 = vmatprep.subr.bf16.mxu0 0
        %2062 = vmatpush1.bf16.msra.mxu0 0
        %2063 = vmatprep.subr.bf16.mxu0 0
        %2064 = vmatpush1.bf16.msra.mxu0 0
        %2065 = vmatprep.mubr.bf16.mxu0 %v1902
        %2066 = vmatmul.mubr.bf16.gmra.mrb[0].mxu0 %v1895
        %v2067 = vpop.f32.mrb[0].mxu0
        %v2068 = vadd.f32 %v2025, %v2067
        %v2069 = vpop.f32.mrb[0].mxu0
        %v2070 = vadd.f32 %v2027, %v2069
        %v2071 = vpop.f32.mrb[0].mxu0
        %v2072 = vadd.f32 %v2029, %v2071
        %v2073 = vpop.f32.mrb[0].mxu0
        %v2074 = vadd.f32 %v2031, %v2073
        %2075 = vdwg.mxu0
        %2076 = vmatprep.subr.bf16.mxu0 %v1658
        %2077 = vmatpush1.bf16.msra.mxu0 %v1657
        %2078 = vmatprep.subr.bf16.mxu0 %v1666
        %2079 = vmatpush1.bf16.msra.mxu0 %v1665
        %2080 = vmatprep.subr.bf16.mxu0 %v1674
        %2081 = vmatpush1.bf16.msra.mxu0 %v1673
        %2082 = vmatprep.subr.bf16.mxu0 %v1682
        %2083 = vmatpush1.bf16.msra.mxu0 %v1681
        %2084 = vmatprep.subr.bf16.mxu0 %v1690
        %2085 = vmatpush1.bf16.msra.mxu0 %v1689
        %2086 = vmatprep.subr.bf16.mxu0 %v1698
        %2087 = vmatpush1.bf16.msra.mxu0 %v1697
        %2088 = vmatprep.subr.bf16.mxu0 %v1706
        %2089 = vmatpush1.bf16.msra.mxu0 %v1705
        %2090 = vmatprep.subr.bf16.mxu0 %v1714
        %2091 = vmatpush1.bf16.msra.mxu0 %v1713
        %2092 = vmatprep.subr.bf16.mxu0 %v1722
        %2093 = vmatpush1.bf16.msra.mxu0 %v1721
        %2094 = vmatprep.subr.bf16.mxu0 %v1730
        %2095 = vmatpush1.bf16.msra.mxu0 %v1729
        %2096 = vmatprep.subr.bf16.mxu0 %v1738
        %2097 = vmatpush1.bf16.msra.mxu0 %v1737
        %2098 = vmatprep.subr.bf16.mxu0 %v1746
        %2099 = vmatpush1.bf16.msra.mxu0 %v1745
        %2100 = vmatprep.subr.bf16.mxu0 %v1754
        %2101 = vmatpush1.bf16.msra.mxu0 %v1753
        %2102 = vmatprep.subr.bf16.mxu0 %v1762
        %2103 = vmatpush1.bf16.msra.mxu0 %v1761
        %2104 = vmatprep.subr.bf16.mxu0 %v1770
        %2105 = vmatpush1.bf16.msra.mxu0 %v1769
        %2106 = vmatprep.subr.bf16.mxu0 %v1778
        %2107 = vmatpush1.bf16.msra.mxu0 %v1777
        %2108 = vmatprep.mubr.bf16.mxu0 %v1894
        %2109 = vmatmul.mubr.bf16.gmra.mrb[0].mxu0 %v1893
        %v2110 = vpop.f32.mrb[0].mxu0
        %v2111 = vadd.f32 %v1874, %v2110
        %v2112 = vpop.f32.mrb[0].mxu0
        %v2113 = vadd.f32 %v1874, %v2112
        %v2114 = vpop.f32.mrb[0].mxu0
        %v2115 = vadd.f32 %v1879, %v2114
        %v2116 = vpop.f32.mrb[0].mxu0
        %v2117 = vadd.f32 %v1879, %v2116
        %2118 = vdwg.mxu0
        %2119 = vmatprep.subr.bf16.mxu0 %v1786
        %2120 = vmatpush1.bf16.msra.mxu0 %v1785
        %2121 = vmatprep.subr.bf16.mxu0 %v1794
        %2122 = vmatpush1.bf16.msra.mxu0 %v1793
        %2123 = vmatprep.subr.bf16.mxu0 %v1802
        %2124 = vmatpush1.bf16.msra.mxu0 %v1801
        %2125 = vmatprep.subr.bf16.mxu0 %v1810
        %2126 = vmatpush1.bf16.msra.mxu0 %v1809
        %2127 = vmatprep.subr.bf16.mxu0 %v1818
        %2128 = vmatpush1.bf16.msra.mxu0 %v1817
        %2129 = vmatprep.subr.bf16.mxu0 %v1826
        %2130 = vmatpush1.bf16.msra.mxu0 %v1825
        %2131 = vmatprep.subr.bf16.mxu0 %v1834
        %2132 = vmatpush1.bf16.msra.mxu0 %v1833
        %2133 = vmatprep.subr.bf16.mxu0 %v1842
        %2134 = vmatpush1.bf16.msra.mxu0 %v1841
        %2135 = vmatprep.subr.bf16.mxu0 %v1850
        %2136 = vmatpush1.bf16.msra.mxu0 %v1849
        %2137 = vmatprep.subr.bf16.mxu0 %v1858
        %2138 = vmatpush1.bf16.msra.mxu0 %v1857
        %2139 = vmatprep.subr.bf16.mxu0 %v1866
        %2140 = vmatpush1.bf16.msra.mxu0 %v1865
        %2141 = vmatprep.subr.bf16.mxu0 0
        %2142 = vmatpush1.bf16.msra.mxu0 0
        %2143 = vmatprep.subr.bf16.mxu0 0
        %2144 = vmatpush1.bf16.msra.mxu0 0
        %2145 = vmatprep.subr.bf16.mxu0 0
        %2146 = vmatpush1.bf16.msra.mxu0 0
        %2147 = vmatprep.subr.bf16.mxu0 0
        %2148 = vmatpush1.bf16.msra.mxu0 0
        %2149 = vmatprep.subr.bf16.mxu0 0
        %2150 = vmatpush1.bf16.msra.mxu0 0
        %2151 = vmatprep.mubr.bf16.mxu0 %v1902
        %2152 = vmatmul.mubr.bf16.gmra.mrb[0].mxu0 %v1895
        %v2153 = vpop.f32.mrb[0].mxu0
        %v2154 = vadd.f32 %v2111, %v2153
        %v2155 = vpop.f32.mrb[0].mxu0
        %v2156 = vadd.f32 %v2113, %v2155
        %v2157 = vpop.f32.mrb[0].mxu0
        %v2158 = vadd.f32 %v2115, %v2157
        %v2159 = vpop.f32.mrb[0].mxu0
        %v2160 = vadd.f32 %v2117, %v2159
        %2161 = vdwg.mxu0
        %2162 = vmatprep.subr.bf16.mxu0 %v1660
        %2163 = vmatpush1.bf16.msra.mxu0 %v1659
        %2164 = vmatprep.subr.bf16.mxu0 %v1668
        %2165 = vmatpush1.bf16.msra.mxu0 %v1667
        %2166 = vmatprep.subr.bf16.mxu0 %v1676
        %2167 = vmatpush1.bf16.msra.mxu0 %v1675
        %2168 = vmatprep.subr.bf16.mxu0 %v1684
        %2169 = vmatpush1.bf16.msra.mxu0 %v1683
        %2170 = vmatprep.subr.bf16.mxu0 %v1692
        %2171 = vmatpush1.bf16.msra.mxu0 %v1691
        %2172 = vmatprep.subr.bf16.mxu0 %v1700
        %2173 = vmatpush1.bf16.msra.mxu0 %v1699
        %2174 = vmatprep.subr.bf16.mxu0 %v1708
        %2175 = vmatpush1.bf16.msra.mxu0 %v1707
        %2176 = vmatprep.subr.bf16.mxu0 %v1716
        %2177 = vmatpush1.bf16.msra.mxu0 %v1715
        %2178 = vmatprep.subr.bf16.mxu0 %v1724
        %2179 = vmatpush1.bf16.msra.mxu0 %v1723
        %2180 = vmatprep.subr.bf16.mxu0 %v1732
        %2181 = vmatpush1.bf16.msra.mxu0 %v1731
        %2182 = vmatprep.subr.bf16.mxu0 %v1740
        %2183 = vmatpush1.bf16.msra.mxu0 %v1739
        %2184 = vmatprep.subr.bf16.mxu0 %v1748
        %2185 = vmatpush1.bf16.msra.mxu0 %v1747
        %2186 = vmatprep.subr.bf16.mxu0 %v1756
        %2187 = vmatpush1.bf16.msra.mxu0 %v1755
        %2188 = vmatprep.subr.bf16.mxu0 %v1764
        %2189 = vmatpush1.bf16.msra.mxu0 %v1763
        %2190 = vmatprep.subr.bf16.mxu0 %v1772
        %2191 = vmatpush1.bf16.msra.mxu0 %v1771
        %2192 = vmatprep.subr.bf16.mxu0 %v1780
        %2193 = vmatpush1.bf16.msra.mxu0 %v1779
        %2194 = vmatprep.mubr.bf16.mxu0 %v1894
        %2195 = vmatmul.mubr.bf16.gmra.mrb[0].mxu0 %v1893
        %v2196 = vpop.f32.mrb[0].mxu0
        %v2197 = vadd.f32 %v1874, %v2196
        %v2198 = vpop.f32.mrb[0].mxu0
        %v2199 = vadd.f32 %v1874, %v2198
        %v2200 = vpop.f32.mrb[0].mxu0
        %v2201 = vadd.f32 %v1879, %v2200
        %v2202 = vpop.f32.mrb[0].mxu0
        %v2203 = vadd.f32 %v1879, %v2202
        %2204 = vdwg.mxu0
        %2205 = vmatprep.subr.bf16.mxu0 %v1788
        %2206 = vmatpush1.bf16.msra.mxu0 %v1787
        %2207 = vmatprep.subr.bf16.mxu0 %v1796
        %2208 = vmatpush1.bf16.msra.mxu0 %v1795
        %2209 = vmatprep.subr.bf16.mxu0 %v1804
        %2210 = vmatpush1.bf16.msra.mxu0 %v1803
        %2211 = vmatprep.subr.bf16.mxu0 %v1812
        %2212 = vmatpush1.bf16.msra.mxu0 %v1811
        %2213 = vmatprep.subr.bf16.mxu0 %v1820
        %2214 = vmatpush1.bf16.msra.mxu0 %v1819
        %2215 = vmatprep.subr.bf16.mxu0 %v1828
        %2216 = vmatpush1.bf16.msra.mxu0 %v1827
        %2217 = vmatprep.subr.bf16.mxu0 %v1836
        %2218 = vmatpush1.bf16.msra.mxu0 %v1835
        %2219 = vmatprep.subr.bf16.mxu0 %v1844
        %2220 = vmatpush1.bf16.msra.mxu0 %v1843
        %2221 = vmatprep.subr.bf16.mxu0 %v1852
        %2222 = vmatpush1.bf16.msra.mxu0 %v1851
        %2223 = vmatprep.subr.bf16.mxu0 %v1860
        %2224 = vmatpush1.bf16.msra.mxu0 %v1859
        %2225 = vmatprep.subr.bf16.mxu0 %v1868
        %2226 = vmatpush1.bf16.msra.mxu0 %v1867
        %2227 = vmatprep.subr.bf16.mxu0 0
        %2228 = vmatpush1.bf16.msra.mxu0 0
        %2229 = vmatprep.subr.bf16.mxu0 0
        %2230 = vmatpush1.bf16.msra.mxu0 0
        %2231 = vmatprep.subr.bf16.mxu0 0
        %2232 = vmatpush1.bf16.msra.mxu0 0
        %2233 = vmatprep.subr.bf16.mxu0 0
        %2234 = vmatpush1.bf16.msra.mxu0 0
        %2235 = vmatprep.subr.bf16.mxu0 0
        %2236 = vmatpush1.bf16.msra.mxu0 0
        %2237 = vmatprep.mubr.bf16.mxu0 %v1902
        %2238 = vmatmul.mubr.bf16.gmra.mrb[0].mxu0 %v1895
        %v2239 = vpop.f32.mrb[0].mxu0
        %v2240 = vadd.f32 %v2197, %v2239
        %v2241 = vpop.f32.mrb[0].mxu0
        %v2242 = vadd.f32 %v2199, %v2241
        %v2243 = vpop.f32.mrb[0].mxu0
        %v2244 = vadd.f32 %v2201, %v2243
        %v2245 = vpop.f32.mrb[0].mxu0
        %v2246 = vadd.f32 %v2203, %v2245
        %2247 = vdwg.mxu0
        %v2248 = vld [vmem:[#allocation10] sm:$0xff]
        %v2250 = vlaneseq
        %v2251 = vshrl.u32 %v2250, 7
        %v2252 = vsub.s32 0, %v2251
        %v2253 = vrot.slane %v2248, %v2252
        %v2254 = vlaneseq
        %v2255 = vshrl.u32 %v2254, 7
        %v2256 = vsub.s32 1, %v2255
        %v2257 = vrot.slane %v2248, %v2256
        %v2258 = vlaneseq
        %v2259 = vshrl.u32 %v2258, 7
        %v2260 = vsub.s32 2, %v2259
        %v2261 = vrot.slane %v2248, %v2260
        %v2262 = vlaneseq
        %v2263 = vshrl.u32 %v2262, 7
        %v2264 = vsub.s32 3, %v2263
        %v2265 = vrot.slane %v2248, %v2264
        %v2266 = vlaneseq
        %v2267 = vshrl.u32 %v2266, 7
        %v2268 = vsub.s32 4, %v2267
        %v2269 = vrot.slane %v2248, %v2268
        %v2270 = vlaneseq
        %v2271 = vshrl.u32 %v2270, 7
        %v2272 = vsub.s32 5, %v2271
        %v2273 = vrot.slane %v2248, %v2272
        %v2274 = vlaneseq
        %v2275 = vshrl.u32 %v2274, 7
        %v2276 = vsub.s32 6, %v2275
        %v2277 = vrot.slane %v2248, %v2276
        %v2278 = vlaneseq
        %v2279 = vshrl.u32 %v2278, 7
        %v2280 = vsub.s32 7, %v2279
        %v2281 = vrot.slane %v2248, %v2280
        %v2290 = vmul.f32 %v1982, %v2253
        %v2291 = vmul.f32 %v1984, %v2257
        %v2292 = vmul.f32 %v2068, %v2261
        %v2293 = vmul.f32 %v2070, %v2265
        %v2294 = vmul.f32 %v2154, %v2269
        %v2295 = vmul.f32 %v2156, %v2273
        %v2296 = vmul.f32 %v2240, %v2277
        %v2297 = vmul.f32 %v2242, %v2281
        %v2298 = vmul.f32 %v1986, %v2253
        %v2299 = vmul.f32 %v1988, %v2257
        %v2300 = vmul.f32 %v2072, %v2261
        %v2301 = vmul.f32 %v2074, %v2265
        %v2302 = vmul.f32 %v2158, %v2269
        %v2303 = vmul.f32 %v2160, %v2273
        %v2304 = vmul.f32 %v2244, %v2277
        %v2305 = vmul.f32 %v2246, %v2281
        %v2306 = vadd.f32 %v2290, %v2291
        %v2307 = vadd.f32 %v2306, %v2292
        %v2308 = vadd.f32 %v2307, %v2293
        %v2309 = vadd.f32 %v2308, %v2294
        %v2310 = vadd.f32 %v2309, %v2295
        %v2311 = vadd.f32 %v2310, %v2296
        %v2312 = vadd.f32 %v2311, %v2297
        %2313 = vadd.xlane.f32.xlu0 %v2312
        %v2314 = vpop.xlane.xlu0 %2313
        %v2315 = vadd.f32 %v2298, %v2299
        %v2316 = vadd.f32 %v2315, %v2300
        %v2317 = vadd.f32 %v2316, %v2301
        %v2318 = vadd.f32 %v2317, %v2302
        %v2319 = vadd.f32 %v2318, %v2303
        %v2320 = vadd.f32 %v2319, %v2304
        %v2321 = vadd.f32 %v2320, %v2305
        %2322 = vadd.xlane.f32.xlu0 %v2321
        %v2323 = vpop.xlane.xlu0 %2322
        %v2324 = vmul.f32 %v2314, 0.001953125
        %v2325 = vmul.f32 %v2323, 0.001953125
        %v2326 = vsub.f32 %v1982, %v2324
        %v2327 = vsub.f32 %v1984, %v2324
        %v2328 = vsub.f32 %v2068, %v2324
        %v2329 = vsub.f32 %v2070, %v2324
        %v2330 = vsub.f32 %v2154, %v2324
        %v2331 = vsub.f32 %v2156, %v2324
        %v2332 = vsub.f32 %v2240, %v2324
        %v2333 = vsub.f32 %v2242, %v2324
        %v2334 = vsub.f32 %v1986, %v2325
        %v2335 = vsub.f32 %v1988, %v2325
        %v2336 = vsub.f32 %v2072, %v2325
        %v2337 = vsub.f32 %v2074, %v2325
        %v2338 = vsub.f32 %v2158, %v2325
        %v2339 = vsub.f32 %v2160, %v2325
        %v2340 = vsub.f32 %v2244, %v2325
        %v2341 = vsub.f32 %v2246, %v2325
        %v2342 = vmul.f32 %v2326, %v2253
        %v2343 = vmul.f32 %v2327, %v2257
        %v2344 = vmul.f32 %v2328, %v2261
        %v2345 = vmul.f32 %v2329, %v2265
        %v2346 = vmul.f32 %v2330, %v2269
        %v2347 = vmul.f32 %v2331, %v2273
        %v2348 = vmul.f32 %v2332, %v2277
        %v2349 = vmul.f32 %v2333, %v2281
        %v2350 = vmul.f32 %v2334, %v2253
        %v2351 = vmul.f32 %v2335, %v2257
        %v2352 = vmul.f32 %v2336, %v2261
        %v2353 = vmul.f32 %v2337, %v2265
        %v2354 = vmul.f32 %v2338, %v2269
        %v2355 = vmul.f32 %v2339, %v2273
        %v2356 = vmul.f32 %v2340, %v2277
        %v2357 = vmul.f32 %v2341, %v2281
        %v2358 = vmul.f32 %v2342, %v2342
        %v2359 = vmul.f32 %v2343, %v2343
        %v2360 = vmul.f32 %v2344, %v2344
        %v2361 = vmul.f32 %v2345, %v2345
        %v2362 = vmul.f32 %v2346, %v2346
        %v2363 = vmul.f32 %v2347, %v2347
        %v2364 = vmul.f32 %v2348, %v2348
        %v2365 = vmul.f32 %v2349, %v2349
        %v2366 = vmul.f32 %v2350, %v2350
        %v2367 = vmul.f32 %v2351, %v2351
        %v2368 = vmul.f32 %v2352, %v2352
        %v2369 = vmul.f32 %v2353, %v2353
        %v2370 = vmul.f32 %v2354, %v2354
        %v2371 = vmul.f32 %v2355, %v2355
        %v2372 = vmul.f32 %v2356, %v2356
        %v2373 = vmul.f32 %v2357, %v2357
        %v2374 = vadd.f32 %v2358, %v2359
        %v2375 = vadd.f32 %v2374, %v2360
        %v2376 = vadd.f32 %v2375, %v2361
        %v2377 = vadd.f32 %v2376, %v2362
        %v2378 = vadd.f32 %v2377, %v2363
        %v2379 = vadd.f32 %v2378, %v2364
        %v2380 = vadd.f32 %v2379, %v2365
        %2381 = vadd.xlane.f32.xlu0 %v2380
        %v2382 = vpop.xlane.xlu0 %2381
        %v2383 = vadd.f32 %v2366, %v2367
        %v2384 = vadd.f32 %v2383, %v2368
        %v2385 = vadd.f32 %v2384, %v2369
        %v2386 = vadd.f32 %v2385, %v2370
        %v2387 = vadd.f32 %v2386, %v2371
        %v2388 = vadd.f32 %v2387, %v2372
        %v2389 = vadd.f32 %v2388, %v2373
        %2390 = vadd.xlane.f32.xlu0 %v2389
        %v2391 = vpop.xlane.xlu0 %2390
        %v2392 = vmul.f32 %v2382, 0.001953125
        %v2393 = vmul.f32 %v2391, 0.001953125
        %v2394 = vmax.f32 %v2392, 0.0
        %v2395 = vmax.f32 %v2393, 0.0
        %v2396 = vadd.f32 %v2394, 1e-05
        %v2397 = vadd.f32 %v2395, 1e-05
        %v2398 = vrsqrt.pop %v2396
        %v2399 = vrsqrt.pop %v2397
        %v2400 = vmul.f32 %v2326, %v2398
        %v2401 = vmul.f32 %v2327, %v2398
        %v2402 = vmul.f32 %v2328, %v2398
        %v2403 = vmul.f32 %v2329, %v2398
        %v2404 = vmul.f32 %v2330, %v2398
        %v2405 = vmul.f32 %v2331, %v2398
        %v2406 = vmul.f32 %v2332, %v2398
        %v2407 = vmul.f32 %v2333, %v2398
        %v2408 = vmul.f32 %v2334, %v2399
        %v2409 = vmul.f32 %v2335, %v2399
        %v2410 = vmul.f32 %v2336, %v2399
        %v2411 = vmul.f32 %v2337, %v2399
        %v2412 = vmul.f32 %v2338, %v2399
        %v2413 = vmul.f32 %v2339, %v2399
        %v2414 = vmul.f32 %v2340, %v2399
        %v2415 = vmul.f32 %v2341, %v2399
        %vm2416 = vcmp.ge.f32.partialorder %v2400, 0.0
        %vm2417 = vcmp.ge.f32.partialorder %v2401, 0.0
        %vm2418 = vcmp.ge.f32.partialorder %v2402, 0.0
        %vm2419 = vcmp.ge.f32.partialorder %v2403, 0.0
        %vm2420 = vcmp.ge.f32.partialorder %v2404, 0.0
        %vm2421 = vcmp.ge.f32.partialorder %v2405, 0.0
        %vm2422 = vcmp.ge.f32.partialorder %v2406, 0.0
        %vm2423 = vcmp.ge.f32.partialorder %v2407, 0.0
        %vm2424 = vcmp.ge.f32.partialorder %v2408, 0.0
        %vm2425 = vcmp.ge.f32.partialorder %v2409, 0.0
        %vm2426 = vcmp.ge.f32.partialorder %v2410, 0.0
        %vm2427 = vcmp.ge.f32.partialorder %v2411, 0.0
        %vm2428 = vcmp.ge.f32.partialorder %v2412, 0.0
        %vm2429 = vcmp.ge.f32.partialorder %v2413, 0.0
        %vm2430 = vcmp.ge.f32.partialorder %v2414, 0.0
        %vm2431 = vcmp.ge.f32.partialorder %v2415, 0.0
        %v2432 = vmul.f32 %v2400, 0.01
        %v2433 = vmul.f32 %v2401, 0.01
        %v2434 = vmul.f32 %v2402, 0.01
        %v2435 = vmul.f32 %v2403, 0.01
        %v2436 = vmul.f32 %v2404, 0.01
        %v2437 = vmul.f32 %v2405, 0.01
        %v2438 = vmul.f32 %v2406, 0.01
        %v2439 = vmul.f32 %v2407, 0.01
        %v2440 = vmul.f32 %v2408, 0.01
        %v2441 = vmul.f32 %v2409, 0.01
        %v2442 = vmul.f32 %v2410, 0.01
        %v2443 = vmul.f32 %v2411, 0.01
        %v2444 = vmul.f32 %v2412, 0.01
        %v2445 = vmul.f32 %v2413, 0.01
        %v2446 = vmul.f32 %v2414, 0.01
        %v2447 = vmul.f32 %v2415, 0.01
        %v2448 = vsel %vm2416, %v2400, %v2432
        %v2449 = vsel %vm2417, %v2401, %v2433
        %v2450 = vsel %vm2418, %v2402, %v2434
        %v2451 = vsel %vm2419, %v2403, %v2435
        %v2452 = vsel %vm2420, %v2404, %v2436
        %v2453 = vsel %vm2421, %v2405, %v2437
        %v2454 = vsel %vm2422, %v2406, %v2438
        %v2455 = vsel %vm2423, %v2407, %v2439
        %v2456 = vsel %vm2424, %v2408, %v2440
        %v2457 = vsel %vm2425, %v2409, %v2441
        %v2458 = vsel %vm2426, %v2410, %v2442
        %v2459 = vsel %vm2427, %v2411, %v2443
        %v2460 = vsel %vm2428, %v2412, %v2444
        %v2461 = vsel %vm2429, %v2413, %v2445
        %v2462 = vsel %vm2430, %v2414, %v2446
        %v2463 = vsel %vm2431, %v2415, %v2447
        %2464 = vst [vmem:[%s362] sm:$0xff] %v2448
        %2465 = vst [vmem:[%s362 + $0x8] sm:$0xff] %v2449
        %2466 = vst [vmem:[%s362 + $0x10] sm:$0xff] %v2450
        %2467 = vst [vmem:[%s362 + $0x18] sm:$0xff] %v2451
        %2468 = vst [vmem:[%s362 + $0x20] sm:$0xff] %v2452
        %2469 = vst [vmem:[%s362 + $0x28] sm:$0xff] %v2453
        %2470 = vst [vmem:[%s362 + $0x30] sm:$0xff] %v2454
        %2471 = vst [vmem:[%s362 + $0x38] sm:$0xff] %v2455
        %2472 = vst [vmem:[%s362 + $0x40] sm:$0xff] %v2456
        %2473 = vst [vmem:[%s362 + $0x48] sm:$0xff] %v2457
        %2474 = vst [vmem:[%s362 + $0x50] sm:$0xff] %v2458
        %2475 = vst [vmem:[%s362 + $0x58] sm:$0xff] %v2459
        %2476 = vst [vmem:[%s362 + $0x60] sm:$0xff] %v2460
        %2477 = vst [vmem:[%s362 + $0x68] sm:$0xff] %v2461
        %2478 = vst [vmem:[%s362 + $0x70] sm:$0xff] %v2462
        %2479 = vst [vmem:[%s362 + $0x78] sm:$0xff] %v2463
        %s2480 = sand.u32 %s172, 1
        %s2481 = scalar_lea.sflag [#allocation5], %s2480
        %s2482 = sand.u32 %s172, 1
        %s2483 = smul.addr %s2482, 128
        %s2484 = scalar_lea.vmem [#allocation14], %s2483
        // Predicated region
        $region69: #{_lambda_.5} parent=43 // pred_check
          %p2485 = pneg %p182
        $region70: #{_lambda_.5} parent=43 // pred_check_branch
          %2487 = sbr.rel (%p2485) target = $region72
        $region71: #{_lambda_.5} parent=43 // pred_region
          %s2489 = ssub.s32 2048, 2048
          %2490 = vsyncadd %s2481, %s2489
          %s2491 = smul.addr %s28, 16
          %s2492 = smul.addr %s2491, 128
          %s2493 = scalar_lea.hbm %s6, %s2492
          %s2494 = sshll.u32 %s2484, 4
          %s2495 = int_to_ptr.vmem [resolvable:$true] %s2494
          %2500 = dma.vmem_to_hbm [thread:$0]  %s2495, 2048, %s2493, %s2481, 1024, 1024, 64
        $region72: #{_lambda_.5} parent=43 // pred_fallthru
          _
      $region44: #{_lambda_.5} parent=5 // pred_fallthru
        _
      %p2501 = scmp.le.s32.totalorder 2, %s23
      // Predicated region
      $region73: #{_lambda_.5} parent=5 // pred_check
        %p2502 = pneg %p2501
      $region74: #{_lambda_.5} parent=5 // pred_check_branch
        %2504 = sbr.rel (%p2502) target = $region76
      $region75: #{_lambda_.5} parent=5 // pred_region
        %s2505 = ssub.s32 %s23, 2
        // Predicated region
        $region77: #{_lambda_.5} parent=75 // pred_check
          %p2506 = pneg %p188
        $region78: #{_lambda_.5} parent=75 // pred_check_branch
          %2508 = sbr.rel (%p2506) target = $region80
        $region79: #{_lambda_.5} parent=75 // pred_region
          %s2509 = sand.u32 %s173, 1
          %s2510 = scalar_lea.sflag [#allocation5], %s2509
          %s2511 = sand.u32 %s173, 1
          %s2512 = smul.addr %s2511, 128
          %s2513 = scalar_lea.vmem [#allocation14], %s2512
          %2514 = dma.done %s2510, 2048
        $region80: #{_lambda_.5} parent=75 // pred_fallthru
          _
      $region76: #{_lambda_.5} parent=5 // pred_fallthru
        _
    $region6: #{_lambda_.5} parent=1 // loop_footer
      %s27 = sadd.s32 1, %s23
    $region7: #{_lambda_.5} parent=1 // loop_footer_branch
      %22 = sbr.rel target = $region3
    $region8: #{_lambda_.5} parent=1 // loop_exit
      _
    %2515 = vsyncpa [#allocation4], 1
    %s2516 = scalar_lea.sflag [#allocation4], 1
    %2517 = vsyncpa %s2516, 1
    %2518 = vsyncpa [#allocation8], 1
    %s2519 = scalar_lea.sflag [#allocation8], 1
    %2520 = vsyncpa %s2519, 1
    %2521 = vsyncpa [#allocation12], 1
    %2522 = vsyncpa [#allocation5], 1
    %s2523 = scalar_lea.sflag [#allocation5], 1
    %2524 = vsyncpa %s2523, 1
    %2525 = vsyncpa [#allocation6], 1
    %s2526 = scalar_lea.sflag [#allocation6], 1
    %2527 = vsyncpa %s2526, 1

</llo_original>
